<compile_context>
chip_gen: v5e
topology: v5e:2x2
jax: 0.10.0
libtpu: 0.0.40
codegen_flags: <defaults>
</compile_context>

<pallas_src>
import functools

import jax
import jax.numpy as jnp
from jax import lax
from jax.experimental import pallas as pl
from jax.experimental.pallas import tpu as pltpu


def _round_up(n, m):
    return (n + m - 1) // m * m


# --------------------------- fused LSTM + head kernel ---------------------------
def _fused_lstm_head_kernel(num_layers, x_ref, *refs):
    """All LSTM layers + FC head for one batch tile, entirely in VMEM.

    x_ref          : (T, BT, I)  time-major input tile (f32)
    per layer      : wih (in_dim, 4*Hp) bf16, whh (Hp, 4*Hp) bf16, b (1, 4*Hp) f32
    head           : w1 (Hp, half) f32, b1 (1, half) f32, w2 (half, O) f32, b2 (1, O) f32
    out_ref        : (BT, O)
    scratches      : seq (T, BT, Hp) f32, gates_x (T*BT, 4*Hp) f32,
                     h (BT, Hp) f32, c (BT, Hp) f32
    PyTorch gate order along the gate axis: [i, f, g, o].
    """
    n_l = 3 * num_layers
    lstm_refs = refs[:n_l]
    (w1_ref, b1_ref, w2_ref, b2_ref, out_ref,
     seq_scr, gx_scr, h_scr, c_scr) = refs[n_l:]

    T, BT, _ = x_ref.shape
    H_pad = h_scr.shape[1]

    for layer in range(num_layers):
        wih_ref = lstm_refs[3 * layer]
        whh_ref = lstm_refs[3 * layer + 1]
        b_ref = lstm_refs[3 * layer + 2]

        # ---- input projection for the whole sequence: one big MXU matmul ----
        # (reshape collapses leading dims only; bias folded in once, here)
        if layer == 0:
            inp2d = x_ref[...].reshape(T * BT, x_ref.shape[2]).astype(jnp.bfloat16)
        else:
            inp2d = seq_scr[...].reshape(T * BT, H_pad).astype(jnp.bfloat16)
        gx_scr[...] = (
            jnp.dot(inp2d, wih_ref[...], preferred_element_type=jnp.float32)
            + b_ref[...]
        )

        h_scr[...] = jnp.zeros_like(h_scr)   # h0 = 0
        c_scr[...] = jnp.zeros_like(c_scr)   # c0 = 0
        write_seq = layer < num_layers - 1   # last layer: only h_T is needed

        def step(t, carry, _write_seq=write_seq, _whh_ref=whh_ref):
            row = pl.multiple_of(t * BT, 8)
            # only the recurrent matmul stays on the serial critical path
            gates = gx_scr[pl.ds(row, BT), :] + jnp.dot(
                h_scr[...].astype(jnp.bfloat16), _whh_ref[...],
                preferred_element_type=jnp.float32)              # (BT, 4*H_pad)
            # lane-aligned gate slices (H_pad is a multiple of 128)
            i_g = jax.nn.sigmoid(gates[:, 0 * H_pad:1 * H_pad])
            f_g = jax.nn.sigmoid(gates[:, 1 * H_pad:2 * H_pad])
            g_g = jnp.tanh(gates[:, 2 * H_pad:3 * H_pad])
            o_g = jax.nn.sigmoid(gates[:, 3 * H_pad:4 * H_pad])
            c_new = f_g * c_scr[...] + i_g * g_g
            h_new = o_g * jnp.tanh(c_new)
            c_scr[...] = c_new
            h_scr[...] = h_new
            if _write_seq:
                seq_scr[t] = h_new          # stays in VMEM for the next layer
            return carry

        lax.fori_loop(0, T, step, 0, unroll=True)
        # TODO(synk): inter-layer LSTM dropout is identity (eval mode).

    # ---- fused FC head on the final hidden state (no HBM round-trip) ----
    h_last = h_scr[...]                                          # (BT, H_pad)
    z = jnp.dot(h_last, w1_ref[...], preferred_element_type=jnp.float32) + b1_ref[...]
    z = jnp.maximum(z, 0.0)                                      # ReLU
    # TODO(synk): nn.Dropout is identity at inference (model.eval()).
    out_ref[...] = (
        jnp.dot(z, w2_ref[...], preferred_element_type=jnp.float32) + b2_ref[...]
    )


# --------------------------------- forward ---------------------------------
@jax.jit
def lstm_model_forward(x, kparams):
    """x: (B, T, input_size) batch_first, like the PyTorch module."""
    lstm = kparams["lstm"]
    num_layers = len(lstm)
    B, T, I = x.shape
    Hp = lstm[0][1].shape[0]                 # padded hidden size (multiple of 128)
    O = kparams["w2"].shape[1]

    # batch tiling: multiple of 8 sublanes, capped at 256 rows per tile
    BT = min(_round_up(B, 8), 256)
    Bp = _round_up(B, BT)
    nb = Bp // BT

    # batch_first -> time-major, pad batch
    x_tm = jnp.transpose(x, (1, 0, 2)).astype(jnp.float32)       # (T, B, I)
    if Bp != B:
        x_tm = jnp.pad(x_tm, ((0, 0), (0, Bp - B), (0, 0)))

    def full_spec(shape):
        return pl.BlockSpec(shape, lambda b, _n=len(shape): (0,) * _n)

    in_specs = [pl.BlockSpec((T, BT, I), lambda b: (0, b, 0))]
    flat_inputs = [x_tm]
    for (wih, whh, bias) in lstm:
        in_specs += [full_spec(wih.shape), full_spec(whh.shape), full_spec(bias.shape)]
        flat_inputs += [wih, whh, bias]
    for name in ("w1", "b1", "w2", "b2"):
        in_specs.append(full_spec(kparams[name].shape))
        flat_inputs.append(kparams[name])

    out = pl.pallas_call(
        functools.partial(_fused_lstm_head_kernel, num_layers),
        out_shape=jax.ShapeDtypeStruct((Bp, O), jnp.float32),
        grid_spec=pltpu.PrefetchScalarGridSpec(
            num_scalar_prefetch=0,
            grid=(nb,),
            in_specs=in_specs,
            out_specs=pl.BlockSpec((BT, O), lambda b: (b, 0)),
            scratch_shapes=[
                pltpu.VMEM((T, BT, Hp), jnp.float32),        # inter-layer hidden seq
                pltpu.VMEM((T * BT, 4 * Hp), jnp.float32),   # precomputed x@W_ih + b
                pltpu.VMEM((BT, Hp), jnp.float32),           # h_t
                pltpu.VMEM((BT, Hp), jnp.float32),           # c_t
            ]),
        compiler_params=pltpu.CompilerParams(
            dimension_semantics=("parallel",),               # megacore on v7x
            vmem_limit_bytes=48 * 1024 * 1024),              # fits v5e/v6e/v7x
    )(*flat_inputs)
    return out[:B]


# ----------------------------- parameter handling -----------------------------
def init_params(key, input_size, hidden_size, num_layers, output_size):
    """PyTorch-convention parameter shapes (nn.LSTM / nn.Linear defaults)."""
    raw = {"lstm": []}
    klstm = 1.0 / (hidden_size ** 0.5)
    keys = jax.random.split(key, num_layers * 4 + 4)
    ki = 0
    for layer in range(num_layers):
        in_dim = input_size if layer == 0 else hidden_size
        w_ih = jax.random.uniform(keys[ki], (4 * hidden_size, in_dim),
                                  jnp.float32, -klstm, klstm); ki += 1
        w_hh = jax.random.uniform(keys[ki], (4 * hidden_size, hidden_size),
                                  jnp.float32, -klstm, klstm); ki += 1
        b_ih = jax.random.uniform(keys[ki], (4 * hidden_size,),
                                  jnp.float32, -klstm, klstm); ki += 1
        b_hh = jax.random.uniform(keys[ki], (4 * hidden_size,),
                                  jnp.float32, -klstm, klstm); ki += 1
        raw["lstm"].append({"w_ih": w_ih, "w_hh": w_hh, "b_ih": b_ih, "b_hh": b_hh})

    half = hidden_size // 2
    k1 = 1.0 / (hidden_size ** 0.5)
    k2 = 1.0 / (half ** 0.5)
    raw["fc1_w"] = jax.random.uniform(keys[ki], (half, hidden_size),
                                      jnp.float32, -k1, k1); ki += 1
    raw["fc1_b"] = jax.random.uniform(keys[ki], (half,), jnp.float32, -k1, k1); ki += 1
    raw["fc2_w"] = jax.random.uniform(keys[ki], (output_size, half),
                                      jnp.float32, -k2, k2); ki += 1
    raw["fc2_b"] = jax.random.uniform(keys[ki], (output_size,),
                                      jnp.float32, -k2, k2); ki += 1
    return raw


def prepare_params(raw):
    """Pad/transpose/cast PyTorch-convention params into kernel-ready form.

    - gate axis laid out as (4, H_pad), H_pad = round_up(H, 128), so every gate
      slice in the kernel starts on a 128-lane boundary,
    - recurrent / hidden input (row) dims zero-padded to H_pad so the padded
      lanes stay exactly zero through the recurrence,
    - LSTM matmul weights cast to bf16 (f32 accumulation in-kernel).
    """
    H = raw["lstm"][0]["w_hh"].shape[1]
    Hp = _round_up(H, 128)

    def pad_gate_cols(m):                    # (..., 4H) -> (..., 4*Hp)
        lead = m.shape[:-1]
        m4 = m.reshape(*lead, 4, H)
        out = jnp.zeros((*lead, 4, Hp), m.dtype).at[..., :H].set(m4)
        return out.reshape(*lead, 4 * Hp)

    lstm = []
    for li, lp in enumerate(raw["lstm"]):
        w_ih_t = pad_gate_cols(lp["w_ih"].T)                        # (in_dim, 4*Hp)
        w_hh_t = pad_gate_cols(lp["w_hh"].T)                        # (H, 4*Hp)
        bias = pad_gate_cols((lp["b_ih"] + lp["b_hh"])[None, :])    # (1, 4*Hp)
        w_hh_t = jnp.zeros((Hp, 4 * Hp), w_hh_t.dtype).at[:H].set(w_hh_t)
        if li > 0:   # layers >= 1 consume the H_pad-wide hidden state
            w_ih_t = jnp.zeros((Hp, 4 * Hp), w_ih_t.dtype).at[:H].set(w_ih_t)
        lstm.append((w_ih_t.astype(jnp.bfloat16),
                     w_hh_t.astype(jnp.bfloat16),
                     bias.astype(jnp.float32)))

    half = raw["fc1_w"].shape[0]
    w1_t = jnp.zeros((Hp, half), jnp.float32).at[:H].set(raw["fc1_w"].T)
    return {
        "lstm": tuple(lstm),
        "w1": w1_t,
        "b1": raw["fc1_b"].reshape(1, half).astype(jnp.float32),
        "w2": raw["fc2_w"].T.astype(jnp.float32),
        "b2": raw["fc2_b"].reshape(1, -1).astype(jnp.float32),
    }


# --------------------------- pure-JAX reference (f32) ---------------------------
def reference_forward(x, raw):
    h_seq = x.astype(jnp.float32)
    B = x.shape[0]
    for lp in raw["lstm"]:
        w_ih, w_hh = lp["w_ih"], lp["w_hh"]
        b = lp["b_ih"] + lp["b_hh"]
        H = w_hh.shape[1]
        h = jnp.zeros((B, H), jnp.float32)
        c = jnp.zeros((B, H), jnp.float32)
        outs = []
        for t in range(h_seq.shape[1]):
            g = h_seq[:, t, :] @ w_ih.T + h @ w_hh.T + b
            i_g = jax.nn.sigmoid(g[:, 0:H])
            f_g = jax.nn.sigmoid(g[:, H:2 * H])
            g_g = jnp.tanh(g[:, 2 * H:3 * H])
            o_g = jax.nn.sigmoid(g[:, 3 * H:4 * H])
            c = f_g * c + i_g * g_g
            h = o_g * jnp.tanh(c)
            outs.append(h)
        h_seq = jnp.stack(outs, axis=1)
    h_last = h_seq[:, -1, :]
    z = jnp.maximum(h_last @ raw["fc1_w"].T + raw["fc1_b"], 0.0)
    return z @ raw["fc2_w"].T + raw["fc2_b"]


if __name__ == "__main__":
    INPUT_SIZE = 8
    HIDDEN_SIZE = 32
    NUM_LAYERS = 2
    OUTPUT_SIZE = 1
    BATCH = 4
    SEQ = 8

    key = jax.random.PRNGKey(0)
    k_x, k_p = jax.random.split(key)
    x = jax.random.normal(k_x, (BATCH, SEQ, INPUT_SIZE), jnp.float32)

    raw = init_params(k_p, INPUT_SIZE, HIDDEN_SIZE, NUM_LAYERS, OUTPUT_SIZE)
    kparams = prepare_params(raw)

    out = lstm_model_forward(x, kparams)
    out = jax.block_until_ready(out)

    assert out.shape == (BATCH, OUTPUT_SIZE)
    assert jnp.all(jnp.isfinite(out))

    # loose tolerance: LSTM matmuls run in bf16 (f32 accumulation)
    ref = reference_forward(x, raw)
    max_err = float(jnp.max(jnp.abs(out - ref)))
    assert max_err < 5e-2, f"max abs error vs f32 reference: {max_err}"

    print("KERNEL_OK")
</pallas_src>

<mosaic_0001>
module attributes {stable_mosaic.version = 11 : i64} {
  func.func @_fused_lstm_head_kernel(%arg0: i32, %arg1: memref<8x8x8xf32, #tpu.memory_space<vmem>>, %arg2: memref<8x512xbf16, #tpu.memory_space<vmem>>, %arg3: memref<128x512xbf16, #tpu.memory_space<vmem>>, %arg4: memref<1x512xf32, #tpu.memory_space<vmem>>, %arg5: memref<128x512xbf16, #tpu.memory_space<vmem>>, %arg6: memref<128x512xbf16, #tpu.memory_space<vmem>>, %arg7: memref<1x512xf32, #tpu.memory_space<vmem>>, %arg8: memref<128x16xf32, #tpu.memory_space<vmem>>, %arg9: memref<1x16xf32, #tpu.memory_space<vmem>>, %arg10: memref<16x1xf32, #tpu.memory_space<vmem>>, %arg11: memref<1x1xf32, #tpu.memory_space<vmem>>, %arg12: memref<8x1xf32, #tpu.memory_space<vmem>>, %arg13: memref<8x8x128xf32, #tpu.memory_space<vmem>>, %arg14: memref<64x512xf32, #tpu.memory_space<vmem>>, %arg15: memref<8x128xf32, #tpu.memory_space<vmem>>, %arg16: memref<8x128xf32, #tpu.memory_space<vmem>>) attributes {dimension_semantics = [#tpu.dimension_semantics<parallel>], iteration_bounds = array<i64: 1>, scalar_prefetch = 0 : i64, scratch_operands = 4 : i64, tpu.core_type = #tpu.core_type<tc>, window_params = [{transform_indices = @transform_0, window_bounds = array<i64: 8, 8, 8>}, {pipeline_mode = #tpu.pipeline_mode<synchronous>, transform_indices = @transform_1, window_bounds = array<i64: 8, 512>}, {pipeline_mode = #tpu.pipeline_mode<synchronous>, transform_indices = @transform_2, window_bounds = array<i64: 128, 512>}, {pipeline_mode = #tpu.pipeline_mode<synchronous>, transform_indices = @transform_3, window_bounds = array<i64: 1, 512>}, {pipeline_mode = #tpu.pipeline_mode<synchronous>, transform_indices = @transform_4, window_bounds = array<i64: 128, 512>}, {pipeline_mode = #tpu.pipeline_mode<synchronous>, transform_indices = @transform_5, window_bounds = array<i64: 128, 512>}, {pipeline_mode = #tpu.pipeline_mode<synchronous>, transform_indices = @transform_6, window_bounds = array<i64: 1, 512>}, {pipeline_mode = #tpu.pipeline_mode<synchronous>, transform_indices = @transform_7, window_bounds = array<i64: 128, 16>}, {pipeline_mode = #tpu.pipeline_mode<synchronous>, transform_indices = @transform_8, window_bounds = array<i64: 1, 16>}, {pipeline_mode = #tpu.pipeline_mode<synchronous>, transform_indices = @transform_9, window_bounds = array<i64: 16, 1>}, {pipeline_mode = #tpu.pipeline_mode<synchronous>, transform_indices = @transform_10, window_bounds = array<i64: 1, 1>}, {transform_indices = @transform_11, window_bounds = array<i64: 8, 1>}]} {
    %c0 = arith.constant 0 : index
    %c0_0 = arith.constant 0 : index
    %c0_1 = arith.constant 0 : index
    %0 = vector.load %arg1[%c0, %c0_0, %c0_1] : memref<8x8x8xf32, #tpu.memory_space<vmem>>, vector<8x8x8xf32>
    %1 = vector.shape_cast %0 : vector<8x8x8xf32> to vector<64x8xf32>
    %2 = arith.truncf %1 : vector<64x8xf32> to vector<64x8xbf16>
    %c0_2 = arith.constant 0 : index
    %c0_3 = arith.constant 0 : index
    %3 = vector.load %arg2[%c0_2, %c0_3] : memref<8x512xbf16, #tpu.memory_space<vmem>>, vector<8x512xbf16>
    %cst = arith.constant dense<0.000000e+00> : vector<64x512xf32>
    %4 = tpu.matmul %2, %3, %cst {dimension_numbers = #tpu.dot_dimension_numbers<[1], [0], [0], [1], [0, 0, 1, 1], [], []>} : vector<64x8xbf16>, vector<8x512xbf16>, vector<64x512xf32> -> vector<64x512xf32>
    %c0_4 = arith.constant 0 : index
    %c0_5 = arith.constant 0 : index
    %5 = vector.load %arg4[%c0_4, %c0_5] : memref<1x512xf32, #tpu.memory_space<vmem>>, vector<1x512xf32>
    %6 = vector.broadcast %5 : vector<1x512xf32> to vector<64x512xf32>
    %7 = arith.addf %4, %6 : vector<64x512xf32>
    %c0_6 = arith.constant 0 : index
    %c0_7 = arith.constant 0 : index
    %8 = vector.load %arg14[%c0_6, %c0_7] : memref<64x512xf32, #tpu.memory_space<vmem>>, vector<64x512xf32>
    tpu.vector_store %arg14[%c0_6, %c0_7], %7 {strides = array<i32>} : memref<64x512xf32, #tpu.memory_space<vmem>>, vector<64x512xf32>,
    %cst_8 = arith.constant 0.000000e+00 : f32
    %9 = vector.broadcast %cst_8 : f32 to vector<8x128xf32>
    %c0_9 = arith.constant 0 : index
    %c0_10 = arith.constant 0 : index
    %10 = vector.load %arg15[%c0_9, %c0_10] : memref<8x128xf32, #tpu.memory_space<vmem>>, vector<8x128xf32>
    tpu.vector_store %arg15[%c0_9, %c0_10], %9 {strides = array<i32>} : memref<8x128xf32, #tpu.memory_space<vmem>>, vector<8x128xf32>,
    %cst_11 = arith.constant 0.000000e+00 : f32
    %11 = vector.broadcast %cst_11 : f32 to vector<8x128xf32>
    %c0_12 = arith.constant 0 : index
    %c0_13 = arith.constant 0 : index
    %12 = vector.load %arg16[%c0_12, %c0_13] : memref<8x128xf32, #tpu.memory_space<vmem>>, vector<8x128xf32>
    tpu.vector_store %arg16[%c0_12, %c0_13], %11 {strides = array<i32>} : memref<8x128xf32, #tpu.memory_space<vmem>>, vector<8x128xf32>,
    %c0_i32 = arith.constant 0 : i32
    %c8_i32 = arith.constant 8 : i32
    %13 = arith.muli %c0_i32, %c8_i32 : i32
    %14 = tpu.assume_multiple %13, 8 : i32
    %15 = arith.index_cast %14 : i32 to index
    %c0_14 = arith.constant 0 : index
    %16 = vector.load %arg14[%15, %c0_14] : memref<64x512xf32, #tpu.memory_space<vmem>>, vector<8x512xf32>
    %c0_15 = arith.constant 0 : index
    %c0_16 = arith.constant 0 : index
    %17 = vector.load %arg15[%c0_15, %c0_16] : memref<8x128xf32, #tpu.memory_space<vmem>>, vector<8x128xf32>
    %18 = arith.truncf %17 : vector<8x128xf32> to vector<8x128xbf16>
    %c0_17 = arith.constant 0 : index
    %c0_18 = arith.constant 0 : index
    %19 = vector.load %arg3[%c0_17, %c0_18] : memref<128x512xbf16, #tpu.memory_space<vmem>>, vector<128x512xbf16>
    %cst_19 = arith.constant dense<0.000000e+00> : vector<8x512xf32>
    %20 = tpu.matmul %18, %19, %cst_19 {dimension_numbers = #tpu.dot_dimension_numbers<[1], [0], [0], [1], [0, 0, 1, 1], [], []>} : vector<8x128xbf16>, vector<128x512xbf16>, vector<8x512xf32> -> vector<8x512xf32>
    %21 = arith.addf %16, %20 : vector<8x512xf32>
    %22 = vector.extract_strided_slice %21 {offsets = [0, 0], sizes = [8, 128], strides = [1, 1]} : vector<8x512xf32> to vector<8x128xf32>
    %23 = arith.negf %22 : vector<8x128xf32>
    %24 = math.exp %23 : vector<8x128xf32>
    %cst_20 = arith.constant 1.000000e+00 : f32
    %25 = vector.broadcast %cst_20 : f32 to vector<8x128xf32>
    %26 = arith.addf %25, %24 : vector<8x128xf32>
    %27 = arith.divf %25, %26 : vector<8x128xf32>
    %28 = vector.extract_strided_slice %21 {offsets = [0, 128], sizes = [8, 128], strides = [1, 1]} : vector<8x512xf32> to vector<8x128xf32>
    %29 = arith.negf %28 : vector<8x128xf32>
    %30 = math.exp %29 : vector<8x128xf32>
    %cst_21 = arith.constant 1.000000e+00 : f32
    %31 = vector.broadcast %cst_21 : f32 to vector<8x128xf32>
    %32 = arith.addf %31, %30 : vector<8x128xf32>
    %33 = arith.divf %31, %32 : vector<8x128xf32>
    %34 = vector.extract_strided_slice %21 {offsets = [0, 256], sizes = [8, 128], strides = [1, 1]} : vector<8x512xf32> to vector<8x128xf32>
    %35 = math.tanh %34 : vector<8x128xf32>
    %36 = vector.extract_strided_slice %21 {offsets = [0, 384], sizes = [8, 128], strides = [1, 1]} : vector<8x512xf32> to vector<8x128xf32>
    %37 = arith.negf %36 : vector<8x128xf32>
    %38 = math.exp %37 : vector<8x128xf32>
    %cst_22 = arith.constant 1.000000e+00 : f32
    %39 = vector.broadcast %cst_22 : f32 to vector<8x128xf32>
    %40 = arith.addf %39, %38 : vector<8x128xf32>
    %41 = arith.divf %39, %40 : vector<8x128xf32>
    %c0_23 = arith.constant 0 : index
    %c0_24 = arith.constant 0 : index
    %42 = vector.load %arg16[%c0_23, %c0_24] : memref<8x128xf32, #tpu.memory_space<vmem>>, vector<8x128xf32>
    %43 = arith.mulf %33, %42 : vector<8x128xf32>
    %44 = arith.mulf %27, %35 : vector<8x128xf32>
    %45 = arith.addf %43, %44 : vector<8x128xf32>
    %46 = math.tanh %45 : vector<8x128xf32>
    %47 = arith.mulf %41, %46 : vector<8x128xf32>
    %c0_25 = arith.constant 0 : index
    %c0_26 = arith.constant 0 : index
    %48 = vector.load %arg16[%c0_25, %c0_26] : memref<8x128xf32, #tpu.memory_space<vmem>>, vector<8x128xf32>
    tpu.vector_store %arg16[%c0_25, %c0_26], %45 {strides = array<i32>} : memref<8x128xf32, #tpu.memory_space<vmem>>, vector<8x128xf32>,
    %c0_27 = arith.constant 0 : index
    %c0_28 = arith.constant 0 : index
    %49 = vector.load %arg15[%c0_27, %c0_28] : memref<8x128xf32, #tpu.memory_space<vmem>>, vector<8x128xf32>
    tpu.vector_store %arg15[%c0_27, %c0_28], %47 {strides = array<i32>} : memref<8x128xf32, #tpu.memory_space<vmem>>, vector<8x128xf32>,
    %50 = arith.index_cast %c0_i32 : i32 to index
    %c0_29 = arith.constant 0 : index
    %c0_30 = arith.constant 0 : index
    %51 = vector.load %arg13[%50, %c0_29, %c0_30] : memref<8x8x128xf32, #tpu.memory_space<vmem>>, vector<1x8x128xf32>
    %52 = vector.shape_cast %51 : vector<1x8x128xf32> to vector<8x128xf32>
    %53 = vector.shape_cast %47 : vector<8x128xf32> to vector<1x8x128xf32>
    tpu.vector_store %arg13[%50, %c0_29, %c0_30], %53 {strides = array<i32>} : memref<8x8x128xf32, #tpu.memory_space<vmem>>, vector<1x8x128xf32>,
    %c1_i32 = arith.constant 1 : i32
    %c8_i32_31 = arith.constant 8 : i32
    %54 = arith.muli %c1_i32, %c8_i32_31 : i32
    %55 = tpu.assume_multiple %54, 8 : i32
    %56 = arith.index_cast %55 : i32 to index
    %c0_32 = arith.constant 0 : index
    %57 = vector.load %arg14[%56, %c0_32] : memref<64x512xf32, #tpu.memory_space<vmem>>, vector<8x512xf32>
    %c0_33 = arith.constant 0 : index
    %c0_34 = arith.constant 0 : index
    %58 = vector.load %arg15[%c0_33, %c0_34] : memref<8x128xf32, #tpu.memory_space<vmem>>, vector<8x128xf32>
    %59 = arith.truncf %58 : vector<8x128xf32> to vector<8x128xbf16>
    %c0_35 = arith.constant 0 : index
    %c0_36 = arith.constant 0 : index
    %60 = vector.load %arg3[%c0_35, %c0_36] : memref<128x512xbf16, #tpu.memory_space<vmem>>, vector<128x512xbf16>
    %cst_37 = arith.constant dense<0.000000e+00> : vector<8x512xf32>
    %61 = tpu.matmul %59, %60, %cst_37 {dimension_numbers = #tpu.dot_dimension_numbers<[1], [0], [0], [1], [0, 0, 1, 1], [], []>} : vector<8x128xbf16>, vector<128x512xbf16>, vector<8x512xf32> -> vector<8x512xf32>
    %62 = arith.addf %57, %61 : vector<8x512xf32>
    %63 = vector.extract_strided_slice %62 {offsets = [0, 0], sizes = [8, 128], strides = [1, 1]} : vector<8x512xf32> to vector<8x128xf32>
    %64 = arith.negf %63 : vector<8x128xf32>
    %65 = math.exp %64 : vector<8x128xf32>
    %cst_38 = arith.constant 1.000000e+00 : f32
    %66 = vector.broadcast %cst_38 : f32 to vector<8x128xf32>
    %67 = arith.addf %66, %65 : vector<8x128xf32>
    %68 = arith.divf %66, %67 : vector<8x128xf32>
    %69 = vector.extract_strided_slice %62 {offsets = [0, 128], sizes = [8, 128], strides = [1, 1]} : vector<8x512xf32> to vector<8x128xf32>
    %70 = arith.negf %69 : vector<8x128xf32>
    %71 = math.exp %70 : vector<8x128xf32>
    %cst_39 = arith.constant 1.000000e+00 : f32
    %72 = vector.broadcast %cst_39 : f32 to vector<8x128xf32>
    %73 = arith.addf %72, %71 : vector<8x128xf32>
    %74 = arith.divf %72, %73 : vector<8x128xf32>
    %75 = vector.extract_strided_slice %62 {offsets = [0, 256], sizes = [8, 128], strides = [1, 1]} : vector<8x512xf32> to vector<8x128xf32>
    %76 = math.tanh %75 : vector<8x128xf32>
    %77 = vector.extract_strided_slice %62 {offsets = [0, 384], sizes = [8, 128], strides = [1, 1]} : vector<8x512xf32> to vector<8x128xf32>
    %78 = arith.negf %77 : vector<8x128xf32>
    %79 = math.exp %78 : vector<8x128xf32>
    %cst_40 = arith.constant 1.000000e+00 : f32
    %80 = vector.broadcast %cst_40 : f32 to vector<8x128xf32>
    %81 = arith.addf %80, %79 : vector<8x128xf32>
    %82 = arith.divf %80, %81 : vector<8x128xf32>
    %c0_41 = arith.constant 0 : index
    %c0_42 = arith.constant 0 : index
    %83 = vector.load %arg16[%c0_41, %c0_42] : memref<8x128xf32, #tpu.memory_space<vmem>>, vector<8x128xf32>
    %84 = arith.mulf %74, %83 : vector<8x128xf32>
    %85 = arith.mulf %68, %76 : vector<8x128xf32>
    %86 = arith.addf %84, %85 : vector<8x128xf32>
    %87 = math.tanh %86 : vector<8x128xf32>
    %88 = arith.mulf %82, %87 : vector<8x128xf32>
    %c0_43 = arith.constant 0 : index
    %c0_44 = arith.constant 0 : index
    %89 = vector.load %arg16[%c0_43, %c0_44] : memref<8x128xf32, #tpu.memory_space<vmem>>, vector<8x128xf32>
    tpu.vector_store %arg16[%c0_43, %c0_44], %86 {strides = array<i32>} : memref<8x128xf32, #tpu.memory_space<vmem>>, vector<8x128xf32>,
    %c0_45 = arith.constant 0 : index
    %c0_46 = arith.constant 0 : index
    %90 = vector.load %arg15[%c0_45, %c0_46] : memref<8x128xf32, #tpu.memory_space<vmem>>, vector<8x128xf32>
    tpu.vector_store %arg15[%c0_45, %c0_46], %88 {strides = array<i32>} : memref<8x128xf32, #tpu.memory_space<vmem>>, vector<8x128xf32>,
    %91 = arith.index_cast %c1_i32 : i32 to index
    %c0_47 = arith.constant 0 : index
    %c0_48 = arith.constant 0 : index
    %92 = vector.load %arg13[%91, %c0_47, %c0_48] : memref<8x8x128xf32, #tpu.memory_space<vmem>>, vector<1x8x128xf32>
    %93 = vector.shape_cast %92 : vector<1x8x128xf32> to vector<8x128xf32>
    %94 = vector.shape_cast %88 : vector<8x128xf32> to vector<1x8x128xf32>
    tpu.vector_store %arg13[%91, %c0_47, %c0_48], %94 {strides = array<i32>} : memref<8x8x128xf32, #tpu.memory_space<vmem>>, vector<1x8x128xf32>,
    %c2_i32 = arith.constant 2 : i32
    %c8_i32_49 = arith.constant 8 : i32
    %95 = arith.muli %c2_i32, %c8_i32_49 : i32
    %96 = tpu.assume_multiple %95, 8 : i32
    %97 = arith.index_cast %96 : i32 to index
    %c0_50 = arith.constant 0 : index
    %98 = vector.load %arg14[%97, %c0_50] : memref<64x512xf32, #tpu.memory_space<vmem>>, vector<8x512xf32>
    %c0_51 = arith.constant 0 : index
    %c0_52 = arith.constant 0 : index
    %99 = vector.load %arg15[%c0_51, %c0_52] : memref<8x128xf32, #tpu.memory_space<vmem>>, vector<8x128xf32>
    %100 = arith.truncf %99 : vector<8x128xf32> to vector<8x128xbf16>
    %c0_53 = arith.constant 0 : index
    %c0_54 = arith.constant 0 : index
    %101 = vector.load %arg3[%c0_53, %c0_54] : memref<128x512xbf16, #tpu.memory_space<vmem>>, vector<128x512xbf16>
    %cst_55 = arith.constant dense<0.000000e+00> : vector<8x512xf32>
    %102 = tpu.matmul %100, %101, %cst_55 {dimension_numbers = #tpu.dot_dimension_numbers<[1], [0], [0], [1], [0, 0, 1, 1], [], []>} : vector<8x128xbf16>, vector<128x512xbf16>, vector<8x512xf32> -> vector<8x512xf32>
    %103 = arith.addf %98, %102 : vector<8x512xf32>
    %104 = vector.extract_strided_slice %103 {offsets = [0, 0], sizes = [8, 128], strides = [1, 1]} : vector<8x512xf32> to vector<8x128xf32>
    %105 = arith.negf %104 : vector<8x128xf32>
    %106 = math.exp %105 : vector<8x128xf32>
    %cst_56 = arith.constant 1.000000e+00 : f32
    %107 = vector.broadcast %cst_56 : f32 to vector<8x128xf32>
    %108 = arith.addf %107, %106 : vector<8x128xf32>
    %109 = arith.divf %107, %108 : vector<8x128xf32>
    %110 = vector.extract_strided_slice %103 {offsets = [0, 128], sizes = [8, 128], strides = [1, 1]} : vector<8x512xf32> to vector<8x128xf32>
    %111 = arith.negf %110 : vector<8x128xf32>
    %112 = math.exp %111 : vector<8x128xf32>
    %cst_57 = arith.constant 1.000000e+00 : f32
    %113 = vector.broadcast %cst_57 : f32 to vector<8x128xf32>
    %114 = arith.addf %113, %112 : vector<8x128xf32>
    %115 = arith.divf %113, %114 : vector<8x128xf32>
    %116 = vector.extract_strided_slice %103 {offsets = [0, 256], sizes = [8, 128], strides = [1, 1]} : vector<8x512xf32> to vector<8x128xf32>
    %117 = math.tanh %116 : vector<8x128xf32>
    %118 = vector.extract_strided_slice %103 {offsets = [0, 384], sizes = [8, 128], strides = [1, 1]} : vector<8x512xf32> to vector<8x128xf32>
    %119 = arith.negf %118 : vector<8x128xf32>
    %120 = math.exp %119 : vector<8x128xf32>
    %cst_58 = arith.constant 1.000000e+00 : f32
    %121 = vector.broadcast %cst_58 : f32 to vector<8x128xf32>
    %122 = arith.addf %121, %120 : vector<8x128xf32>
    %123 = arith.divf %121, %122 : vector<8x128xf32>
    %c0_59 = arith.constant 0 : index
    %c0_60 = arith.constant 0 : index
    %124 = vector.load %arg16[%c0_59, %c0_60] : memref<8x128xf32, #tpu.memory_space<vmem>>, vector<8x128xf32>
    %125 = arith.mulf %115, %124 : vector<8x128xf32>
    %126 = arith.mulf %109, %117 : vector<8x128xf32>
    %127 = arith.addf %125, %126 : vector<8x128xf32>
    %128 = math.tanh %127 : vector<8x128xf32>
    %129 = arith.mulf %123, %128 : vector<8x128xf32>
    %c0_61 = arith.constant 0 : index
    %c0_62 = arith.constant 0 : index
    %130 = vector.load %arg16[%c0_61, %c0_62] : memref<8x128xf32, #tpu.memory_space<vmem>>, vector<8x128xf32>
    tpu.vector_store %arg16[%c0_61, %c0_62], %127 {strides = array<i32>} : memref<8x128xf32, #tpu.memory_space<vmem>>, vector<8x128xf32>,
    %c0_63 = arith.constant 0 : index
    %c0_64 = arith.constant 0 : index
    %131 = vector.load %arg15[%c0_63, %c0_64] : memref<8x128xf32, #tpu.memory_space<vmem>>, vector<8x128xf32>
    tpu.vector_store %arg15[%c0_63, %c0_64], %129 {strides = array<i32>} : memref<8x128xf32, #tpu.memory_space<vmem>>, vector<8x128xf32>,
    %132 = arith.index_cast %c2_i32 : i32 to index
    %c0_65 = arith.constant 0 : index
    %c0_66 = arith.constant 0 : index
    %133 = vector.load %arg13[%132, %c0_65, %c0_66] : memref<8x8x128xf32, #tpu.memory_space<vmem>>, vector<1x8x128xf32>
    %134 = vector.shape_cast %133 : vector<1x8x128xf32> to vector<8x128xf32>
    %135 = vector.shape_cast %129 : vector<8x128xf32> to vector<1x8x128xf32>
    tpu.vector_store %arg13[%132, %c0_65, %c0_66], %135 {strides = array<i32>} : memref<8x8x128xf32, #tpu.memory_space<vmem>>, vector<1x8x128xf32>,
    %c3_i32 = arith.constant 3 : i32
    %c8_i32_67 = arith.constant 8 : i32
    %136 = arith.muli %c3_i32, %c8_i32_67 : i32
    %137 = tpu.assume_multiple %136, 8 : i32
    %138 = arith.index_cast %137 : i32 to index
    %c0_68 = arith.constant 0 : index
    %139 = vector.load %arg14[%138, %c0_68] : memref<64x512xf32, #tpu.memory_space<vmem>>, vector<8x512xf32>
    %c0_69 = arith.constant 0 : index
    %c0_70 = arith.constant 0 : index
    %140 = vector.load %arg15[%c0_69, %c0_70] : memref<8x128xf32, #tpu.memory_space<vmem>>, vector<8x128xf32>
    %141 = arith.truncf %140 : vector<8x128xf32> to vector<8x128xbf16>
    %c0_71 = arith.constant 0 : index
    %c0_72 = arith.constant 0 : index
    %142 = vector.load %arg3[%c0_71, %c0_72] : memref<128x512xbf16, #tpu.memory_space<vmem>>, vector<128x512xbf16>
    %cst_73 = arith.constant dense<0.000000e+00> : vector<8x512xf32>
    %143 = tpu.matmul %141, %142, %cst_73 {dimension_numbers = #tpu.dot_dimension_numbers<[1], [0], [0], [1], [0, 0, 1, 1], [], []>} : vector<8x128xbf16>, vector<128x512xbf16>, vector<8x512xf32> -> vector<8x512xf32>
    %144 = arith.addf %139, %143 : vector<8x512xf32>
    %145 = vector.extract_strided_slice %144 {offsets = [0, 0], sizes = [8, 128], strides = [1, 1]} : vector<8x512xf32> to vector<8x128xf32>
    %146 = arith.negf %145 : vector<8x128xf32>
    %147 = math.exp %146 : vector<8x128xf32>
    %cst_74 = arith.constant 1.000000e+00 : f32
    %148 = vector.broadcast %cst_74 : f32 to vector<8x128xf32>
    %149 = arith.addf %148, %147 : vector<8x128xf32>
    %150 = arith.divf %148, %149 : vector<8x128xf32>
    %151 = vector.extract_strided_slice %144 {offsets = [0, 128], sizes = [8, 128], strides = [1, 1]} : vector<8x512xf32> to vector<8x128xf32>
    %152 = arith.negf %151 : vector<8x128xf32>
    %153 = math.exp %152 : vector<8x128xf32>
    %cst_75 = arith.constant 1.000000e+00 : f32
    %154 = vector.broadcast %cst_75 : f32 to vector<8x128xf32>
    %155 = arith.addf %154, %153 : vector<8x128xf32>
    %156 = arith.divf %154, %155 : vector<8x128xf32>
    %157 = vector.extract_strided_slice %144 {offsets = [0, 256], sizes = [8, 128], strides = [1, 1]} : vector<8x512xf32> to vector<8x128xf32>
    %158 = math.tanh %157 : vector<8x128xf32>
    %159 = vector.extract_strided_slice %144 {offsets = [0, 384], sizes = [8, 128], strides = [1, 1]} : vector<8x512xf32> to vector<8x128xf32>
    %160 = arith.negf %159 : vector<8x128xf32>
    %161 = math.exp %160 : vector<8x128xf32>
    %cst_76 = arith.constant 1.000000e+00 : f32
    %162 = vector.broadcast %cst_76 : f32 to vector<8x128xf32>
    %163 = arith.addf %162, %161 : vector<8x128xf32>
    %164 = arith.divf %162, %163 : vector<8x128xf32>
    %c0_77 = arith.constant 0 : index
    %c0_78 = arith.constant 0 : index
    %165 = vector.load %arg16[%c0_77, %c0_78] : memref<8x128xf32, #tpu.memory_space<vmem>>, vector<8x128xf32>
    %166 = arith.mulf %156, %165 : vector<8x128xf32>
    %167 = arith.mulf %150, %158 : vector<8x128xf32>
    %168 = arith.addf %166, %167 : vector<8x128xf32>
    %169 = math.tanh %168 : vector<8x128xf32>
    %170 = arith.mulf %164, %169 : vector<8x128xf32>
    %c0_79 = arith.constant 0 : index
    %c0_80 = arith.constant 0 : index
    %171 = vector.load %arg16[%c0_79, %c0_80] : memref<8x128xf32, #tpu.memory_space<vmem>>, vector<8x128xf32>
    tpu.vector_store %arg16[%c0_79, %c0_80], %168 {strides = array<i32>} : memref<8x128xf32, #tpu.memory_space<vmem>>, vector<8x128xf32>,
    %c0_81 = arith.constant 0 : index
    %c0_82 = arith.constant 0 : index
    %172 = vector.load %arg15[%c0_81, %c0_82] : memref<8x128xf32, #tpu.memory_space<vmem>>, vector<8x128xf32>
    tpu.vector_store %arg15[%c0_81, %c0_82], %170 {strides = array<i32>} : memref<8x128xf32, #tpu.memory_space<vmem>>, vector<8x128xf32>,
    %173 = arith.index_cast %c3_i32 : i32 to index
    %c0_83 = arith.constant 0 : index
    %c0_84 = arith.constant 0 : index
    %174 = vector.load %arg13[%173, %c0_83, %c0_84] : memref<8x8x128xf32, #tpu.memory_space<vmem>>, vector<1x8x128xf32>
    %175 = vector.shape_cast %174 : vector<1x8x128xf32> to vector<8x128xf32>
    %176 = vector.shape_cast %170 : vector<8x128xf32> to vector<1x8x128xf32>
    tpu.vector_store %arg13[%173, %c0_83, %c0_84], %176 {strides = array<i32>} : memref<8x8x128xf32, #tpu.memory_space<vmem>>, vector<1x8x128xf32>,
    %c4_i32 = arith.constant 4 : i32
    %c8_i32_85 = arith.constant 8 : i32
    %177 = arith.muli %c4_i32, %c8_i32_85 : i32
    %178 = tpu.assume_multiple %177, 8 : i32
    %179 = arith.index_cast %178 : i32 to index
    %c0_86 = arith.constant 0 : index
    %180 = vector.load %arg14[%179, %c0_86] : memref<64x512xf32, #tpu.memory_space<vmem>>, vector<8x512xf32>
    %c0_87 = arith.constant 0 : index
    %c0_88 = arith.constant 0 : index
    %181 = vector.load %arg15[%c0_87, %c0_88] : memref<8x128xf32, #tpu.memory_space<vmem>>, vector<8x128xf32>
    %182 = arith.truncf %181 : vector<8x128xf32> to vector<8x128xbf16>
    %c0_89 = arith.constant 0 : index
    %c0_90 = arith.constant 0 : index
    %183 = vector.load %arg3[%c0_89, %c0_90] : memref<128x512xbf16, #tpu.memory_space<vmem>>, vector<128x512xbf16>
    %cst_91 = arith.constant dense<0.000000e+00> : vector<8x512xf32>
    %184 = tpu.matmul %182, %183, %cst_91 {dimension_numbers = #tpu.dot_dimension_numbers<[1], [0], [0], [1], [0, 0, 1, 1], [], []>} : vector<8x128xbf16>, vector<128x512xbf16>, vector<8x512xf32> -> vector<8x512xf32>
    %185 = arith.addf %180, %184 : vector<8x512xf32>
    %186 = vector.extract_strided_slice %185 {offsets = [0, 0], sizes = [8, 128], strides = [1, 1]} : vector<8x512xf32> to vector<8x128xf32>
    %187 = arith.negf %186 : vector<8x128xf32>
    %188 = math.exp %187 : vector<8x128xf32>
    %cst_92 = arith.constant 1.000000e+00 : f32
    %189 = vector.broadcast %cst_92 : f32 to vector<8x128xf32>
    %190 = arith.addf %189, %188 : vector<8x128xf32>
    %191 = arith.divf %189, %190 : vector<8x128xf32>
    %192 = vector.extract_strided_slice %185 {offsets = [0, 128], sizes = [8, 128], strides = [1, 1]} : vector<8x512xf32> to vector<8x128xf32>
    %193 = arith.negf %192 : vector<8x128xf32>
    %194 = math.exp %193 : vector<8x128xf32>
    %cst_93 = arith.constant 1.000000e+00 : f32
    %195 = vector.broadcast %cst_93 : f32 to vector<8x128xf32>
    %196 = arith.addf %195, %194 : vector<8x128xf32>
    %197 = arith.divf %195, %196 : vector<8x128xf32>
    %198 = vector.extract_strided_slice %185 {offsets = [0, 256], sizes = [8, 128], strides = [1, 1]} : vector<8x512xf32> to vector<8x128xf32>
    %199 = math.tanh %198 : vector<8x128xf32>
    %200 = vector.extract_strided_slice %185 {offsets = [0, 384], sizes = [8, 128], strides = [1, 1]} : vector<8x512xf32> to vector<8x128xf32>
    %201 = arith.negf %200 : vector<8x128xf32>
    %202 = math.exp %201 : vector<8x128xf32>
    %cst_94 = arith.constant 1.000000e+00 : f32
    %203 = vector.broadcast %cst_94 : f32 to vector<8x128xf32>
    %204 = arith.addf %203, %202 : vector<8x128xf32>
    %205 = arith.divf %203, %204 : vector<8x128xf32>
    %c0_95 = arith.constant 0 : index
    %c0_96 = arith.constant 0 : index
    %206 = vector.load %arg16[%c0_95, %c0_96] : memref<8x128xf32, #tpu.memory_space<vmem>>, vector<8x128xf32>
    %207 = arith.mulf %197, %206 : vector<8x128xf32>
    %208 = arith.mulf %191, %199 : vector<8x128xf32>
    %209 = arith.addf %207, %208 : vector<8x128xf32>
    %210 = math.tanh %209 : vector<8x128xf32>
    %211 = arith.mulf %205, %210 : vector<8x128xf32>
    %c0_97 = arith.constant 0 : index
    %c0_98 = arith.constant 0 : index
    %212 = vector.load %arg16[%c0_97, %c0_98] : memref<8x128xf32, #tpu.memory_space<vmem>>, vector<8x128xf32>
    tpu.vector_store %arg16[%c0_97, %c0_98], %209 {strides = array<i32>} : memref<8x128xf32, #tpu.memory_space<vmem>>, vector<8x128xf32>,
    %c0_99 = arith.constant 0 : index
    %c0_100 = arith.constant 0 : index
    %213 = vector.load %arg15[%c0_99, %c0_100] : memref<8x128xf32, #tpu.memory_space<vmem>>, vector<8x128xf32>
    tpu.vector_store %arg15[%c0_99, %c0_100], %211 {strides = array<i32>} : memref<8x128xf32, #tpu.memory_space<vmem>>, vector<8x128xf32>,
    %214 = arith.index_cast %c4_i32 : i32 to index
    %c0_101 = arith.constant 0 : index
    %c0_102 = arith.constant 0 : index
    %215 = vector.load %arg13[%214, %c0_101, %c0_102] : memref<8x8x128xf32, #tpu.memory_space<vmem>>, vector<1x8x128xf32>
    %216 = vector.shape_cast %215 : vector<1x8x128xf32> to vector<8x128xf32>
    %217 = vector.shape_cast %211 : vector<8x128xf32> to vector<1x8x128xf32>
    tpu.vector_store %arg13[%214, %c0_101, %c0_102], %217 {strides = array<i32>} : memref<8x8x128xf32, #tpu.memory_space<vmem>>, vector<1x8x128xf32>,
    %c5_i32 = arith.constant 5 : i32
    %c8_i32_103 = arith.constant 8 : i32
    %218 = arith.muli %c5_i32, %c8_i32_103 : i32
    %219 = tpu.assume_multiple %218, 8 : i32
    %220 = arith.index_cast %219 : i32 to index
    %c0_104 = arith.constant 0 : index
    %221 = vector.load %arg14[%220, %c0_104] : memref<64x512xf32, #tpu.memory_space<vmem>>, vector<8x512xf32>
    %c0_105 = arith.constant 0 : index
    %c0_106 = arith.constant 0 : index
    %222 = vector.load %arg15[%c0_105, %c0_106] : memref<8x128xf32, #tpu.memory_space<vmem>>, vector<8x128xf32>
    %223 = arith.truncf %222 : vector<8x128xf32> to vector<8x128xbf16>
    %c0_107 = arith.constant 0 : index
    %c0_108 = arith.constant 0 : index
    %224 = vector.load %arg3[%c0_107, %c0_108] : memref<128x512xbf16, #tpu.memory_space<vmem>>, vector<128x512xbf16>
    %cst_109 = arith.constant dense<0.000000e+00> : vector<8x512xf32>
    %225 = tpu.matmul %223, %224, %cst_109 {dimension_numbers = #tpu.dot_dimension_numbers<[1], [0], [0], [1], [0, 0, 1, 1], [], []>} : vector<8x128xbf16>, vector<128x512xbf16>, vector<8x512xf32> -> vector<8x512xf32>
    %226 = arith.addf %221, %225 : vector<8x512xf32>
    %227 = vector.extract_strided_slice %226 {offsets = [0, 0], sizes = [8, 128], strides = [1, 1]} : vector<8x512xf32> to vector<8x128xf32>
    %228 = arith.negf %227 : vector<8x128xf32>
    %229 = math.exp %228 : vector<8x128xf32>
    %cst_110 = arith.constant 1.000000e+00 : f32
    %230 = vector.broadcast %cst_110 : f32 to vector<8x128xf32>
    %231 = arith.addf %230, %229 : vector<8x128xf32>
    %232 = arith.divf %230, %231 : vector<8x128xf32>
    %233 = vector.extract_strided_slice %226 {offsets = [0, 128], sizes = [8, 128], strides = [1, 1]} : vector<8x512xf32> to vector<8x128xf32>
    %234 = arith.negf %233 : vector<8x128xf32>
    %235 = math.exp %234 : vector<8x128xf32>
    %cst_111 = arith.constant 1.000000e+00 : f32
    %236 = vector.broadcast %cst_111 : f32 to vector<8x128xf32>
    %237 = arith.addf %236, %235 : vector<8x128xf32>
    %238 = arith.divf %236, %237 : vector<8x128xf32>
    %239 = vector.extract_strided_slice %226 {offsets = [0, 256], sizes = [8, 128], strides = [1, 1]} : vector<8x512xf32> to vector<8x128xf32>
    %240 = math.tanh %239 : vector<8x128xf32>
    %241 = vector.extract_strided_slice %226 {offsets = [0, 384], sizes = [8, 128], strides = [1, 1]} : vector<8x512xf32> to vector<8x128xf32>
    %242 = arith.negf %241 : vector<8x128xf32>
    %243 = math.exp %242 : vector<8x128xf32>
    %cst_112 = arith.constant 1.000000e+00 : f32
    %244 = vector.broadcast %cst_112 : f32 to vector<8x128xf32>
    %245 = arith.addf %244, %243 : vector<8x128xf32>
    %246 = arith.divf %244, %245 : vector<8x128xf32>
    %c0_113 = arith.constant 0 : index
    %c0_114 = arith.constant 0 : index
    %247 = vector.load %arg16[%c0_113, %c0_114] : memref<8x128xf32, #tpu.memory_space<vmem>>, vector<8x128xf32>
    %248 = arith.mulf %238, %247 : vector<8x128xf32>
    %249 = arith.mulf %232, %240 : vector<8x128xf32>
    %250 = arith.addf %248, %249 : vector<8x128xf32>
    %251 = math.tanh %250 : vector<8x128xf32>
    %252 = arith.mulf %246, %251 : vector<8x128xf32>
    %c0_115 = arith.constant 0 : index
    %c0_116 = arith.constant 0 : index
    %253 = vector.load %arg16[%c0_115, %c0_116] : memref<8x128xf32, #tpu.memory_space<vmem>>, vector<8x128xf32>
    tpu.vector_store %arg16[%c0_115, %c0_116], %250 {strides = array<i32>} : memref<8x128xf32, #tpu.memory_space<vmem>>, vector<8x128xf32>,
    %c0_117 = arith.constant 0 : index
    %c0_118 = arith.constant 0 : index
    %254 = vector.load %arg15[%c0_117, %c0_118] : memref<8x128xf32, #tpu.memory_space<vmem>>, vector<8x128xf32>
    tpu.vector_store %arg15[%c0_117, %c0_118], %252 {strides = array<i32>} : memref<8x128xf32, #tpu.memory_space<vmem>>, vector<8x128xf32>,
    %255 = arith.index_cast %c5_i32 : i32 to index
    %c0_119 = arith.constant 0 : index
    %c0_120 = arith.constant 0 : index
    %256 = vector.load %arg13[%255, %c0_119, %c0_120] : memref<8x8x128xf32, #tpu.memory_space<vmem>>, vector<1x8x128xf32>
    %257 = vector.shape_cast %256 : vector<1x8x128xf32> to vector<8x128xf32>
    %258 = vector.shape_cast %252 : vector<8x128xf32> to vector<1x8x128xf32>
    tpu.vector_store %arg13[%255, %c0_119, %c0_120], %258 {strides = array<i32>} : memref<8x8x128xf32, #tpu.memory_space<vmem>>, vector<1x8x128xf32>,
    %c6_i32 = arith.constant 6 : i32
    %c8_i32_121 = arith.constant 8 : i32
    %259 = arith.muli %c6_i32, %c8_i32_121 : i32
    %260 = tpu.assume_multiple %259, 8 : i32
    %261 = arith.index_cast %260 : i32 to index
    %c0_122 = arith.constant 0 : index
    %262 = vector.load %arg14[%261, %c0_122] : memref<64x512xf32, #tpu.memory_space<vmem>>, vector<8x512xf32>
    %c0_123 = arith.constant 0 : index
    %c0_124 = arith.constant 0 : index
    %263 = vector.load %arg15[%c0_123, %c0_124] : memref<8x128xf32, #tpu.memory_space<vmem>>, vector<8x128xf32>
    %264 = arith.truncf %263 : vector<8x128xf32> to vector<8x128xbf16>
    %c0_125 = arith.constant 0 : index
    %c0_126 = arith.constant 0 : index
    %265 = vector.load %arg3[%c0_125, %c0_126] : memref<128x512xbf16, #tpu.memory_space<vmem>>, vector<128x512xbf16>
    %cst_127 = arith.constant dense<0.000000e+00> : vector<8x512xf32>
    %266 = tpu.matmul %264, %265, %cst_127 {dimension_numbers = #tpu.dot_dimension_numbers<[1], [0], [0], [1], [0, 0, 1, 1], [], []>} : vector<8x128xbf16>, vector<128x512xbf16>, vector<8x512xf32> -> vector<8x512xf32>
    %267 = arith.addf %262, %266 : vector<8x512xf32>
    %268 = vector.extract_strided_slice %267 {offsets = [0, 0], sizes = [8, 128], strides = [1, 1]} : vector<8x512xf32> to vector<8x128xf32>
    %269 = arith.negf %268 : vector<8x128xf32>
    %270 = math.exp %269 : vector<8x128xf32>
    %cst_128 = arith.constant 1.000000e+00 : f32
    %271 = vector.broadcast %cst_128 : f32 to vector<8x128xf32>
    %272 = arith.addf %271, %270 : vector<8x128xf32>
    %273 = arith.divf %271, %272 : vector<8x128xf32>
    %274 = vector.extract_strided_slice %267 {offsets = [0, 128], sizes = [8, 128], strides = [1, 1]} : vector<8x512xf32> to vector<8x128xf32>
    %275 = arith.negf %274 : vector<8x128xf32>
    %276 = math.exp %275 : vector<8x128xf32>
    %cst_129 = arith.constant 1.000000e+00 : f32
    %277 = vector.broadcast %cst_129 : f32 to vector<8x128xf32>
    %278 = arith.addf %277, %276 : vector<8x128xf32>
    %279 = arith.divf %277, %278 : vector<8x128xf32>
    %280 = vector.extract_strided_slice %267 {offsets = [0, 256], sizes = [8, 128], strides = [1, 1]} : vector<8x512xf32> to vector<8x128xf32>
    %281 = math.tanh %280 : vector<8x128xf32>
    %282 = vector.extract_strided_slice %267 {offsets = [0, 384], sizes = [8, 128], strides = [1, 1]} : vector<8x512xf32> to vector<8x128xf32>
    %283 = arith.negf %282 : vector<8x128xf32>
    %284 = math.exp %283 : vector<8x128xf32>
    %cst_130 = arith.constant 1.000000e+00 : f32
    %285 = vector.broadcast %cst_130 : f32 to vector<8x128xf32>
    %286 = arith.addf %285, %284 : vector<8x128xf32>
    %287 = arith.divf %285, %286 : vector<8x128xf32>
    %c0_131 = arith.constant 0 : index
    %c0_132 = arith.constant 0 : index
    %288 = vector.load %arg16[%c0_131, %c0_132] : memref<8x128xf32, #tpu.memory_space<vmem>>, vector<8x128xf32>
    %289 = arith.mulf %279, %288 : vector<8x128xf32>
    %290 = arith.mulf %273, %281 : vector<8x128xf32>
    %291 = arith.addf %289, %290 : vector<8x128xf32>
    %292 = math.tanh %291 : vector<8x128xf32>
    %293 = arith.mulf %287, %292 : vector<8x128xf32>
    %c0_133 = arith.constant 0 : index
    %c0_134 = arith.constant 0 : index
    %294 = vector.load %arg16[%c0_133, %c0_134] : memref<8x128xf32, #tpu.memory_space<vmem>>, vector<8x128xf32>
    tpu.vector_store %arg16[%c0_133, %c0_134], %291 {strides = array<i32>} : memref<8x128xf32, #tpu.memory_space<vmem>>, vector<8x128xf32>,
    %c0_135 = arith.constant 0 : index
    %c0_136 = arith.constant 0 : index
    %295 = vector.load %arg15[%c0_135, %c0_136] : memref<8x128xf32, #tpu.memory_space<vmem>>, vector<8x128xf32>
    tpu.vector_store %arg15[%c0_135, %c0_136], %293 {strides = array<i32>} : memref<8x128xf32, #tpu.memory_space<vmem>>, vector<8x128xf32>,
    %296 = arith.index_cast %c6_i32 : i32 to index
    %c0_137 = arith.constant 0 : index
    %c0_138 = arith.constant 0 : index
    %297 = vector.load %arg13[%296, %c0_137, %c0_138] : memref<8x8x128xf32, #tpu.memory_space<vmem>>, vector<1x8x128xf32>
    %298 = vector.shape_cast %297 : vector<1x8x128xf32> to vector<8x128xf32>
    %299 = vector.shape_cast %293 : vector<8x128xf32> to vector<1x8x128xf32>
    tpu.vector_store %arg13[%296, %c0_137, %c0_138], %299 {strides = array<i32>} : memref<8x8x128xf32, #tpu.memory_space<vmem>>, vector<1x8x128xf32>,
    %c7_i32 = arith.constant 7 : i32
    %c8_i32_139 = arith.constant 8 : i32
    %300 = arith.muli %c7_i32, %c8_i32_139 : i32
    %301 = tpu.assume_multiple %300, 8 : i32
    %302 = arith.index_cast %301 : i32 to index
    %c0_140 = arith.constant 0 : index
    %303 = vector.load %arg14[%302, %c0_140] : memref<64x512xf32, #tpu.memory_space<vmem>>, vector<8x512xf32>
    %c0_141 = arith.constant 0 : index
    %c0_142 = arith.constant 0 : index
    %304 = vector.load %arg15[%c0_141, %c0_142] : memref<8x128xf32, #tpu.memory_space<vmem>>, vector<8x128xf32>
    %305 = arith.truncf %304 : vector<8x128xf32> to vector<8x128xbf16>
    %c0_143 = arith.constant 0 : index
    %c0_144 = arith.constant 0 : index
    %306 = vector.load %arg3[%c0_143, %c0_144] : memref<128x512xbf16, #tpu.memory_space<vmem>>, vector<128x512xbf16>
    %cst_145 = arith.constant dense<0.000000e+00> : vector<8x512xf32>
    %307 = tpu.matmul %305, %306, %cst_145 {dimension_numbers = #tpu.dot_dimension_numbers<[1], [0], [0], [1], [0, 0, 1, 1], [], []>} : vector<8x128xbf16>, vector<128x512xbf16>, vector<8x512xf32> -> vector<8x512xf32>
    %308 = arith.addf %303, %307 : vector<8x512xf32>
    %309 = vector.extract_strided_slice %308 {offsets = [0, 0], sizes = [8, 128], strides = [1, 1]} : vector<8x512xf32> to vector<8x128xf32>
    %310 = arith.negf %309 : vector<8x128xf32>
    %311 = math.exp %310 : vector<8x128xf32>
    %cst_146 = arith.constant 1.000000e+00 : f32
    %312 = vector.broadcast %cst_146 : f32 to vector<8x128xf32>
    %313 = arith.addf %312, %311 : vector<8x128xf32>
    %314 = arith.divf %312, %313 : vector<8x128xf32>
    %315 = vector.extract_strided_slice %308 {offsets = [0, 128], sizes = [8, 128], strides = [1, 1]} : vector<8x512xf32> to vector<8x128xf32>
    %316 = arith.negf %315 : vector<8x128xf32>
    %317 = math.exp %316 : vector<8x128xf32>
    %cst_147 = arith.constant 1.000000e+00 : f32
    %318 = vector.broadcast %cst_147 : f32 to vector<8x128xf32>
    %319 = arith.addf %318, %317 : vector<8x128xf32>
    %320 = arith.divf %318, %319 : vector<8x128xf32>
    %321 = vector.extract_strided_slice %308 {offsets = [0, 256], sizes = [8, 128], strides = [1, 1]} : vector<8x512xf32> to vector<8x128xf32>
    %322 = math.tanh %321 : vector<8x128xf32>
    %323 = vector.extract_strided_slice %308 {offsets = [0, 384], sizes = [8, 128], strides = [1, 1]} : vector<8x512xf32> to vector<8x128xf32>
    %324 = arith.negf %323 : vector<8x128xf32>
    %325 = math.exp %324 : vector<8x128xf32>
    %cst_148 = arith.constant 1.000000e+00 : f32
    %326 = vector.broadcast %cst_148 : f32 to vector<8x128xf32>
    %327 = arith.addf %326, %325 : vector<8x128xf32>
    %328 = arith.divf %326, %327 : vector<8x128xf32>
    %c0_149 = arith.constant 0 : index
    %c0_150 = arith.constant 0 : index
    %329 = vector.load %arg16[%c0_149, %c0_150] : memref<8x128xf32, #tpu.memory_space<vmem>>, vector<8x128xf32>
    %330 = arith.mulf %320, %329 : vector<8x128xf32>
    %331 = arith.mulf %314, %322 : vector<8x128xf32>
    %332 = arith.addf %330, %331 : vector<8x128xf32>
    %333 = math.tanh %332 : vector<8x128xf32>
    %334 = arith.mulf %328, %333 : vector<8x128xf32>
    %c0_151 = arith.constant 0 : index
    %c0_152 = arith.constant 0 : index
    %335 = vector.load %arg16[%c0_151, %c0_152] : memref<8x128xf32, #tpu.memory_space<vmem>>, vector<8x128xf32>
    tpu.vector_store %arg16[%c0_151, %c0_152], %332 {strides = array<i32>} : memref<8x128xf32, #tpu.memory_space<vmem>>, vector<8x128xf32>,
    %c0_153 = arith.constant 0 : index
    %c0_154 = arith.constant 0 : index
    %336 = vector.load %arg15[%c0_153, %c0_154] : memref<8x128xf32, #tpu.memory_space<vmem>>, vector<8x128xf32>
    tpu.vector_store %arg15[%c0_153, %c0_154], %334 {strides = array<i32>} : memref<8x128xf32, #tpu.memory_space<vmem>>, vector<8x128xf32>,
    %337 = arith.index_cast %c7_i32 : i32 to index
    %c0_155 = arith.constant 0 : index
    %c0_156 = arith.constant 0 : index
    %338 = vector.load %arg13[%337, %c0_155, %c0_156] : memref<8x8x128xf32, #tpu.memory_space<vmem>>, vector<1x8x128xf32>
    %339 = vector.shape_cast %338 : vector<1x8x128xf32> to vector<8x128xf32>
    %340 = vector.shape_cast %334 : vector<8x128xf32> to vector<1x8x128xf32>
    tpu.vector_store %arg13[%337, %c0_155, %c0_156], %340 {strides = array<i32>} : memref<8x8x128xf32, #tpu.memory_space<vmem>>, vector<1x8x128xf32>,
    %c8_i32_157 = arith.constant 8 : i32
    %c0_158 = arith.constant 0 : index
    %c0_159 = arith.constant 0 : index
    %c0_160 = arith.constant 0 : index
    %341 = vector.load %arg13[%c0_158, %c0_159, %c0_160] : memref<8x8x128xf32, #tpu.memory_space<vmem>>, vector<8x8x128xf32>
    %342 = vector.shape_cast %341 : vector<8x8x128xf32> to vector<64x128xf32>
    %343 = arith.truncf %342 : vector<64x128xf32> to vector<64x128xbf16>
    %c0_161 = arith.constant 0 : index
    %c0_162 = arith.constant 0 : index
    %344 = vector.load %arg5[%c0_161, %c0_162] : memref<128x512xbf16, #tpu.memory_space<vmem>>, vector<128x512xbf16>
    %cst_163 = arith.constant dense<0.000000e+00> : vector<64x512xf32>
    %345 = tpu.matmul %343, %344, %cst_163 {dimension_numbers = #tpu.dot_dimension_numbers<[1], [0], [0], [1], [0, 0, 1, 1], [], []>} : vector<64x128xbf16>, vector<128x512xbf16>, vector<64x512xf32> -> vector<64x512xf32>
    %c0_164 = arith.constant 0 : index
    %c0_165 = arith.constant 0 : index
    %346 = vector.load %arg7[%c0_164, %c0_165] : memref<1x512xf32, #tpu.memory_space<vmem>>, vector<1x512xf32>
    %347 = vector.broadcast %346 : vector<1x512xf32> to vector<64x512xf32>
    %348 = arith.addf %345, %347 : vector<64x512xf32>
    %c0_166 = arith.constant 0 : index
    %c0_167 = arith.constant 0 : index
    %349 = vector.load %arg14[%c0_166, %c0_167] : memref<64x512xf32, #tpu.memory_space<vmem>>, vector<64x512xf32>
    tpu.vector_store %arg14[%c0_166, %c0_167], %348 {strides = array<i32>} : memref<64x512xf32, #tpu.memory_space<vmem>>, vector<64x512xf32>,
    %cst_168 = arith.constant 0.000000e+00 : f32
    %350 = vector.broadcast %cst_168 : f32 to vector<8x128xf32>
    %c0_169 = arith.constant 0 : index
    %c0_170 = arith.constant 0 : index
    %351 = vector.load %arg15[%c0_169, %c0_170] : memref<8x128xf32, #tpu.memory_space<vmem>>, vector<8x128xf32>
    tpu.vector_store %arg15[%c0_169, %c0_170], %350 {strides = array<i32>} : memref<8x128xf32, #tpu.memory_space<vmem>>, vector<8x128xf32>,
    %cst_171 = arith.constant 0.000000e+00 : f32
    %352 = vector.broadcast %cst_171 : f32 to vector<8x128xf32>
    %c0_172 = arith.constant 0 : index
    %c0_173 = arith.constant 0 : index
    %353 = vector.load %arg16[%c0_172, %c0_173] : memref<8x128xf32, #tpu.memory_space<vmem>>, vector<8x128xf32>
    tpu.vector_store %arg16[%c0_172, %c0_173], %352 {strides = array<i32>} : memref<8x128xf32, #tpu.memory_space<vmem>>, vector<8x128xf32>,
    %c0_i32_174 = arith.constant 0 : i32
    %c8_i32_175 = arith.constant 8 : i32
    %354 = arith.muli %c0_i32_174, %c8_i32_175 : i32
    %355 = tpu.assume_multiple %354, 8 : i32
    %356 = arith.index_cast %355 : i32 to index
    %c0_176 = arith.constant 0 : index
    %357 = vector.load %arg14[%356, %c0_176] : memref<64x512xf32, #tpu.memory_space<vmem>>, vector<8x512xf32>
    %c0_177 = arith.constant 0 : index
    %c0_178 = arith.constant 0 : index
    %358 = vector.load %arg15[%c0_177, %c0_178] : memref<8x128xf32, #tpu.memory_space<vmem>>, vector<8x128xf32>
    %359 = arith.truncf %358 : vector<8x128xf32> to vector<8x128xbf16>
    %c0_179 = arith.constant 0 : index
    %c0_180 = arith.constant 0 : index
    %360 = vector.load %arg6[%c0_179, %c0_180] : memref<128x512xbf16, #tpu.memory_space<vmem>>, vector<128x512xbf16>
    %cst_181 = arith.constant dense<0.000000e+00> : vector<8x512xf32>
    %361 = tpu.matmul %359, %360, %cst_181 {dimension_numbers = #tpu.dot_dimension_numbers<[1], [0], [0], [1], [0, 0, 1, 1], [], []>} : vector<8x128xbf16>, vector<128x512xbf16>, vector<8x512xf32> -> vector<8x512xf32>
    %362 = arith.addf %357, %361 : vector<8x512xf32>
    %363 = vector.extract_strided_slice %362 {offsets = [0, 0], sizes = [8, 128], strides = [1, 1]} : vector<8x512xf32> to vector<8x128xf32>
    %364 = arith.negf %363 : vector<8x128xf32>
    %365 = math.exp %364 : vector<8x128xf32>
    %cst_182 = arith.constant 1.000000e+00 : f32
    %366 = vector.broadcast %cst_182 : f32 to vector<8x128xf32>
    %367 = arith.addf %366, %365 : vector<8x128xf32>
    %368 = arith.divf %366, %367 : vector<8x128xf32>
    %369 = vector.extract_strided_slice %362 {offsets = [0, 128], sizes = [8, 128], strides = [1, 1]} : vector<8x512xf32> to vector<8x128xf32>
    %370 = arith.negf %369 : vector<8x128xf32>
    %371 = math.exp %370 : vector<8x128xf32>
    %cst_183 = arith.constant 1.000000e+00 : f32
    %372 = vector.broadcast %cst_183 : f32 to vector<8x128xf32>
    %373 = arith.addf %372, %371 : vector<8x128xf32>
    %374 = arith.divf %372, %373 : vector<8x128xf32>
    %375 = vector.extract_strided_slice %362 {offsets = [0, 256], sizes = [8, 128], strides = [1, 1]} : vector<8x512xf32> to vector<8x128xf32>
    %376 = math.tanh %375 : vector<8x128xf32>
    %377 = vector.extract_strided_slice %362 {offsets = [0, 384], sizes = [8, 128], strides = [1, 1]} : vector<8x512xf32> to vector<8x128xf32>
    %378 = arith.negf %377 : vector<8x128xf32>
    %379 = math.exp %378 : vector<8x128xf32>
    %cst_184 = arith.constant 1.000000e+00 : f32
    %380 = vector.broadcast %cst_184 : f32 to vector<8x128xf32>
    %381 = arith.addf %380, %379 : vector<8x128xf32>
    %382 = arith.divf %380, %381 : vector<8x128xf32>
    %c0_185 = arith.constant 0 : index
    %c0_186 = arith.constant 0 : index
    %383 = vector.load %arg16[%c0_185, %c0_186] : memref<8x128xf32, #tpu.memory_space<vmem>>, vector<8x128xf32>
    %384 = arith.mulf %374, %383 : vector<8x128xf32>
    %385 = arith.mulf %368, %376 : vector<8x128xf32>
    %386 = arith.addf %384, %385 : vector<8x128xf32>
    %387 = math.tanh %386 : vector<8x128xf32>
    %388 = arith.mulf %382, %387 : vector<8x128xf32>
    %c0_187 = arith.constant 0 : index
    %c0_188 = arith.constant 0 : index
    %389 = vector.load %arg16[%c0_187, %c0_188] : memref<8x128xf32, #tpu.memory_space<vmem>>, vector<8x128xf32>
    tpu.vector_store %arg16[%c0_187, %c0_188], %386 {strides = array<i32>} : memref<8x128xf32, #tpu.memory_space<vmem>>, vector<8x128xf32>,
    %c0_189 = arith.constant 0 : index
    %c0_190 = arith.constant 0 : index
    %390 = vector.load %arg15[%c0_189, %c0_190] : memref<8x128xf32, #tpu.memory_space<vmem>>, vector<8x128xf32>
    tpu.vector_store %arg15[%c0_189, %c0_190], %388 {strides = array<i32>} : memref<8x128xf32, #tpu.memory_space<vmem>>, vector<8x128xf32>,
    %c1_i32_191 = arith.constant 1 : i32
    %c8_i32_192 = arith.constant 8 : i32
    %391 = arith.muli %c1_i32_191, %c8_i32_192 : i32
    %392 = tpu.assume_multiple %391, 8 : i32
    %393 = arith.index_cast %392 : i32 to index
    %c0_193 = arith.constant 0 : index
    %394 = vector.load %arg14[%393, %c0_193] : memref<64x512xf32, #tpu.memory_space<vmem>>, vector<8x512xf32>
    %c0_194 = arith.constant 0 : index
    %c0_195 = arith.constant 0 : index
    %395 = vector.load %arg15[%c0_194, %c0_195] : memref<8x128xf32, #tpu.memory_space<vmem>>, vector<8x128xf32>
    %396 = arith.truncf %395 : vector<8x128xf32> to vector<8x128xbf16>
    %c0_196 = arith.constant 0 : index
    %c0_197 = arith.constant 0 : index
    %397 = vector.load %arg6[%c0_196, %c0_197] : memref<128x512xbf16, #tpu.memory_space<vmem>>, vector<128x512xbf16>
    %cst_198 = arith.constant dense<0.000000e+00> : vector<8x512xf32>
    %398 = tpu.matmul %396, %397, %cst_198 {dimension_numbers = #tpu.dot_dimension_numbers<[1], [0], [0], [1], [0, 0, 1, 1], [], []>} : vector<8x128xbf16>, vector<128x512xbf16>, vector<8x512xf32> -> vector<8x512xf32>
    %399 = arith.addf %394, %398 : vector<8x512xf32>
    %400 = vector.extract_strided_slice %399 {offsets = [0, 0], sizes = [8, 128], strides = [1, 1]} : vector<8x512xf32> to vector<8x128xf32>
    %401 = arith.negf %400 : vector<8x128xf32>
    %402 = math.exp %401 : vector<8x128xf32>
    %cst_199 = arith.constant 1.000000e+00 : f32
    %403 = vector.broadcast %cst_199 : f32 to vector<8x128xf32>
    %404 = arith.addf %403, %402 : vector<8x128xf32>
    %405 = arith.divf %403, %404 : vector<8x128xf32>
    %406 = vector.extract_strided_slice %399 {offsets = [0, 128], sizes = [8, 128], strides = [1, 1]} : vector<8x512xf32> to vector<8x128xf32>
    %407 = arith.negf %406 : vector<8x128xf32>
    %408 = math.exp %407 : vector<8x128xf32>
    %cst_200 = arith.constant 1.000000e+00 : f32
    %409 = vector.broadcast %cst_200 : f32 to vector<8x128xf32>
    %410 = arith.addf %409, %408 : vector<8x128xf32>
    %411 = arith.divf %409, %410 : vector<8x128xf32>
    %412 = vector.extract_strided_slice %399 {offsets = [0, 256], sizes = [8, 128], strides = [1, 1]} : vector<8x512xf32> to vector<8x128xf32>
    %413 = math.tanh %412 : vector<8x128xf32>
    %414 = vector.extract_strided_slice %399 {offsets = [0, 384], sizes = [8, 128], strides = [1, 1]} : vector<8x512xf32> to vector<8x128xf32>
    %415 = arith.negf %414 : vector<8x128xf32>
    %416 = math.exp %415 : vector<8x128xf32>
    %cst_201 = arith.constant 1.000000e+00 : f32
    %417 = vector.broadcast %cst_201 : f32 to vector<8x128xf32>
    %418 = arith.addf %417, %416 : vector<8x128xf32>
    %419 = arith.divf %417, %418 : vector<8x128xf32>
    %c0_202 = arith.constant 0 : index
    %c0_203 = arith.constant 0 : index
    %420 = vector.load %arg16[%c0_202, %c0_203] : memref<8x128xf32, #tpu.memory_space<vmem>>, vector<8x128xf32>
    %421 = arith.mulf %411, %420 : vector<8x128xf32>
    %422 = arith.mulf %405, %413 : vector<8x128xf32>
    %423 = arith.addf %421, %422 : vector<8x128xf32>
    %424 = math.tanh %423 : vector<8x128xf32>
    %425 = arith.mulf %419, %424 : vector<8x128xf32>
    %c0_204 = arith.constant 0 : index
    %c0_205 = arith.constant 0 : index
    %426 = vector.load %arg16[%c0_204, %c0_205] : memref<8x128xf32, #tpu.memory_space<vmem>>, vector<8x128xf32>
    tpu.vector_store %arg16[%c0_204, %c0_205], %423 {strides = array<i32>} : memref<8x128xf32, #tpu.memory_space<vmem>>, vector<8x128xf32>,
    %c0_206 = arith.constant 0 : index
    %c0_207 = arith.constant 0 : index
    %427 = vector.load %arg15[%c0_206, %c0_207] : memref<8x128xf32, #tpu.memory_space<vmem>>, vector<8x128xf32>
    tpu.vector_store %arg15[%c0_206, %c0_207], %425 {strides = array<i32>} : memref<8x128xf32, #tpu.memory_space<vmem>>, vector<8x128xf32>,
    %c2_i32_208 = arith.constant 2 : i32
    %c8_i32_209 = arith.constant 8 : i32
    %428 = arith.muli %c2_i32_208, %c8_i32_209 : i32
    %429 = tpu.assume_multiple %428, 8 : i32
    %430 = arith.index_cast %429 : i32 to index
    %c0_210 = arith.constant 0 : index
    %431 = vector.load %arg14[%430, %c0_210] : memref<64x512xf32, #tpu.memory_space<vmem>>, vector<8x512xf32>
    %c0_211 = arith.constant 0 : index
    %c0_212 = arith.constant 0 : index
    %432 = vector.load %arg15[%c0_211, %c0_212] : memref<8x128xf32, #tpu.memory_space<vmem>>, vector<8x128xf32>
    %433 = arith.truncf %432 : vector<8x128xf32> to vector<8x128xbf16>
    %c0_213 = arith.constant 0 : index
    %c0_214 = arith.constant 0 : index
    %434 = vector.load %arg6[%c0_213, %c0_214] : memref<128x512xbf16, #tpu.memory_space<vmem>>, vector<128x512xbf16>
    %cst_215 = arith.constant dense<0.000000e+00> : vector<8x512xf32>
    %435 = tpu.matmul %433, %434, %cst_215 {dimension_numbers = #tpu.dot_dimension_numbers<[1], [0], [0], [1], [0, 0, 1, 1], [], []>} : vector<8x128xbf16>, vector<128x512xbf16>, vector<8x512xf32> -> vector<8x512xf32>
    %436 = arith.addf %431, %435 : vector<8x512xf32>
    %437 = vector.extract_strided_slice %436 {offsets = [0, 0], sizes = [8, 128], strides = [1, 1]} : vector<8x512xf32> to vector<8x128xf32>
    %438 = arith.negf %437 : vector<8x128xf32>
    %439 = math.exp %438 : vector<8x128xf32>
    %cst_216 = arith.constant 1.000000e+00 : f32
    %440 = vector.broadcast %cst_216 : f32 to vector<8x128xf32>
    %441 = arith.addf %440, %439 : vector<8x128xf32>
    %442 = arith.divf %440, %441 : vector<8x128xf32>
    %443 = vector.extract_strided_slice %436 {offsets = [0, 128], sizes = [8, 128], strides = [1, 1]} : vector<8x512xf32> to vector<8x128xf32>
    %444 = arith.negf %443 : vector<8x128xf32>
    %445 = math.exp %444 : vector<8x128xf32>
    %cst_217 = arith.constant 1.000000e+00 : f32
    %446 = vector.broadcast %cst_217 : f32 to vector<8x128xf32>
    %447 = arith.addf %446, %445 : vector<8x128xf32>
    %448 = arith.divf %446, %447 : vector<8x128xf32>
    %449 = vector.extract_strided_slice %436 {offsets = [0, 256], sizes = [8, 128], strides = [1, 1]} : vector<8x512xf32> to vector<8x128xf32>
    %450 = math.tanh %449 : vector<8x128xf32>
    %451 = vector.extract_strided_slice %436 {offsets = [0, 384], sizes = [8, 128], strides = [1, 1]} : vector<8x512xf32> to vector<8x128xf32>
    %452 = arith.negf %451 : vector<8x128xf32>
    %453 = math.exp %452 : vector<8x128xf32>
    %cst_218 = arith.constant 1.000000e+00 : f32
    %454 = vector.broadcast %cst_218 : f32 to vector<8x128xf32>
    %455 = arith.addf %454, %453 : vector<8x128xf32>
    %456 = arith.divf %454, %455 : vector<8x128xf32>
    %c0_219 = arith.constant 0 : index
    %c0_220 = arith.constant 0 : index
    %457 = vector.load %arg16[%c0_219, %c0_220] : memref<8x128xf32, #tpu.memory_space<vmem>>, vector<8x128xf32>
    %458 = arith.mulf %448, %457 : vector<8x128xf32>
    %459 = arith.mulf %442, %450 : vector<8x128xf32>
    %460 = arith.addf %458, %459 : vector<8x128xf32>
    %461 = math.tanh %460 : vector<8x128xf32>
    %462 = arith.mulf %456, %461 : vector<8x128xf32>
    %c0_221 = arith.constant 0 : index
    %c0_222 = arith.constant 0 : index
    %463 = vector.load %arg16[%c0_221, %c0_222] : memref<8x128xf32, #tpu.memory_space<vmem>>, vector<8x128xf32>
    tpu.vector_store %arg16[%c0_221, %c0_222], %460 {strides = array<i32>} : memref<8x128xf32, #tpu.memory_space<vmem>>, vector<8x128xf32>,
    %c0_223 = arith.constant 0 : index
    %c0_224 = arith.constant 0 : index
    %464 = vector.load %arg15[%c0_223, %c0_224] : memref<8x128xf32, #tpu.memory_space<vmem>>, vector<8x128xf32>
    tpu.vector_store %arg15[%c0_223, %c0_224], %462 {strides = array<i32>} : memref<8x128xf32, #tpu.memory_space<vmem>>, vector<8x128xf32>,
    %c3_i32_225 = arith.constant 3 : i32
    %c8_i32_226 = arith.constant 8 : i32
    %465 = arith.muli %c3_i32_225, %c8_i32_226 : i32
    %466 = tpu.assume_multiple %465, 8 : i32
    %467 = arith.index_cast %466 : i32 to index
    %c0_227 = arith.constant 0 : index
    %468 = vector.load %arg14[%467, %c0_227] : memref<64x512xf32, #tpu.memory_space<vmem>>, vector<8x512xf32>
    %c0_228 = arith.constant 0 : index
    %c0_229 = arith.constant 0 : index
    %469 = vector.load %arg15[%c0_228, %c0_229] : memref<8x128xf32, #tpu.memory_space<vmem>>, vector<8x128xf32>
    %470 = arith.truncf %469 : vector<8x128xf32> to vector<8x128xbf16>
    %c0_230 = arith.constant 0 : index
    %c0_231 = arith.constant 0 : index
    %471 = vector.load %arg6[%c0_230, %c0_231] : memref<128x512xbf16, #tpu.memory_space<vmem>>, vector<128x512xbf16>
    %cst_232 = arith.constant dense<0.000000e+00> : vector<8x512xf32>
    %472 = tpu.matmul %470, %471, %cst_232 {dimension_numbers = #tpu.dot_dimension_numbers<[1], [0], [0], [1], [0, 0, 1, 1], [], []>} : vector<8x128xbf16>, vector<128x512xbf16>, vector<8x512xf32> -> vector<8x512xf32>
    %473 = arith.addf %468, %472 : vector<8x512xf32>
    %474 = vector.extract_strided_slice %473 {offsets = [0, 0], sizes = [8, 128], strides = [1, 1]} : vector<8x512xf32> to vector<8x128xf32>
    %475 = arith.negf %474 : vector<8x128xf32>
    %476 = math.exp %475 : vector<8x128xf32>
    %cst_233 = arith.constant 1.000000e+00 : f32
    %477 = vector.broadcast %cst_233 : f32 to vector<8x128xf32>
    %478 = arith.addf %477, %476 : vector<8x128xf32>
    %479 = arith.divf %477, %478 : vector<8x128xf32>
    %480 = vector.extract_strided_slice %473 {offsets = [0, 128], sizes = [8, 128], strides = [1, 1]} : vector<8x512xf32> to vector<8x128xf32>
    %481 = arith.negf %480 : vector<8x128xf32>
    %482 = math.exp %481 : vector<8x128xf32>
    %cst_234 = arith.constant 1.000000e+00 : f32
    %483 = vector.broadcast %cst_234 : f32 to vector<8x128xf32>
    %484 = arith.addf %483, %482 : vector<8x128xf32>
    %485 = arith.divf %483, %484 : vector<8x128xf32>
    %486 = vector.extract_strided_slice %473 {offsets = [0, 256], sizes = [8, 128], strides = [1, 1]} : vector<8x512xf32> to vector<8x128xf32>
    %487 = math.tanh %486 : vector<8x128xf32>
    %488 = vector.extract_strided_slice %473 {offsets = [0, 384], sizes = [8, 128], strides = [1, 1]} : vector<8x512xf32> to vector<8x128xf32>
    %489 = arith.negf %488 : vector<8x128xf32>
    %490 = math.exp %489 : vector<8x128xf32>
    %cst_235 = arith.constant 1.000000e+00 : f32
    %491 = vector.broadcast %cst_235 : f32 to vector<8x128xf32>
    %492 = arith.addf %491, %490 : vector<8x128xf32>
    %493 = arith.divf %491, %492 : vector<8x128xf32>
    %c0_236 = arith.constant 0 : index
    %c0_237 = arith.constant 0 : index
    %494 = vector.load %arg16[%c0_236, %c0_237] : memref<8x128xf32, #tpu.memory_space<vmem>>, vector<8x128xf32>
    %495 = arith.mulf %485, %494 : vector<8x128xf32>
    %496 = arith.mulf %479, %487 : vector<8x128xf32>
    %497 = arith.addf %495, %496 : vector<8x128xf32>
    %498 = math.tanh %497 : vector<8x128xf32>
    %499 = arith.mulf %493, %498 : vector<8x128xf32>
    %c0_238 = arith.constant 0 : index
    %c0_239 = arith.constant 0 : index
    %500 = vector.load %arg16[%c0_238, %c0_239] : memref<8x128xf32, #tpu.memory_space<vmem>>, vector<8x128xf32>
    tpu.vector_store %arg16[%c0_238, %c0_239], %497 {strides = array<i32>} : memref<8x128xf32, #tpu.memory_space<vmem>>, vector<8x128xf32>,
    %c0_240 = arith.constant 0 : index
    %c0_241 = arith.constant 0 : index
    %501 = vector.load %arg15[%c0_240, %c0_241] : memref<8x128xf32, #tpu.memory_space<vmem>>, vector<8x128xf32>
    tpu.vector_store %arg15[%c0_240, %c0_241], %499 {strides = array<i32>} : memref<8x128xf32, #tpu.memory_space<vmem>>, vector<8x128xf32>,
    %c4_i32_242 = arith.constant 4 : i32
    %c8_i32_243 = arith.constant 8 : i32
    %502 = arith.muli %c4_i32_242, %c8_i32_243 : i32
    %503 = tpu.assume_multiple %502, 8 : i32
    %504 = arith.index_cast %503 : i32 to index
    %c0_244 = arith.constant 0 : index
    %505 = vector.load %arg14[%504, %c0_244] : memref<64x512xf32, #tpu.memory_space<vmem>>, vector<8x512xf32>
    %c0_245 = arith.constant 0 : index
    %c0_246 = arith.constant 0 : index
    %506 = vector.load %arg15[%c0_245, %c0_246] : memref<8x128xf32, #tpu.memory_space<vmem>>, vector<8x128xf32>
    %507 = arith.truncf %506 : vector<8x128xf32> to vector<8x128xbf16>
    %c0_247 = arith.constant 0 : index
    %c0_248 = arith.constant 0 : index
    %508 = vector.load %arg6[%c0_247, %c0_248] : memref<128x512xbf16, #tpu.memory_space<vmem>>, vector<128x512xbf16>
    %cst_249 = arith.constant dense<0.000000e+00> : vector<8x512xf32>
    %509 = tpu.matmul %507, %508, %cst_249 {dimension_numbers = #tpu.dot_dimension_numbers<[1], [0], [0], [1], [0, 0, 1, 1], [], []>} : vector<8x128xbf16>, vector<128x512xbf16>, vector<8x512xf32> -> vector<8x512xf32>
    %510 = arith.addf %505, %509 : vector<8x512xf32>
    %511 = vector.extract_strided_slice %510 {offsets = [0, 0], sizes = [8, 128], strides = [1, 1]} : vector<8x512xf32> to vector<8x128xf32>
    %512 = arith.negf %511 : vector<8x128xf32>
    %513 = math.exp %512 : vector<8x128xf32>
    %cst_250 = arith.constant 1.000000e+00 : f32
    %514 = vector.broadcast %cst_250 : f32 to vector<8x128xf32>
    %515 = arith.addf %514, %513 : vector<8x128xf32>
    %516 = arith.divf %514, %515 : vector<8x128xf32>
    %517 = vector.extract_strided_slice %510 {offsets = [0, 128], sizes = [8, 128], strides = [1, 1]} : vector<8x512xf32> to vector<8x128xf32>
    %518 = arith.negf %517 : vector<8x128xf32>
    %519 = math.exp %518 : vector<8x128xf32>
    %cst_251 = arith.constant 1.000000e+00 : f32
    %520 = vector.broadcast %cst_251 : f32 to vector<8x128xf32>
    %521 = arith.addf %520, %519 : vector<8x128xf32>
    %522 = arith.divf %520, %521 : vector<8x128xf32>
    %523 = vector.extract_strided_slice %510 {offsets = [0, 256], sizes = [8, 128], strides = [1, 1]} : vector<8x512xf32> to vector<8x128xf32>
    %524 = math.tanh %523 : vector<8x128xf32>
    %525 = vector.extract_strided_slice %510 {offsets = [0, 384], sizes = [8, 128], strides = [1, 1]} : vector<8x512xf32> to vector<8x128xf32>
    %526 = arith.negf %525 : vector<8x128xf32>
    %527 = math.exp %526 : vector<8x128xf32>
    %cst_252 = arith.constant 1.000000e+00 : f32
    %528 = vector.broadcast %cst_252 : f32 to vector<8x128xf32>
    %529 = arith.addf %528, %527 : vector<8x128xf32>
    %530 = arith.divf %528, %529 : vector<8x128xf32>
    %c0_253 = arith.constant 0 : index
    %c0_254 = arith.constant 0 : index
    %531 = vector.load %arg16[%c0_253, %c0_254] : memref<8x128xf32, #tpu.memory_space<vmem>>, vector<8x128xf32>
    %532 = arith.mulf %522, %531 : vector<8x128xf32>
    %533 = arith.mulf %516, %524 : vector<8x128xf32>
    %534 = arith.addf %532, %533 : vector<8x128xf32>
    %535 = math.tanh %534 : vector<8x128xf32>
    %536 = arith.mulf %530, %535 : vector<8x128xf32>
    %c0_255 = arith.constant 0 : index
    %c0_256 = arith.constant 0 : index
    %537 = vector.load %arg16[%c0_255, %c0_256] : memref<8x128xf32, #tpu.memory_space<vmem>>, vector<8x128xf32>
    tpu.vector_store %arg16[%c0_255, %c0_256], %534 {strides = array<i32>} : memref<8x128xf32, #tpu.memory_space<vmem>>, vector<8x128xf32>,
    %c0_257 = arith.constant 0 : index
    %c0_258 = arith.constant 0 : index
    %538 = vector.load %arg15[%c0_257, %c0_258] : memref<8x128xf32, #tpu.memory_space<vmem>>, vector<8x128xf32>
    tpu.vector_store %arg15[%c0_257, %c0_258], %536 {strides = array<i32>} : memref<8x128xf32, #tpu.memory_space<vmem>>, vector<8x128xf32>,
    %c5_i32_259 = arith.constant 5 : i32
    %c8_i32_260 = arith.constant 8 : i32
    %539 = arith.muli %c5_i32_259, %c8_i32_260 : i32
    %540 = tpu.assume_multiple %539, 8 : i32
    %541 = arith.index_cast %540 : i32 to index
    %c0_261 = arith.constant 0 : index
    %542 = vector.load %arg14[%541, %c0_261] : memref<64x512xf32, #tpu.memory_space<vmem>>, vector<8x512xf32>
    %c0_262 = arith.constant 0 : index
    %c0_263 = arith.constant 0 : index
    %543 = vector.load %arg15[%c0_262, %c0_263] : memref<8x128xf32, #tpu.memory_space<vmem>>, vector<8x128xf32>
    %544 = arith.truncf %543 : vector<8x128xf32> to vector<8x128xbf16>
    %c0_264 = arith.constant 0 : index
    %c0_265 = arith.constant 0 : index
    %545 = vector.load %arg6[%c0_264, %c0_265] : memref<128x512xbf16, #tpu.memory_space<vmem>>, vector<128x512xbf16>
    %cst_266 = arith.constant dense<0.000000e+00> : vector<8x512xf32>
    %546 = tpu.matmul %544, %545, %cst_266 {dimension_numbers = #tpu.dot_dimension_numbers<[1], [0], [0], [1], [0, 0, 1, 1], [], []>} : vector<8x128xbf16>, vector<128x512xbf16>, vector<8x512xf32> -> vector<8x512xf32>
    %547 = arith.addf %542, %546 : vector<8x512xf32>
    %548 = vector.extract_strided_slice %547 {offsets = [0, 0], sizes = [8, 128], strides = [1, 1]} : vector<8x512xf32> to vector<8x128xf32>
    %549 = arith.negf %548 : vector<8x128xf32>
    %550 = math.exp %549 : vector<8x128xf32>
    %cst_267 = arith.constant 1.000000e+00 : f32
    %551 = vector.broadcast %cst_267 : f32 to vector<8x128xf32>
    %552 = arith.addf %551, %550 : vector<8x128xf32>
    %553 = arith.divf %551, %552 : vector<8x128xf32>
    %554 = vector.extract_strided_slice %547 {offsets = [0, 128], sizes = [8, 128], strides = [1, 1]} : vector<8x512xf32> to vector<8x128xf32>
    %555 = arith.negf %554 : vector<8x128xf32>
    %556 = math.exp %555 : vector<8x128xf32>
    %cst_268 = arith.constant 1.000000e+00 : f32
    %557 = vector.broadcast %cst_268 : f32 to vector<8x128xf32>
    %558 = arith.addf %557, %556 : vector<8x128xf32>
    %559 = arith.divf %557, %558 : vector<8x128xf32>
    %560 = vector.extract_strided_slice %547 {offsets = [0, 256], sizes = [8, 128], strides = [1, 1]} : vector<8x512xf32> to vector<8x128xf32>
    %561 = math.tanh %560 : vector<8x128xf32>
    %562 = vector.extract_strided_slice %547 {offsets = [0, 384], sizes = [8, 128], strides = [1, 1]} : vector<8x512xf32> to vector<8x128xf32>
    %563 = arith.negf %562 : vector<8x128xf32>
    %564 = math.exp %563 : vector<8x128xf32>
    %cst_269 = arith.constant 1.000000e+00 : f32
    %565 = vector.broadcast %cst_269 : f32 to vector<8x128xf32>
    %566 = arith.addf %565, %564 : vector<8x128xf32>
    %567 = arith.divf %565, %566 : vector<8x128xf32>
    %c0_270 = arith.constant 0 : index
    %c0_271 = arith.constant 0 : index
    %568 = vector.load %arg16[%c0_270, %c0_271] : memref<8x128xf32, #tpu.memory_space<vmem>>, vector<8x128xf32>
    %569 = arith.mulf %559, %568 : vector<8x128xf32>
    %570 = arith.mulf %553, %561 : vector<8x128xf32>
    %571 = arith.addf %569, %570 : vector<8x128xf32>
    %572 = math.tanh %571 : vector<8x128xf32>
    %573 = arith.mulf %567, %572 : vector<8x128xf32>
    %c0_272 = arith.constant 0 : index
    %c0_273 = arith.constant 0 : index
    %574 = vector.load %arg16[%c0_272, %c0_273] : memref<8x128xf32, #tpu.memory_space<vmem>>, vector<8x128xf32>
    tpu.vector_store %arg16[%c0_272, %c0_273], %571 {strides = array<i32>} : memref<8x128xf32, #tpu.memory_space<vmem>>, vector<8x128xf32>,
    %c0_274 = arith.constant 0 : index
    %c0_275 = arith.constant 0 : index
    %575 = vector.load %arg15[%c0_274, %c0_275] : memref<8x128xf32, #tpu.memory_space<vmem>>, vector<8x128xf32>
    tpu.vector_store %arg15[%c0_274, %c0_275], %573 {strides = array<i32>} : memref<8x128xf32, #tpu.memory_space<vmem>>, vector<8x128xf32>,
    %c6_i32_276 = arith.constant 6 : i32
    %c8_i32_277 = arith.constant 8 : i32
    %576 = arith.muli %c6_i32_276, %c8_i32_277 : i32
    %577 = tpu.assume_multiple %576, 8 : i32
    %578 = arith.index_cast %577 : i32 to index
    %c0_278 = arith.constant 0 : index
    %579 = vector.load %arg14[%578, %c0_278] : memref<64x512xf32, #tpu.memory_space<vmem>>, vector<8x512xf32>
    %c0_279 = arith.constant 0 : index
    %c0_280 = arith.constant 0 : index
    %580 = vector.load %arg15[%c0_279, %c0_280] : memref<8x128xf32, #tpu.memory_space<vmem>>, vector<8x128xf32>
    %581 = arith.truncf %580 : vector<8x128xf32> to vector<8x128xbf16>
    %c0_281 = arith.constant 0 : index
    %c0_282 = arith.constant 0 : index
    %582 = vector.load %arg6[%c0_281, %c0_282] : memref<128x512xbf16, #tpu.memory_space<vmem>>, vector<128x512xbf16>
    %cst_283 = arith.constant dense<0.000000e+00> : vector<8x512xf32>
    %583 = tpu.matmul %581, %582, %cst_283 {dimension_numbers = #tpu.dot_dimension_numbers<[1], [0], [0], [1], [0, 0, 1, 1], [], []>} : vector<8x128xbf16>, vector<128x512xbf16>, vector<8x512xf32> -> vector<8x512xf32>
    %584 = arith.addf %579, %583 : vector<8x512xf32>
    %585 = vector.extract_strided_slice %584 {offsets = [0, 0], sizes = [8, 128], strides = [1, 1]} : vector<8x512xf32> to vector<8x128xf32>
    %586 = arith.negf %585 : vector<8x128xf32>
    %587 = math.exp %586 : vector<8x128xf32>
    %cst_284 = arith.constant 1.000000e+00 : f32
    %588 = vector.broadcast %cst_284 : f32 to vector<8x128xf32>
    %589 = arith.addf %588, %587 : vector<8x128xf32>
    %590 = arith.divf %588, %589 : vector<8x128xf32>
    %591 = vector.extract_strided_slice %584 {offsets = [0, 128], sizes = [8, 128], strides = [1, 1]} : vector<8x512xf32> to vector<8x128xf32>
    %592 = arith.negf %591 : vector<8x128xf32>
    %593 = math.exp %592 : vector<8x128xf32>
    %cst_285 = arith.constant 1.000000e+00 : f32
    %594 = vector.broadcast %cst_285 : f32 to vector<8x128xf32>
    %595 = arith.addf %594, %593 : vector<8x128xf32>
    %596 = arith.divf %594, %595 : vector<8x128xf32>
    %597 = vector.extract_strided_slice %584 {offsets = [0, 256], sizes = [8, 128], strides = [1, 1]} : vector<8x512xf32> to vector<8x128xf32>
    %598 = math.tanh %597 : vector<8x128xf32>
    %599 = vector.extract_strided_slice %584 {offsets = [0, 384], sizes = [8, 128], strides = [1, 1]} : vector<8x512xf32> to vector<8x128xf32>
    %600 = arith.negf %599 : vector<8x128xf32>
    %601 = math.exp %600 : vector<8x128xf32>
    %cst_286 = arith.constant 1.000000e+00 : f32
    %602 = vector.broadcast %cst_286 : f32 to vector<8x128xf32>
    %603 = arith.addf %602, %601 : vector<8x128xf32>
    %604 = arith.divf %602, %603 : vector<8x128xf32>
    %c0_287 = arith.constant 0 : index
    %c0_288 = arith.constant 0 : index
    %605 = vector.load %arg16[%c0_287, %c0_288] : memref<8x128xf32, #tpu.memory_space<vmem>>, vector<8x128xf32>
    %606 = arith.mulf %596, %605 : vector<8x128xf32>
    %607 = arith.mulf %590, %598 : vector<8x128xf32>
    %608 = arith.addf %606, %607 : vector<8x128xf32>
    %609 = math.tanh %608 : vector<8x128xf32>
    %610 = arith.mulf %604, %609 : vector<8x128xf32>
    %c0_289 = arith.constant 0 : index
    %c0_290 = arith.constant 0 : index
    %611 = vector.load %arg16[%c0_289, %c0_290] : memref<8x128xf32, #tpu.memory_space<vmem>>, vector<8x128xf32>
    tpu.vector_store %arg16[%c0_289, %c0_290], %608 {strides = array<i32>} : memref<8x128xf32, #tpu.memory_space<vmem>>, vector<8x128xf32>,
    %c0_291 = arith.constant 0 : index
    %c0_292 = arith.constant 0 : index
    %612 = vector.load %arg15[%c0_291, %c0_292] : memref<8x128xf32, #tpu.memory_space<vmem>>, vector<8x128xf32>
    tpu.vector_store %arg15[%c0_291, %c0_292], %610 {strides = array<i32>} : memref<8x128xf32, #tpu.memory_space<vmem>>, vector<8x128xf32>,
    %c7_i32_293 = arith.constant 7 : i32
    %c8_i32_294 = arith.constant 8 : i32
    %613 = arith.muli %c7_i32_293, %c8_i32_294 : i32
    %614 = tpu.assume_multiple %613, 8 : i32
    %615 = arith.index_cast %614 : i32 to index
    %c0_295 = arith.constant 0 : index
    %616 = vector.load %arg14[%615, %c0_295] : memref<64x512xf32, #tpu.memory_space<vmem>>, vector<8x512xf32>
    %c0_296 = arith.constant 0 : index
    %c0_297 = arith.constant 0 : index
    %617 = vector.load %arg15[%c0_296, %c0_297] : memref<8x128xf32, #tpu.memory_space<vmem>>, vector<8x128xf32>
    %618 = arith.truncf %617 : vector<8x128xf32> to vector<8x128xbf16>
    %c0_298 = arith.constant 0 : index
    %c0_299 = arith.constant 0 : index
    %619 = vector.load %arg6[%c0_298, %c0_299] : memref<128x512xbf16, #tpu.memory_space<vmem>>, vector<128x512xbf16>
    %cst_300 = arith.constant dense<0.000000e+00> : vector<8x512xf32>
    %620 = tpu.matmul %618, %619, %cst_300 {dimension_numbers = #tpu.dot_dimension_numbers<[1], [0], [0], [1], [0, 0, 1, 1], [], []>} : vector<8x128xbf16>, vector<128x512xbf16>, vector<8x512xf32> -> vector<8x512xf32>
    %621 = arith.addf %616, %620 : vector<8x512xf32>
    %622 = vector.extract_strided_slice %621 {offsets = [0, 0], sizes = [8, 128], strides = [1, 1]} : vector<8x512xf32> to vector<8x128xf32>
    %623 = arith.negf %622 : vector<8x128xf32>
    %624 = math.exp %623 : vector<8x128xf32>
    %cst_301 = arith.constant 1.000000e+00 : f32
    %625 = vector.broadcast %cst_301 : f32 to vector<8x128xf32>
    %626 = arith.addf %625, %624 : vector<8x128xf32>
    %627 = arith.divf %625, %626 : vector<8x128xf32>
    %628 = vector.extract_strided_slice %621 {offsets = [0, 128], sizes = [8, 128], strides = [1, 1]} : vector<8x512xf32> to vector<8x128xf32>
    %629 = arith.negf %628 : vector<8x128xf32>
    %630 = math.exp %629 : vector<8x128xf32>
    %cst_302 = arith.constant 1.000000e+00 : f32
    %631 = vector.broadcast %cst_302 : f32 to vector<8x128xf32>
    %632 = arith.addf %631, %630 : vector<8x128xf32>
    %633 = arith.divf %631, %632 : vector<8x128xf32>
    %634 = vector.extract_strided_slice %621 {offsets = [0, 256], sizes = [8, 128], strides = [1, 1]} : vector<8x512xf32> to vector<8x128xf32>
    %635 = math.tanh %634 : vector<8x128xf32>
    %636 = vector.extract_strided_slice %621 {offsets = [0, 384], sizes = [8, 128], strides = [1, 1]} : vector<8x512xf32> to vector<8x128xf32>
    %637 = arith.negf %636 : vector<8x128xf32>
    %638 = math.exp %637 : vector<8x128xf32>
    %cst_303 = arith.constant 1.000000e+00 : f32
    %639 = vector.broadcast %cst_303 : f32 to vector<8x128xf32>
    %640 = arith.addf %639, %638 : vector<8x128xf32>
    %641 = arith.divf %639, %640 : vector<8x128xf32>
    %c0_304 = arith.constant 0 : index
    %c0_305 = arith.constant 0 : index
    %642 = vector.load %arg16[%c0_304, %c0_305] : memref<8x128xf32, #tpu.memory_space<vmem>>, vector<8x128xf32>
    %643 = arith.mulf %633, %642 : vector<8x128xf32>
    %644 = arith.mulf %627, %635 : vector<8x128xf32>
    %645 = arith.addf %643, %644 : vector<8x128xf32>
    %646 = math.tanh %645 : vector<8x128xf32>
    %647 = arith.mulf %641, %646 : vector<8x128xf32>
    %c0_306 = arith.constant 0 : index
    %c0_307 = arith.constant 0 : index
    %648 = vector.load %arg16[%c0_306, %c0_307] : memref<8x128xf32, #tpu.memory_space<vmem>>, vector<8x128xf32>
    tpu.vector_store %arg16[%c0_306, %c0_307], %645 {strides = array<i32>} : memref<8x128xf32, #tpu.memory_space<vmem>>, vector<8x128xf32>,
    %c0_308 = arith.constant 0 : index
    %c0_309 = arith.constant 0 : index
    %649 = vector.load %arg15[%c0_308, %c0_309] : memref<8x128xf32, #tpu.memory_space<vmem>>, vector<8x128xf32>
    tpu.vector_store %arg15[%c0_308, %c0_309], %647 {strides = array<i32>} : memref<8x128xf32, #tpu.memory_space<vmem>>, vector<8x128xf32>,
    %c8_i32_310 = arith.constant 8 : i32
    %c0_311 = arith.constant 0 : index
    %c0_312 = arith.constant 0 : index
    %650 = vector.load %arg15[%c0_311, %c0_312] : memref<8x128xf32, #tpu.memory_space<vmem>>, vector<8x128xf32>
    %c0_313 = arith.constant 0 : index
    %c0_314 = arith.constant 0 : index
    %651 = vector.load %arg8[%c0_313, %c0_314] : memref<128x16xf32, #tpu.memory_space<vmem>>, vector<128x16xf32>
    %cst_315 = arith.constant dense<0.000000e+00> : vector<8x16xf32>
    %652 = tpu.matmul %650, %651, %cst_315 {dimension_numbers = #tpu.dot_dimension_numbers<[1], [0], [0], [1], [0, 0, 1, 1], [], []>} : vector<8x128xf32>, vector<128x16xf32>, vector<8x16xf32> -> vector<8x16xf32>
    %c0_316 = arith.constant 0 : index
    %c0_317 = arith.constant 0 : index
    %653 = vector.load %arg9[%c0_316, %c0_317] : memref<1x16xf32, #tpu.memory_space<vmem>>, vector<1x16xf32>
    %654 = vector.broadcast %653 : vector<1x16xf32> to vector<8x16xf32>
    %655 = arith.addf %652, %654 : vector<8x16xf32>
    %cst_318 = arith.constant 0.000000e+00 : f32
    %656 = vector.broadcast %cst_318 : f32 to vector<8x16xf32>
    %657 = arith.maximumf %655, %656 : vector<8x16xf32>
    %c0_319 = arith.constant 0 : index
    %c0_320 = arith.constant 0 : index
    %658 = vector.load %arg10[%c0_319, %c0_320] : memref<16x1xf32, #tpu.memory_space<vmem>>, vector<16x1xf32>
    %cst_321 = arith.constant dense<0.000000e+00> : vector<8x1xf32>
    %659 = tpu.matmul %657, %658, %cst_321 {dimension_numbers = #tpu.dot_dimension_numbers<[1], [0], [0], [1], [0, 0, 1, 1], [], []>} : vector<8x16xf32>, vector<16x1xf32>, vector<8x1xf32> -> vector<8x1xf32>
    %c0_322 = arith.constant 0 : index
    %c0_323 = arith.constant 0 : index
    %660 = vector.load %arg11[%c0_322, %c0_323] : memref<1x1xf32, #tpu.memory_space<vmem>>, vector<1x1xf32>
    %661 = vector.broadcast %660 : vector<1x1xf32> to vector<8x1xf32>
    %662 = arith.addf %659, %661 : vector<8x1xf32>
    %c0_324 = arith.constant 0 : index
    %c0_325 = arith.constant 0 : index
    %663 = vector.load %arg12[%c0_324, %c0_325] : memref<8x1xf32, #tpu.memory_space<vmem>>, vector<8x1xf32>
    tpu.vector_store %arg12[%c0_324, %c0_325], %662 {strides = array<i32>} : memref<8x1xf32, #tpu.memory_space<vmem>>, vector<8x1xf32>,
    return
  }
  func.func @transform_0(%arg0: i32) -> (i32, i32, i32) {
    %c0_i32 = arith.constant 0 : i32
    %c0_i32_0 = arith.constant 0 : i32
    %c0_i32_1 = arith.constant 0 : i32
    return %c0_i32, %arg0, %c0_i32_0 : i32, i32, i32
  }
  func.func @transform_1(%arg0: i32) -> (i32, i32) {
    %c0_i32 = arith.constant 0 : i32
    %c0_i32_0 = arith.constant 0 : i32
    %c0_i32_1 = arith.constant 0 : i32
    return %c0_i32, %c0_i32_0 : i32, i32
  }
  func.func @transform_2(%arg0: i32) -> (i32, i32) {
    %c0_i32 = arith.constant 0 : i32
    %c0_i32_0 = arith.constant 0 : i32
    %c0_i32_1 = arith.constant 0 : i32
    return %c0_i32, %c0_i32_0 : i32, i32
  }
  func.func @transform_3(%arg0: i32) -> (i32, i32) {
    %c0_i32 = arith.constant 0 : i32
    %c0_i32_0 = arith.constant 0 : i32
    %c0_i32_1 = arith.constant 0 : i32
    return %c0_i32, %c0_i32_0 : i32, i32
  }
  func.func @transform_4(%arg0: i32) -> (i32, i32) {
    %c0_i32 = arith.constant 0 : i32
    %c0_i32_0 = arith.constant 0 : i32
    %c0_i32_1 = arith.constant 0 : i32
    return %c0_i32, %c0_i32_0 : i32, i32
  }
  func.func @transform_5(%arg0: i32) -> (i32, i32) {
    %c0_i32 = arith.constant 0 : i32
    %c0_i32_0 = arith.constant 0 : i32
    %c0_i32_1 = arith.constant 0 : i32
    return %c0_i32, %c0_i32_0 : i32, i32
  }
  func.func @transform_6(%arg0: i32) -> (i32, i32) {
    %c0_i32 = arith.constant 0 : i32
    %c0_i32_0 = arith.constant 0 : i32
    %c0_i32_1 = arith.constant 0 : i32
    return %c0_i32, %c0_i32_0 : i32, i32
  }
  func.func @transform_7(%arg0: i32) -> (i32, i32) {
    %c0_i32 = arith.constant 0 : i32
    %c0_i32_0 = arith.constant 0 : i32
    %c0_i32_1 = arith.constant 0 : i32
    return %c0_i32, %c0_i32_0 : i32, i32
  }
  func.func @transform_8(%arg0: i32) -> (i32, i32) {
    %c0_i32 = arith.constant 0 : i32
    %c0_i32_0 = arith.constant 0 : i32
    %c0_i32_1 = arith.constant 0 : i32
    return %c0_i32, %c0_i32_0 : i32, i32
  }
  func.func @transform_9(%arg0: i32) -> (i32, i32) {
    %c0_i32 = arith.constant 0 : i32
    %c0_i32_0 = arith.constant 0 : i32
    %c0_i32_1 = arith.constant 0 : i32
    return %c0_i32, %c0_i32_0 : i32, i32
  }
  func.func @transform_10(%arg0: i32) -> (i32, i32) {
    %c0_i32 = arith.constant 0 : i32
    %c0_i32_0 = arith.constant 0 : i32
    %c0_i32_1 = arith.constant 0 : i32
    return %c0_i32, %c0_i32_0 : i32, i32
  }
  func.func @transform_11(%arg0: i32) -> (i32, i32) {
    %c0_i32 = arith.constant 0 : i32
    %c0_i32_0 = arith.constant 0 : i32
    return %arg0, %c0_i32 : i32, i32
  }
}

</mosaic_0001>

<llo_original>
// kernel: lstm_model_forward.1
$region0: #{lstm_model_forward.1}
  #allocation0 [shape = 'u32[]', space=smem, size = 0x4, offset = 0x4, fixed_abs, tag = 'smem constant byte address 0x4 - core index']
  #allocation1 [shape = 'u32[72,128]{1,0:T(1,128)}', space=vmem, size = 0x9000, scoped, tag = 'internal scratch']
  #allocation2 [shape = 'f32[8,8,128]{2,1,0:T(8,128)}', space=vmem, size = 0x8000, scoped, tag = 'scratch operand']
  #allocation3 [shape = 'f32[64,512]{1,0:T(8,128)}', space=vmem, size = 0x20000, scoped, tag = 'scratch operand']
  #allocation4 [shape = 'f32[8,128]{1,0:T(8,128)}', space=vmem, size = 0x1000, scoped, tag = 'scratch operand']
  #allocation5 [shape = 'f32[8,128]{1,0:T(8,128)}', space=vmem, size = 0x1000, scoped, tag = 'scratch operand']
  #allocation6 [shape = 'f32[1,1]{1,0:T(1,128)S(1)}', space=vmem, size = 0x200, scoped, tag = 'scoped memory for lstm_model_forward.1']
  %s0 = inlined_call_operand.vmem [shape: f32[8,8,8], index: 0, kind: input, shape index: {}]
  %s1 = inlined_call_operand.vmem [shape: bf16[8,512], index: 1, kind: input, shape index: {}]
  %s2 = inlined_call_operand.hbm [shape: bf16[128,512], index: 2, kind: input, shape index: {}]
  %s3 = inlined_call_operand.vmem [shape: f32[1,512], index: 3, kind: input, shape index: {}]
  %s4 = inlined_call_operand.hbm [shape: bf16[128,512], index: 4, kind: input, shape index: {}]
  %s5 = inlined_call_operand.hbm [shape: bf16[128,512], index: 5, kind: input, shape index: {}]
  %s6 = inlined_call_operand.vmem [shape: f32[1,512], index: 6, kind: input, shape index: {}]
  %s7 = inlined_call_operand.vmem [shape: f32[128,16], index: 7, kind: input, shape index: {}]
  %s8 = inlined_call_operand.vmem [shape: f32[1,16], index: 8, kind: input, shape index: {}]
  %s9 = inlined_call_operand.vmem [shape: f32[16,1], index: 9, kind: input, shape index: {}]
  %s10 = inlined_call_operand.<no memory space> [shape: f32[1,1], index: 10, kind: input, shape index: {}]
  %s11 = inlined_call_operand.vmem [shape: f32[8,1], index: 11, kind: output, shape index: {}]
  %s12 = sld [smem:[#allocation0]]
  $region66: #{lstm_model_forward.1} parent=0
    _
  %s14 = ssub.s32 1, %s12
  %s15 = scalar_select 0, %s14, %s12
  %v16 = vstv %s10
  %17 = vst [vmem:[#allocation6] sm:$0x1] %v16
  $region1: #{lstm_model_forward.1} parent=0
    #allocation7 [shape = 'u8[131072]{0}', space=vmem, size = 0x20000, scoped, tag = 'input window, operand 2, single buffered']
    #allocation8 [shape = 's32[1]{0}', space=sflag, size = 0x4, scoped, tag = 'scoped memory for lstm_model_forward.1']
    #allocation9 [shape = 'u8[131072]{0}', space=vmem, size = 0x20000, scoped, tag = 'input window, operand 4, single buffered']
    #allocation10 [shape = 's32[1]{0}', space=sflag, size = 0x4, scoped, tag = 'scoped memory for lstm_model_forward.1']
    #allocation11 [shape = 'u8[131072]{0}', space=vmem, size = 0x20000, scoped, tag = 'input window, operand 5, single buffered']
    %18 = vsyncpa [#allocation8], 0
    %19 = vsyncpa [#allocation10], 0
    // Predicated region
    $region2: #{lstm_model_forward.1} parent=1 // pred_check
      _
    $region3: #{lstm_model_forward.1} parent=1 // pred_check_branch
      %21 = sbr.rel (0) target = $region5
    $region4: #{lstm_model_forward.1} parent=1 // pred_region
      _
    $region5: #{lstm_model_forward.1} parent=1 // pred_fallthru
      _
    // Predicated region
    $region6: #{lstm_model_forward.1} parent=1 // pred_check
      _
    $region7: #{lstm_model_forward.1} parent=1 // pred_check_branch
      %23 = sbr.rel (0) target = $region9
    $region8: #{lstm_model_forward.1} parent=1 // pred_region
      _
    $region9: #{lstm_model_forward.1} parent=1 // pred_fallthru
      _
    // Predicated region
    $region10: #{lstm_model_forward.1} parent=1 // pred_check
      _
    $region11: #{lstm_model_forward.1} parent=1 // pred_check_branch
      %25 = sbr.rel (0) target = $region13
    $region12: #{lstm_model_forward.1} parent=1 // pred_region
      %27 = vsyncadd [#allocation8], 0
      %s28 = sshll.u32 %s2, 4
      %s29 = int_to_ptr.hbm [resolvable:$true] %s28
      %s30 = sshll.u32 [#allocation7], 4
      %s31 = int_to_ptr.vmem [resolvable:$true] %s30
      %36 = dma.hbm_to_vmem [thread:$0]  %s29, 4096, %s31, [#allocation8], 256, 256, 16
    $region13: #{lstm_model_forward.1} parent=1 // pred_fallthru
      _
    // Predicated region
    $region14: #{lstm_model_forward.1} parent=1 // pred_check
      _
    $region15: #{lstm_model_forward.1} parent=1 // pred_check_branch
      %38 = sbr.rel (0) target = $region17
    $region16: #{lstm_model_forward.1} parent=1 // pred_region
      _
    $region17: #{lstm_model_forward.1} parent=1 // pred_fallthru
      _
    // Predicated region
    $region18: #{lstm_model_forward.1} parent=1 // pred_check
      _
    $region19: #{lstm_model_forward.1} parent=1 // pred_check_branch
      %40 = sbr.rel (0) target = $region21
    $region20: #{lstm_model_forward.1} parent=1 // pred_region
      %42 = vsyncadd [#allocation10], 0
      %s43 = sshll.u32 %s4, 4
      %s44 = int_to_ptr.hbm [resolvable:$true] %s43
      %s45 = sshll.u32 [#allocation9], 4
      %s46 = int_to_ptr.vmem [resolvable:$true] %s45
      %51 = dma.hbm_to_vmem [thread:$0]  %s44, 4096, %s46, [#allocation10], 256, 256, 16
    $region21: #{lstm_model_forward.1} parent=1 // pred_fallthru
      _
    // Predicated region
    $region22: #{lstm_model_forward.1} parent=1 // pred_check
      _
    $region23: #{lstm_model_forward.1} parent=1 // pred_check_branch
      %53 = sbr.rel (0) target = $region25
    $region24: #{lstm_model_forward.1} parent=1 // pred_region
      %55 = vsyncadd [#allocation10], 0
      %s56 = sshll.u32 %s5, 4
      %s57 = int_to_ptr.hbm [resolvable:$true] %s56
      %s58 = sshll.u32 [#allocation11], 4
      %s59 = int_to_ptr.vmem [resolvable:$true] %s58
      %64 = dma.hbm_to_vmem [thread:$0]  %s57, 4096, %s59, [#allocation10], 256, 256, 16
    $region25: #{lstm_model_forward.1} parent=1 // pred_fallthru
      _
    // Predicated region
    $region26: #{lstm_model_forward.1} parent=1 // pred_check
      _
    $region27: #{lstm_model_forward.1} parent=1 // pred_check_branch
      %66 = sbr.rel (0) target = $region29
    $region28: #{lstm_model_forward.1} parent=1 // pred_region
      _
    $region29: #{lstm_model_forward.1} parent=1 // pred_fallthru
      _
    // Predicated region
    $region30: #{lstm_model_forward.1} parent=1 // pred_check
      _
    $region31: #{lstm_model_forward.1} parent=1 // pred_check_branch
      %68 = sbr.rel (0) target = $region33
    $region32: #{lstm_model_forward.1} parent=1 // pred_region
      _
    $region33: #{lstm_model_forward.1} parent=1 // pred_fallthru
      _
    // Predicated region
    $region34: #{lstm_model_forward.1} parent=1 // pred_check
      _
    $region35: #{lstm_model_forward.1} parent=1 // pred_check_branch
      %70 = sbr.rel (0) target = $region37
    $region36: #{lstm_model_forward.1} parent=1 // pred_region
      _
    $region37: #{lstm_model_forward.1} parent=1 // pred_fallthru
      _
    // Predicated region
    $region38: #{lstm_model_forward.1} parent=1 // pred_check
      _
    $region39: #{lstm_model_forward.1} parent=1 // pred_check_branch
      %72 = sbr.rel (0) target = $region41
    $region40: #{lstm_model_forward.1} parent=1 // pred_region
      _
    $region41: #{lstm_model_forward.1} parent=1 // pred_fallthru
      _
    // Predicated region
    $region42: #{lstm_model_forward.1} parent=1 // pred_check
      _
    $region43: #{lstm_model_forward.1} parent=1 // pred_check_branch
      %74 = sbr.rel (0) target = $region45
    $region44: #{lstm_model_forward.1} parent=1 // pred_region
      _
    $region45: #{lstm_model_forward.1} parent=1 // pred_fallthru
      _
    // Predicated region
    $region46: #{lstm_model_forward.1} parent=1 // pred_check
      _
    $region47: #{lstm_model_forward.1} parent=1 // pred_check_branch
      %76 = sbr.rel (0) target = $region49
    $region48: #{lstm_model_forward.1} parent=1 // pred_region
      %78 = dma.done [#allocation8], 4096
    $region49: #{lstm_model_forward.1} parent=1 // pred_fallthru
      _
    // Predicated region
    $region50: #{lstm_model_forward.1} parent=1 // pred_check
      _
    $region51: #{lstm_model_forward.1} parent=1 // pred_check_branch
      %80 = sbr.rel (0) target = $region53
    $region52: #{lstm_model_forward.1} parent=1 // pred_region
      %82 = dma.done [#allocation10], 4096
    $region53: #{lstm_model_forward.1} parent=1 // pred_fallthru
      _
    // Predicated region
    $region54: #{lstm_model_forward.1} parent=1 // pred_check
      _
    $region55: #{lstm_model_forward.1} parent=1 // pred_check_branch
      %84 = sbr.rel (0) target = $region57
    $region56: #{lstm_model_forward.1} parent=1 // pred_region
      %86 = dma.done [#allocation10], 4096
    $region57: #{lstm_model_forward.1} parent=1 // pred_fallthru
      _
    %v88 = vld [vmem:[%s0] sm:$0xff]
    %v89 = vld [vmem:[%s0 + $0x8] sm:$0xff]
    %v90 = vld [vmem:[%s0 + $0x10] sm:$0xff]
    %v91 = vld [vmem:[%s0 + $0x18] sm:$0xff]
    %v92 = vld [vmem:[%s0 + $0x20] sm:$0xff]
    %v93 = vld [vmem:[%s0 + $0x28] sm:$0xff]
    %v94 = vld [vmem:[%s0 + $0x30] sm:$0xff]
    %v95 = vld [vmem:[%s0 + $0x38] sm:$0xff]
    %v96 = vpack.c.bf16 %v89, %v88
    %v97 = vpack.c.bf16 %v91, %v90
    %v98 = vpack.c.bf16 %v93, %v92
    %v99 = vpack.c.bf16 %v95, %v94
    %v100 = vld [vmem:[%s1] sm:$0xff]
    %v101 = vld [vmem:[%s1 + $0x8] sm:$0xff]
    %v102 = vld [vmem:[%s3] sm:$0xf]
    %v104 = vperm.slane %v102, 0
    %v105 = vperm.slane %v102, 1
    %v106 = vperm.slane %v102, 2
    %v107 = vperm.slane %v102, 3
    %v114 = vunpack.c.l.b16 %v100
    %v115 = vunpack.c.h.b16 %v100
    %v116 = vunpack.c.l.b16 %v101
    %v117 = vunpack.c.h.b16 %v101
    %v118 = vpack.c.b16 %v114, %v114
    %v119 = vpack.c.b16 %v115, %v115
    %v120 = vpack.c.b16 %v116, %v116
    %v121 = vpack.c.b16 %v117, %v117
    %vm122 = vcmask 64512
    %v124 = vsel %vm122, %v96, 0
    %v127 = vsel %vm122, %v97, 0
    %v130 = vsel %vm122, %v98, 0
    %v133 = vsel %vm122, %v99, 0
    %vm135 = vcmask 1043456
    %v137 = vsel %vm135, %v118, 0
    %v140 = vsel %vm135, %v119, 0
    %v143 = vsel %vm135, %v120, 0
    %v146 = vsel %vm135, %v121, 0
    %148 = vmatpush.bf16.msra.mxu0 0
    %149 = vmatpush.bf16.msra.mxu0 0
    %150 = vmatpush.bf16.msra.mxu0 0
    %151 = vmatpush.bf16.msra.mxu0 0
    %152 = vmatpush.bf16.msra.mxu0 0
    %153 = vmatpush.bf16.msra.mxu0 0
    %154 = vmatpush.bf16.msra.mxu0 0
    %155 = vmatpush.bf16.msra.mxu0 %v137
    %156 = vmatmul.bf16.gmra.mxu0 %v124
    %v157 = vpop.f32.mrf.mxu0
    %v158 = vadd.f32 %v104, %v157
    %v159 = vpop.f32.mrf.mxu0
    %v160 = vadd.f32 %v104, %v159
    %161 = vmatmul.bf16.gmra.mxu0 %v127
    %v162 = vpop.f32.mrf.mxu0
    %v163 = vadd.f32 %v104, %v162
    %v164 = vpop.f32.mrf.mxu0
    %v165 = vadd.f32 %v104, %v164
    %166 = vmatmul.bf16.gmra.mxu0 %v130
    %v167 = vpop.f32.mrf.mxu0
    %v168 = vadd.f32 %v104, %v167
    %v169 = vpop.f32.mrf.mxu0
    %v170 = vadd.f32 %v104, %v169
    %171 = vmatmul.bf16.gmra.mxu0 %v133
    %v172 = vpop.f32.mrf.mxu0
    %v173 = vadd.f32 %v104, %v172
    %v174 = vpop.f32.mrf.mxu0
    %v175 = vadd.f32 %v104, %v174
    %176 = vdwg.mxu0
    %177 = vmatpush.bf16.msra.mxu0 0
    %178 = vmatpush.bf16.msra.mxu0 0
    %179 = vmatpush.bf16.msra.mxu0 0
    %180 = vmatpush.bf16.msra.mxu0 0
    %181 = vmatpush.bf16.msra.mxu0 0
    %182 = vmatpush.bf16.msra.mxu0 0
    %183 = vmatpush.bf16.msra.mxu0 0
    %184 = vmatpush.bf16.msra.mxu0 %v140
    %185 = vmatmul.bf16.gmra.mxu0 %v124
    %v186 = vpop.f32.mrf.mxu0
    %v187 = vadd.f32 %v105, %v186
    %v188 = vpop.f32.mrf.mxu0
    %v189 = vadd.f32 %v105, %v188
    %190 = vmatmul.bf16.gmra.mxu0 %v127
    %v191 = vpop.f32.mrf.mxu0
    %v192 = vadd.f32 %v105, %v191
    %v193 = vpop.f32.mrf.mxu0
    %v194 = vadd.f32 %v105, %v193
    %195 = vmatmul.bf16.gmra.mxu0 %v130
    %v196 = vpop.f32.mrf.mxu0
    %v197 = vadd.f32 %v105, %v196
    %v198 = vpop.f32.mrf.mxu0
    %v199 = vadd.f32 %v105, %v198
    %200 = vmatmul.bf16.gmra.mxu0 %v133
    %v201 = vpop.f32.mrf.mxu0
    %v202 = vadd.f32 %v105, %v201
    %v203 = vpop.f32.mrf.mxu0
    %v204 = vadd.f32 %v105, %v203
    %205 = vdwg.mxu0
    %206 = vmatpush.bf16.msra.mxu0 0
    %207 = vmatpush.bf16.msra.mxu0 0
    %208 = vmatpush.bf16.msra.mxu0 0
    %209 = vmatpush.bf16.msra.mxu0 0
    %210 = vmatpush.bf16.msra.mxu0 0
    %211 = vmatpush.bf16.msra.mxu0 0
    %212 = vmatpush.bf16.msra.mxu0 0
    %213 = vmatpush.bf16.msra.mxu0 %v143
    %214 = vmatmul.bf16.gmra.mxu0 %v124
    %v215 = vpop.f32.mrf.mxu0
    %v216 = vadd.f32 %v106, %v215
    %v217 = vpop.f32.mrf.mxu0
    %v218 = vadd.f32 %v106, %v217
    %219 = vmatmul.bf16.gmra.mxu0 %v127
    %v220 = vpop.f32.mrf.mxu0
    %v221 = vadd.f32 %v106, %v220
    %v222 = vpop.f32.mrf.mxu0
    %v223 = vadd.f32 %v106, %v222
    %224 = vmatmul.bf16.gmra.mxu0 %v130
    %v225 = vpop.f32.mrf.mxu0
    %v226 = vadd.f32 %v106, %v225
    %v227 = vpop.f32.mrf.mxu0
    %v228 = vadd.f32 %v106, %v227
    %229 = vmatmul.bf16.gmra.mxu0 %v133
    %v230 = vpop.f32.mrf.mxu0
    %v231 = vadd.f32 %v106, %v230
    %v232 = vpop.f32.mrf.mxu0
    %v233 = vadd.f32 %v106, %v232
    %234 = vdwg.mxu0
    %235 = vmatpush.bf16.msra.mxu0 0
    %236 = vmatpush.bf16.msra.mxu0 0
    %237 = vmatpush.bf16.msra.mxu0 0
    %238 = vmatpush.bf16.msra.mxu0 0
    %239 = vmatpush.bf16.msra.mxu0 0
    %240 = vmatpush.bf16.msra.mxu0 0
    %241 = vmatpush.bf16.msra.mxu0 0
    %242 = vmatpush.bf16.msra.mxu0 %v146
    %243 = vmatmul.bf16.gmra.mxu0 %v124
    %v244 = vpop.f32.mrf.mxu0
    %v245 = vadd.f32 %v107, %v244
    %v246 = vpop.f32.mrf.mxu0
    %v247 = vadd.f32 %v107, %v246
    %248 = vmatmul.bf16.gmra.mxu0 %v127
    %v249 = vpop.f32.mrf.mxu0
    %v250 = vadd.f32 %v107, %v249
    %v251 = vpop.f32.mrf.mxu0
    %v252 = vadd.f32 %v107, %v251
    %253 = vmatmul.bf16.gmra.mxu0 %v130
    %v254 = vpop.f32.mrf.mxu0
    %v255 = vadd.f32 %v107, %v254
    %v256 = vpop.f32.mrf.mxu0
    %v257 = vadd.f32 %v107, %v256
    %258 = vmatmul.bf16.gmra.mxu0 %v133
    %v259 = vpop.f32.mrf.mxu0
    %v260 = vadd.f32 %v107, %v259
    %v261 = vpop.f32.mrf.mxu0
    %v262 = vadd.f32 %v107, %v261
    %263 = vdwg.mxu0
    %264 = vst [vmem:[#allocation3] sm:$0xff] %v158
    %265 = vst [vmem:[#allocation3 + $0x8] sm:$0xff] %v187
    %266 = vst [vmem:[#allocation3 + $0x10] sm:$0xff] %v216
    %267 = vst [vmem:[#allocation3 + $0x18] sm:$0xff] %v245
    %268 = vst [vmem:[#allocation3 + $0x20] sm:$0xff] %v160
    %269 = vst [vmem:[#allocation3 + $0x28] sm:$0xff] %v189
    %270 = vst [vmem:[#allocation3 + $0x30] sm:$0xff] %v218
    %271 = vst [vmem:[#allocation3 + $0x38] sm:$0xff] %v247
    %272 = vst [vmem:[#allocation3 + $0x40] sm:$0xff] %v163
    %273 = vst [vmem:[#allocation3 + $0x48] sm:$0xff] %v192
    %274 = vst [vmem:[#allocation3 + $0x50] sm:$0xff] %v221
    %275 = vst [vmem:[#allocation3 + $0x58] sm:$0xff] %v250
    %276 = vst [vmem:[#allocation3 + $0x60] sm:$0xff] %v165
    %277 = vst [vmem:[#allocation3 + $0x68] sm:$0xff] %v194
    %278 = vst [vmem:[#allocation3 + $0x70] sm:$0xff] %v223
    %279 = vst [vmem:[#allocation3 + $0x78] sm:$0xff] %v252
    %280 = vst [vmem:[#allocation3 + $0x80] sm:$0xff] %v168
    %281 = vst [vmem:[#allocation3 + $0x88] sm:$0xff] %v197
    %282 = vst [vmem:[#allocation3 + $0x90] sm:$0xff] %v226
    %283 = vst [vmem:[#allocation3 + $0x98] sm:$0xff] %v255
    %284 = vst [vmem:[#allocation3 + $0xa0] sm:$0xff] %v170
    %285 = vst [vmem:[#allocation3 + $0xa8] sm:$0xff] %v199
    %286 = vst [vmem:[#allocation3 + $0xb0] sm:$0xff] %v228
    %287 = vst [vmem:[#allocation3 + $0xb8] sm:$0xff] %v257
    %288 = vst [vmem:[#allocation3 + $0xc0] sm:$0xff] %v173
    %289 = vst [vmem:[#allocation3 + $0xc8] sm:$0xff] %v202
    %290 = vst [vmem:[#allocation3 + $0xd0] sm:$0xff] %v231
    %291 = vst [vmem:[#allocation3 + $0xd8] sm:$0xff] %v260
    %292 = vst [vmem:[#allocation3 + $0xe0] sm:$0xff] %v175
    %293 = vst [vmem:[#allocation3 + $0xe8] sm:$0xff] %v204
    %294 = vst [vmem:[#allocation3 + $0xf0] sm:$0xff] %v233
    %295 = vst [vmem:[#allocation3 + $0xf8] sm:$0xff] %v262
    %296 = vst [vmem:[#allocation4] sm:$0xff] 0.0
    %297 = vst [vmem:[#allocation5] sm:$0xff] 0.0
    %s298 = smul.u32 0, 4
    %s299 = smul.addr %s298, 8
    %s300 = scalar_lea.vmem [#allocation3], %s299
    %v301 = vld [vmem:[%s300] sm:$0xff]
    %v302 = vld [vmem:[%s300 + $0x8] sm:$0xff]
    %v303 = vld [vmem:[%s300 + $0x10] sm:$0xff]
    %v304 = vld [vmem:[%s300 + $0x18] sm:$0xff]
    %v305 = vld [vmem:[#allocation4] sm:$0xff]
    %v306 = vpack.c.bf16 %v305, %v305
    %v307 = vld [vmem:[#allocation7] sm:$0xff]
    %v308 = vld [vmem:[#allocation7 + $0x8] sm:$0xff]
    %v309 = vld [vmem:[#allocation7 + $0x10] sm:$0xff]
    %v310 = vld [vmem:[#allocation7 + $0x18] sm:$0xff]
    %v311 = vld [vmem:[#allocation7 + $0x20] sm:$0xff]
    %v312 = vld [vmem:[#allocation7 + $0x28] sm:$0xff]
    %v313 = vld [vmem:[#allocation7 + $0x30] sm:$0xff]
    %v314 = vld [vmem:[#allocation7 + $0x38] sm:$0xff]
    %v315 = vld [vmem:[#allocation7 + $0x40] sm:$0xff]
    %v316 = vld [vmem:[#allocation7 + $0x48] sm:$0xff]
    %v317 = vld [vmem:[#allocation7 + $0x50] sm:$0xff]
    %v318 = vld [vmem:[#allocation7 + $0x58] sm:$0xff]
    %v319 = vld [vmem:[#allocation7 + $0x60] sm:$0xff]
    %v320 = vld [vmem:[#allocation7 + $0x68] sm:$0xff]
    %v321 = vld [vmem:[#allocation7 + $0x70] sm:$0xff]
    %v322 = vld [vmem:[#allocation7 + $0x78] sm:$0xff]
    %v323 = vld [vmem:[#allocation7 + $0x80] sm:$0xff]
    %v324 = vld [vmem:[#allocation7 + $0x88] sm:$0xff]
    %v325 = vld [vmem:[#allocation7 + $0x90] sm:$0xff]
    %v326 = vld [vmem:[#allocation7 + $0x98] sm:$0xff]
    %v327 = vld [vmem:[#allocation7 + $0xa0] sm:$0xff]
    %v328 = vld [vmem:[#allocation7 + $0xa8] sm:$0xff]
    %v329 = vld [vmem:[#allocation7 + $0xb0] sm:$0xff]
    %v330 = vld [vmem:[#allocation7 + $0xb8] sm:$0xff]
    %v331 = vld [vmem:[#allocation7 + $0xc0] sm:$0xff]
    %v332 = vld [vmem:[#allocation7 + $0xc8] sm:$0xff]
    %v333 = vld [vmem:[#allocation7 + $0xd0] sm:$0xff]
    %v334 = vld [vmem:[#allocation7 + $0xd8] sm:$0xff]
    %v335 = vld [vmem:[#allocation7 + $0xe0] sm:$0xff]
    %v336 = vld [vmem:[#allocation7 + $0xe8] sm:$0xff]
    %v337 = vld [vmem:[#allocation7 + $0xf0] sm:$0xff]
    %v338 = vld [vmem:[#allocation7 + $0xf8] sm:$0xff]
    %v371 = vunpack.c.l.b16 %v307
    %v372 = vunpack.c.h.b16 %v307
    %v373 = vunpack.c.l.b16 %v308
    %v374 = vunpack.c.h.b16 %v308
    %v375 = vunpack.c.l.b16 %v309
    %v376 = vunpack.c.h.b16 %v309
    %v377 = vunpack.c.l.b16 %v310
    %v378 = vunpack.c.h.b16 %v310
    %v379 = vunpack.c.l.b16 %v311
    %v380 = vunpack.c.h.b16 %v311
    %v381 = vunpack.c.l.b16 %v312
    %v382 = vunpack.c.h.b16 %v312
    %v383 = vunpack.c.l.b16 %v313
    %v384 = vunpack.c.h.b16 %v313
    %v385 = vunpack.c.l.b16 %v314
    %v386 = vunpack.c.h.b16 %v314
    %v387 = vunpack.c.l.b16 %v315
    %v388 = vunpack.c.h.b16 %v315
    %v389 = vunpack.c.l.b16 %v316
    %v390 = vunpack.c.h.b16 %v316
    %v391 = vunpack.c.l.b16 %v317
    %v392 = vunpack.c.h.b16 %v317
    %v393 = vunpack.c.l.b16 %v318
    %v394 = vunpack.c.h.b16 %v318
    %v395 = vunpack.c.l.b16 %v319
    %v396 = vunpack.c.h.b16 %v319
    %v397 = vunpack.c.l.b16 %v320
    %v398 = vunpack.c.h.b16 %v320
    %v399 = vunpack.c.l.b16 %v321
    %v400 = vunpack.c.h.b16 %v321
    %v401 = vunpack.c.l.b16 %v322
    %v402 = vunpack.c.h.b16 %v322
    %v403 = vunpack.c.l.b16 %v323
    %v404 = vunpack.c.h.b16 %v323
    %v405 = vunpack.c.l.b16 %v324
    %v406 = vunpack.c.h.b16 %v324
    %v407 = vunpack.c.l.b16 %v325
    %v408 = vunpack.c.h.b16 %v325
    %v409 = vunpack.c.l.b16 %v326
    %v410 = vunpack.c.h.b16 %v326
    %v411 = vunpack.c.l.b16 %v327
    %v412 = vunpack.c.h.b16 %v327
    %v413 = vunpack.c.l.b16 %v328
    %v414 = vunpack.c.h.b16 %v328
    %v415 = vunpack.c.l.b16 %v329
    %v416 = vunpack.c.h.b16 %v329
    %v417 = vunpack.c.l.b16 %v330
    %v418 = vunpack.c.h.b16 %v330
    %v419 = vunpack.c.l.b16 %v331
    %v420 = vunpack.c.h.b16 %v331
    %v421 = vunpack.c.l.b16 %v332
    %v422 = vunpack.c.h.b16 %v332
    %v423 = vunpack.c.l.b16 %v333
    %v424 = vunpack.c.h.b16 %v333
    %v425 = vunpack.c.l.b16 %v334
    %v426 = vunpack.c.h.b16 %v334
    %v427 = vunpack.c.l.b16 %v335
    %v428 = vunpack.c.h.b16 %v335
    %v429 = vunpack.c.l.b16 %v336
    %v430 = vunpack.c.h.b16 %v336
    %v431 = vunpack.c.l.b16 %v337
    %v432 = vunpack.c.h.b16 %v337
    %v433 = vunpack.c.l.b16 %v338
    %v434 = vunpack.c.h.b16 %v338
    %v435 = vpack.c.b16 %v375, %v371
    %v436 = vpack.c.b16 %v376, %v372
    %v437 = vpack.c.b16 %v377, %v373
    %v438 = vpack.c.b16 %v378, %v374
    %v439 = vpack.c.b16 %v383, %v379
    %v440 = vpack.c.b16 %v384, %v380
    %v441 = vpack.c.b16 %v385, %v381
    %v442 = vpack.c.b16 %v386, %v382
    %v443 = vpack.c.b16 %v391, %v387
    %v444 = vpack.c.b16 %v392, %v388
    %v445 = vpack.c.b16 %v393, %v389
    %v446 = vpack.c.b16 %v394, %v390
    %v447 = vpack.c.b16 %v399, %v395
    %v448 = vpack.c.b16 %v400, %v396
    %v449 = vpack.c.b16 %v401, %v397
    %v450 = vpack.c.b16 %v402, %v398
    %v451 = vpack.c.b16 %v407, %v403
    %v452 = vpack.c.b16 %v408, %v404
    %v453 = vpack.c.b16 %v409, %v405
    %v454 = vpack.c.b16 %v410, %v406
    %v455 = vpack.c.b16 %v415, %v411
    %v456 = vpack.c.b16 %v416, %v412
    %v457 = vpack.c.b16 %v417, %v413
    %v458 = vpack.c.b16 %v418, %v414
    %v459 = vpack.c.b16 %v423, %v419
    %v460 = vpack.c.b16 %v424, %v420
    %v461 = vpack.c.b16 %v425, %v421
    %v462 = vpack.c.b16 %v426, %v422
    %v463 = vpack.c.b16 %v431, %v427
    %v464 = vpack.c.b16 %v432, %v428
    %v465 = vpack.c.b16 %v433, %v429
    %v466 = vpack.c.b16 %v434, %v430
    %499 = vmatpush.bf16.msra.mxu0 %v463
    %500 = vmatpush.bf16.msra.mxu0 %v459
    %501 = vmatpush.bf16.msra.mxu0 %v455
    %502 = vmatpush.bf16.msra.mxu0 %v451
    %503 = vmatpush.bf16.msra.mxu0 %v447
    %504 = vmatpush.bf16.msra.mxu0 %v443
    %505 = vmatpush.bf16.msra.mxu0 %v439
    %506 = vmatpush.bf16.msra.mxu0 %v435
    %507 = vmatmul.bf16.gmra.mxu0 %v306
    %v508 = vpop.f32.mrf.mxu0
    %v509 = vadd.f32 0.0, %v508
    %v510 = vpop.f32.mrf.mxu0
    %511 = vdwg.mxu0
    %512 = vmatpush.bf16.msra.mxu0 %v464
    %513 = vmatpush.bf16.msra.mxu0 %v460
    %514 = vmatpush.bf16.msra.mxu0 %v456
    %515 = vmatpush.bf16.msra.mxu0 %v452
    %516 = vmatpush.bf16.msra.mxu0 %v448
    %517 = vmatpush.bf16.msra.mxu0 %v444
    %518 = vmatpush.bf16.msra.mxu0 %v440
    %519 = vmatpush.bf16.msra.mxu0 %v436
    %520 = vmatmul.bf16.gmra.mxu0 %v306
    %v521 = vpop.f32.mrf.mxu0
    %v522 = vadd.f32 0.0, %v521
    %v523 = vpop.f32.mrf.mxu0
    %524 = vdwg.mxu0
    %525 = vmatpush.bf16.msra.mxu0 %v465
    %526 = vmatpush.bf16.msra.mxu0 %v461
    %527 = vmatpush.bf16.msra.mxu0 %v457
    %528 = vmatpush.bf16.msra.mxu0 %v453
    %529 = vmatpush.bf16.msra.mxu0 %v449
    %530 = vmatpush.bf16.msra.mxu0 %v445
    %531 = vmatpush.bf16.msra.mxu0 %v441
    %532 = vmatpush.bf16.msra.mxu0 %v437
    %533 = vmatmul.bf16.gmra.mxu0 %v306
    %v534 = vpop.f32.mrf.mxu0
    %v535 = vadd.f32 0.0, %v534
    %v536 = vpop.f32.mrf.mxu0
    %537 = vdwg.mxu0
    %538 = vmatpush.bf16.msra.mxu0 %v466
    %539 = vmatpush.bf16.msra.mxu0 %v462
    %540 = vmatpush.bf16.msra.mxu0 %v458
    %541 = vmatpush.bf16.msra.mxu0 %v454
    %542 = vmatpush.bf16.msra.mxu0 %v450
    %543 = vmatpush.bf16.msra.mxu0 %v446
    %544 = vmatpush.bf16.msra.mxu0 %v442
    %545 = vmatpush.bf16.msra.mxu0 %v438
    %546 = vmatmul.bf16.gmra.mxu0 %v306
    %v547 = vpop.f32.mrf.mxu0
    %v548 = vadd.f32 0.0, %v547
    %v549 = vpop.f32.mrf.mxu0
    %550 = vdwg.mxu0
    %v551 = vadd.f32 %v301, %v509
    %v552 = vadd.f32 %v302, %v522
    %v553 = vadd.f32 %v303, %v535
    %v554 = vadd.f32 %v304, %v548
    %v555 = vxor.u32 %v551, 2147483648
    %v556 = vmul.f32 %v555, 1.442695
    %v557 = vpow.pop %v556
    %v558 = vadd.f32 %v557, 1.0
    %v559 = vrcp.pop %v558
    %v560 = vmul.f32 %v558, %v559
    %v561 = vsub.f32 1.0, %v560
    %v562 = vmul.f32 %v559, %v561
    %v563 = vadd.f32 %v559, %v562
    %vm564 = vweird.f32 %v558
    %vm565 = vweird.f32 %v559
    %vm566 = vmor %vm564, %vm565
    %v567 = vsel %vm566, %v559, %v563
    %v568 = vand.u32 2147483647, %v558
    %vm569 = vcmp.eq.f32.partialorder %v568, 8.507059e+37
    %v570 = vand.u32 %v558, 2147483648
    %v571 = vor.u32 1.1754944e-38, %v570
    %v572 = vsel %vm569, %v571, %v567
    %v573 = vmul.f32 1.0, %v572
    %v574 = vxor.u32 %v552, 2147483648
    %v575 = vmul.f32 %v574, 1.442695
    %v576 = vpow.pop %v575
    %v577 = vadd.f32 %v576, 1.0
    %v578 = vrcp.pop %v577
    %v579 = vmul.f32 %v577, %v578
    %v580 = vsub.f32 1.0, %v579
    %v581 = vmul.f32 %v578, %v580
    %v582 = vadd.f32 %v578, %v581
    %vm583 = vweird.f32 %v577
    %vm584 = vweird.f32 %v578
    %vm585 = vmor %vm583, %vm584
    %v586 = vsel %vm585, %v578, %v582
    %v587 = vand.u32 2147483647, %v577
    %vm588 = vcmp.eq.f32.partialorder %v587, 8.507059e+37
    %v589 = vand.u32 %v577, 2147483648
    %v590 = vor.u32 1.1754944e-38, %v589
    %v591 = vsel %vm588, %v590, %v586
    %v592 = vmul.f32 1.0, %v591
    %v593 = vtanh.pop %v553
    %v594 = vxor.u32 %v554, 2147483648
    %v595 = vmul.f32 %v594, 1.442695
    %v596 = vpow.pop %v595
    %v597 = vadd.f32 %v596, 1.0
    %v598 = vrcp.pop %v597
    %v599 = vmul.f32 %v597, %v598
    %v600 = vsub.f32 1.0, %v599
    %v601 = vmul.f32 %v598, %v600
    %v602 = vadd.f32 %v598, %v601
    %vm603 = vweird.f32 %v597
    %vm604 = vweird.f32 %v598
    %vm605 = vmor %vm603, %vm604
    %v606 = vsel %vm605, %v598, %v602
    %v607 = vand.u32 2147483647, %v597
    %vm608 = vcmp.eq.f32.partialorder %v607, 8.507059e+37
    %v609 = vand.u32 %v597, 2147483648
    %v610 = vor.u32 1.1754944e-38, %v609
    %v611 = vsel %vm608, %v610, %v606
    %v612 = vmul.f32 1.0, %v611
    %v613 = vld [vmem:[#allocation5] sm:$0xff]
    %v614 = vmul.f32 %v592, %v613
    %v615 = vmul.f32 %v573, %v593
    %v616 = vadd.f32 %v614, %v615
    %v617 = vtanh.pop %v616
    %v618 = vmul.f32 %v612, %v617
    %619 = vst [vmem:[#allocation5] sm:$0xff] %v616
    %620 = vst [vmem:[#allocation4] sm:$0xff] %v618
    %621 = vst [vmem:[#allocation2] sm:$0xff] %v618
    %s622 = smul.u32 1, 4
    %s623 = smul.addr %s622, 8
    %s624 = scalar_lea.vmem [#allocation3], %s623
    %v625 = vld [vmem:[%s624] sm:$0xff]
    %v626 = vld [vmem:[%s624 + $0x8] sm:$0xff]
    %v627 = vld [vmem:[%s624 + $0x10] sm:$0xff]
    %v628 = vld [vmem:[%s624 + $0x18] sm:$0xff]
    %v629 = vld [vmem:[#allocation4] sm:$0xff]
    %v630 = vpack.c.bf16 %v629, %v629
    %v631 = vld [vmem:[#allocation7] sm:$0xff]
    %v632 = vld [vmem:[#allocation7 + $0x8] sm:$0xff]
    %v633 = vld [vmem:[#allocation7 + $0x10] sm:$0xff]
    %v634 = vld [vmem:[#allocation7 + $0x18] sm:$0xff]
    %v635 = vld [vmem:[#allocation7 + $0x20] sm:$0xff]
    %v636 = vld [vmem:[#allocation7 + $0x28] sm:$0xff]
    %v637 = vld [vmem:[#allocation7 + $0x30] sm:$0xff]
    %v638 = vld [vmem:[#allocation7 + $0x38] sm:$0xff]
    %v639 = vld [vmem:[#allocation7 + $0x40] sm:$0xff]
    %v640 = vld [vmem:[#allocation7 + $0x48] sm:$0xff]
    %v641 = vld [vmem:[#allocation7 + $0x50] sm:$0xff]
    %v642 = vld [vmem:[#allocation7 + $0x58] sm:$0xff]
    %v643 = vld [vmem:[#allocation7 + $0x60] sm:$0xff]
    %v644 = vld [vmem:[#allocation7 + $0x68] sm:$0xff]
    %v645 = vld [vmem:[#allocation7 + $0x70] sm:$0xff]
    %v646 = vld [vmem:[#allocation7 + $0x78] sm:$0xff]
    %v647 = vld [vmem:[#allocation7 + $0x80] sm:$0xff]
    %v648 = vld [vmem:[#allocation7 + $0x88] sm:$0xff]
    %v649 = vld [vmem:[#allocation7 + $0x90] sm:$0xff]
    %v650 = vld [vmem:[#allocation7 + $0x98] sm:$0xff]
    %v651 = vld [vmem:[#allocation7 + $0xa0] sm:$0xff]
    %v652 = vld [vmem:[#allocation7 + $0xa8] sm:$0xff]
    %v653 = vld [vmem:[#allocation7 + $0xb0] sm:$0xff]
    %v654 = vld [vmem:[#allocation7 + $0xb8] sm:$0xff]
    %v655 = vld [vmem:[#allocation7 + $0xc0] sm:$0xff]
    %v656 = vld [vmem:[#allocation7 + $0xc8] sm:$0xff]
    %v657 = vld [vmem:[#allocation7 + $0xd0] sm:$0xff]
    %v658 = vld [vmem:[#allocation7 + $0xd8] sm:$0xff]
    %v659 = vld [vmem:[#allocation7 + $0xe0] sm:$0xff]
    %v660 = vld [vmem:[#allocation7 + $0xe8] sm:$0xff]
    %v661 = vld [vmem:[#allocation7 + $0xf0] sm:$0xff]
    %v662 = vld [vmem:[#allocation7 + $0xf8] sm:$0xff]
    %v695 = vunpack.c.l.b16 %v631
    %v696 = vunpack.c.h.b16 %v631
    %v697 = vunpack.c.l.b16 %v632
    %v698 = vunpack.c.h.b16 %v632
    %v699 = vunpack.c.l.b16 %v633
    %v700 = vunpack.c.h.b16 %v633
    %v701 = vunpack.c.l.b16 %v634
    %v702 = vunpack.c.h.b16 %v634
    %v703 = vunpack.c.l.b16 %v635
    %v704 = vunpack.c.h.b16 %v635
    %v705 = vunpack.c.l.b16 %v636
    %v706 = vunpack.c.h.b16 %v636
    %v707 = vunpack.c.l.b16 %v637
    %v708 = vunpack.c.h.b16 %v637
    %v709 = vunpack.c.l.b16 %v638
    %v710 = vunpack.c.h.b16 %v638
    %v711 = vunpack.c.l.b16 %v639
    %v712 = vunpack.c.h.b16 %v639
    %v713 = vunpack.c.l.b16 %v640
    %v714 = vunpack.c.h.b16 %v640
    %v715 = vunpack.c.l.b16 %v641
    %v716 = vunpack.c.h.b16 %v641
    %v717 = vunpack.c.l.b16 %v642
    %v718 = vunpack.c.h.b16 %v642
    %v719 = vunpack.c.l.b16 %v643
    %v720 = vunpack.c.h.b16 %v643
    %v721 = vunpack.c.l.b16 %v644
    %v722 = vunpack.c.h.b16 %v644
    %v723 = vunpack.c.l.b16 %v645
    %v724 = vunpack.c.h.b16 %v645
    %v725 = vunpack.c.l.b16 %v646
    %v726 = vunpack.c.h.b16 %v646
    %v727 = vunpack.c.l.b16 %v647
    %v728 = vunpack.c.h.b16 %v647
    %v729 = vunpack.c.l.b16 %v648
    %v730 = vunpack.c.h.b16 %v648
    %v731 = vunpack.c.l.b16 %v649
    %v732 = vunpack.c.h.b16 %v649
    %v733 = vunpack.c.l.b16 %v650
    %v734 = vunpack.c.h.b16 %v650
    %v735 = vunpack.c.l.b16 %v651
    %v736 = vunpack.c.h.b16 %v651
    %v737 = vunpack.c.l.b16 %v652
    %v738 = vunpack.c.h.b16 %v652
    %v739 = vunpack.c.l.b16 %v653
    %v740 = vunpack.c.h.b16 %v653
    %v741 = vunpack.c.l.b16 %v654
    %v742 = vunpack.c.h.b16 %v654
    %v743 = vunpack.c.l.b16 %v655
    %v744 = vunpack.c.h.b16 %v655
    %v745 = vunpack.c.l.b16 %v656
    %v746 = vunpack.c.h.b16 %v656
    %v747 = vunpack.c.l.b16 %v657
    %v748 = vunpack.c.h.b16 %v657
    %v749 = vunpack.c.l.b16 %v658
    %v750 = vunpack.c.h.b16 %v658
    %v751 = vunpack.c.l.b16 %v659
    %v752 = vunpack.c.h.b16 %v659
    %v753 = vunpack.c.l.b16 %v660
    %v754 = vunpack.c.h.b16 %v660
    %v755 = vunpack.c.l.b16 %v661
    %v756 = vunpack.c.h.b16 %v661
    %v757 = vunpack.c.l.b16 %v662
    %v758 = vunpack.c.h.b16 %v662
    %v759 = vpack.c.b16 %v699, %v695
    %v760 = vpack.c.b16 %v700, %v696
    %v761 = vpack.c.b16 %v701, %v697
    %v762 = vpack.c.b16 %v702, %v698
    %v763 = vpack.c.b16 %v707, %v703
    %v764 = vpack.c.b16 %v708, %v704
    %v765 = vpack.c.b16 %v709, %v705
    %v766 = vpack.c.b16 %v710, %v706
    %v767 = vpack.c.b16 %v715, %v711
    %v768 = vpack.c.b16 %v716, %v712
    %v769 = vpack.c.b16 %v717, %v713
    %v770 = vpack.c.b16 %v718, %v714
    %v771 = vpack.c.b16 %v723, %v719
    %v772 = vpack.c.b16 %v724, %v720
    %v773 = vpack.c.b16 %v725, %v721
    %v774 = vpack.c.b16 %v726, %v722
    %v775 = vpack.c.b16 %v731, %v727
    %v776 = vpack.c.b16 %v732, %v728
    %v777 = vpack.c.b16 %v733, %v729
    %v778 = vpack.c.b16 %v734, %v730
    %v779 = vpack.c.b16 %v739, %v735
    %v780 = vpack.c.b16 %v740, %v736
    %v781 = vpack.c.b16 %v741, %v737
    %v782 = vpack.c.b16 %v742, %v738
    %v783 = vpack.c.b16 %v747, %v743
    %v784 = vpack.c.b16 %v748, %v744
    %v785 = vpack.c.b16 %v749, %v745
    %v786 = vpack.c.b16 %v750, %v746
    %v787 = vpack.c.b16 %v755, %v751
    %v788 = vpack.c.b16 %v756, %v752
    %v789 = vpack.c.b16 %v757, %v753
    %v790 = vpack.c.b16 %v758, %v754
    %823 = vmatpush.bf16.msra.mxu0 %v787
    %824 = vmatpush.bf16.msra.mxu0 %v783
    %825 = vmatpush.bf16.msra.mxu0 %v779
    %826 = vmatpush.bf16.msra.mxu0 %v775
    %827 = vmatpush.bf16.msra.mxu0 %v771
    %828 = vmatpush.bf16.msra.mxu0 %v767
    %829 = vmatpush.bf16.msra.mxu0 %v763
    %830 = vmatpush.bf16.msra.mxu0 %v759
    %831 = vmatmul.bf16.gmra.mxu0 %v630
    %v832 = vpop.f32.mrf.mxu0
    %v833 = vadd.f32 0.0, %v832
    %v834 = vpop.f32.mrf.mxu0
    %835 = vdwg.mxu0
    %836 = vmatpush.bf16.msra.mxu0 %v788
    %837 = vmatpush.bf16.msra.mxu0 %v784
    %838 = vmatpush.bf16.msra.mxu0 %v780
    %839 = vmatpush.bf16.msra.mxu0 %v776
    %840 = vmatpush.bf16.msra.mxu0 %v772
    %841 = vmatpush.bf16.msra.mxu0 %v768
    %842 = vmatpush.bf16.msra.mxu0 %v764
    %843 = vmatpush.bf16.msra.mxu0 %v760
    %844 = vmatmul.bf16.gmra.mxu0 %v630
    %v845 = vpop.f32.mrf.mxu0
    %v846 = vadd.f32 0.0, %v845
    %v847 = vpop.f32.mrf.mxu0
    %848 = vdwg.mxu0
    %849 = vmatpush.bf16.msra.mxu0 %v789
    %850 = vmatpush.bf16.msra.mxu0 %v785
    %851 = vmatpush.bf16.msra.mxu0 %v781
    %852 = vmatpush.bf16.msra.mxu0 %v777
    %853 = vmatpush.bf16.msra.mxu0 %v773
    %854 = vmatpush.bf16.msra.mxu0 %v769
    %855 = vmatpush.bf16.msra.mxu0 %v765
    %856 = vmatpush.bf16.msra.mxu0 %v761
    %857 = vmatmul.bf16.gmra.mxu0 %v630
    %v858 = vpop.f32.mrf.mxu0
    %v859 = vadd.f32 0.0, %v858
    %v860 = vpop.f32.mrf.mxu0
    %861 = vdwg.mxu0
    %862 = vmatpush.bf16.msra.mxu0 %v790
    %863 = vmatpush.bf16.msra.mxu0 %v786
    %864 = vmatpush.bf16.msra.mxu0 %v782
    %865 = vmatpush.bf16.msra.mxu0 %v778
    %866 = vmatpush.bf16.msra.mxu0 %v774
    %867 = vmatpush.bf16.msra.mxu0 %v770
    %868 = vmatpush.bf16.msra.mxu0 %v766
    %869 = vmatpush.bf16.msra.mxu0 %v762
    %870 = vmatmul.bf16.gmra.mxu0 %v630
    %v871 = vpop.f32.mrf.mxu0
    %v872 = vadd.f32 0.0, %v871
    %v873 = vpop.f32.mrf.mxu0
    %874 = vdwg.mxu0
    %v875 = vadd.f32 %v625, %v833
    %v876 = vadd.f32 %v626, %v846
    %v877 = vadd.f32 %v627, %v859
    %v878 = vadd.f32 %v628, %v872
    %v879 = vxor.u32 %v875, 2147483648
    %v880 = vmul.f32 %v879, 1.442695
    %v881 = vpow.pop %v880
    %v882 = vadd.f32 %v881, 1.0
    %v883 = vrcp.pop %v882
    %v884 = vmul.f32 %v882, %v883
    %v885 = vsub.f32 1.0, %v884
    %v886 = vmul.f32 %v883, %v885
    %v887 = vadd.f32 %v883, %v886
    %vm888 = vweird.f32 %v882
    %vm889 = vweird.f32 %v883
    %vm890 = vmor %vm888, %vm889
    %v891 = vsel %vm890, %v883, %v887
    %v892 = vand.u32 2147483647, %v882
    %vm893 = vcmp.eq.f32.partialorder %v892, 8.507059e+37
    %v894 = vand.u32 %v882, 2147483648
    %v895 = vor.u32 1.1754944e-38, %v894
    %v896 = vsel %vm893, %v895, %v891
    %v897 = vmul.f32 1.0, %v896
    %v898 = vxor.u32 %v876, 2147483648
    %v899 = vmul.f32 %v898, 1.442695
    %v900 = vpow.pop %v899
    %v901 = vadd.f32 %v900, 1.0
    %v902 = vrcp.pop %v901
    %v903 = vmul.f32 %v901, %v902
    %v904 = vsub.f32 1.0, %v903
    %v905 = vmul.f32 %v902, %v904
    %v906 = vadd.f32 %v902, %v905
    %vm907 = vweird.f32 %v901
    %vm908 = vweird.f32 %v902
    %vm909 = vmor %vm907, %vm908
    %v910 = vsel %vm909, %v902, %v906
    %v911 = vand.u32 2147483647, %v901
    %vm912 = vcmp.eq.f32.partialorder %v911, 8.507059e+37
    %v913 = vand.u32 %v901, 2147483648
    %v914 = vor.u32 1.1754944e-38, %v913
    %v915 = vsel %vm912, %v914, %v910
    %v916 = vmul.f32 1.0, %v915
    %v917 = vtanh.pop %v877
    %v918 = vxor.u32 %v878, 2147483648
    %v919 = vmul.f32 %v918, 1.442695
    %v920 = vpow.pop %v919
    %v921 = vadd.f32 %v920, 1.0
    %v922 = vrcp.pop %v921
    %v923 = vmul.f32 %v921, %v922
    %v924 = vsub.f32 1.0, %v923
    %v925 = vmul.f32 %v922, %v924
    %v926 = vadd.f32 %v922, %v925
    %vm927 = vweird.f32 %v921
    %vm928 = vweird.f32 %v922
    %vm929 = vmor %vm927, %vm928
    %v930 = vsel %vm929, %v922, %v926
    %v931 = vand.u32 2147483647, %v921
    %vm932 = vcmp.eq.f32.partialorder %v931, 8.507059e+37
    %v933 = vand.u32 %v921, 2147483648
    %v934 = vor.u32 1.1754944e-38, %v933
    %v935 = vsel %vm932, %v934, %v930
    %v936 = vmul.f32 1.0, %v935
    %v937 = vld [vmem:[#allocation5] sm:$0xff]
    %v938 = vmul.f32 %v916, %v937
    %v939 = vmul.f32 %v897, %v917
    %v940 = vadd.f32 %v938, %v939
    %v941 = vtanh.pop %v940
    %v942 = vmul.f32 %v936, %v941
    %943 = vst [vmem:[#allocation5] sm:$0xff] %v940
    %944 = vst [vmem:[#allocation4] sm:$0xff] %v942
    %s945 = scalar_lea.vmem [#allocation2], 8
    %946 = vst [vmem:[%s945] sm:$0xff] %v942
    %s947 = smul.u32 2, 4
    %s948 = smul.addr %s947, 8
    %s949 = scalar_lea.vmem [#allocation3], %s948
    %v950 = vld [vmem:[%s949] sm:$0xff]
    %v951 = vld [vmem:[%s949 + $0x8] sm:$0xff]
    %v952 = vld [vmem:[%s949 + $0x10] sm:$0xff]
    %v953 = vld [vmem:[%s949 + $0x18] sm:$0xff]
    %v954 = vld [vmem:[#allocation4] sm:$0xff]
    %v955 = vpack.c.bf16 %v954, %v954
    %v956 = vld [vmem:[#allocation7] sm:$0xff]
    %v957 = vld [vmem:[#allocation7 + $0x8] sm:$0xff]
    %v958 = vld [vmem:[#allocation7 + $0x10] sm:$0xff]
    %v959 = vld [vmem:[#allocation7 + $0x18] sm:$0xff]
    %v960 = vld [vmem:[#allocation7 + $0x20] sm:$0xff]
    %v961 = vld [vmem:[#allocation7 + $0x28] sm:$0xff]
    %v962 = vld [vmem:[#allocation7 + $0x30] sm:$0xff]
    %v963 = vld [vmem:[#allocation7 + $0x38] sm:$0xff]
    %v964 = vld [vmem:[#allocation7 + $0x40] sm:$0xff]
    %v965 = vld [vmem:[#allocation7 + $0x48] sm:$0xff]
    %v966 = vld [vmem:[#allocation7 + $0x50] sm:$0xff]
    %v967 = vld [vmem:[#allocation7 + $0x58] sm:$0xff]
    %v968 = vld [vmem:[#allocation7 + $0x60] sm:$0xff]
    %v969 = vld [vmem:[#allocation7 + $0x68] sm:$0xff]
    %v970 = vld [vmem:[#allocation7 + $0x70] sm:$0xff]
    %v971 = vld [vmem:[#allocation7 + $0x78] sm:$0xff]
    %v972 = vld [vmem:[#allocation7 + $0x80] sm:$0xff]
    %v973 = vld [vmem:[#allocation7 + $0x88] sm:$0xff]
    %v974 = vld [vmem:[#allocation7 + $0x90] sm:$0xff]
    %v975 = vld [vmem:[#allocation7 + $0x98] sm:$0xff]
    %v976 = vld [vmem:[#allocation7 + $0xa0] sm:$0xff]
    %v977 = vld [vmem:[#allocation7 + $0xa8] sm:$0xff]
    %v978 = vld [vmem:[#allocation7 + $0xb0] sm:$0xff]
    %v979 = vld [vmem:[#allocation7 + $0xb8] sm:$0xff]
    %v980 = vld [vmem:[#allocation7 + $0xc0] sm:$0xff]
    %v981 = vld [vmem:[#allocation7 + $0xc8] sm:$0xff]
    %v982 = vld [vmem:[#allocation7 + $0xd0] sm:$0xff]
    %v983 = vld [vmem:[#allocation7 + $0xd8] sm:$0xff]
    %v984 = vld [vmem:[#allocation7 + $0xe0] sm:$0xff]
    %v985 = vld [vmem:[#allocation7 + $0xe8] sm:$0xff]
    %v986 = vld [vmem:[#allocation7 + $0xf0] sm:$0xff]
    %v987 = vld [vmem:[#allocation7 + $0xf8] sm:$0xff]
    %v1020 = vunpack.c.l.b16 %v956
    %v1021 = vunpack.c.h.b16 %v956
    %v1022 = vunpack.c.l.b16 %v957
    %v1023 = vunpack.c.h.b16 %v957
    %v1024 = vunpack.c.l.b16 %v958
    %v1025 = vunpack.c.h.b16 %v958
    %v1026 = vunpack.c.l.b16 %v959
    %v1027 = vunpack.c.h.b16 %v959
    %v1028 = vunpack.c.l.b16 %v960
    %v1029 = vunpack.c.h.b16 %v960
    %v1030 = vunpack.c.l.b16 %v961
    %v1031 = vunpack.c.h.b16 %v961
    %v1032 = vunpack.c.l.b16 %v962
    %v1033 = vunpack.c.h.b16 %v962
    %v1034 = vunpack.c.l.b16 %v963
    %v1035 = vunpack.c.h.b16 %v963
    %v1036 = vunpack.c.l.b16 %v964
    %v1037 = vunpack.c.h.b16 %v964
    %v1038 = vunpack.c.l.b16 %v965
    %v1039 = vunpack.c.h.b16 %v965
    %v1040 = vunpack.c.l.b16 %v966
    %v1041 = vunpack.c.h.b16 %v966
    %v1042 = vunpack.c.l.b16 %v967
    %v1043 = vunpack.c.h.b16 %v967
    %v1044 = vunpack.c.l.b16 %v968
    %v1045 = vunpack.c.h.b16 %v968
    %v1046 = vunpack.c.l.b16 %v969
    %v1047 = vunpack.c.h.b16 %v969
    %v1048 = vunpack.c.l.b16 %v970
    %v1049 = vunpack.c.h.b16 %v970
    %v1050 = vunpack.c.l.b16 %v971
    %v1051 = vunpack.c.h.b16 %v971
    %v1052 = vunpack.c.l.b16 %v972
    %v1053 = vunpack.c.h.b16 %v972
    %v1054 = vunpack.c.l.b16 %v973
    %v1055 = vunpack.c.h.b16 %v973
    %v1056 = vunpack.c.l.b16 %v974
    %v1057 = vunpack.c.h.b16 %v974
    %v1058 = vunpack.c.l.b16 %v975
    %v1059 = vunpack.c.h.b16 %v975
    %v1060 = vunpack.c.l.b16 %v976
    %v1061 = vunpack.c.h.b16 %v976
    %v1062 = vunpack.c.l.b16 %v977
    %v1063 = vunpack.c.h.b16 %v977
    %v1064 = vunpack.c.l.b16 %v978
    %v1065 = vunpack.c.h.b16 %v978
    %v1066 = vunpack.c.l.b16 %v979
    %v1067 = vunpack.c.h.b16 %v979
    %v1068 = vunpack.c.l.b16 %v980
    %v1069 = vunpack.c.h.b16 %v980
    %v1070 = vunpack.c.l.b16 %v981
    %v1071 = vunpack.c.h.b16 %v981
    %v1072 = vunpack.c.l.b16 %v982
    %v1073 = vunpack.c.h.b16 %v982
    %v1074 = vunpack.c.l.b16 %v983
    %v1075 = vunpack.c.h.b16 %v983
    %v1076 = vunpack.c.l.b16 %v984
    %v1077 = vunpack.c.h.b16 %v984
    %v1078 = vunpack.c.l.b16 %v985
    %v1079 = vunpack.c.h.b16 %v985
    %v1080 = vunpack.c.l.b16 %v986
    %v1081 = vunpack.c.h.b16 %v986
    %v1082 = vunpack.c.l.b16 %v987
    %v1083 = vunpack.c.h.b16 %v987
    %v1084 = vpack.c.b16 %v1024, %v1020
    %v1085 = vpack.c.b16 %v1025, %v1021
    %v1086 = vpack.c.b16 %v1026, %v1022
    %v1087 = vpack.c.b16 %v1027, %v1023
    %v1088 = vpack.c.b16 %v1032, %v1028
    %v1089 = vpack.c.b16 %v1033, %v1029
    %v1090 = vpack.c.b16 %v1034, %v1030
    %v1091 = vpack.c.b16 %v1035, %v1031
    %v1092 = vpack.c.b16 %v1040, %v1036
    %v1093 = vpack.c.b16 %v1041, %v1037
    %v1094 = vpack.c.b16 %v1042, %v1038
    %v1095 = vpack.c.b16 %v1043, %v1039
    %v1096 = vpack.c.b16 %v1048, %v1044
    %v1097 = vpack.c.b16 %v1049, %v1045
    %v1098 = vpack.c.b16 %v1050, %v1046
    %v1099 = vpack.c.b16 %v1051, %v1047
    %v1100 = vpack.c.b16 %v1056, %v1052
    %v1101 = vpack.c.b16 %v1057, %v1053
    %v1102 = vpack.c.b16 %v1058, %v1054
    %v1103 = vpack.c.b16 %v1059, %v1055
    %v1104 = vpack.c.b16 %v1064, %v1060
    %v1105 = vpack.c.b16 %v1065, %v1061
    %v1106 = vpack.c.b16 %v1066, %v1062
    %v1107 = vpack.c.b16 %v1067, %v1063
    %v1108 = vpack.c.b16 %v1072, %v1068
    %v1109 = vpack.c.b16 %v1073, %v1069
    %v1110 = vpack.c.b16 %v1074, %v1070
    %v1111 = vpack.c.b16 %v1075, %v1071
    %v1112 = vpack.c.b16 %v1080, %v1076
    %v1113 = vpack.c.b16 %v1081, %v1077
    %v1114 = vpack.c.b16 %v1082, %v1078
    %v1115 = vpack.c.b16 %v1083, %v1079
    %1148 = vmatpush.bf16.msra.mxu0 %v1112
    %1149 = vmatpush.bf16.msra.mxu0 %v1108
    %1150 = vmatpush.bf16.msra.mxu0 %v1104
    %1151 = vmatpush.bf16.msra.mxu0 %v1100
    %1152 = vmatpush.bf16.msra.mxu0 %v1096
    %1153 = vmatpush.bf16.msra.mxu0 %v1092
    %1154 = vmatpush.bf16.msra.mxu0 %v1088
    %1155 = vmatpush.bf16.msra.mxu0 %v1084
    %1156 = vmatmul.bf16.gmra.mxu0 %v955
    %v1157 = vpop.f32.mrf.mxu0
    %v1158 = vadd.f32 0.0, %v1157
    %v1159 = vpop.f32.mrf.mxu0
    %1160 = vdwg.mxu0
    %1161 = vmatpush.bf16.msra.mxu0 %v1113
    %1162 = vmatpush.bf16.msra.mxu0 %v1109
    %1163 = vmatpush.bf16.msra.mxu0 %v1105
    %1164 = vmatpush.bf16.msra.mxu0 %v1101
    %1165 = vmatpush.bf16.msra.mxu0 %v1097
    %1166 = vmatpush.bf16.msra.mxu0 %v1093
    %1167 = vmatpush.bf16.msra.mxu0 %v1089
    %1168 = vmatpush.bf16.msra.mxu0 %v1085
    %1169 = vmatmul.bf16.gmra.mxu0 %v955
    %v1170 = vpop.f32.mrf.mxu0
    %v1171 = vadd.f32 0.0, %v1170
    %v1172 = vpop.f32.mrf.mxu0
    %1173 = vdwg.mxu0
    %1174 = vmatpush.bf16.msra.mxu0 %v1114
    %1175 = vmatpush.bf16.msra.mxu0 %v1110
    %1176 = vmatpush.bf16.msra.mxu0 %v1106
    %1177 = vmatpush.bf16.msra.mxu0 %v1102
    %1178 = vmatpush.bf16.msra.mxu0 %v1098
    %1179 = vmatpush.bf16.msra.mxu0 %v1094
    %1180 = vmatpush.bf16.msra.mxu0 %v1090
    %1181 = vmatpush.bf16.msra.mxu0 %v1086
    %1182 = vmatmul.bf16.gmra.mxu0 %v955
    %v1183 = vpop.f32.mrf.mxu0
    %v1184 = vadd.f32 0.0, %v1183
    %v1185 = vpop.f32.mrf.mxu0
    %1186 = vdwg.mxu0
    %1187 = vmatpush.bf16.msra.mxu0 %v1115
    %1188 = vmatpush.bf16.msra.mxu0 %v1111
    %1189 = vmatpush.bf16.msra.mxu0 %v1107
    %1190 = vmatpush.bf16.msra.mxu0 %v1103
    %1191 = vmatpush.bf16.msra.mxu0 %v1099
    %1192 = vmatpush.bf16.msra.mxu0 %v1095
    %1193 = vmatpush.bf16.msra.mxu0 %v1091
    %1194 = vmatpush.bf16.msra.mxu0 %v1087
    %1195 = vmatmul.bf16.gmra.mxu0 %v955
    %v1196 = vpop.f32.mrf.mxu0
    %v1197 = vadd.f32 0.0, %v1196
    %v1198 = vpop.f32.mrf.mxu0
    %1199 = vdwg.mxu0
    %v1200 = vadd.f32 %v950, %v1158
    %v1201 = vadd.f32 %v951, %v1171
    %v1202 = vadd.f32 %v952, %v1184
    %v1203 = vadd.f32 %v953, %v1197
    %v1204 = vxor.u32 %v1200, 2147483648
    %v1205 = vmul.f32 %v1204, 1.442695
    %v1206 = vpow.pop %v1205
    %v1207 = vadd.f32 %v1206, 1.0
    %v1208 = vrcp.pop %v1207
    %v1209 = vmul.f32 %v1207, %v1208
    %v1210 = vsub.f32 1.0, %v1209
    %v1211 = vmul.f32 %v1208, %v1210
    %v1212 = vadd.f32 %v1208, %v1211
    %vm1213 = vweird.f32 %v1207
    %vm1214 = vweird.f32 %v1208
    %vm1215 = vmor %vm1213, %vm1214
    %v1216 = vsel %vm1215, %v1208, %v1212
    %v1217 = vand.u32 2147483647, %v1207
    %vm1218 = vcmp.eq.f32.partialorder %v1217, 8.507059e+37
    %v1219 = vand.u32 %v1207, 2147483648
    %v1220 = vor.u32 1.1754944e-38, %v1219
    %v1221 = vsel %vm1218, %v1220, %v1216
    %v1222 = vmul.f32 1.0, %v1221
    %v1223 = vxor.u32 %v1201, 2147483648
    %v1224 = vmul.f32 %v1223, 1.442695
    %v1225 = vpow.pop %v1224
    %v1226 = vadd.f32 %v1225, 1.0
    %v1227 = vrcp.pop %v1226
    %v1228 = vmul.f32 %v1226, %v1227
    %v1229 = vsub.f32 1.0, %v1228
    %v1230 = vmul.f32 %v1227, %v1229
    %v1231 = vadd.f32 %v1227, %v1230
    %vm1232 = vweird.f32 %v1226
    %vm1233 = vweird.f32 %v1227
    %vm1234 = vmor %vm1232, %vm1233
    %v1235 = vsel %vm1234, %v1227, %v1231
    %v1236 = vand.u32 2147483647, %v1226
    %vm1237 = vcmp.eq.f32.partialorder %v1236, 8.507059e+37
    %v1238 = vand.u32 %v1226, 2147483648
    %v1239 = vor.u32 1.1754944e-38, %v1238
    %v1240 = vsel %vm1237, %v1239, %v1235
    %v1241 = vmul.f32 1.0, %v1240
    %v1242 = vtanh.pop %v1202
    %v1243 = vxor.u32 %v1203, 2147483648
    %v1244 = vmul.f32 %v1243, 1.442695
    %v1245 = vpow.pop %v1244
    %v1246 = vadd.f32 %v1245, 1.0
    %v1247 = vrcp.pop %v1246
    %v1248 = vmul.f32 %v1246, %v1247
    %v1249 = vsub.f32 1.0, %v1248
    %v1250 = vmul.f32 %v1247, %v1249
    %v1251 = vadd.f32 %v1247, %v1250
    %vm1252 = vweird.f32 %v1246
    %vm1253 = vweird.f32 %v1247
    %vm1254 = vmor %vm1252, %vm1253
    %v1255 = vsel %vm1254, %v1247, %v1251
    %v1256 = vand.u32 2147483647, %v1246
    %vm1257 = vcmp.eq.f32.partialorder %v1256, 8.507059e+37
    %v1258 = vand.u32 %v1246, 2147483648
    %v1259 = vor.u32 1.1754944e-38, %v1258
    %v1260 = vsel %vm1257, %v1259, %v1255
    %v1261 = vmul.f32 1.0, %v1260
    %v1262 = vld [vmem:[#allocation5] sm:$0xff]
    %v1263 = vmul.f32 %v1241, %v1262
    %v1264 = vmul.f32 %v1222, %v1242
    %v1265 = vadd.f32 %v1263, %v1264
    %v1266 = vtanh.pop %v1265
    %v1267 = vmul.f32 %v1261, %v1266
    %1268 = vst [vmem:[#allocation5] sm:$0xff] %v1265
    %1269 = vst [vmem:[#allocation4] sm:$0xff] %v1267
    %s1270 = scalar_lea.vmem [#allocation2], 16
    %1271 = vst [vmem:[%s1270] sm:$0xff] %v1267
    %s1272 = smul.u32 3, 4
    %s1273 = smul.addr %s1272, 8
    %s1274 = scalar_lea.vmem [#allocation3], %s1273
    %v1275 = vld [vmem:[%s1274] sm:$0xff]
    %v1276 = vld [vmem:[%s1274 + $0x8] sm:$0xff]
    %v1277 = vld [vmem:[%s1274 + $0x10] sm:$0xff]
    %v1278 = vld [vmem:[%s1274 + $0x18] sm:$0xff]
    %v1279 = vld [vmem:[#allocation4] sm:$0xff]
    %v1280 = vpack.c.bf16 %v1279, %v1279
    %v1281 = vld [vmem:[#allocation7] sm:$0xff]
    %v1282 = vld [vmem:[#allocation7 + $0x8] sm:$0xff]
    %v1283 = vld [vmem:[#allocation7 + $0x10] sm:$0xff]
    %v1284 = vld [vmem:[#allocation7 + $0x18] sm:$0xff]
    %v1285 = vld [vmem:[#allocation7 + $0x20] sm:$0xff]
    %v1286 = vld [vmem:[#allocation7 + $0x28] sm:$0xff]
    %v1287 = vld [vmem:[#allocation7 + $0x30] sm:$0xff]
    %v1288 = vld [vmem:[#allocation7 + $0x38] sm:$0xff]
    %v1289 = vld [vmem:[#allocation7 + $0x40] sm:$0xff]
    %v1290 = vld [vmem:[#allocation7 + $0x48] sm:$0xff]
    %v1291 = vld [vmem:[#allocation7 + $0x50] sm:$0xff]
    %v1292 = vld [vmem:[#allocation7 + $0x58] sm:$0xff]
    %v1293 = vld [vmem:[#allocation7 + $0x60] sm:$0xff]
    %v1294 = vld [vmem:[#allocation7 + $0x68] sm:$0xff]
    %v1295 = vld [vmem:[#allocation7 + $0x70] sm:$0xff]
    %v1296 = vld [vmem:[#allocation7 + $0x78] sm:$0xff]
    %v1297 = vld [vmem:[#allocation7 + $0x80] sm:$0xff]
    %v1298 = vld [vmem:[#allocation7 + $0x88] sm:$0xff]
    %v1299 = vld [vmem:[#allocation7 + $0x90] sm:$0xff]
    %v1300 = vld [vmem:[#allocation7 + $0x98] sm:$0xff]
    %v1301 = vld [vmem:[#allocation7 + $0xa0] sm:$0xff]
    %v1302 = vld [vmem:[#allocation7 + $0xa8] sm:$0xff]
    %v1303 = vld [vmem:[#allocation7 + $0xb0] sm:$0xff]
    %v1304 = vld [vmem:[#allocation7 + $0xb8] sm:$0xff]
    %v1305 = vld [vmem:[#allocation7 + $0xc0] sm:$0xff]
    %v1306 = vld [vmem:[#allocation7 + $0xc8] sm:$0xff]
    %v1307 = vld [vmem:[#allocation7 + $0xd0] sm:$0xff]
    %v1308 = vld [vmem:[#allocation7 + $0xd8] sm:$0xff]
    %v1309 = vld [vmem:[#allocation7 + $0xe0] sm:$0xff]
    %v1310 = vld [vmem:[#allocation7 + $0xe8] sm:$0xff]
    %v1311 = vld [vmem:[#allocation7 + $0xf0] sm:$0xff]
    %v1312 = vld [vmem:[#allocation7 + $0xf8] sm:$0xff]
    %v1345 = vunpack.c.l.b16 %v1281
    %v1346 = vunpack.c.h.b16 %v1281
    %v1347 = vunpack.c.l.b16 %v1282
    %v1348 = vunpack.c.h.b16 %v1282
    %v1349 = vunpack.c.l.b16 %v1283
    %v1350 = vunpack.c.h.b16 %v1283
    %v1351 = vunpack.c.l.b16 %v1284
    %v1352 = vunpack.c.h.b16 %v1284
    %v1353 = vunpack.c.l.b16 %v1285
    %v1354 = vunpack.c.h.b16 %v1285
    %v1355 = vunpack.c.l.b16 %v1286
    %v1356 = vunpack.c.h.b16 %v1286
    %v1357 = vunpack.c.l.b16 %v1287
    %v1358 = vunpack.c.h.b16 %v1287
    %v1359 = vunpack.c.l.b16 %v1288
    %v1360 = vunpack.c.h.b16 %v1288
    %v1361 = vunpack.c.l.b16 %v1289
    %v1362 = vunpack.c.h.b16 %v1289
    %v1363 = vunpack.c.l.b16 %v1290
    %v1364 = vunpack.c.h.b16 %v1290
    %v1365 = vunpack.c.l.b16 %v1291
    %v1366 = vunpack.c.h.b16 %v1291
    %v1367 = vunpack.c.l.b16 %v1292
    %v1368 = vunpack.c.h.b16 %v1292
    %v1369 = vunpack.c.l.b16 %v1293
    %v1370 = vunpack.c.h.b16 %v1293
    %v1371 = vunpack.c.l.b16 %v1294
    %v1372 = vunpack.c.h.b16 %v1294
    %v1373 = vunpack.c.l.b16 %v1295
    %v1374 = vunpack.c.h.b16 %v1295
    %v1375 = vunpack.c.l.b16 %v1296
    %v1376 = vunpack.c.h.b16 %v1296
    %v1377 = vunpack.c.l.b16 %v1297
    %v1378 = vunpack.c.h.b16 %v1297
    %v1379 = vunpack.c.l.b16 %v1298
    %v1380 = vunpack.c.h.b16 %v1298
    %v1381 = vunpack.c.l.b16 %v1299
    %v1382 = vunpack.c.h.b16 %v1299
    %v1383 = vunpack.c.l.b16 %v1300
    %v1384 = vunpack.c.h.b16 %v1300
    %v1385 = vunpack.c.l.b16 %v1301
    %v1386 = vunpack.c.h.b16 %v1301
    %v1387 = vunpack.c.l.b16 %v1302
    %v1388 = vunpack.c.h.b16 %v1302
    %v1389 = vunpack.c.l.b16 %v1303
    %v1390 = vunpack.c.h.b16 %v1303
    %v1391 = vunpack.c.l.b16 %v1304
    %v1392 = vunpack.c.h.b16 %v1304
    %v1393 = vunpack.c.l.b16 %v1305
    %v1394 = vunpack.c.h.b16 %v1305
    %v1395 = vunpack.c.l.b16 %v1306
    %v1396 = vunpack.c.h.b16 %v1306
    %v1397 = vunpack.c.l.b16 %v1307
    %v1398 = vunpack.c.h.b16 %v1307
    %v1399 = vunpack.c.l.b16 %v1308
    %v1400 = vunpack.c.h.b16 %v1308
    %v1401 = vunpack.c.l.b16 %v1309
    %v1402 = vunpack.c.h.b16 %v1309
    %v1403 = vunpack.c.l.b16 %v1310
    %v1404 = vunpack.c.h.b16 %v1310
    %v1405 = vunpack.c.l.b16 %v1311
    %v1406 = vunpack.c.h.b16 %v1311
    %v1407 = vunpack.c.l.b16 %v1312
    %v1408 = vunpack.c.h.b16 %v1312
    %v1409 = vpack.c.b16 %v1349, %v1345
    %v1410 = vpack.c.b16 %v1350, %v1346
    %v1411 = vpack.c.b16 %v1351, %v1347
    %v1412 = vpack.c.b16 %v1352, %v1348
    %v1413 = vpack.c.b16 %v1357, %v1353
    %v1414 = vpack.c.b16 %v1358, %v1354
    %v1415 = vpack.c.b16 %v1359, %v1355
    %v1416 = vpack.c.b16 %v1360, %v1356
    %v1417 = vpack.c.b16 %v1365, %v1361
    %v1418 = vpack.c.b16 %v1366, %v1362
    %v1419 = vpack.c.b16 %v1367, %v1363
    %v1420 = vpack.c.b16 %v1368, %v1364
    %v1421 = vpack.c.b16 %v1373, %v1369
    %v1422 = vpack.c.b16 %v1374, %v1370
    %v1423 = vpack.c.b16 %v1375, %v1371
    %v1424 = vpack.c.b16 %v1376, %v1372
    %v1425 = vpack.c.b16 %v1381, %v1377
    %v1426 = vpack.c.b16 %v1382, %v1378
    %v1427 = vpack.c.b16 %v1383, %v1379
    %v1428 = vpack.c.b16 %v1384, %v1380
    %v1429 = vpack.c.b16 %v1389, %v1385
    %v1430 = vpack.c.b16 %v1390, %v1386
    %v1431 = vpack.c.b16 %v1391, %v1387
    %v1432 = vpack.c.b16 %v1392, %v1388
    %v1433 = vpack.c.b16 %v1397, %v1393
    %v1434 = vpack.c.b16 %v1398, %v1394
    %v1435 = vpack.c.b16 %v1399, %v1395
    %v1436 = vpack.c.b16 %v1400, %v1396
    %v1437 = vpack.c.b16 %v1405, %v1401
    %v1438 = vpack.c.b16 %v1406, %v1402
    %v1439 = vpack.c.b16 %v1407, %v1403
    %v1440 = vpack.c.b16 %v1408, %v1404
    %1473 = vmatpush.bf16.msra.mxu0 %v1437
    %1474 = vmatpush.bf16.msra.mxu0 %v1433
    %1475 = vmatpush.bf16.msra.mxu0 %v1429
    %1476 = vmatpush.bf16.msra.mxu0 %v1425
    %1477 = vmatpush.bf16.msra.mxu0 %v1421
    %1478 = vmatpush.bf16.msra.mxu0 %v1417
    %1479 = vmatpush.bf16.msra.mxu0 %v1413
    %1480 = vmatpush.bf16.msra.mxu0 %v1409
    %1481 = vmatmul.bf16.gmra.mxu0 %v1280
    %v1482 = vpop.f32.mrf.mxu0
    %v1483 = vadd.f32 0.0, %v1482
    %v1484 = vpop.f32.mrf.mxu0
    %1485 = vdwg.mxu0
    %1486 = vmatpush.bf16.msra.mxu0 %v1438
    %1487 = vmatpush.bf16.msra.mxu0 %v1434
    %1488 = vmatpush.bf16.msra.mxu0 %v1430
    %1489 = vmatpush.bf16.msra.mxu0 %v1426
    %1490 = vmatpush.bf16.msra.mxu0 %v1422
    %1491 = vmatpush.bf16.msra.mxu0 %v1418
    %1492 = vmatpush.bf16.msra.mxu0 %v1414
    %1493 = vmatpush.bf16.msra.mxu0 %v1410
    %1494 = vmatmul.bf16.gmra.mxu0 %v1280
    %v1495 = vpop.f32.mrf.mxu0
    %v1496 = vadd.f32 0.0, %v1495
    %v1497 = vpop.f32.mrf.mxu0
    %1498 = vdwg.mxu0
    %1499 = vmatpush.bf16.msra.mxu0 %v1439
    %1500 = vmatpush.bf16.msra.mxu0 %v1435
    %1501 = vmatpush.bf16.msra.mxu0 %v1431
    %1502 = vmatpush.bf16.msra.mxu0 %v1427
    %1503 = vmatpush.bf16.msra.mxu0 %v1423
    %1504 = vmatpush.bf16.msra.mxu0 %v1419
    %1505 = vmatpush.bf16.msra.mxu0 %v1415
    %1506 = vmatpush.bf16.msra.mxu0 %v1411
    %1507 = vmatmul.bf16.gmra.mxu0 %v1280
    %v1508 = vpop.f32.mrf.mxu0
    %v1509 = vadd.f32 0.0, %v1508
    %v1510 = vpop.f32.mrf.mxu0
    %1511 = vdwg.mxu0
    %1512 = vmatpush.bf16.msra.mxu0 %v1440
    %1513 = vmatpush.bf16.msra.mxu0 %v1436
    %1514 = vmatpush.bf16.msra.mxu0 %v1432
    %1515 = vmatpush.bf16.msra.mxu0 %v1428
    %1516 = vmatpush.bf16.msra.mxu0 %v1424
    %1517 = vmatpush.bf16.msra.mxu0 %v1420
    %1518 = vmatpush.bf16.msra.mxu0 %v1416
    %1519 = vmatpush.bf16.msra.mxu0 %v1412
    %1520 = vmatmul.bf16.gmra.mxu0 %v1280
    %v1521 = vpop.f32.mrf.mxu0
    %v1522 = vadd.f32 0.0, %v1521
    %v1523 = vpop.f32.mrf.mxu0
    %1524 = vdwg.mxu0
    %v1525 = vadd.f32 %v1275, %v1483
    %v1526 = vadd.f32 %v1276, %v1496
    %v1527 = vadd.f32 %v1277, %v1509
    %v1528 = vadd.f32 %v1278, %v1522
    %v1529 = vxor.u32 %v1525, 2147483648
    %v1530 = vmul.f32 %v1529, 1.442695
    %v1531 = vpow.pop %v1530
    %v1532 = vadd.f32 %v1531, 1.0
    %v1533 = vrcp.pop %v1532
    %v1534 = vmul.f32 %v1532, %v1533
    %v1535 = vsub.f32 1.0, %v1534
    %v1536 = vmul.f32 %v1533, %v1535
    %v1537 = vadd.f32 %v1533, %v1536
    %vm1538 = vweird.f32 %v1532
    %vm1539 = vweird.f32 %v1533
    %vm1540 = vmor %vm1538, %vm1539
    %v1541 = vsel %vm1540, %v1533, %v1537
    %v1542 = vand.u32 2147483647, %v1532
    %vm1543 = vcmp.eq.f32.partialorder %v1542, 8.507059e+37
    %v1544 = vand.u32 %v1532, 2147483648
    %v1545 = vor.u32 1.1754944e-38, %v1544
    %v1546 = vsel %vm1543, %v1545, %v1541
    %v1547 = vmul.f32 1.0, %v1546
    %v1548 = vxor.u32 %v1526, 2147483648
    %v1549 = vmul.f32 %v1548, 1.442695
    %v1550 = vpow.pop %v1549
    %v1551 = vadd.f32 %v1550, 1.0
    %v1552 = vrcp.pop %v1551
    %v1553 = vmul.f32 %v1551, %v1552
    %v1554 = vsub.f32 1.0, %v1553
    %v1555 = vmul.f32 %v1552, %v1554
    %v1556 = vadd.f32 %v1552, %v1555
    %vm1557 = vweird.f32 %v1551
    %vm1558 = vweird.f32 %v1552
    %vm1559 = vmor %vm1557, %vm1558
    %v1560 = vsel %vm1559, %v1552, %v1556
    %v1561 = vand.u32 2147483647, %v1551
    %vm1562 = vcmp.eq.f32.partialorder %v1561, 8.507059e+37
    %v1563 = vand.u32 %v1551, 2147483648
    %v1564 = vor.u32 1.1754944e-38, %v1563
    %v1565 = vsel %vm1562, %v1564, %v1560
    %v1566 = vmul.f32 1.0, %v1565
    %v1567 = vtanh.pop %v1527
    %v1568 = vxor.u32 %v1528, 2147483648
    %v1569 = vmul.f32 %v1568, 1.442695
    %v1570 = vpow.pop %v1569
    %v1571 = vadd.f32 %v1570, 1.0
    %v1572 = vrcp.pop %v1571
    %v1573 = vmul.f32 %v1571, %v1572
    %v1574 = vsub.f32 1.0, %v1573
    %v1575 = vmul.f32 %v1572, %v1574
    %v1576 = vadd.f32 %v1572, %v1575
    %vm1577 = vweird.f32 %v1571
    %vm1578 = vweird.f32 %v1572
    %vm1579 = vmor %vm1577, %vm1578
    %v1580 = vsel %vm1579, %v1572, %v1576
    %v1581 = vand.u32 2147483647, %v1571
    %vm1582 = vcmp.eq.f32.partialorder %v1581, 8.507059e+37
    %v1583 = vand.u32 %v1571, 2147483648
    %v1584 = vor.u32 1.1754944e-38, %v1583
    %v1585 = vsel %vm1582, %v1584, %v1580
    %v1586 = vmul.f32 1.0, %v1585
    %v1587 = vld [vmem:[#allocation5] sm:$0xff]
    %v1588 = vmul.f32 %v1566, %v1587
    %v1589 = vmul.f32 %v1547, %v1567
    %v1590 = vadd.f32 %v1588, %v1589
    %v1591 = vtanh.pop %v1590
    %v1592 = vmul.f32 %v1586, %v1591
    %1593 = vst [vmem:[#allocation5] sm:$0xff] %v1590
    %1594 = vst [vmem:[#allocation4] sm:$0xff] %v1592
    %s1595 = scalar_lea.vmem [#allocation2], 24
    %1596 = vst [vmem:[%s1595] sm:$0xff] %v1592
    %s1597 = smul.u32 4, 4
    %s1598 = smul.addr %s1597, 8
    %s1599 = scalar_lea.vmem [#allocation3], %s1598
    %v1600 = vld [vmem:[%s1599] sm:$0xff]
    %v1601 = vld [vmem:[%s1599 + $0x8] sm:$0xff]
    %v1602 = vld [vmem:[%s1599 + $0x10] sm:$0xff]
    %v1603 = vld [vmem:[%s1599 + $0x18] sm:$0xff]
    %v1604 = vld [vmem:[#allocation4] sm:$0xff]
    %v1605 = vpack.c.bf16 %v1604, %v1604
    %v1606 = vld [vmem:[#allocation7] sm:$0xff]
    %v1607 = vld [vmem:[#allocation7 + $0x8] sm:$0xff]
    %v1608 = vld [vmem:[#allocation7 + $0x10] sm:$0xff]
    %v1609 = vld [vmem:[#allocation7 + $0x18] sm:$0xff]
    %v1610 = vld [vmem:[#allocation7 + $0x20] sm:$0xff]
    %v1611 = vld [vmem:[#allocation7 + $0x28] sm:$0xff]
    %v1612 = vld [vmem:[#allocation7 + $0x30] sm:$0xff]
    %v1613 = vld [vmem:[#allocation7 + $0x38] sm:$0xff]
    %v1614 = vld [vmem:[#allocation7 + $0x40] sm:$0xff]
    %v1615 = vld [vmem:[#allocation7 + $0x48] sm:$0xff]
    %v1616 = vld [vmem:[#allocation7 + $0x50] sm:$0xff]
    %v1617 = vld [vmem:[#allocation7 + $0x58] sm:$0xff]
    %v1618 = vld [vmem:[#allocation7 + $0x60] sm:$0xff]
    %v1619 = vld [vmem:[#allocation7 + $0x68] sm:$0xff]
    %v1620 = vld [vmem:[#allocation7 + $0x70] sm:$0xff]
    %v1621 = vld [vmem:[#allocation7 + $0x78] sm:$0xff]
    %v1622 = vld [vmem:[#allocation7 + $0x80] sm:$0xff]
    %v1623 = vld [vmem:[#allocation7 + $0x88] sm:$0xff]
    %v1624 = vld [vmem:[#allocation7 + $0x90] sm:$0xff]
    %v1625 = vld [vmem:[#allocation7 + $0x98] sm:$0xff]
    %v1626 = vld [vmem:[#allocation7 + $0xa0] sm:$0xff]
    %v1627 = vld [vmem:[#allocation7 + $0xa8] sm:$0xff]
    %v1628 = vld [vmem:[#allocation7 + $0xb0] sm:$0xff]
    %v1629 = vld [vmem:[#allocation7 + $0xb8] sm:$0xff]
    %v1630 = vld [vmem:[#allocation7 + $0xc0] sm:$0xff]
    %v1631 = vld [vmem:[#allocation7 + $0xc8] sm:$0xff]
    %v1632 = vld [vmem:[#allocation7 + $0xd0] sm:$0xff]
    %v1633 = vld [vmem:[#allocation7 + $0xd8] sm:$0xff]
    %v1634 = vld [vmem:[#allocation7 + $0xe0] sm:$0xff]
    %v1635 = vld [vmem:[#allocation7 + $0xe8] sm:$0xff]
    %v1636 = vld [vmem:[#allocation7 + $0xf0] sm:$0xff]
    %v1637 = vld [vmem:[#allocation7 + $0xf8] sm:$0xff]
    %v1670 = vunpack.c.l.b16 %v1606
    %v1671 = vunpack.c.h.b16 %v1606
    %v1672 = vunpack.c.l.b16 %v1607
    %v1673 = vunpack.c.h.b16 %v1607
    %v1674 = vunpack.c.l.b16 %v1608
    %v1675 = vunpack.c.h.b16 %v1608
    %v1676 = vunpack.c.l.b16 %v1609
    %v1677 = vunpack.c.h.b16 %v1609
    %v1678 = vunpack.c.l.b16 %v1610
    %v1679 = vunpack.c.h.b16 %v1610
    %v1680 = vunpack.c.l.b16 %v1611
    %v1681 = vunpack.c.h.b16 %v1611
    %v1682 = vunpack.c.l.b16 %v1612
    %v1683 = vunpack.c.h.b16 %v1612
    %v1684 = vunpack.c.l.b16 %v1613
    %v1685 = vunpack.c.h.b16 %v1613
    %v1686 = vunpack.c.l.b16 %v1614
    %v1687 = vunpack.c.h.b16 %v1614
    %v1688 = vunpack.c.l.b16 %v1615
    %v1689 = vunpack.c.h.b16 %v1615
    %v1690 = vunpack.c.l.b16 %v1616
    %v1691 = vunpack.c.h.b16 %v1616
    %v1692 = vunpack.c.l.b16 %v1617
    %v1693 = vunpack.c.h.b16 %v1617
    %v1694 = vunpack.c.l.b16 %v1618
    %v1695 = vunpack.c.h.b16 %v1618
    %v1696 = vunpack.c.l.b16 %v1619
    %v1697 = vunpack.c.h.b16 %v1619
    %v1698 = vunpack.c.l.b16 %v1620
    %v1699 = vunpack.c.h.b16 %v1620
    %v1700 = vunpack.c.l.b16 %v1621
    %v1701 = vunpack.c.h.b16 %v1621
    %v1702 = vunpack.c.l.b16 %v1622
    %v1703 = vunpack.c.h.b16 %v1622
    %v1704 = vunpack.c.l.b16 %v1623
    %v1705 = vunpack.c.h.b16 %v1623
    %v1706 = vunpack.c.l.b16 %v1624
    %v1707 = vunpack.c.h.b16 %v1624
    %v1708 = vunpack.c.l.b16 %v1625
    %v1709 = vunpack.c.h.b16 %v1625
    %v1710 = vunpack.c.l.b16 %v1626
    %v1711 = vunpack.c.h.b16 %v1626
    %v1712 = vunpack.c.l.b16 %v1627
    %v1713 = vunpack.c.h.b16 %v1627
    %v1714 = vunpack.c.l.b16 %v1628
    %v1715 = vunpack.c.h.b16 %v1628
    %v1716 = vunpack.c.l.b16 %v1629
    %v1717 = vunpack.c.h.b16 %v1629
    %v1718 = vunpack.c.l.b16 %v1630
    %v1719 = vunpack.c.h.b16 %v1630
    %v1720 = vunpack.c.l.b16 %v1631
    %v1721 = vunpack.c.h.b16 %v1631
    %v1722 = vunpack.c.l.b16 %v1632
    %v1723 = vunpack.c.h.b16 %v1632
    %v1724 = vunpack.c.l.b16 %v1633
    %v1725 = vunpack.c.h.b16 %v1633
    %v1726 = vunpack.c.l.b16 %v1634
    %v1727 = vunpack.c.h.b16 %v1634
    %v1728 = vunpack.c.l.b16 %v1635
    %v1729 = vunpack.c.h.b16 %v1635
    %v1730 = vunpack.c.l.b16 %v1636
    %v1731 = vunpack.c.h.b16 %v1636
    %v1732 = vunpack.c.l.b16 %v1637
    %v1733 = vunpack.c.h.b16 %v1637
    %v1734 = vpack.c.b16 %v1674, %v1670
    %v1735 = vpack.c.b16 %v1675, %v1671
    %v1736 = vpack.c.b16 %v1676, %v1672
    %v1737 = vpack.c.b16 %v1677, %v1673
    %v1738 = vpack.c.b16 %v1682, %v1678
    %v1739 = vpack.c.b16 %v1683, %v1679
    %v1740 = vpack.c.b16 %v1684, %v1680
    %v1741 = vpack.c.b16 %v1685, %v1681
    %v1742 = vpack.c.b16 %v1690, %v1686
    %v1743 = vpack.c.b16 %v1691, %v1687
    %v1744 = vpack.c.b16 %v1692, %v1688
    %v1745 = vpack.c.b16 %v1693, %v1689
    %v1746 = vpack.c.b16 %v1698, %v1694
    %v1747 = vpack.c.b16 %v1699, %v1695
    %v1748 = vpack.c.b16 %v1700, %v1696
    %v1749 = vpack.c.b16 %v1701, %v1697
    %v1750 = vpack.c.b16 %v1706, %v1702
    %v1751 = vpack.c.b16 %v1707, %v1703
    %v1752 = vpack.c.b16 %v1708, %v1704
    %v1753 = vpack.c.b16 %v1709, %v1705
    %v1754 = vpack.c.b16 %v1714, %v1710
    %v1755 = vpack.c.b16 %v1715, %v1711
    %v1756 = vpack.c.b16 %v1716, %v1712
    %v1757 = vpack.c.b16 %v1717, %v1713
    %v1758 = vpack.c.b16 %v1722, %v1718
    %v1759 = vpack.c.b16 %v1723, %v1719
    %v1760 = vpack.c.b16 %v1724, %v1720
    %v1761 = vpack.c.b16 %v1725, %v1721
    %v1762 = vpack.c.b16 %v1730, %v1726
    %v1763 = vpack.c.b16 %v1731, %v1727
    %v1764 = vpack.c.b16 %v1732, %v1728
    %v1765 = vpack.c.b16 %v1733, %v1729
    %1798 = vmatpush.bf16.msra.mxu0 %v1762
    %1799 = vmatpush.bf16.msra.mxu0 %v1758
    %1800 = vmatpush.bf16.msra.mxu0 %v1754
    %1801 = vmatpush.bf16.msra.mxu0 %v1750
    %1802 = vmatpush.bf16.msra.mxu0 %v1746
    %1803 = vmatpush.bf16.msra.mxu0 %v1742
    %1804 = vmatpush.bf16.msra.mxu0 %v1738
    %1805 = vmatpush.bf16.msra.mxu0 %v1734
    %1806 = vmatmul.bf16.gmra.mxu0 %v1605
    %v1807 = vpop.f32.mrf.mxu0
    %v1808 = vadd.f32 0.0, %v1807
    %v1809 = vpop.f32.mrf.mxu0
    %1810 = vdwg.mxu0
    %1811 = vmatpush.bf16.msra.mxu0 %v1763
    %1812 = vmatpush.bf16.msra.mxu0 %v1759
    %1813 = vmatpush.bf16.msra.mxu0 %v1755
    %1814 = vmatpush.bf16.msra.mxu0 %v1751
    %1815 = vmatpush.bf16.msra.mxu0 %v1747
    %1816 = vmatpush.bf16.msra.mxu0 %v1743
    %1817 = vmatpush.bf16.msra.mxu0 %v1739
    %1818 = vmatpush.bf16.msra.mxu0 %v1735
    %1819 = vmatmul.bf16.gmra.mxu0 %v1605
    %v1820 = vpop.f32.mrf.mxu0
    %v1821 = vadd.f32 0.0, %v1820
    %v1822 = vpop.f32.mrf.mxu0
    %1823 = vdwg.mxu0
    %1824 = vmatpush.bf16.msra.mxu0 %v1764
    %1825 = vmatpush.bf16.msra.mxu0 %v1760
    %1826 = vmatpush.bf16.msra.mxu0 %v1756
    %1827 = vmatpush.bf16.msra.mxu0 %v1752
    %1828 = vmatpush.bf16.msra.mxu0 %v1748
    %1829 = vmatpush.bf16.msra.mxu0 %v1744
    %1830 = vmatpush.bf16.msra.mxu0 %v1740
    %1831 = vmatpush.bf16.msra.mxu0 %v1736
    %1832 = vmatmul.bf16.gmra.mxu0 %v1605
    %v1833 = vpop.f32.mrf.mxu0
    %v1834 = vadd.f32 0.0, %v1833
    %v1835 = vpop.f32.mrf.mxu0
    %1836 = vdwg.mxu0
    %1837 = vmatpush.bf16.msra.mxu0 %v1765
    %1838 = vmatpush.bf16.msra.mxu0 %v1761
    %1839 = vmatpush.bf16.msra.mxu0 %v1757
    %1840 = vmatpush.bf16.msra.mxu0 %v1753
    %1841 = vmatpush.bf16.msra.mxu0 %v1749
    %1842 = vmatpush.bf16.msra.mxu0 %v1745
    %1843 = vmatpush.bf16.msra.mxu0 %v1741
    %1844 = vmatpush.bf16.msra.mxu0 %v1737
    %1845 = vmatmul.bf16.gmra.mxu0 %v1605
    %v1846 = vpop.f32.mrf.mxu0
    %v1847 = vadd.f32 0.0, %v1846
    %v1848 = vpop.f32.mrf.mxu0
    %1849 = vdwg.mxu0
    %v1850 = vadd.f32 %v1600, %v1808
    %v1851 = vadd.f32 %v1601, %v1821
    %v1852 = vadd.f32 %v1602, %v1834
    %v1853 = vadd.f32 %v1603, %v1847
    %v1854 = vxor.u32 %v1850, 2147483648
    %v1855 = vmul.f32 %v1854, 1.442695
    %v1856 = vpow.pop %v1855
    %v1857 = vadd.f32 %v1856, 1.0
    %v1858 = vrcp.pop %v1857
    %v1859 = vmul.f32 %v1857, %v1858
    %v1860 = vsub.f32 1.0, %v1859
    %v1861 = vmul.f32 %v1858, %v1860
    %v1862 = vadd.f32 %v1858, %v1861
    %vm1863 = vweird.f32 %v1857
    %vm1864 = vweird.f32 %v1858
    %vm1865 = vmor %vm1863, %vm1864
    %v1866 = vsel %vm1865, %v1858, %v1862
    %v1867 = vand.u32 2147483647, %v1857
    %vm1868 = vcmp.eq.f32.partialorder %v1867, 8.507059e+37
    %v1869 = vand.u32 %v1857, 2147483648
    %v1870 = vor.u32 1.1754944e-38, %v1869
    %v1871 = vsel %vm1868, %v1870, %v1866
    %v1872 = vmul.f32 1.0, %v1871
    %v1873 = vxor.u32 %v1851, 2147483648
    %v1874 = vmul.f32 %v1873, 1.442695
    %v1875 = vpow.pop %v1874
    %v1876 = vadd.f32 %v1875, 1.0
    %v1877 = vrcp.pop %v1876
    %v1878 = vmul.f32 %v1876, %v1877
    %v1879 = vsub.f32 1.0, %v1878
    %v1880 = vmul.f32 %v1877, %v1879
    %v1881 = vadd.f32 %v1877, %v1880
    %vm1882 = vweird.f32 %v1876
    %vm1883 = vweird.f32 %v1877
    %vm1884 = vmor %vm1882, %vm1883
    %v1885 = vsel %vm1884, %v1877, %v1881
    %v1886 = vand.u32 2147483647, %v1876
    %vm1887 = vcmp.eq.f32.partialorder %v1886, 8.507059e+37
    %v1888 = vand.u32 %v1876, 2147483648
    %v1889 = vor.u32 1.1754944e-38, %v1888
    %v1890 = vsel %vm1887, %v1889, %v1885
    %v1891 = vmul.f32 1.0, %v1890
    %v1892 = vtanh.pop %v1852
    %v1893 = vxor.u32 %v1853, 2147483648
    %v1894 = vmul.f32 %v1893, 1.442695
    %v1895 = vpow.pop %v1894
    %v1896 = vadd.f32 %v1895, 1.0
    %v1897 = vrcp.pop %v1896
    %v1898 = vmul.f32 %v1896, %v1897
    %v1899 = vsub.f32 1.0, %v1898
    %v1900 = vmul.f32 %v1897, %v1899
    %v1901 = vadd.f32 %v1897, %v1900
    %vm1902 = vweird.f32 %v1896
    %vm1903 = vweird.f32 %v1897
    %vm1904 = vmor %vm1902, %vm1903
    %v1905 = vsel %vm1904, %v1897, %v1901
    %v1906 = vand.u32 2147483647, %v1896
    %vm1907 = vcmp.eq.f32.partialorder %v1906, 8.507059e+37
    %v1908 = vand.u32 %v1896, 2147483648
    %v1909 = vor.u32 1.1754944e-38, %v1908
    %v1910 = vsel %vm1907, %v1909, %v1905
    %v1911 = vmul.f32 1.0, %v1910
    %v1912 = vld [vmem:[#allocation5] sm:$0xff]
    %v1913 = vmul.f32 %v1891, %v1912
    %v1914 = vmul.f32 %v1872, %v1892
    %v1915 = vadd.f32 %v1913, %v1914
    %v1916 = vtanh.pop %v1915
    %v1917 = vmul.f32 %v1911, %v1916
    %1918 = vst [vmem:[#allocation5] sm:$0xff] %v1915
    %1919 = vst [vmem:[#allocation4] sm:$0xff] %v1917
    %s1920 = scalar_lea.vmem [#allocation2], 32
    %1921 = vst [vmem:[%s1920] sm:$0xff] %v1917
    %s1922 = smul.u32 5, 4
    %s1923 = smul.addr %s1922, 8
    %s1924 = scalar_lea.vmem [#allocation3], %s1923
    %v1925 = vld [vmem:[%s1924] sm:$0xff]
    %v1926 = vld [vmem:[%s1924 + $0x8] sm:$0xff]
    %v1927 = vld [vmem:[%s1924 + $0x10] sm:$0xff]
    %v1928 = vld [vmem:[%s1924 + $0x18] sm:$0xff]
    %v1929 = vld [vmem:[#allocation4] sm:$0xff]
    %v1930 = vpack.c.bf16 %v1929, %v1929
    %v1931 = vld [vmem:[#allocation7] sm:$0xff]
    %v1932 = vld [vmem:[#allocation7 + $0x8] sm:$0xff]
    %v1933 = vld [vmem:[#allocation7 + $0x10] sm:$0xff]
    %v1934 = vld [vmem:[#allocation7 + $0x18] sm:$0xff]
    %v1935 = vld [vmem:[#allocation7 + $0x20] sm:$0xff]
    %v1936 = vld [vmem:[#allocation7 + $0x28] sm:$0xff]
    %v1937 = vld [vmem:[#allocation7 + $0x30] sm:$0xff]
    %v1938 = vld [vmem:[#allocation7 + $0x38] sm:$0xff]
    %v1939 = vld [vmem:[#allocation7 + $0x40] sm:$0xff]
    %v1940 = vld [vmem:[#allocation7 + $0x48] sm:$0xff]
    %v1941 = vld [vmem:[#allocation7 + $0x50] sm:$0xff]
    %v1942 = vld [vmem:[#allocation7 + $0x58] sm:$0xff]
    %v1943 = vld [vmem:[#allocation7 + $0x60] sm:$0xff]
    %v1944 = vld [vmem:[#allocation7 + $0x68] sm:$0xff]
    %v1945 = vld [vmem:[#allocation7 + $0x70] sm:$0xff]
    %v1946 = vld [vmem:[#allocation7 + $0x78] sm:$0xff]
    %v1947 = vld [vmem:[#allocation7 + $0x80] sm:$0xff]
    %v1948 = vld [vmem:[#allocation7 + $0x88] sm:$0xff]
    %v1949 = vld [vmem:[#allocation7 + $0x90] sm:$0xff]
    %v1950 = vld [vmem:[#allocation7 + $0x98] sm:$0xff]
    %v1951 = vld [vmem:[#allocation7 + $0xa0] sm:$0xff]
    %v1952 = vld [vmem:[#allocation7 + $0xa8] sm:$0xff]
    %v1953 = vld [vmem:[#allocation7 + $0xb0] sm:$0xff]
    %v1954 = vld [vmem:[#allocation7 + $0xb8] sm:$0xff]
    %v1955 = vld [vmem:[#allocation7 + $0xc0] sm:$0xff]
    %v1956 = vld [vmem:[#allocation7 + $0xc8] sm:$0xff]
    %v1957 = vld [vmem:[#allocation7 + $0xd0] sm:$0xff]
    %v1958 = vld [vmem:[#allocation7 + $0xd8] sm:$0xff]
    %v1959 = vld [vmem:[#allocation7 + $0xe0] sm:$0xff]
    %v1960 = vld [vmem:[#allocation7 + $0xe8] sm:$0xff]
    %v1961 = vld [vmem:[#allocation7 + $0xf0] sm:$0xff]
    %v1962 = vld [vmem:[#allocation7 + $0xf8] sm:$0xff]
    %v1995 = vunpack.c.l.b16 %v1931
    %v1996 = vunpack.c.h.b16 %v1931
    %v1997 = vunpack.c.l.b16 %v1932
    %v1998 = vunpack.c.h.b16 %v1932
    %v1999 = vunpack.c.l.b16 %v1933
    %v2000 = vunpack.c.h.b16 %v1933
    %v2001 = vunpack.c.l.b16 %v1934
    %v2002 = vunpack.c.h.b16 %v1934
    %v2003 = vunpack.c.l.b16 %v1935
    %v2004 = vunpack.c.h.b16 %v1935
    %v2005 = vunpack.c.l.b16 %v1936
    %v2006 = vunpack.c.h.b16 %v1936
    %v2007 = vunpack.c.l.b16 %v1937
    %v2008 = vunpack.c.h.b16 %v1937
    %v2009 = vunpack.c.l.b16 %v1938
    %v2010 = vunpack.c.h.b16 %v1938
    %v2011 = vunpack.c.l.b16 %v1939
    %v2012 = vunpack.c.h.b16 %v1939
    %v2013 = vunpack.c.l.b16 %v1940
    %v2014 = vunpack.c.h.b16 %v1940
    %v2015 = vunpack.c.l.b16 %v1941
    %v2016 = vunpack.c.h.b16 %v1941
    %v2017 = vunpack.c.l.b16 %v1942
    %v2018 = vunpack.c.h.b16 %v1942
    %v2019 = vunpack.c.l.b16 %v1943
    %v2020 = vunpack.c.h.b16 %v1943
    %v2021 = vunpack.c.l.b16 %v1944
    %v2022 = vunpack.c.h.b16 %v1944
    %v2023 = vunpack.c.l.b16 %v1945
    %v2024 = vunpack.c.h.b16 %v1945
    %v2025 = vunpack.c.l.b16 %v1946
    %v2026 = vunpack.c.h.b16 %v1946
    %v2027 = vunpack.c.l.b16 %v1947
    %v2028 = vunpack.c.h.b16 %v1947
    %v2029 = vunpack.c.l.b16 %v1948
    %v2030 = vunpack.c.h.b16 %v1948
    %v2031 = vunpack.c.l.b16 %v1949
    %v2032 = vunpack.c.h.b16 %v1949
    %v2033 = vunpack.c.l.b16 %v1950
    %v2034 = vunpack.c.h.b16 %v1950
    %v2035 = vunpack.c.l.b16 %v1951
    %v2036 = vunpack.c.h.b16 %v1951
    %v2037 = vunpack.c.l.b16 %v1952
    %v2038 = vunpack.c.h.b16 %v1952
    %v2039 = vunpack.c.l.b16 %v1953
    %v2040 = vunpack.c.h.b16 %v1953
    %v2041 = vunpack.c.l.b16 %v1954
    %v2042 = vunpack.c.h.b16 %v1954
    %v2043 = vunpack.c.l.b16 %v1955
    %v2044 = vunpack.c.h.b16 %v1955
    %v2045 = vunpack.c.l.b16 %v1956
    %v2046 = vunpack.c.h.b16 %v1956
    %v2047 = vunpack.c.l.b16 %v1957
    %v2048 = vunpack.c.h.b16 %v1957
    %v2049 = vunpack.c.l.b16 %v1958
    %v2050 = vunpack.c.h.b16 %v1958
    %v2051 = vunpack.c.l.b16 %v1959
    %v2052 = vunpack.c.h.b16 %v1959
    %v2053 = vunpack.c.l.b16 %v1960
    %v2054 = vunpack.c.h.b16 %v1960
    %v2055 = vunpack.c.l.b16 %v1961
    %v2056 = vunpack.c.h.b16 %v1961
    %v2057 = vunpack.c.l.b16 %v1962
    %v2058 = vunpack.c.h.b16 %v1962
    %v2059 = vpack.c.b16 %v1999, %v1995
    %v2060 = vpack.c.b16 %v2000, %v1996
    %v2061 = vpack.c.b16 %v2001, %v1997
    %v2062 = vpack.c.b16 %v2002, %v1998
    %v2063 = vpack.c.b16 %v2007, %v2003
    %v2064 = vpack.c.b16 %v2008, %v2004
    %v2065 = vpack.c.b16 %v2009, %v2005
    %v2066 = vpack.c.b16 %v2010, %v2006
    %v2067 = vpack.c.b16 %v2015, %v2011
    %v2068 = vpack.c.b16 %v2016, %v2012
    %v2069 = vpack.c.b16 %v2017, %v2013
    %v2070 = vpack.c.b16 %v2018, %v2014
    %v2071 = vpack.c.b16 %v2023, %v2019
    %v2072 = vpack.c.b16 %v2024, %v2020
    %v2073 = vpack.c.b16 %v2025, %v2021
    %v2074 = vpack.c.b16 %v2026, %v2022
    %v2075 = vpack.c.b16 %v2031, %v2027
    %v2076 = vpack.c.b16 %v2032, %v2028
    %v2077 = vpack.c.b16 %v2033, %v2029
    %v2078 = vpack.c.b16 %v2034, %v2030
    %v2079 = vpack.c.b16 %v2039, %v2035
    %v2080 = vpack.c.b16 %v2040, %v2036
    %v2081 = vpack.c.b16 %v2041, %v2037
    %v2082 = vpack.c.b16 %v2042, %v2038
    %v2083 = vpack.c.b16 %v2047, %v2043
    %v2084 = vpack.c.b16 %v2048, %v2044
    %v2085 = vpack.c.b16 %v2049, %v2045
    %v2086 = vpack.c.b16 %v2050, %v2046
    %v2087 = vpack.c.b16 %v2055, %v2051
    %v2088 = vpack.c.b16 %v2056, %v2052
    %v2089 = vpack.c.b16 %v2057, %v2053
    %v2090 = vpack.c.b16 %v2058, %v2054
    %2123 = vmatpush.bf16.msra.mxu0 %v2087
    %2124 = vmatpush.bf16.msra.mxu0 %v2083
    %2125 = vmatpush.bf16.msra.mxu0 %v2079
    %2126 = vmatpush.bf16.msra.mxu0 %v2075
    %2127 = vmatpush.bf16.msra.mxu0 %v2071
    %2128 = vmatpush.bf16.msra.mxu0 %v2067
    %2129 = vmatpush.bf16.msra.mxu0 %v2063
    %2130 = vmatpush.bf16.msra.mxu0 %v2059
    %2131 = vmatmul.bf16.gmra.mxu0 %v1930
    %v2132 = vpop.f32.mrf.mxu0
    %v2133 = vadd.f32 0.0, %v2132
    %v2134 = vpop.f32.mrf.mxu0
    %2135 = vdwg.mxu0
    %2136 = vmatpush.bf16.msra.mxu0 %v2088
    %2137 = vmatpush.bf16.msra.mxu0 %v2084
    %2138 = vmatpush.bf16.msra.mxu0 %v2080
    %2139 = vmatpush.bf16.msra.mxu0 %v2076
    %2140 = vmatpush.bf16.msra.mxu0 %v2072
    %2141 = vmatpush.bf16.msra.mxu0 %v2068
    %2142 = vmatpush.bf16.msra.mxu0 %v2064
    %2143 = vmatpush.bf16.msra.mxu0 %v2060
    %2144 = vmatmul.bf16.gmra.mxu0 %v1930
    %v2145 = vpop.f32.mrf.mxu0
    %v2146 = vadd.f32 0.0, %v2145
    %v2147 = vpop.f32.mrf.mxu0
    %2148 = vdwg.mxu0
    %2149 = vmatpush.bf16.msra.mxu0 %v2089
    %2150 = vmatpush.bf16.msra.mxu0 %v2085
    %2151 = vmatpush.bf16.msra.mxu0 %v2081
    %2152 = vmatpush.bf16.msra.mxu0 %v2077
    %2153 = vmatpush.bf16.msra.mxu0 %v2073
    %2154 = vmatpush.bf16.msra.mxu0 %v2069
    %2155 = vmatpush.bf16.msra.mxu0 %v2065
    %2156 = vmatpush.bf16.msra.mxu0 %v2061
    %2157 = vmatmul.bf16.gmra.mxu0 %v1930
    %v2158 = vpop.f32.mrf.mxu0
    %v2159 = vadd.f32 0.0, %v2158
    %v2160 = vpop.f32.mrf.mxu0
    %2161 = vdwg.mxu0
    %2162 = vmatpush.bf16.msra.mxu0 %v2090
    %2163 = vmatpush.bf16.msra.mxu0 %v2086
    %2164 = vmatpush.bf16.msra.mxu0 %v2082
    %2165 = vmatpush.bf16.msra.mxu0 %v2078
    %2166 = vmatpush.bf16.msra.mxu0 %v2074
    %2167 = vmatpush.bf16.msra.mxu0 %v2070
    %2168 = vmatpush.bf16.msra.mxu0 %v2066
    %2169 = vmatpush.bf16.msra.mxu0 %v2062
    %2170 = vmatmul.bf16.gmra.mxu0 %v1930
    %v2171 = vpop.f32.mrf.mxu0
    %v2172 = vadd.f32 0.0, %v2171
    %v2173 = vpop.f32.mrf.mxu0
    %2174 = vdwg.mxu0
    %v2175 = vadd.f32 %v1925, %v2133
    %v2176 = vadd.f32 %v1926, %v2146
    %v2177 = vadd.f32 %v1927, %v2159
    %v2178 = vadd.f32 %v1928, %v2172
    %v2179 = vxor.u32 %v2175, 2147483648
    %v2180 = vmul.f32 %v2179, 1.442695
    %v2181 = vpow.pop %v2180
    %v2182 = vadd.f32 %v2181, 1.0
    %v2183 = vrcp.pop %v2182
    %v2184 = vmul.f32 %v2182, %v2183
    %v2185 = vsub.f32 1.0, %v2184
    %v2186 = vmul.f32 %v2183, %v2185
    %v2187 = vadd.f32 %v2183, %v2186
    %vm2188 = vweird.f32 %v2182
    %vm2189 = vweird.f32 %v2183
    %vm2190 = vmor %vm2188, %vm2189
    %v2191 = vsel %vm2190, %v2183, %v2187
    %v2192 = vand.u32 2147483647, %v2182
    %vm2193 = vcmp.eq.f32.partialorder %v2192, 8.507059e+37
    %v2194 = vand.u32 %v2182, 2147483648
    %v2195 = vor.u32 1.1754944e-38, %v2194
    %v2196 = vsel %vm2193, %v2195, %v2191
    %v2197 = vmul.f32 1.0, %v2196
    %v2198 = vxor.u32 %v2176, 2147483648
    %v2199 = vmul.f32 %v2198, 1.442695
    %v2200 = vpow.pop %v2199
    %v2201 = vadd.f32 %v2200, 1.0
    %v2202 = vrcp.pop %v2201
    %v2203 = vmul.f32 %v2201, %v2202
    %v2204 = vsub.f32 1.0, %v2203
    %v2205 = vmul.f32 %v2202, %v2204
    %v2206 = vadd.f32 %v2202, %v2205
    %vm2207 = vweird.f32 %v2201
    %vm2208 = vweird.f32 %v2202
    %vm2209 = vmor %vm2207, %vm2208
    %v2210 = vsel %vm2209, %v2202, %v2206
    %v2211 = vand.u32 2147483647, %v2201
    %vm2212 = vcmp.eq.f32.partialorder %v2211, 8.507059e+37
    %v2213 = vand.u32 %v2201, 2147483648
    %v2214 = vor.u32 1.1754944e-38, %v2213
    %v2215 = vsel %vm2212, %v2214, %v2210
    %v2216 = vmul.f32 1.0, %v2215
    %v2217 = vtanh.pop %v2177
    %v2218 = vxor.u32 %v2178, 2147483648
    %v2219 = vmul.f32 %v2218, 1.442695
    %v2220 = vpow.pop %v2219
    %v2221 = vadd.f32 %v2220, 1.0
    %v2222 = vrcp.pop %v2221
    %v2223 = vmul.f32 %v2221, %v2222
    %v2224 = vsub.f32 1.0, %v2223
    %v2225 = vmul.f32 %v2222, %v2224
    %v2226 = vadd.f32 %v2222, %v2225
    %vm2227 = vweird.f32 %v2221
    %vm2228 = vweird.f32 %v2222
    %vm2229 = vmor %vm2227, %vm2228
    %v2230 = vsel %vm2229, %v2222, %v2226
    %v2231 = vand.u32 2147483647, %v2221
    %vm2232 = vcmp.eq.f32.partialorder %v2231, 8.507059e+37
    %v2233 = vand.u32 %v2221, 2147483648
    %v2234 = vor.u32 1.1754944e-38, %v2233
    %v2235 = vsel %vm2232, %v2234, %v2230
    %v2236 = vmul.f32 1.0, %v2235
    %v2237 = vld [vmem:[#allocation5] sm:$0xff]
    %v2238 = vmul.f32 %v2216, %v2237
    %v2239 = vmul.f32 %v2197, %v2217
    %v2240 = vadd.f32 %v2238, %v2239
    %v2241 = vtanh.pop %v2240
    %v2242 = vmul.f32 %v2236, %v2241
    %2243 = vst [vmem:[#allocation5] sm:$0xff] %v2240
    %2244 = vst [vmem:[#allocation4] sm:$0xff] %v2242
    %s2245 = scalar_lea.vmem [#allocation2], 40
    %2246 = vst [vmem:[%s2245] sm:$0xff] %v2242
    %s2247 = smul.u32 6, 4
    %s2248 = smul.addr %s2247, 8
    %s2249 = scalar_lea.vmem [#allocation3], %s2248
    %v2250 = vld [vmem:[%s2249] sm:$0xff]
    %v2251 = vld [vmem:[%s2249 + $0x8] sm:$0xff]
    %v2252 = vld [vmem:[%s2249 + $0x10] sm:$0xff]
    %v2253 = vld [vmem:[%s2249 + $0x18] sm:$0xff]
    %v2254 = vld [vmem:[#allocation4] sm:$0xff]
    %v2255 = vpack.c.bf16 %v2254, %v2254
    %v2256 = vld [vmem:[#allocation7] sm:$0xff]
    %v2257 = vld [vmem:[#allocation7 + $0x8] sm:$0xff]
    %v2258 = vld [vmem:[#allocation7 + $0x10] sm:$0xff]
    %v2259 = vld [vmem:[#allocation7 + $0x18] sm:$0xff]
    %v2260 = vld [vmem:[#allocation7 + $0x20] sm:$0xff]
    %v2261 = vld [vmem:[#allocation7 + $0x28] sm:$0xff]
    %v2262 = vld [vmem:[#allocation7 + $0x30] sm:$0xff]
    %v2263 = vld [vmem:[#allocation7 + $0x38] sm:$0xff]
    %v2264 = vld [vmem:[#allocation7 + $0x40] sm:$0xff]
    %v2265 = vld [vmem:[#allocation7 + $0x48] sm:$0xff]
    %v2266 = vld [vmem:[#allocation7 + $0x50] sm:$0xff]
    %v2267 = vld [vmem:[#allocation7 + $0x58] sm:$0xff]
    %v2268 = vld [vmem:[#allocation7 + $0x60] sm:$0xff]
    %v2269 = vld [vmem:[#allocation7 + $0x68] sm:$0xff]
    %v2270 = vld [vmem:[#allocation7 + $0x70] sm:$0xff]
    %v2271 = vld [vmem:[#allocation7 + $0x78] sm:$0xff]
    %v2272 = vld [vmem:[#allocation7 + $0x80] sm:$0xff]
    %v2273 = vld [vmem:[#allocation7 + $0x88] sm:$0xff]
    %v2274 = vld [vmem:[#allocation7 + $0x90] sm:$0xff]
    %v2275 = vld [vmem:[#allocation7 + $0x98] sm:$0xff]
    %v2276 = vld [vmem:[#allocation7 + $0xa0] sm:$0xff]
    %v2277 = vld [vmem:[#allocation7 + $0xa8] sm:$0xff]
    %v2278 = vld [vmem:[#allocation7 + $0xb0] sm:$0xff]
    %v2279 = vld [vmem:[#allocation7 + $0xb8] sm:$0xff]
    %v2280 = vld [vmem:[#allocation7 + $0xc0] sm:$0xff]
    %v2281 = vld [vmem:[#allocation7 + $0xc8] sm:$0xff]
    %v2282 = vld [vmem:[#allocation7 + $0xd0] sm:$0xff]
    %v2283 = vld [vmem:[#allocation7 + $0xd8] sm:$0xff]
    %v2284 = vld [vmem:[#allocation7 + $0xe0] sm:$0xff]
    %v2285 = vld [vmem:[#allocation7 + $0xe8] sm:$0xff]
    %v2286 = vld [vmem:[#allocation7 + $0xf0] sm:$0xff]
    %v2287 = vld [vmem:[#allocation7 + $0xf8] sm:$0xff]
    %v2320 = vunpack.c.l.b16 %v2256
    %v2321 = vunpack.c.h.b16 %v2256
    %v2322 = vunpack.c.l.b16 %v2257
    %v2323 = vunpack.c.h.b16 %v2257
    %v2324 = vunpack.c.l.b16 %v2258
    %v2325 = vunpack.c.h.b16 %v2258
    %v2326 = vunpack.c.l.b16 %v2259
    %v2327 = vunpack.c.h.b16 %v2259
    %v2328 = vunpack.c.l.b16 %v2260
    %v2329 = vunpack.c.h.b16 %v2260
    %v2330 = vunpack.c.l.b16 %v2261
    %v2331 = vunpack.c.h.b16 %v2261
    %v2332 = vunpack.c.l.b16 %v2262
    %v2333 = vunpack.c.h.b16 %v2262
    %v2334 = vunpack.c.l.b16 %v2263
    %v2335 = vunpack.c.h.b16 %v2263
    %v2336 = vunpack.c.l.b16 %v2264
    %v2337 = vunpack.c.h.b16 %v2264
    %v2338 = vunpack.c.l.b16 %v2265
    %v2339 = vunpack.c.h.b16 %v2265
    %v2340 = vunpack.c.l.b16 %v2266
    %v2341 = vunpack.c.h.b16 %v2266
    %v2342 = vunpack.c.l.b16 %v2267
    %v2343 = vunpack.c.h.b16 %v2267
    %v2344 = vunpack.c.l.b16 %v2268
    %v2345 = vunpack.c.h.b16 %v2268
    %v2346 = vunpack.c.l.b16 %v2269
    %v2347 = vunpack.c.h.b16 %v2269
    %v2348 = vunpack.c.l.b16 %v2270
    %v2349 = vunpack.c.h.b16 %v2270
    %v2350 = vunpack.c.l.b16 %v2271
    %v2351 = vunpack.c.h.b16 %v2271
    %v2352 = vunpack.c.l.b16 %v2272
    %v2353 = vunpack.c.h.b16 %v2272
    %v2354 = vunpack.c.l.b16 %v2273
    %v2355 = vunpack.c.h.b16 %v2273
    %v2356 = vunpack.c.l.b16 %v2274
    %v2357 = vunpack.c.h.b16 %v2274
    %v2358 = vunpack.c.l.b16 %v2275
    %v2359 = vunpack.c.h.b16 %v2275
    %v2360 = vunpack.c.l.b16 %v2276
    %v2361 = vunpack.c.h.b16 %v2276
    %v2362 = vunpack.c.l.b16 %v2277
    %v2363 = vunpack.c.h.b16 %v2277
    %v2364 = vunpack.c.l.b16 %v2278
    %v2365 = vunpack.c.h.b16 %v2278
    %v2366 = vunpack.c.l.b16 %v2279
    %v2367 = vunpack.c.h.b16 %v2279
    %v2368 = vunpack.c.l.b16 %v2280
    %v2369 = vunpack.c.h.b16 %v2280
    %v2370 = vunpack.c.l.b16 %v2281
    %v2371 = vunpack.c.h.b16 %v2281
    %v2372 = vunpack.c.l.b16 %v2282
    %v2373 = vunpack.c.h.b16 %v2282
    %v2374 = vunpack.c.l.b16 %v2283
    %v2375 = vunpack.c.h.b16 %v2283
    %v2376 = vunpack.c.l.b16 %v2284
    %v2377 = vunpack.c.h.b16 %v2284
    %v2378 = vunpack.c.l.b16 %v2285
    %v2379 = vunpack.c.h.b16 %v2285
    %v2380 = vunpack.c.l.b16 %v2286
    %v2381 = vunpack.c.h.b16 %v2286
    %v2382 = vunpack.c.l.b16 %v2287
    %v2383 = vunpack.c.h.b16 %v2287
    %v2384 = vpack.c.b16 %v2324, %v2320
    %v2385 = vpack.c.b16 %v2325, %v2321
    %v2386 = vpack.c.b16 %v2326, %v2322
    %v2387 = vpack.c.b16 %v2327, %v2323
    %v2388 = vpack.c.b16 %v2332, %v2328
    %v2389 = vpack.c.b16 %v2333, %v2329
    %v2390 = vpack.c.b16 %v2334, %v2330
    %v2391 = vpack.c.b16 %v2335, %v2331
    %v2392 = vpack.c.b16 %v2340, %v2336
    %v2393 = vpack.c.b16 %v2341, %v2337
    %v2394 = vpack.c.b16 %v2342, %v2338
    %v2395 = vpack.c.b16 %v2343, %v2339
    %v2396 = vpack.c.b16 %v2348, %v2344
    %v2397 = vpack.c.b16 %v2349, %v2345
    %v2398 = vpack.c.b16 %v2350, %v2346
    %v2399 = vpack.c.b16 %v2351, %v2347
    %v2400 = vpack.c.b16 %v2356, %v2352
    %v2401 = vpack.c.b16 %v2357, %v2353
    %v2402 = vpack.c.b16 %v2358, %v2354
    %v2403 = vpack.c.b16 %v2359, %v2355
    %v2404 = vpack.c.b16 %v2364, %v2360
    %v2405 = vpack.c.b16 %v2365, %v2361
    %v2406 = vpack.c.b16 %v2366, %v2362
    %v2407 = vpack.c.b16 %v2367, %v2363
    %v2408 = vpack.c.b16 %v2372, %v2368
    %v2409 = vpack.c.b16 %v2373, %v2369
    %v2410 = vpack.c.b16 %v2374, %v2370
    %v2411 = vpack.c.b16 %v2375, %v2371
    %v2412 = vpack.c.b16 %v2380, %v2376
    %v2413 = vpack.c.b16 %v2381, %v2377
    %v2414 = vpack.c.b16 %v2382, %v2378
    %v2415 = vpack.c.b16 %v2383, %v2379
    %2448 = vmatpush.bf16.msra.mxu0 %v2412
    %2449 = vmatpush.bf16.msra.mxu0 %v2408
    %2450 = vmatpush.bf16.msra.mxu0 %v2404
    %2451 = vmatpush.bf16.msra.mxu0 %v2400
    %2452 = vmatpush.bf16.msra.mxu0 %v2396
    %2453 = vmatpush.bf16.msra.mxu0 %v2392
    %2454 = vmatpush.bf16.msra.mxu0 %v2388
    %2455 = vmatpush.bf16.msra.mxu0 %v2384
    %2456 = vmatmul.bf16.gmra.mxu0 %v2255
    %v2457 = vpop.f32.mrf.mxu0
    %v2458 = vadd.f32 0.0, %v2457
    %v2459 = vpop.f32.mrf.mxu0
    %2460 = vdwg.mxu0
    %2461 = vmatpush.bf16.msra.mxu0 %v2413
    %2462 = vmatpush.bf16.msra.mxu0 %v2409
    %2463 = vmatpush.bf16.msra.mxu0 %v2405
    %2464 = vmatpush.bf16.msra.mxu0 %v2401
    %2465 = vmatpush.bf16.msra.mxu0 %v2397
    %2466 = vmatpush.bf16.msra.mxu0 %v2393
    %2467 = vmatpush.bf16.msra.mxu0 %v2389
    %2468 = vmatpush.bf16.msra.mxu0 %v2385
    %2469 = vmatmul.bf16.gmra.mxu0 %v2255
    %v2470 = vpop.f32.mrf.mxu0
    %v2471 = vadd.f32 0.0, %v2470
    %v2472 = vpop.f32.mrf.mxu0
    %2473 = vdwg.mxu0
    %2474 = vmatpush.bf16.msra.mxu0 %v2414
    %2475 = vmatpush.bf16.msra.mxu0 %v2410
    %2476 = vmatpush.bf16.msra.mxu0 %v2406
    %2477 = vmatpush.bf16.msra.mxu0 %v2402
    %2478 = vmatpush.bf16.msra.mxu0 %v2398
    %2479 = vmatpush.bf16.msra.mxu0 %v2394
    %2480 = vmatpush.bf16.msra.mxu0 %v2390
    %2481 = vmatpush.bf16.msra.mxu0 %v2386
    %2482 = vmatmul.bf16.gmra.mxu0 %v2255
    %v2483 = vpop.f32.mrf.mxu0
    %v2484 = vadd.f32 0.0, %v2483
    %v2485 = vpop.f32.mrf.mxu0
    %2486 = vdwg.mxu0
    %2487 = vmatpush.bf16.msra.mxu0 %v2415
    %2488 = vmatpush.bf16.msra.mxu0 %v2411
    %2489 = vmatpush.bf16.msra.mxu0 %v2407
    %2490 = vmatpush.bf16.msra.mxu0 %v2403
    %2491 = vmatpush.bf16.msra.mxu0 %v2399
    %2492 = vmatpush.bf16.msra.mxu0 %v2395
    %2493 = vmatpush.bf16.msra.mxu0 %v2391
    %2494 = vmatpush.bf16.msra.mxu0 %v2387
    %2495 = vmatmul.bf16.gmra.mxu0 %v2255
    %v2496 = vpop.f32.mrf.mxu0
    %v2497 = vadd.f32 0.0, %v2496
    %v2498 = vpop.f32.mrf.mxu0
    %2499 = vdwg.mxu0
    %v2500 = vadd.f32 %v2250, %v2458
    %v2501 = vadd.f32 %v2251, %v2471
    %v2502 = vadd.f32 %v2252, %v2484
    %v2503 = vadd.f32 %v2253, %v2497
    %v2504 = vxor.u32 %v2500, 2147483648
    %v2505 = vmul.f32 %v2504, 1.442695
    %v2506 = vpow.pop %v2505
    %v2507 = vadd.f32 %v2506, 1.0
    %v2508 = vrcp.pop %v2507
    %v2509 = vmul.f32 %v2507, %v2508
    %v2510 = vsub.f32 1.0, %v2509
    %v2511 = vmul.f32 %v2508, %v2510
    %v2512 = vadd.f32 %v2508, %v2511
    %vm2513 = vweird.f32 %v2507
    %vm2514 = vweird.f32 %v2508
    %vm2515 = vmor %vm2513, %vm2514
    %v2516 = vsel %vm2515, %v2508, %v2512
    %v2517 = vand.u32 2147483647, %v2507
    %vm2518 = vcmp.eq.f32.partialorder %v2517, 8.507059e+37
    %v2519 = vand.u32 %v2507, 2147483648
    %v2520 = vor.u32 1.1754944e-38, %v2519
    %v2521 = vsel %vm2518, %v2520, %v2516
    %v2522 = vmul.f32 1.0, %v2521
    %v2523 = vxor.u32 %v2501, 2147483648
    %v2524 = vmul.f32 %v2523, 1.442695
    %v2525 = vpow.pop %v2524
    %v2526 = vadd.f32 %v2525, 1.0
    %v2527 = vrcp.pop %v2526
    %v2528 = vmul.f32 %v2526, %v2527
    %v2529 = vsub.f32 1.0, %v2528
    %v2530 = vmul.f32 %v2527, %v2529
    %v2531 = vadd.f32 %v2527, %v2530
    %vm2532 = vweird.f32 %v2526
    %vm2533 = vweird.f32 %v2527
    %vm2534 = vmor %vm2532, %vm2533
    %v2535 = vsel %vm2534, %v2527, %v2531
    %v2536 = vand.u32 2147483647, %v2526
    %vm2537 = vcmp.eq.f32.partialorder %v2536, 8.507059e+37
    %v2538 = vand.u32 %v2526, 2147483648
    %v2539 = vor.u32 1.1754944e-38, %v2538
    %v2540 = vsel %vm2537, %v2539, %v2535
    %v2541 = vmul.f32 1.0, %v2540
    %v2542 = vtanh.pop %v2502
    %v2543 = vxor.u32 %v2503, 2147483648
    %v2544 = vmul.f32 %v2543, 1.442695
    %v2545 = vpow.pop %v2544
    %v2546 = vadd.f32 %v2545, 1.0
    %v2547 = vrcp.pop %v2546
    %v2548 = vmul.f32 %v2546, %v2547
    %v2549 = vsub.f32 1.0, %v2548
    %v2550 = vmul.f32 %v2547, %v2549
    %v2551 = vadd.f32 %v2547, %v2550
    %vm2552 = vweird.f32 %v2546
    %vm2553 = vweird.f32 %v2547
    %vm2554 = vmor %vm2552, %vm2553
    %v2555 = vsel %vm2554, %v2547, %v2551
    %v2556 = vand.u32 2147483647, %v2546
    %vm2557 = vcmp.eq.f32.partialorder %v2556, 8.507059e+37
    %v2558 = vand.u32 %v2546, 2147483648
    %v2559 = vor.u32 1.1754944e-38, %v2558
    %v2560 = vsel %vm2557, %v2559, %v2555
    %v2561 = vmul.f32 1.0, %v2560
    %v2562 = vld [vmem:[#allocation5] sm:$0xff]
    %v2563 = vmul.f32 %v2541, %v2562
    %v2564 = vmul.f32 %v2522, %v2542
    %v2565 = vadd.f32 %v2563, %v2564
    %v2566 = vtanh.pop %v2565
    %v2567 = vmul.f32 %v2561, %v2566
    %2568 = vst [vmem:[#allocation5] sm:$0xff] %v2565
    %2569 = vst [vmem:[#allocation4] sm:$0xff] %v2567
    %s2570 = scalar_lea.vmem [#allocation2], 48
    %2571 = vst [vmem:[%s2570] sm:$0xff] %v2567
    %s2572 = smul.u32 7, 4
    %s2573 = smul.addr %s2572, 8
    %s2574 = scalar_lea.vmem [#allocation3], %s2573
    %v2575 = vld [vmem:[%s2574] sm:$0xff]
    %v2576 = vld [vmem:[%s2574 + $0x8] sm:$0xff]
    %v2577 = vld [vmem:[%s2574 + $0x10] sm:$0xff]
    %v2578 = vld [vmem:[%s2574 + $0x18] sm:$0xff]
    %v2579 = vld [vmem:[#allocation4] sm:$0xff]
    %v2580 = vpack.c.bf16 %v2579, %v2579
    %v2581 = vld [vmem:[#allocation7] sm:$0xff]
    %v2582 = vld [vmem:[#allocation7 + $0x8] sm:$0xff]
    %v2583 = vld [vmem:[#allocation7 + $0x10] sm:$0xff]
    %v2584 = vld [vmem:[#allocation7 + $0x18] sm:$0xff]
    %v2585 = vld [vmem:[#allocation7 + $0x20] sm:$0xff]
    %v2586 = vld [vmem:[#allocation7 + $0x28] sm:$0xff]
    %v2587 = vld [vmem:[#allocation7 + $0x30] sm:$0xff]
    %v2588 = vld [vmem:[#allocation7 + $0x38] sm:$0xff]
    %v2589 = vld [vmem:[#allocation7 + $0x40] sm:$0xff]
    %v2590 = vld [vmem:[#allocation7 + $0x48] sm:$0xff]
    %v2591 = vld [vmem:[#allocation7 + $0x50] sm:$0xff]
    %v2592 = vld [vmem:[#allocation7 + $0x58] sm:$0xff]
    %v2593 = vld [vmem:[#allocation7 + $0x60] sm:$0xff]
    %v2594 = vld [vmem:[#allocation7 + $0x68] sm:$0xff]
    %v2595 = vld [vmem:[#allocation7 + $0x70] sm:$0xff]
    %v2596 = vld [vmem:[#allocation7 + $0x78] sm:$0xff]
    %v2597 = vld [vmem:[#allocation7 + $0x80] sm:$0xff]
    %v2598 = vld [vmem:[#allocation7 + $0x88] sm:$0xff]
    %v2599 = vld [vmem:[#allocation7 + $0x90] sm:$0xff]
    %v2600 = vld [vmem:[#allocation7 + $0x98] sm:$0xff]
    %v2601 = vld [vmem:[#allocation7 + $0xa0] sm:$0xff]
    %v2602 = vld [vmem:[#allocation7 + $0xa8] sm:$0xff]
    %v2603 = vld [vmem:[#allocation7 + $0xb0] sm:$0xff]
    %v2604 = vld [vmem:[#allocation7 + $0xb8] sm:$0xff]
    %v2605 = vld [vmem:[#allocation7 + $0xc0] sm:$0xff]
    %v2606 = vld [vmem:[#allocation7 + $0xc8] sm:$0xff]
    %v2607 = vld [vmem:[#allocation7 + $0xd0] sm:$0xff]
    %v2608 = vld [vmem:[#allocation7 + $0xd8] sm:$0xff]
    %v2609 = vld [vmem:[#allocation7 + $0xe0] sm:$0xff]
    %v2610 = vld [vmem:[#allocation7 + $0xe8] sm:$0xff]
    %v2611 = vld [vmem:[#allocation7 + $0xf0] sm:$0xff]
    %v2612 = vld [vmem:[#allocation7 + $0xf8] sm:$0xff]
    %v2645 = vunpack.c.l.b16 %v2581
    %v2646 = vunpack.c.h.b16 %v2581
    %v2647 = vunpack.c.l.b16 %v2582
    %v2648 = vunpack.c.h.b16 %v2582
    %v2649 = vunpack.c.l.b16 %v2583
    %v2650 = vunpack.c.h.b16 %v2583
    %v2651 = vunpack.c.l.b16 %v2584
    %v2652 = vunpack.c.h.b16 %v2584
    %v2653 = vunpack.c.l.b16 %v2585
    %v2654 = vunpack.c.h.b16 %v2585
    %v2655 = vunpack.c.l.b16 %v2586
    %v2656 = vunpack.c.h.b16 %v2586
    %v2657 = vunpack.c.l.b16 %v2587
    %v2658 = vunpack.c.h.b16 %v2587
    %v2659 = vunpack.c.l.b16 %v2588
    %v2660 = vunpack.c.h.b16 %v2588
    %v2661 = vunpack.c.l.b16 %v2589
    %v2662 = vunpack.c.h.b16 %v2589
    %v2663 = vunpack.c.l.b16 %v2590
    %v2664 = vunpack.c.h.b16 %v2590
    %v2665 = vunpack.c.l.b16 %v2591
    %v2666 = vunpack.c.h.b16 %v2591
    %v2667 = vunpack.c.l.b16 %v2592
    %v2668 = vunpack.c.h.b16 %v2592
    %v2669 = vunpack.c.l.b16 %v2593
    %v2670 = vunpack.c.h.b16 %v2593
    %v2671 = vunpack.c.l.b16 %v2594
    %v2672 = vunpack.c.h.b16 %v2594
    %v2673 = vunpack.c.l.b16 %v2595
    %v2674 = vunpack.c.h.b16 %v2595
    %v2675 = vunpack.c.l.b16 %v2596
    %v2676 = vunpack.c.h.b16 %v2596
    %v2677 = vunpack.c.l.b16 %v2597
    %v2678 = vunpack.c.h.b16 %v2597
    %v2679 = vunpack.c.l.b16 %v2598
    %v2680 = vunpack.c.h.b16 %v2598
    %v2681 = vunpack.c.l.b16 %v2599
    %v2682 = vunpack.c.h.b16 %v2599
    %v2683 = vunpack.c.l.b16 %v2600
    %v2684 = vunpack.c.h.b16 %v2600
    %v2685 = vunpack.c.l.b16 %v2601
    %v2686 = vunpack.c.h.b16 %v2601
    %v2687 = vunpack.c.l.b16 %v2602
    %v2688 = vunpack.c.h.b16 %v2602
    %v2689 = vunpack.c.l.b16 %v2603
    %v2690 = vunpack.c.h.b16 %v2603
    %v2691 = vunpack.c.l.b16 %v2604
    %v2692 = vunpack.c.h.b16 %v2604
    %v2693 = vunpack.c.l.b16 %v2605
    %v2694 = vunpack.c.h.b16 %v2605
    %v2695 = vunpack.c.l.b16 %v2606
    %v2696 = vunpack.c.h.b16 %v2606
    %v2697 = vunpack.c.l.b16 %v2607
    %v2698 = vunpack.c.h.b16 %v2607
    %v2699 = vunpack.c.l.b16 %v2608
    %v2700 = vunpack.c.h.b16 %v2608
    %v2701 = vunpack.c.l.b16 %v2609
    %v2702 = vunpack.c.h.b16 %v2609
    %v2703 = vunpack.c.l.b16 %v2610
    %v2704 = vunpack.c.h.b16 %v2610
    %v2705 = vunpack.c.l.b16 %v2611
    %v2706 = vunpack.c.h.b16 %v2611
    %v2707 = vunpack.c.l.b16 %v2612
    %v2708 = vunpack.c.h.b16 %v2612
    %v2709 = vpack.c.b16 %v2649, %v2645
    %v2710 = vpack.c.b16 %v2650, %v2646
    %v2711 = vpack.c.b16 %v2651, %v2647
    %v2712 = vpack.c.b16 %v2652, %v2648
    %v2713 = vpack.c.b16 %v2657, %v2653
    %v2714 = vpack.c.b16 %v2658, %v2654
    %v2715 = vpack.c.b16 %v2659, %v2655
    %v2716 = vpack.c.b16 %v2660, %v2656
    %v2717 = vpack.c.b16 %v2665, %v2661
    %v2718 = vpack.c.b16 %v2666, %v2662
    %v2719 = vpack.c.b16 %v2667, %v2663
    %v2720 = vpack.c.b16 %v2668, %v2664
    %v2721 = vpack.c.b16 %v2673, %v2669
    %v2722 = vpack.c.b16 %v2674, %v2670
    %v2723 = vpack.c.b16 %v2675, %v2671
    %v2724 = vpack.c.b16 %v2676, %v2672
    %v2725 = vpack.c.b16 %v2681, %v2677
    %v2726 = vpack.c.b16 %v2682, %v2678
    %v2727 = vpack.c.b16 %v2683, %v2679
    %v2728 = vpack.c.b16 %v2684, %v2680
    %v2729 = vpack.c.b16 %v2689, %v2685
    %v2730 = vpack.c.b16 %v2690, %v2686
    %v2731 = vpack.c.b16 %v2691, %v2687
    %v2732 = vpack.c.b16 %v2692, %v2688
    %v2733 = vpack.c.b16 %v2697, %v2693
    %v2734 = vpack.c.b16 %v2698, %v2694
    %v2735 = vpack.c.b16 %v2699, %v2695
    %v2736 = vpack.c.b16 %v2700, %v2696
    %v2737 = vpack.c.b16 %v2705, %v2701
    %v2738 = vpack.c.b16 %v2706, %v2702
    %v2739 = vpack.c.b16 %v2707, %v2703
    %v2740 = vpack.c.b16 %v2708, %v2704
    %2773 = vmatpush.bf16.msra.mxu0 %v2737
    %2774 = vmatpush.bf16.msra.mxu0 %v2733
    %2775 = vmatpush.bf16.msra.mxu0 %v2729
    %2776 = vmatpush.bf16.msra.mxu0 %v2725
    %2777 = vmatpush.bf16.msra.mxu0 %v2721
    %2778 = vmatpush.bf16.msra.mxu0 %v2717
    %2779 = vmatpush.bf16.msra.mxu0 %v2713
    %2780 = vmatpush.bf16.msra.mxu0 %v2709
    %2781 = vmatmul.bf16.gmra.mxu0 %v2580
    %v2782 = vpop.f32.mrf.mxu0
    %v2783 = vadd.f32 0.0, %v2782
    %v2784 = vpop.f32.mrf.mxu0
    %2785 = vdwg.mxu0
    %2786 = vmatpush.bf16.msra.mxu0 %v2738
    %2787 = vmatpush.bf16.msra.mxu0 %v2734
    %2788 = vmatpush.bf16.msra.mxu0 %v2730
    %2789 = vmatpush.bf16.msra.mxu0 %v2726
    %2790 = vmatpush.bf16.msra.mxu0 %v2722
    %2791 = vmatpush.bf16.msra.mxu0 %v2718
    %2792 = vmatpush.bf16.msra.mxu0 %v2714
    %2793 = vmatpush.bf16.msra.mxu0 %v2710
    %2794 = vmatmul.bf16.gmra.mxu0 %v2580
    %v2795 = vpop.f32.mrf.mxu0
    %v2796 = vadd.f32 0.0, %v2795
    %v2797 = vpop.f32.mrf.mxu0
    %2798 = vdwg.mxu0
    %2799 = vmatpush.bf16.msra.mxu0 %v2739
    %2800 = vmatpush.bf16.msra.mxu0 %v2735
    %2801 = vmatpush.bf16.msra.mxu0 %v2731
    %2802 = vmatpush.bf16.msra.mxu0 %v2727
    %2803 = vmatpush.bf16.msra.mxu0 %v2723
    %2804 = vmatpush.bf16.msra.mxu0 %v2719
    %2805 = vmatpush.bf16.msra.mxu0 %v2715
    %2806 = vmatpush.bf16.msra.mxu0 %v2711
    %2807 = vmatmul.bf16.gmra.mxu0 %v2580
    %v2808 = vpop.f32.mrf.mxu0
    %v2809 = vadd.f32 0.0, %v2808
    %v2810 = vpop.f32.mrf.mxu0
    %2811 = vdwg.mxu0
    %2812 = vmatpush.bf16.msra.mxu0 %v2740
    %2813 = vmatpush.bf16.msra.mxu0 %v2736
    %2814 = vmatpush.bf16.msra.mxu0 %v2732
    %2815 = vmatpush.bf16.msra.mxu0 %v2728
    %2816 = vmatpush.bf16.msra.mxu0 %v2724
    %2817 = vmatpush.bf16.msra.mxu0 %v2720
    %2818 = vmatpush.bf16.msra.mxu0 %v2716
    %2819 = vmatpush.bf16.msra.mxu0 %v2712
    %2820 = vmatmul.bf16.gmra.mxu0 %v2580
    %v2821 = vpop.f32.mrf.mxu0
    %v2822 = vadd.f32 0.0, %v2821
    %v2823 = vpop.f32.mrf.mxu0
    %2824 = vdwg.mxu0
    %v2825 = vadd.f32 %v2575, %v2783
    %v2826 = vadd.f32 %v2576, %v2796
    %v2827 = vadd.f32 %v2577, %v2809
    %v2828 = vadd.f32 %v2578, %v2822
    %v2829 = vxor.u32 %v2825, 2147483648
    %v2830 = vmul.f32 %v2829, 1.442695
    %v2831 = vpow.pop %v2830
    %v2832 = vadd.f32 %v2831, 1.0
    %v2833 = vrcp.pop %v2832
    %v2834 = vmul.f32 %v2832, %v2833
    %v2835 = vsub.f32 1.0, %v2834
    %v2836 = vmul.f32 %v2833, %v2835
    %v2837 = vadd.f32 %v2833, %v2836
    %vm2838 = vweird.f32 %v2832
    %vm2839 = vweird.f32 %v2833
    %vm2840 = vmor %vm2838, %vm2839
    %v2841 = vsel %vm2840, %v2833, %v2837
    %v2842 = vand.u32 2147483647, %v2832
    %vm2843 = vcmp.eq.f32.partialorder %v2842, 8.507059e+37
    %v2844 = vand.u32 %v2832, 2147483648
    %v2845 = vor.u32 1.1754944e-38, %v2844
    %v2846 = vsel %vm2843, %v2845, %v2841
    %v2847 = vmul.f32 1.0, %v2846
    %v2848 = vxor.u32 %v2826, 2147483648
    %v2849 = vmul.f32 %v2848, 1.442695
    %v2850 = vpow.pop %v2849
    %v2851 = vadd.f32 %v2850, 1.0
    %v2852 = vrcp.pop %v2851
    %v2853 = vmul.f32 %v2851, %v2852
    %v2854 = vsub.f32 1.0, %v2853
    %v2855 = vmul.f32 %v2852, %v2854
    %v2856 = vadd.f32 %v2852, %v2855
    %vm2857 = vweird.f32 %v2851
    %vm2858 = vweird.f32 %v2852
    %vm2859 = vmor %vm2857, %vm2858
    %v2860 = vsel %vm2859, %v2852, %v2856
    %v2861 = vand.u32 2147483647, %v2851
    %vm2862 = vcmp.eq.f32.partialorder %v2861, 8.507059e+37
    %v2863 = vand.u32 %v2851, 2147483648
    %v2864 = vor.u32 1.1754944e-38, %v2863
    %v2865 = vsel %vm2862, %v2864, %v2860
    %v2866 = vmul.f32 1.0, %v2865
    %v2867 = vtanh.pop %v2827
    %v2868 = vxor.u32 %v2828, 2147483648
    %v2869 = vmul.f32 %v2868, 1.442695
    %v2870 = vpow.pop %v2869
    %v2871 = vadd.f32 %v2870, 1.0
    %v2872 = vrcp.pop %v2871
    %v2873 = vmul.f32 %v2871, %v2872
    %v2874 = vsub.f32 1.0, %v2873
    %v2875 = vmul.f32 %v2872, %v2874
    %v2876 = vadd.f32 %v2872, %v2875
    %vm2877 = vweird.f32 %v2871
    %vm2878 = vweird.f32 %v2872
    %vm2879 = vmor %vm2877, %vm2878
    %v2880 = vsel %vm2879, %v2872, %v2876
    %v2881 = vand.u32 2147483647, %v2871
    %vm2882 = vcmp.eq.f32.partialorder %v2881, 8.507059e+37
    %v2883 = vand.u32 %v2871, 2147483648
    %v2884 = vor.u32 1.1754944e-38, %v2883
    %v2885 = vsel %vm2882, %v2884, %v2880
    %v2886 = vmul.f32 1.0, %v2885
    %v2887 = vld [vmem:[#allocation5] sm:$0xff]
    %v2888 = vmul.f32 %v2866, %v2887
    %v2889 = vmul.f32 %v2847, %v2867
    %v2890 = vadd.f32 %v2888, %v2889
    %v2891 = vtanh.pop %v2890
    %v2892 = vmul.f32 %v2886, %v2891
    %2893 = vst [vmem:[#allocation5] sm:$0xff] %v2890
    %2894 = vst [vmem:[#allocation4] sm:$0xff] %v2892
    %s2895 = scalar_lea.vmem [#allocation2], 56
    %2896 = vst [vmem:[%s2895] sm:$0xff] %v2892
    %v2897 = vld [vmem:[#allocation2] sm:$0xff]
    %v2898 = vld [vmem:[#allocation2 + $0x8] sm:$0xff]
    %v2899 = vld [vmem:[#allocation2 + $0x10] sm:$0xff]
    %v2900 = vld [vmem:[#allocation2 + $0x18] sm:$0xff]
    %v2901 = vld [vmem:[#allocation2 + $0x20] sm:$0xff]
    %v2902 = vld [vmem:[#allocation2 + $0x28] sm:$0xff]
    %v2903 = vld [vmem:[#allocation2 + $0x30] sm:$0xff]
    %v2904 = vld [vmem:[#allocation2 + $0x38] sm:$0xff]
    %v2905 = vpack.c.bf16 %v2898, %v2897
    %v2906 = vpack.c.bf16 %v2900, %v2899
    %v2907 = vpack.c.bf16 %v2902, %v2901
    %v2908 = vpack.c.bf16 %v2904, %v2903
    %v2909 = vld [vmem:[#allocation9] sm:$0xff]
    %v2910 = vld [vmem:[#allocation9 + $0x8] sm:$0xff]
    %v2911 = vld [vmem:[#allocation9 + $0x10] sm:$0xff]
    %v2912 = vld [vmem:[#allocation9 + $0x18] sm:$0xff]
    %v2913 = vld [vmem:[#allocation9 + $0x20] sm:$0xff]
    %v2914 = vld [vmem:[#allocation9 + $0x28] sm:$0xff]
    %v2915 = vld [vmem:[#allocation9 + $0x30] sm:$0xff]
    %v2916 = vld [vmem:[#allocation9 + $0x38] sm:$0xff]
    %v2917 = vld [vmem:[#allocation9 + $0x40] sm:$0xff]
    %v2918 = vld [vmem:[#allocation9 + $0x48] sm:$0xff]
    %v2919 = vld [vmem:[#allocation9 + $0x50] sm:$0xff]
    %v2920 = vld [vmem:[#allocation9 + $0x58] sm:$0xff]
    %v2921 = vld [vmem:[#allocation9 + $0x60] sm:$0xff]
    %v2922 = vld [vmem:[#allocation9 + $0x68] sm:$0xff]
    %v2923 = vld [vmem:[#allocation9 + $0x70] sm:$0xff]
    %v2924 = vld [vmem:[#allocation9 + $0x78] sm:$0xff]
    %v2925 = vld [vmem:[#allocation9 + $0x80] sm:$0xff]
    %v2926 = vld [vmem:[#allocation9 + $0x88] sm:$0xff]
    %v2927 = vld [vmem:[#allocation9 + $0x90] sm:$0xff]
    %v2928 = vld [vmem:[#allocation9 + $0x98] sm:$0xff]
    %v2929 = vld [vmem:[#allocation9 + $0xa0] sm:$0xff]
    %v2930 = vld [vmem:[#allocation9 + $0xa8] sm:$0xff]
    %v2931 = vld [vmem:[#allocation9 + $0xb0] sm:$0xff]
    %v2932 = vld [vmem:[#allocation9 + $0xb8] sm:$0xff]
    %v2933 = vld [vmem:[#allocation9 + $0xc0] sm:$0xff]
    %v2934 = vld [vmem:[#allocation9 + $0xc8] sm:$0xff]
    %v2935 = vld [vmem:[#allocation9 + $0xd0] sm:$0xff]
    %v2936 = vld [vmem:[#allocation9 + $0xd8] sm:$0xff]
    %v2937 = vld [vmem:[#allocation9 + $0xe0] sm:$0xff]
    %v2938 = vld [vmem:[#allocation9 + $0xe8] sm:$0xff]
    %v2939 = vld [vmem:[#allocation9 + $0xf0] sm:$0xff]
    %v2940 = vld [vmem:[#allocation9 + $0xf8] sm:$0xff]
    %v2941 = vld [vmem:[%s6] sm:$0xf]
    %v2943 = vperm.slane %v2941, 0
    %v2944 = vperm.slane %v2941, 1
    %v2945 = vperm.slane %v2941, 2
    %v2946 = vperm.slane %v2941, 3
    %v2983 = vunpack.c.l.b16 %v2909
    %v2984 = vunpack.c.h.b16 %v2909
    %v2985 = vunpack.c.l.b16 %v2910
    %v2986 = vunpack.c.h.b16 %v2910
    %v2987 = vunpack.c.l.b16 %v2911
    %v2988 = vunpack.c.h.b16 %v2911
    %v2989 = vunpack.c.l.b16 %v2912
    %v2990 = vunpack.c.h.b16 %v2912
    %v2991 = vunpack.c.l.b16 %v2913
    %v2992 = vunpack.c.h.b16 %v2913
    %v2993 = vunpack.c.l.b16 %v2914
    %v2994 = vunpack.c.h.b16 %v2914
    %v2995 = vunpack.c.l.b16 %v2915
    %v2996 = vunpack.c.h.b16 %v2915
    %v2997 = vunpack.c.l.b16 %v2916
    %v2998 = vunpack.c.h.b16 %v2916
    %v2999 = vunpack.c.l.b16 %v2917
    %v3000 = vunpack.c.h.b16 %v2917
    %v3001 = vunpack.c.l.b16 %v2918
    %v3002 = vunpack.c.h.b16 %v2918
    %v3003 = vunpack.c.l.b16 %v2919
    %v3004 = vunpack.c.h.b16 %v2919
    %v3005 = vunpack.c.l.b16 %v2920
    %v3006 = vunpack.c.h.b16 %v2920
    %v3007 = vunpack.c.l.b16 %v2921
    %v3008 = vunpack.c.h.b16 %v2921
    %v3009 = vunpack.c.l.b16 %v2922
    %v3010 = vunpack.c.h.b16 %v2922
    %v3011 = vunpack.c.l.b16 %v2923
    %v3012 = vunpack.c.h.b16 %v2923
    %v3013 = vunpack.c.l.b16 %v2924
    %v3014 = vunpack.c.h.b16 %v2924
    %v3015 = vunpack.c.l.b16 %v2925
    %v3016 = vunpack.c.h.b16 %v2925
    %v3017 = vunpack.c.l.b16 %v2926
    %v3018 = vunpack.c.h.b16 %v2926
    %v3019 = vunpack.c.l.b16 %v2927
    %v3020 = vunpack.c.h.b16 %v2927
    %v3021 = vunpack.c.l.b16 %v2928
    %v3022 = vunpack.c.h.b16 %v2928
    %v3023 = vunpack.c.l.b16 %v2929
    %v3024 = vunpack.c.h.b16 %v2929
    %v3025 = vunpack.c.l.b16 %v2930
    %v3026 = vunpack.c.h.b16 %v2930
    %v3027 = vunpack.c.l.b16 %v2931
    %v3028 = vunpack.c.h.b16 %v2931
    %v3029 = vunpack.c.l.b16 %v2932
    %v3030 = vunpack.c.h.b16 %v2932
    %v3031 = vunpack.c.l.b16 %v2933
    %v3032 = vunpack.c.h.b16 %v2933
    %v3033 = vunpack.c.l.b16 %v2934
    %v3034 = vunpack.c.h.b16 %v2934
    %v3035 = vunpack.c.l.b16 %v2935
    %v3036 = vunpack.c.h.b16 %v2935
    %v3037 = vunpack.c.l.b16 %v2936
    %v3038 = vunpack.c.h.b16 %v2936
    %v3039 = vunpack.c.l.b16 %v2937
    %v3040 = vunpack.c.h.b16 %v2937
    %v3041 = vunpack.c.l.b16 %v2938
    %v3042 = vunpack.c.h.b16 %v2938
    %v3043 = vunpack.c.l.b16 %v2939
    %v3044 = vunpack.c.h.b16 %v2939
    %v3045 = vunpack.c.l.b16 %v2940
    %v3046 = vunpack.c.h.b16 %v2940
    %v3047 = vpack.c.b16 %v2987, %v2983
    %v3048 = vpack.c.b16 %v2988, %v2984
    %v3049 = vpack.c.b16 %v2989, %v2985
    %v3050 = vpack.c.b16 %v2990, %v2986
    %v3051 = vpack.c.b16 %v2995, %v2991
    %v3052 = vpack.c.b16 %v2996, %v2992
    %v3053 = vpack.c.b16 %v2997, %v2993
    %v3054 = vpack.c.b16 %v2998, %v2994
    %v3055 = vpack.c.b16 %v3003, %v2999
    %v3056 = vpack.c.b16 %v3004, %v3000
    %v3057 = vpack.c.b16 %v3005, %v3001
    %v3058 = vpack.c.b16 %v3006, %v3002
    %v3059 = vpack.c.b16 %v3011, %v3007
    %v3060 = vpack.c.b16 %v3012, %v3008
    %v3061 = vpack.c.b16 %v3013, %v3009
    %v3062 = vpack.c.b16 %v3014, %v3010
    %v3063 = vpack.c.b16 %v3019, %v3015
    %v3064 = vpack.c.b16 %v3020, %v3016
    %v3065 = vpack.c.b16 %v3021, %v3017
    %v3066 = vpack.c.b16 %v3022, %v3018
    %v3067 = vpack.c.b16 %v3027, %v3023
    %v3068 = vpack.c.b16 %v3028, %v3024
    %v3069 = vpack.c.b16 %v3029, %v3025
    %v3070 = vpack.c.b16 %v3030, %v3026
    %v3071 = vpack.c.b16 %v3035, %v3031
    %v3072 = vpack.c.b16 %v3036, %v3032
    %v3073 = vpack.c.b16 %v3037, %v3033
    %v3074 = vpack.c.b16 %v3038, %v3034
    %v3075 = vpack.c.b16 %v3043, %v3039
    %v3076 = vpack.c.b16 %v3044, %v3040
    %v3077 = vpack.c.b16 %v3045, %v3041
    %v3078 = vpack.c.b16 %v3046, %v3042
    %3111 = vmatpush.bf16.msra.mxu0 %v3075
    %3112 = vmatpush.bf16.msra.mxu0 %v3071
    %3113 = vmatpush.bf16.msra.mxu0 %v3067
    %3114 = vmatpush.bf16.msra.mxu0 %v3063
    %3115 = vmatpush.bf16.msra.mxu0 %v3059
    %3116 = vmatpush.bf16.msra.mxu0 %v3055
    %3117 = vmatpush.bf16.msra.mxu0 %v3051
    %3118 = vmatpush.bf16.msra.mxu0 %v3047
    %3119 = vmatmul.bf16.gmra.mxu0 %v2905
    %v3120 = vpop.f32.mrf.mxu0
    %v3121 = vadd.f32 %v2943, %v3120
    %v3122 = vpop.f32.mrf.mxu0
    %v3123 = vadd.f32 %v2943, %v3122
    %3124 = vmatmul.bf16.gmra.mxu0 %v2906
    %v3125 = vpop.f32.mrf.mxu0
    %v3126 = vadd.f32 %v2943, %v3125
    %v3127 = vpop.f32.mrf.mxu0
    %v3128 = vadd.f32 %v2943, %v3127
    %3129 = vmatmul.bf16.gmra.mxu0 %v2907
    %v3130 = vpop.f32.mrf.mxu0
    %v3131 = vadd.f32 %v2943, %v3130
    %v3132 = vpop.f32.mrf.mxu0
    %v3133 = vadd.f32 %v2943, %v3132
    %3134 = vmatmul.bf16.gmra.mxu0 %v2908
    %v3135 = vpop.f32.mrf.mxu0
    %v3136 = vadd.f32 %v2943, %v3135
    %v3137 = vpop.f32.mrf.mxu0
    %v3138 = vadd.f32 %v2943, %v3137
    %3139 = vdwg.mxu0
    %3140 = vmatpush.bf16.msra.mxu0 %v3076
    %3141 = vmatpush.bf16.msra.mxu0 %v3072
    %3142 = vmatpush.bf16.msra.mxu0 %v3068
    %3143 = vmatpush.bf16.msra.mxu0 %v3064
    %3144 = vmatpush.bf16.msra.mxu0 %v3060
    %3145 = vmatpush.bf16.msra.mxu0 %v3056
    %3146 = vmatpush.bf16.msra.mxu0 %v3052
    %3147 = vmatpush.bf16.msra.mxu0 %v3048
    %3148 = vmatmul.bf16.gmra.mxu0 %v2905
    %v3149 = vpop.f32.mrf.mxu0
    %v3150 = vadd.f32 %v2944, %v3149
    %v3151 = vpop.f32.mrf.mxu0
    %v3152 = vadd.f32 %v2944, %v3151
    %3153 = vmatmul.bf16.gmra.mxu0 %v2906
    %v3154 = vpop.f32.mrf.mxu0
    %v3155 = vadd.f32 %v2944, %v3154
    %v3156 = vpop.f32.mrf.mxu0
    %v3157 = vadd.f32 %v2944, %v3156
    %3158 = vmatmul.bf16.gmra.mxu0 %v2907
    %v3159 = vpop.f32.mrf.mxu0
    %v3160 = vadd.f32 %v2944, %v3159
    %v3161 = vpop.f32.mrf.mxu0
    %v3162 = vadd.f32 %v2944, %v3161
    %3163 = vmatmul.bf16.gmra.mxu0 %v2908
    %v3164 = vpop.f32.mrf.mxu0
    %v3165 = vadd.f32 %v2944, %v3164
    %v3166 = vpop.f32.mrf.mxu0
    %v3167 = vadd.f32 %v2944, %v3166
    %3168 = vdwg.mxu0
    %3169 = vmatpush.bf16.msra.mxu0 %v3077
    %3170 = vmatpush.bf16.msra.mxu0 %v3073
    %3171 = vmatpush.bf16.msra.mxu0 %v3069
    %3172 = vmatpush.bf16.msra.mxu0 %v3065
    %3173 = vmatpush.bf16.msra.mxu0 %v3061
    %3174 = vmatpush.bf16.msra.mxu0 %v3057
    %3175 = vmatpush.bf16.msra.mxu0 %v3053
    %3176 = vmatpush.bf16.msra.mxu0 %v3049
    %3177 = vmatmul.bf16.gmra.mxu0 %v2905
    %v3178 = vpop.f32.mrf.mxu0
    %v3179 = vadd.f32 %v2945, %v3178
    %v3180 = vpop.f32.mrf.mxu0
    %v3181 = vadd.f32 %v2945, %v3180
    %3182 = vmatmul.bf16.gmra.mxu0 %v2906
    %v3183 = vpop.f32.mrf.mxu0
    %v3184 = vadd.f32 %v2945, %v3183
    %v3185 = vpop.f32.mrf.mxu0
    %v3186 = vadd.f32 %v2945, %v3185
    %3187 = vmatmul.bf16.gmra.mxu0 %v2907
    %v3188 = vpop.f32.mrf.mxu0
    %v3189 = vadd.f32 %v2945, %v3188
    %v3190 = vpop.f32.mrf.mxu0
    %v3191 = vadd.f32 %v2945, %v3190
    %3192 = vmatmul.bf16.gmra.mxu0 %v2908
    %v3193 = vpop.f32.mrf.mxu0
    %v3194 = vadd.f32 %v2945, %v3193
    %v3195 = vpop.f32.mrf.mxu0
    %v3196 = vadd.f32 %v2945, %v3195
    %3197 = vdwg.mxu0
    %3198 = vmatpush.bf16.msra.mxu0 %v3078
    %3199 = vmatpush.bf16.msra.mxu0 %v3074
    %3200 = vmatpush.bf16.msra.mxu0 %v3070
    %3201 = vmatpush.bf16.msra.mxu0 %v3066
    %3202 = vmatpush.bf16.msra.mxu0 %v3062
    %3203 = vmatpush.bf16.msra.mxu0 %v3058
    %3204 = vmatpush.bf16.msra.mxu0 %v3054
    %3205 = vmatpush.bf16.msra.mxu0 %v3050
    %3206 = vmatmul.bf16.gmra.mxu0 %v2905
    %v3207 = vpop.f32.mrf.mxu0
    %v3208 = vadd.f32 %v2946, %v3207
    %v3209 = vpop.f32.mrf.mxu0
    %v3210 = vadd.f32 %v2946, %v3209
    %3211 = vmatmul.bf16.gmra.mxu0 %v2906
    %v3212 = vpop.f32.mrf.mxu0
    %v3213 = vadd.f32 %v2946, %v3212
    %v3214 = vpop.f32.mrf.mxu0
    %v3215 = vadd.f32 %v2946, %v3214
    %3216 = vmatmul.bf16.gmra.mxu0 %v2907
    %v3217 = vpop.f32.mrf.mxu0
    %v3218 = vadd.f32 %v2946, %v3217
    %v3219 = vpop.f32.mrf.mxu0
    %v3220 = vadd.f32 %v2946, %v3219
    %3221 = vmatmul.bf16.gmra.mxu0 %v2908
    %v3222 = vpop.f32.mrf.mxu0
    %v3223 = vadd.f32 %v2946, %v3222
    %v3224 = vpop.f32.mrf.mxu0
    %v3225 = vadd.f32 %v2946, %v3224
    %3226 = vdwg.mxu0
    %3227 = vst [vmem:[#allocation3] sm:$0xff] %v3121
    %3228 = vst [vmem:[#allocation3 + $0x8] sm:$0xff] %v3150
    %3229 = vst [vmem:[#allocation3 + $0x10] sm:$0xff] %v3179
    %3230 = vst [vmem:[#allocation3 + $0x18] sm:$0xff] %v3208
    %3231 = vst [vmem:[#allocation3 + $0x20] sm:$0xff] %v3123
    %3232 = vst [vmem:[#allocation3 + $0x28] sm:$0xff] %v3152
    %3233 = vst [vmem:[#allocation3 + $0x30] sm:$0xff] %v3181
    %3234 = vst [vmem:[#allocation3 + $0x38] sm:$0xff] %v3210
    %3235 = vst [vmem:[#allocation3 + $0x40] sm:$0xff] %v3126
    %3236 = vst [vmem:[#allocation3 + $0x48] sm:$0xff] %v3155
    %3237 = vst [vmem:[#allocation3 + $0x50] sm:$0xff] %v3184
    %3238 = vst [vmem:[#allocation3 + $0x58] sm:$0xff] %v3213
    %3239 = vst [vmem:[#allocation3 + $0x60] sm:$0xff] %v3128
    %3240 = vst [vmem:[#allocation3 + $0x68] sm:$0xff] %v3157
    %3241 = vst [vmem:[#allocation3 + $0x70] sm:$0xff] %v3186
    %3242 = vst [vmem:[#allocation3 + $0x78] sm:$0xff] %v3215
    %3243 = vst [vmem:[#allocation3 + $0x80] sm:$0xff] %v3131
    %3244 = vst [vmem:[#allocation3 + $0x88] sm:$0xff] %v3160
    %3245 = vst [vmem:[#allocation3 + $0x90] sm:$0xff] %v3189
    %3246 = vst [vmem:[#allocation3 + $0x98] sm:$0xff] %v3218
    %3247 = vst [vmem:[#allocation3 + $0xa0] sm:$0xff] %v3133
    %3248 = vst [vmem:[#allocation3 + $0xa8] sm:$0xff] %v3162
    %3249 = vst [vmem:[#allocation3 + $0xb0] sm:$0xff] %v3191
    %3250 = vst [vmem:[#allocation3 + $0xb8] sm:$0xff] %v3220
    %3251 = vst [vmem:[#allocation3 + $0xc0] sm:$0xff] %v3136
    %3252 = vst [vmem:[#allocation3 + $0xc8] sm:$0xff] %v3165
    %3253 = vst [vmem:[#allocation3 + $0xd0] sm:$0xff] %v3194
    %3254 = vst [vmem:[#allocation3 + $0xd8] sm:$0xff] %v3223
    %3255 = vst [vmem:[#allocation3 + $0xe0] sm:$0xff] %v3138
    %3256 = vst [vmem:[#allocation3 + $0xe8] sm:$0xff] %v3167
    %3257 = vst [vmem:[#allocation3 + $0xf0] sm:$0xff] %v3196
    %3258 = vst [vmem:[#allocation3 + $0xf8] sm:$0xff] %v3225
    %3259 = vst [vmem:[#allocation4] sm:$0xff] 0.0
    %3260 = vst [vmem:[#allocation5] sm:$0xff] 0.0
    %v3261 = vld [vmem:[%s300] sm:$0xff]
    %v3262 = vld [vmem:[%s300 + $0x8] sm:$0xff]
    %v3263 = vld [vmem:[%s300 + $0x10] sm:$0xff]
    %v3264 = vld [vmem:[%s300 + $0x18] sm:$0xff]
    %v3265 = vld [vmem:[#allocation4] sm:$0xff]
    %v3266 = vpack.c.bf16 %v3265, %v3265
    %v3267 = vld [vmem:[#allocation11] sm:$0xff]
    %v3268 = vld [vmem:[#allocation11 + $0x8] sm:$0xff]
    %v3269 = vld [vmem:[#allocation11 + $0x10] sm:$0xff]
    %v3270 = vld [vmem:[#allocation11 + $0x18] sm:$0xff]
    %v3271 = vld [vmem:[#allocation11 + $0x20] sm:$0xff]
    %v3272 = vld [vmem:[#allocation11 + $0x28] sm:$0xff]
    %v3273 = vld [vmem:[#allocation11 + $0x30] sm:$0xff]
    %v3274 = vld [vmem:[#allocation11 + $0x38] sm:$0xff]
    %v3275 = vld [vmem:[#allocation11 + $0x40] sm:$0xff]
    %v3276 = vld [vmem:[#allocation11 + $0x48] sm:$0xff]
    %v3277 = vld [vmem:[#allocation11 + $0x50] sm:$0xff]
    %v3278 = vld [vmem:[#allocation11 + $0x58] sm:$0xff]
    %v3279 = vld [vmem:[#allocation11 + $0x60] sm:$0xff]
    %v3280 = vld [vmem:[#allocation11 + $0x68] sm:$0xff]
    %v3281 = vld [vmem:[#allocation11 + $0x70] sm:$0xff]
    %v3282 = vld [vmem:[#allocation11 + $0x78] sm:$0xff]
    %v3283 = vld [vmem:[#allocation11 + $0x80] sm:$0xff]
    %v3284 = vld [vmem:[#allocation11 + $0x88] sm:$0xff]
    %v3285 = vld [vmem:[#allocation11 + $0x90] sm:$0xff]
    %v3286 = vld [vmem:[#allocation11 + $0x98] sm:$0xff]
    %v3287 = vld [vmem:[#allocation11 + $0xa0] sm:$0xff]
    %v3288 = vld [vmem:[#allocation11 + $0xa8] sm:$0xff]
    %v3289 = vld [vmem:[#allocation11 + $0xb0] sm:$0xff]
    %v3290 = vld [vmem:[#allocation11 + $0xb8] sm:$0xff]
    %v3291 = vld [vmem:[#allocation11 + $0xc0] sm:$0xff]
    %v3292 = vld [vmem:[#allocation11 + $0xc8] sm:$0xff]
    %v3293 = vld [vmem:[#allocation11 + $0xd0] sm:$0xff]
    %v3294 = vld [vmem:[#allocation11 + $0xd8] sm:$0xff]
    %v3295 = vld [vmem:[#allocation11 + $0xe0] sm:$0xff]
    %v3296 = vld [vmem:[#allocation11 + $0xe8] sm:$0xff]
    %v3297 = vld [vmem:[#allocation11 + $0xf0] sm:$0xff]
    %v3298 = vld [vmem:[#allocation11 + $0xf8] sm:$0xff]
    %v3331 = vunpack.c.l.b16 %v3267
    %v3332 = vunpack.c.h.b16 %v3267
    %v3333 = vunpack.c.l.b16 %v3268
    %v3334 = vunpack.c.h.b16 %v3268
    %v3335 = vunpack.c.l.b16 %v3269
    %v3336 = vunpack.c.h.b16 %v3269
    %v3337 = vunpack.c.l.b16 %v3270
    %v3338 = vunpack.c.h.b16 %v3270
    %v3339 = vunpack.c.l.b16 %v3271
    %v3340 = vunpack.c.h.b16 %v3271
    %v3341 = vunpack.c.l.b16 %v3272
    %v3342 = vunpack.c.h.b16 %v3272
    %v3343 = vunpack.c.l.b16 %v3273
    %v3344 = vunpack.c.h.b16 %v3273
    %v3345 = vunpack.c.l.b16 %v3274
    %v3346 = vunpack.c.h.b16 %v3274
    %v3347 = vunpack.c.l.b16 %v3275
    %v3348 = vunpack.c.h.b16 %v3275
    %v3349 = vunpack.c.l.b16 %v3276
    %v3350 = vunpack.c.h.b16 %v3276
    %v3351 = vunpack.c.l.b16 %v3277
    %v3352 = vunpack.c.h.b16 %v3277
    %v3353 = vunpack.c.l.b16 %v3278
    %v3354 = vunpack.c.h.b16 %v3278
    %v3355 = vunpack.c.l.b16 %v3279
    %v3356 = vunpack.c.h.b16 %v3279
    %v3357 = vunpack.c.l.b16 %v3280
    %v3358 = vunpack.c.h.b16 %v3280
    %v3359 = vunpack.c.l.b16 %v3281
    %v3360 = vunpack.c.h.b16 %v3281
    %v3361 = vunpack.c.l.b16 %v3282
    %v3362 = vunpack.c.h.b16 %v3282
    %v3363 = vunpack.c.l.b16 %v3283
    %v3364 = vunpack.c.h.b16 %v3283
    %v3365 = vunpack.c.l.b16 %v3284
    %v3366 = vunpack.c.h.b16 %v3284
    %v3367 = vunpack.c.l.b16 %v3285
    %v3368 = vunpack.c.h.b16 %v3285
    %v3369 = vunpack.c.l.b16 %v3286
    %v3370 = vunpack.c.h.b16 %v3286
    %v3371 = vunpack.c.l.b16 %v3287
    %v3372 = vunpack.c.h.b16 %v3287
    %v3373 = vunpack.c.l.b16 %v3288
    %v3374 = vunpack.c.h.b16 %v3288
    %v3375 = vunpack.c.l.b16 %v3289
    %v3376 = vunpack.c.h.b16 %v3289
    %v3377 = vunpack.c.l.b16 %v3290
    %v3378 = vunpack.c.h.b16 %v3290
    %v3379 = vunpack.c.l.b16 %v3291
    %v3380 = vunpack.c.h.b16 %v3291
    %v3381 = vunpack.c.l.b16 %v3292
    %v3382 = vunpack.c.h.b16 %v3292
    %v3383 = vunpack.c.l.b16 %v3293
    %v3384 = vunpack.c.h.b16 %v3293
    %v3385 = vunpack.c.l.b16 %v3294
    %v3386 = vunpack.c.h.b16 %v3294
    %v3387 = vunpack.c.l.b16 %v3295
    %v3388 = vunpack.c.h.b16 %v3295
    %v3389 = vunpack.c.l.b16 %v3296
    %v3390 = vunpack.c.h.b16 %v3296
    %v3391 = vunpack.c.l.b16 %v3297
    %v3392 = vunpack.c.h.b16 %v3297
    %v3393 = vunpack.c.l.b16 %v3298
    %v3394 = vunpack.c.h.b16 %v3298
    %v3395 = vpack.c.b16 %v3335, %v3331
    %v3396 = vpack.c.b16 %v3336, %v3332
    %v3397 = vpack.c.b16 %v3337, %v3333
    %v3398 = vpack.c.b16 %v3338, %v3334
    %v3399 = vpack.c.b16 %v3343, %v3339
    %v3400 = vpack.c.b16 %v3344, %v3340
    %v3401 = vpack.c.b16 %v3345, %v3341
    %v3402 = vpack.c.b16 %v3346, %v3342
    %v3403 = vpack.c.b16 %v3351, %v3347
    %v3404 = vpack.c.b16 %v3352, %v3348
    %v3405 = vpack.c.b16 %v3353, %v3349
    %v3406 = vpack.c.b16 %v3354, %v3350
    %v3407 = vpack.c.b16 %v3359, %v3355
    %v3408 = vpack.c.b16 %v3360, %v3356
    %v3409 = vpack.c.b16 %v3361, %v3357
    %v3410 = vpack.c.b16 %v3362, %v3358
    %v3411 = vpack.c.b16 %v3367, %v3363
    %v3412 = vpack.c.b16 %v3368, %v3364
    %v3413 = vpack.c.b16 %v3369, %v3365
    %v3414 = vpack.c.b16 %v3370, %v3366
    %v3415 = vpack.c.b16 %v3375, %v3371
    %v3416 = vpack.c.b16 %v3376, %v3372
    %v3417 = vpack.c.b16 %v3377, %v3373
    %v3418 = vpack.c.b16 %v3378, %v3374
    %v3419 = vpack.c.b16 %v3383, %v3379
    %v3420 = vpack.c.b16 %v3384, %v3380
    %v3421 = vpack.c.b16 %v3385, %v3381
    %v3422 = vpack.c.b16 %v3386, %v3382
    %v3423 = vpack.c.b16 %v3391, %v3387
    %v3424 = vpack.c.b16 %v3392, %v3388
    %v3425 = vpack.c.b16 %v3393, %v3389
    %v3426 = vpack.c.b16 %v3394, %v3390
    %3459 = vmatpush.bf16.msra.mxu0 %v3423
    %3460 = vmatpush.bf16.msra.mxu0 %v3419
    %3461 = vmatpush.bf16.msra.mxu0 %v3415
    %3462 = vmatpush.bf16.msra.mxu0 %v3411
    %3463 = vmatpush.bf16.msra.mxu0 %v3407
    %3464 = vmatpush.bf16.msra.mxu0 %v3403
    %3465 = vmatpush.bf16.msra.mxu0 %v3399
    %3466 = vmatpush.bf16.msra.mxu0 %v3395
    %3467 = vmatmul.bf16.gmra.mxu0 %v3266
    %v3468 = vpop.f32.mrf.mxu0
    %v3469 = vadd.f32 0.0, %v3468
    %v3470 = vpop.f32.mrf.mxu0
    %3471 = vdwg.mxu0
    %3472 = vmatpush.bf16.msra.mxu0 %v3424
    %3473 = vmatpush.bf16.msra.mxu0 %v3420
    %3474 = vmatpush.bf16.msra.mxu0 %v3416
    %3475 = vmatpush.bf16.msra.mxu0 %v3412
    %3476 = vmatpush.bf16.msra.mxu0 %v3408
    %3477 = vmatpush.bf16.msra.mxu0 %v3404
    %3478 = vmatpush.bf16.msra.mxu0 %v3400
    %3479 = vmatpush.bf16.msra.mxu0 %v3396
    %3480 = vmatmul.bf16.gmra.mxu0 %v3266
    %v3481 = vpop.f32.mrf.mxu0
    %v3482 = vadd.f32 0.0, %v3481
    %v3483 = vpop.f32.mrf.mxu0
    %3484 = vdwg.mxu0
    %3485 = vmatpush.bf16.msra.mxu0 %v3425
    %3486 = vmatpush.bf16.msra.mxu0 %v3421
    %3487 = vmatpush.bf16.msra.mxu0 %v3417
    %3488 = vmatpush.bf16.msra.mxu0 %v3413
    %3489 = vmatpush.bf16.msra.mxu0 %v3409
    %3490 = vmatpush.bf16.msra.mxu0 %v3405
    %3491 = vmatpush.bf16.msra.mxu0 %v3401
    %3492 = vmatpush.bf16.msra.mxu0 %v3397
    %3493 = vmatmul.bf16.gmra.mxu0 %v3266
    %v3494 = vpop.f32.mrf.mxu0
    %v3495 = vadd.f32 0.0, %v3494
    %v3496 = vpop.f32.mrf.mxu0
    %3497 = vdwg.mxu0
    %3498 = vmatpush.bf16.msra.mxu0 %v3426
    %3499 = vmatpush.bf16.msra.mxu0 %v3422
    %3500 = vmatpush.bf16.msra.mxu0 %v3418
    %3501 = vmatpush.bf16.msra.mxu0 %v3414
    %3502 = vmatpush.bf16.msra.mxu0 %v3410
    %3503 = vmatpush.bf16.msra.mxu0 %v3406
    %3504 = vmatpush.bf16.msra.mxu0 %v3402
    %3505 = vmatpush.bf16.msra.mxu0 %v3398
    %3506 = vmatmul.bf16.gmra.mxu0 %v3266
    %v3507 = vpop.f32.mrf.mxu0
    %v3508 = vadd.f32 0.0, %v3507
    %v3509 = vpop.f32.mrf.mxu0
    %3510 = vdwg.mxu0
    %v3511 = vadd.f32 %v3261, %v3469
    %v3512 = vadd.f32 %v3262, %v3482
    %v3513 = vadd.f32 %v3263, %v3495
    %v3514 = vadd.f32 %v3264, %v3508
    %v3515 = vxor.u32 %v3511, 2147483648
    %v3516 = vmul.f32 %v3515, 1.442695
    %v3517 = vpow.pop %v3516
    %v3518 = vadd.f32 %v3517, 1.0
    %v3519 = vrcp.pop %v3518
    %v3520 = vmul.f32 %v3518, %v3519
    %v3521 = vsub.f32 1.0, %v3520
    %v3522 = vmul.f32 %v3519, %v3521
    %v3523 = vadd.f32 %v3519, %v3522
    %vm3524 = vweird.f32 %v3518
    %vm3525 = vweird.f32 %v3519
    %vm3526 = vmor %vm3524, %vm3525
    %v3527 = vsel %vm3526, %v3519, %v3523
    %v3528 = vand.u32 2147483647, %v3518
    %vm3529 = vcmp.eq.f32.partialorder %v3528, 8.507059e+37
    %v3530 = vand.u32 %v3518, 2147483648
    %v3531 = vor.u32 1.1754944e-38, %v3530
    %v3532 = vsel %vm3529, %v3531, %v3527
    %v3533 = vmul.f32 1.0, %v3532
    %v3534 = vxor.u32 %v3512, 2147483648
    %v3535 = vmul.f32 %v3534, 1.442695
    %v3536 = vpow.pop %v3535
    %v3537 = vadd.f32 %v3536, 1.0
    %v3538 = vrcp.pop %v3537
    %v3539 = vmul.f32 %v3537, %v3538
    %v3540 = vsub.f32 1.0, %v3539
    %v3541 = vmul.f32 %v3538, %v3540
    %v3542 = vadd.f32 %v3538, %v3541
    %vm3543 = vweird.f32 %v3537
    %vm3544 = vweird.f32 %v3538
    %vm3545 = vmor %vm3543, %vm3544
    %v3546 = vsel %vm3545, %v3538, %v3542
    %v3547 = vand.u32 2147483647, %v3537
    %vm3548 = vcmp.eq.f32.partialorder %v3547, 8.507059e+37
    %v3549 = vand.u32 %v3537, 2147483648
    %v3550 = vor.u32 1.1754944e-38, %v3549
    %v3551 = vsel %vm3548, %v3550, %v3546
    %v3552 = vmul.f32 1.0, %v3551
    %v3553 = vtanh.pop %v3513
    %v3554 = vxor.u32 %v3514, 2147483648
    %v3555 = vmul.f32 %v3554, 1.442695
    %v3556 = vpow.pop %v3555
    %v3557 = vadd.f32 %v3556, 1.0
    %v3558 = vrcp.pop %v3557
    %v3559 = vmul.f32 %v3557, %v3558
    %v3560 = vsub.f32 1.0, %v3559
    %v3561 = vmul.f32 %v3558, %v3560
    %v3562 = vadd.f32 %v3558, %v3561
    %vm3563 = vweird.f32 %v3557
    %vm3564 = vweird.f32 %v3558
    %vm3565 = vmor %vm3563, %vm3564
    %v3566 = vsel %vm3565, %v3558, %v3562
    %v3567 = vand.u32 2147483647, %v3557
    %vm3568 = vcmp.eq.f32.partialorder %v3567, 8.507059e+37
    %v3569 = vand.u32 %v3557, 2147483648
    %v3570 = vor.u32 1.1754944e-38, %v3569
    %v3571 = vsel %vm3568, %v3570, %v3566
    %v3572 = vmul.f32 1.0, %v3571
    %v3573 = vld [vmem:[#allocation5] sm:$0xff]
    %v3574 = vmul.f32 %v3552, %v3573
    %v3575 = vmul.f32 %v3533, %v3553
    %v3576 = vadd.f32 %v3574, %v3575
    %v3577 = vtanh.pop %v3576
    %v3578 = vmul.f32 %v3572, %v3577
    %3579 = vst [vmem:[#allocation5] sm:$0xff] %v3576
    %3580 = vst [vmem:[#allocation4] sm:$0xff] %v3578
    %v3581 = vld [vmem:[%s624] sm:$0xff]
    %v3582 = vld [vmem:[%s624 + $0x8] sm:$0xff]
    %v3583 = vld [vmem:[%s624 + $0x10] sm:$0xff]
    %v3584 = vld [vmem:[%s624 + $0x18] sm:$0xff]
    %v3585 = vld [vmem:[#allocation4] sm:$0xff]
    %v3586 = vpack.c.bf16 %v3585, %v3585
    %v3587 = vld [vmem:[#allocation11] sm:$0xff]
    %v3588 = vld [vmem:[#allocation11 + $0x8] sm:$0xff]
    %v3589 = vld [vmem:[#allocation11 + $0x10] sm:$0xff]
    %v3590 = vld [vmem:[#allocation11 + $0x18] sm:$0xff]
    %v3591 = vld [vmem:[#allocation11 + $0x20] sm:$0xff]
    %v3592 = vld [vmem:[#allocation11 + $0x28] sm:$0xff]
    %v3593 = vld [vmem:[#allocation11 + $0x30] sm:$0xff]
    %v3594 = vld [vmem:[#allocation11 + $0x38] sm:$0xff]
    %v3595 = vld [vmem:[#allocation11 + $0x40] sm:$0xff]
    %v3596 = vld [vmem:[#allocation11 + $0x48] sm:$0xff]
    %v3597 = vld [vmem:[#allocation11 + $0x50] sm:$0xff]
    %v3598 = vld [vmem:[#allocation11 + $0x58] sm:$0xff]
    %v3599 = vld [vmem:[#allocation11 + $0x60] sm:$0xff]
    %v3600 = vld [vmem:[#allocation11 + $0x68] sm:$0xff]
    %v3601 = vld [vmem:[#allocation11 + $0x70] sm:$0xff]
    %v3602 = vld [vmem:[#allocation11 + $0x78] sm:$0xff]
    %v3603 = vld [vmem:[#allocation11 + $0x80] sm:$0xff]
    %v3604 = vld [vmem:[#allocation11 + $0x88] sm:$0xff]
    %v3605 = vld [vmem:[#allocation11 + $0x90] sm:$0xff]
    %v3606 = vld [vmem:[#allocation11 + $0x98] sm:$0xff]
    %v3607 = vld [vmem:[#allocation11 + $0xa0] sm:$0xff]
    %v3608 = vld [vmem:[#allocation11 + $0xa8] sm:$0xff]
    %v3609 = vld [vmem:[#allocation11 + $0xb0] sm:$0xff]
    %v3610 = vld [vmem:[#allocation11 + $0xb8] sm:$0xff]
    %v3611 = vld [vmem:[#allocation11 + $0xc0] sm:$0xff]
    %v3612 = vld [vmem:[#allocation11 + $0xc8] sm:$0xff]
    %v3613 = vld [vmem:[#allocation11 + $0xd0] sm:$0xff]
    %v3614 = vld [vmem:[#allocation11 + $0xd8] sm:$0xff]
    %v3615 = vld [vmem:[#allocation11 + $0xe0] sm:$0xff]
    %v3616 = vld [vmem:[#allocation11 + $0xe8] sm:$0xff]
    %v3617 = vld [vmem:[#allocation11 + $0xf0] sm:$0xff]
    %v3618 = vld [vmem:[#allocation11 + $0xf8] sm:$0xff]
    %v3651 = vunpack.c.l.b16 %v3587
    %v3652 = vunpack.c.h.b16 %v3587
    %v3653 = vunpack.c.l.b16 %v3588
    %v3654 = vunpack.c.h.b16 %v3588
    %v3655 = vunpack.c.l.b16 %v3589
    %v3656 = vunpack.c.h.b16 %v3589
    %v3657 = vunpack.c.l.b16 %v3590
    %v3658 = vunpack.c.h.b16 %v3590
    %v3659 = vunpack.c.l.b16 %v3591
    %v3660 = vunpack.c.h.b16 %v3591
    %v3661 = vunpack.c.l.b16 %v3592
    %v3662 = vunpack.c.h.b16 %v3592
    %v3663 = vunpack.c.l.b16 %v3593
    %v3664 = vunpack.c.h.b16 %v3593
    %v3665 = vunpack.c.l.b16 %v3594
    %v3666 = vunpack.c.h.b16 %v3594
    %v3667 = vunpack.c.l.b16 %v3595
    %v3668 = vunpack.c.h.b16 %v3595
    %v3669 = vunpack.c.l.b16 %v3596
    %v3670 = vunpack.c.h.b16 %v3596
    %v3671 = vunpack.c.l.b16 %v3597
    %v3672 = vunpack.c.h.b16 %v3597
    %v3673 = vunpack.c.l.b16 %v3598
    %v3674 = vunpack.c.h.b16 %v3598
    %v3675 = vunpack.c.l.b16 %v3599
    %v3676 = vunpack.c.h.b16 %v3599
    %v3677 = vunpack.c.l.b16 %v3600
    %v3678 = vunpack.c.h.b16 %v3600
    %v3679 = vunpack.c.l.b16 %v3601
    %v3680 = vunpack.c.h.b16 %v3601
    %v3681 = vunpack.c.l.b16 %v3602
    %v3682 = vunpack.c.h.b16 %v3602
    %v3683 = vunpack.c.l.b16 %v3603
    %v3684 = vunpack.c.h.b16 %v3603
    %v3685 = vunpack.c.l.b16 %v3604
    %v3686 = vunpack.c.h.b16 %v3604
    %v3687 = vunpack.c.l.b16 %v3605
    %v3688 = vunpack.c.h.b16 %v3605
    %v3689 = vunpack.c.l.b16 %v3606
    %v3690 = vunpack.c.h.b16 %v3606
    %v3691 = vunpack.c.l.b16 %v3607
    %v3692 = vunpack.c.h.b16 %v3607
    %v3693 = vunpack.c.l.b16 %v3608
    %v3694 = vunpack.c.h.b16 %v3608
    %v3695 = vunpack.c.l.b16 %v3609
    %v3696 = vunpack.c.h.b16 %v3609
    %v3697 = vunpack.c.l.b16 %v3610
    %v3698 = vunpack.c.h.b16 %v3610
    %v3699 = vunpack.c.l.b16 %v3611
    %v3700 = vunpack.c.h.b16 %v3611
    %v3701 = vunpack.c.l.b16 %v3612
    %v3702 = vunpack.c.h.b16 %v3612
    %v3703 = vunpack.c.l.b16 %v3613
    %v3704 = vunpack.c.h.b16 %v3613
    %v3705 = vunpack.c.l.b16 %v3614
    %v3706 = vunpack.c.h.b16 %v3614
    %v3707 = vunpack.c.l.b16 %v3615
    %v3708 = vunpack.c.h.b16 %v3615
    %v3709 = vunpack.c.l.b16 %v3616
    %v3710 = vunpack.c.h.b16 %v3616
    %v3711 = vunpack.c.l.b16 %v3617
    %v3712 = vunpack.c.h.b16 %v3617
    %v3713 = vunpack.c.l.b16 %v3618
    %v3714 = vunpack.c.h.b16 %v3618
    %v3715 = vpack.c.b16 %v3655, %v3651
    %v3716 = vpack.c.b16 %v3656, %v3652
    %v3717 = vpack.c.b16 %v3657, %v3653
    %v3718 = vpack.c.b16 %v3658, %v3654
    %v3719 = vpack.c.b16 %v3663, %v3659
    %v3720 = vpack.c.b16 %v3664, %v3660
    %v3721 = vpack.c.b16 %v3665, %v3661
    %v3722 = vpack.c.b16 %v3666, %v3662
    %v3723 = vpack.c.b16 %v3671, %v3667
    %v3724 = vpack.c.b16 %v3672, %v3668
    %v3725 = vpack.c.b16 %v3673, %v3669
    %v3726 = vpack.c.b16 %v3674, %v3670
    %v3727 = vpack.c.b16 %v3679, %v3675
    %v3728 = vpack.c.b16 %v3680, %v3676
    %v3729 = vpack.c.b16 %v3681, %v3677
    %v3730 = vpack.c.b16 %v3682, %v3678
    %v3731 = vpack.c.b16 %v3687, %v3683
    %v3732 = vpack.c.b16 %v3688, %v3684
    %v3733 = vpack.c.b16 %v3689, %v3685
    %v3734 = vpack.c.b16 %v3690, %v3686
    %v3735 = vpack.c.b16 %v3695, %v3691
    %v3736 = vpack.c.b16 %v3696, %v3692
    %v3737 = vpack.c.b16 %v3697, %v3693
    %v3738 = vpack.c.b16 %v3698, %v3694
    %v3739 = vpack.c.b16 %v3703, %v3699
    %v3740 = vpack.c.b16 %v3704, %v3700
    %v3741 = vpack.c.b16 %v3705, %v3701
    %v3742 = vpack.c.b16 %v3706, %v3702
    %v3743 = vpack.c.b16 %v3711, %v3707
    %v3744 = vpack.c.b16 %v3712, %v3708
    %v3745 = vpack.c.b16 %v3713, %v3709
    %v3746 = vpack.c.b16 %v3714, %v3710
    %3779 = vmatpush.bf16.msra.mxu0 %v3743
    %3780 = vmatpush.bf16.msra.mxu0 %v3739
    %3781 = vmatpush.bf16.msra.mxu0 %v3735
    %3782 = vmatpush.bf16.msra.mxu0 %v3731
    %3783 = vmatpush.bf16.msra.mxu0 %v3727
    %3784 = vmatpush.bf16.msra.mxu0 %v3723
    %3785 = vmatpush.bf16.msra.mxu0 %v3719
    %3786 = vmatpush.bf16.msra.mxu0 %v3715
    %3787 = vmatmul.bf16.gmra.mxu0 %v3586
    %v3788 = vpop.f32.mrf.mxu0
    %v3789 = vadd.f32 0.0, %v3788
    %v3790 = vpop.f32.mrf.mxu0
    %3791 = vdwg.mxu0
    %3792 = vmatpush.bf16.msra.mxu0 %v3744
    %3793 = vmatpush.bf16.msra.mxu0 %v3740
    %3794 = vmatpush.bf16.msra.mxu0 %v3736
    %3795 = vmatpush.bf16.msra.mxu0 %v3732
    %3796 = vmatpush.bf16.msra.mxu0 %v3728
    %3797 = vmatpush.bf16.msra.mxu0 %v3724
    %3798 = vmatpush.bf16.msra.mxu0 %v3720
    %3799 = vmatpush.bf16.msra.mxu0 %v3716
    %3800 = vmatmul.bf16.gmra.mxu0 %v3586
    %v3801 = vpop.f32.mrf.mxu0
    %v3802 = vadd.f32 0.0, %v3801
    %v3803 = vpop.f32.mrf.mxu0
    %3804 = vdwg.mxu0
    %3805 = vmatpush.bf16.msra.mxu0 %v3745
    %3806 = vmatpush.bf16.msra.mxu0 %v3741
    %3807 = vmatpush.bf16.msra.mxu0 %v3737
    %3808 = vmatpush.bf16.msra.mxu0 %v3733
    %3809 = vmatpush.bf16.msra.mxu0 %v3729
    %3810 = vmatpush.bf16.msra.mxu0 %v3725
    %3811 = vmatpush.bf16.msra.mxu0 %v3721
    %3812 = vmatpush.bf16.msra.mxu0 %v3717
    %3813 = vmatmul.bf16.gmra.mxu0 %v3586
    %v3814 = vpop.f32.mrf.mxu0
    %v3815 = vadd.f32 0.0, %v3814
    %v3816 = vpop.f32.mrf.mxu0
    %3817 = vdwg.mxu0
    %3818 = vmatpush.bf16.msra.mxu0 %v3746
    %3819 = vmatpush.bf16.msra.mxu0 %v3742
    %3820 = vmatpush.bf16.msra.mxu0 %v3738
    %3821 = vmatpush.bf16.msra.mxu0 %v3734
    %3822 = vmatpush.bf16.msra.mxu0 %v3730
    %3823 = vmatpush.bf16.msra.mxu0 %v3726
    %3824 = vmatpush.bf16.msra.mxu0 %v3722
    %3825 = vmatpush.bf16.msra.mxu0 %v3718
    %3826 = vmatmul.bf16.gmra.mxu0 %v3586
    %v3827 = vpop.f32.mrf.mxu0
    %v3828 = vadd.f32 0.0, %v3827
    %v3829 = vpop.f32.mrf.mxu0
    %3830 = vdwg.mxu0
    %v3831 = vadd.f32 %v3581, %v3789
    %v3832 = vadd.f32 %v3582, %v3802
    %v3833 = vadd.f32 %v3583, %v3815
    %v3834 = vadd.f32 %v3584, %v3828
    %v3835 = vxor.u32 %v3831, 2147483648
    %v3836 = vmul.f32 %v3835, 1.442695
    %v3837 = vpow.pop %v3836
    %v3838 = vadd.f32 %v3837, 1.0
    %v3839 = vrcp.pop %v3838
    %v3840 = vmul.f32 %v3838, %v3839
    %v3841 = vsub.f32 1.0, %v3840
    %v3842 = vmul.f32 %v3839, %v3841
    %v3843 = vadd.f32 %v3839, %v3842
    %vm3844 = vweird.f32 %v3838
    %vm3845 = vweird.f32 %v3839
    %vm3846 = vmor %vm3844, %vm3845
    %v3847 = vsel %vm3846, %v3839, %v3843
    %v3848 = vand.u32 2147483647, %v3838
    %vm3849 = vcmp.eq.f32.partialorder %v3848, 8.507059e+37
    %v3850 = vand.u32 %v3838, 2147483648
    %v3851 = vor.u32 1.1754944e-38, %v3850
    %v3852 = vsel %vm3849, %v3851, %v3847
    %v3853 = vmul.f32 1.0, %v3852
    %v3854 = vxor.u32 %v3832, 2147483648
    %v3855 = vmul.f32 %v3854, 1.442695
    %v3856 = vpow.pop %v3855
    %v3857 = vadd.f32 %v3856, 1.0
    %v3858 = vrcp.pop %v3857
    %v3859 = vmul.f32 %v3857, %v3858
    %v3860 = vsub.f32 1.0, %v3859
    %v3861 = vmul.f32 %v3858, %v3860
    %v3862 = vadd.f32 %v3858, %v3861
    %vm3863 = vweird.f32 %v3857
    %vm3864 = vweird.f32 %v3858
    %vm3865 = vmor %vm3863, %vm3864
    %v3866 = vsel %vm3865, %v3858, %v3862
    %v3867 = vand.u32 2147483647, %v3857
    %vm3868 = vcmp.eq.f32.partialorder %v3867, 8.507059e+37
    %v3869 = vand.u32 %v3857, 2147483648
    %v3870 = vor.u32 1.1754944e-38, %v3869
    %v3871 = vsel %vm3868, %v3870, %v3866
    %v3872 = vmul.f32 1.0, %v3871
    %v3873 = vtanh.pop %v3833
    %v3874 = vxor.u32 %v3834, 2147483648
    %v3875 = vmul.f32 %v3874, 1.442695
    %v3876 = vpow.pop %v3875
    %v3877 = vadd.f32 %v3876, 1.0
    %v3878 = vrcp.pop %v3877
    %v3879 = vmul.f32 %v3877, %v3878
    %v3880 = vsub.f32 1.0, %v3879
    %v3881 = vmul.f32 %v3878, %v3880
    %v3882 = vadd.f32 %v3878, %v3881
    %vm3883 = vweird.f32 %v3877
    %vm3884 = vweird.f32 %v3878
    %vm3885 = vmor %vm3883, %vm3884
    %v3886 = vsel %vm3885, %v3878, %v3882
    %v3887 = vand.u32 2147483647, %v3877
    %vm3888 = vcmp.eq.f32.partialorder %v3887, 8.507059e+37
    %v3889 = vand.u32 %v3877, 2147483648
    %v3890 = vor.u32 1.1754944e-38, %v3889
    %v3891 = vsel %vm3888, %v3890, %v3886
    %v3892 = vmul.f32 1.0, %v3891
    %v3893 = vld [vmem:[#allocation5] sm:$0xff]
    %v3894 = vmul.f32 %v3872, %v3893
    %v3895 = vmul.f32 %v3853, %v3873
    %v3896 = vadd.f32 %v3894, %v3895
    %v3897 = vtanh.pop %v3896
    %v3898 = vmul.f32 %v3892, %v3897
    %3899 = vst [vmem:[#allocation5] sm:$0xff] %v3896
    %3900 = vst [vmem:[#allocation4] sm:$0xff] %v3898
    %v3901 = vld [vmem:[%s949] sm:$0xff]
    %v3902 = vld [vmem:[%s949 + $0x8] sm:$0xff]
    %v3903 = vld [vmem:[%s949 + $0x10] sm:$0xff]
    %v3904 = vld [vmem:[%s949 + $0x18] sm:$0xff]
    %v3905 = vld [vmem:[#allocation4] sm:$0xff]
    %v3906 = vpack.c.bf16 %v3905, %v3905
    %v3907 = vld [vmem:[#allocation11] sm:$0xff]
    %v3908 = vld [vmem:[#allocation11 + $0x8] sm:$0xff]
    %v3909 = vld [vmem:[#allocation11 + $0x10] sm:$0xff]
    %v3910 = vld [vmem:[#allocation11 + $0x18] sm:$0xff]
    %v3911 = vld [vmem:[#allocation11 + $0x20] sm:$0xff]
    %v3912 = vld [vmem:[#allocation11 + $0x28] sm:$0xff]
    %v3913 = vld [vmem:[#allocation11 + $0x30] sm:$0xff]
    %v3914 = vld [vmem:[#allocation11 + $0x38] sm:$0xff]
    %v3915 = vld [vmem:[#allocation11 + $0x40] sm:$0xff]
    %v3916 = vld [vmem:[#allocation11 + $0x48] sm:$0xff]
    %v3917 = vld [vmem:[#allocation11 + $0x50] sm:$0xff]
    %v3918 = vld [vmem:[#allocation11 + $0x58] sm:$0xff]
    %v3919 = vld [vmem:[#allocation11 + $0x60] sm:$0xff]
    %v3920 = vld [vmem:[#allocation11 + $0x68] sm:$0xff]
    %v3921 = vld [vmem:[#allocation11 + $0x70] sm:$0xff]
    %v3922 = vld [vmem:[#allocation11 + $0x78] sm:$0xff]
    %v3923 = vld [vmem:[#allocation11 + $0x80] sm:$0xff]
    %v3924 = vld [vmem:[#allocation11 + $0x88] sm:$0xff]
    %v3925 = vld [vmem:[#allocation11 + $0x90] sm:$0xff]
    %v3926 = vld [vmem:[#allocation11 + $0x98] sm:$0xff]
    %v3927 = vld [vmem:[#allocation11 + $0xa0] sm:$0xff]
    %v3928 = vld [vmem:[#allocation11 + $0xa8] sm:$0xff]
    %v3929 = vld [vmem:[#allocation11 + $0xb0] sm:$0xff]
    %v3930 = vld [vmem:[#allocation11 + $0xb8] sm:$0xff]
    %v3931 = vld [vmem:[#allocation11 + $0xc0] sm:$0xff]
    %v3932 = vld [vmem:[#allocation11 + $0xc8] sm:$0xff]
    %v3933 = vld [vmem:[#allocation11 + $0xd0] sm:$0xff]
    %v3934 = vld [vmem:[#allocation11 + $0xd8] sm:$0xff]
    %v3935 = vld [vmem:[#allocation11 + $0xe0] sm:$0xff]
    %v3936 = vld [vmem:[#allocation11 + $0xe8] sm:$0xff]
    %v3937 = vld [vmem:[#allocation11 + $0xf0] sm:$0xff]
    %v3938 = vld [vmem:[#allocation11 + $0xf8] sm:$0xff]
    %v3971 = vunpack.c.l.b16 %v3907
    %v3972 = vunpack.c.h.b16 %v3907
    %v3973 = vunpack.c.l.b16 %v3908
    %v3974 = vunpack.c.h.b16 %v3908
    %v3975 = vunpack.c.l.b16 %v3909
    %v3976 = vunpack.c.h.b16 %v3909
    %v3977 = vunpack.c.l.b16 %v3910
    %v3978 = vunpack.c.h.b16 %v3910
    %v3979 = vunpack.c.l.b16 %v3911
    %v3980 = vunpack.c.h.b16 %v3911
    %v3981 = vunpack.c.l.b16 %v3912
    %v3982 = vunpack.c.h.b16 %v3912
    %v3983 = vunpack.c.l.b16 %v3913
    %v3984 = vunpack.c.h.b16 %v3913
    %v3985 = vunpack.c.l.b16 %v3914
    %v3986 = vunpack.c.h.b16 %v3914
    %v3987 = vunpack.c.l.b16 %v3915
    %v3988 = vunpack.c.h.b16 %v3915
    %v3989 = vunpack.c.l.b16 %v3916
    %v3990 = vunpack.c.h.b16 %v3916
    %v3991 = vunpack.c.l.b16 %v3917
    %v3992 = vunpack.c.h.b16 %v3917
    %v3993 = vunpack.c.l.b16 %v3918
    %v3994 = vunpack.c.h.b16 %v3918
    %v3995 = vunpack.c.l.b16 %v3919
    %v3996 = vunpack.c.h.b16 %v3919
    %v3997 = vunpack.c.l.b16 %v3920
    %v3998 = vunpack.c.h.b16 %v3920
    %v3999 = vunpack.c.l.b16 %v3921
    %v4000 = vunpack.c.h.b16 %v3921
    %v4001 = vunpack.c.l.b16 %v3922
    %v4002 = vunpack.c.h.b16 %v3922
    %v4003 = vunpack.c.l.b16 %v3923
    %v4004 = vunpack.c.h.b16 %v3923
    %v4005 = vunpack.c.l.b16 %v3924
    %v4006 = vunpack.c.h.b16 %v3924
    %v4007 = vunpack.c.l.b16 %v3925
    %v4008 = vunpack.c.h.b16 %v3925
    %v4009 = vunpack.c.l.b16 %v3926
    %v4010 = vunpack.c.h.b16 %v3926
    %v4011 = vunpack.c.l.b16 %v3927
    %v4012 = vunpack.c.h.b16 %v3927
    %v4013 = vunpack.c.l.b16 %v3928
    %v4014 = vunpack.c.h.b16 %v3928
    %v4015 = vunpack.c.l.b16 %v3929
    %v4016 = vunpack.c.h.b16 %v3929
    %v4017 = vunpack.c.l.b16 %v3930
    %v4018 = vunpack.c.h.b16 %v3930
    %v4019 = vunpack.c.l.b16 %v3931
    %v4020 = vunpack.c.h.b16 %v3931
    %v4021 = vunpack.c.l.b16 %v3932
    %v4022 = vunpack.c.h.b16 %v3932
    %v4023 = vunpack.c.l.b16 %v3933
    %v4024 = vunpack.c.h.b16 %v3933
    %v4025 = vunpack.c.l.b16 %v3934
    %v4026 = vunpack.c.h.b16 %v3934
    %v4027 = vunpack.c.l.b16 %v3935
    %v4028 = vunpack.c.h.b16 %v3935
    %v4029 = vunpack.c.l.b16 %v3936
    %v4030 = vunpack.c.h.b16 %v3936
    %v4031 = vunpack.c.l.b16 %v3937
    %v4032 = vunpack.c.h.b16 %v3937
    %v4033 = vunpack.c.l.b16 %v3938
    %v4034 = vunpack.c.h.b16 %v3938
    %v4035 = vpack.c.b16 %v3975, %v3971
    %v4036 = vpack.c.b16 %v3976, %v3972
    %v4037 = vpack.c.b16 %v3977, %v3973
    %v4038 = vpack.c.b16 %v3978, %v3974
    %v4039 = vpack.c.b16 %v3983, %v3979
    %v4040 = vpack.c.b16 %v3984, %v3980
    %v4041 = vpack.c.b16 %v3985, %v3981
    %v4042 = vpack.c.b16 %v3986, %v3982
    %v4043 = vpack.c.b16 %v3991, %v3987
    %v4044 = vpack.c.b16 %v3992, %v3988
    %v4045 = vpack.c.b16 %v3993, %v3989
    %v4046 = vpack.c.b16 %v3994, %v3990
    %v4047 = vpack.c.b16 %v3999, %v3995
    %v4048 = vpack.c.b16 %v4000, %v3996
    %v4049 = vpack.c.b16 %v4001, %v3997
    %v4050 = vpack.c.b16 %v4002, %v3998
    %v4051 = vpack.c.b16 %v4007, %v4003
    %v4052 = vpack.c.b16 %v4008, %v4004
    %v4053 = vpack.c.b16 %v4009, %v4005
    %v4054 = vpack.c.b16 %v4010, %v4006
    %v4055 = vpack.c.b16 %v4015, %v4011
    %v4056 = vpack.c.b16 %v4016, %v4012
    %v4057 = vpack.c.b16 %v4017, %v4013
    %v4058 = vpack.c.b16 %v4018, %v4014
    %v4059 = vpack.c.b16 %v4023, %v4019
    %v4060 = vpack.c.b16 %v4024, %v4020
    %v4061 = vpack.c.b16 %v4025, %v4021
    %v4062 = vpack.c.b16 %v4026, %v4022
    %v4063 = vpack.c.b16 %v4031, %v4027
    %v4064 = vpack.c.b16 %v4032, %v4028
    %v4065 = vpack.c.b16 %v4033, %v4029
    %v4066 = vpack.c.b16 %v4034, %v4030
    %4099 = vmatpush.bf16.msra.mxu0 %v4063
    %4100 = vmatpush.bf16.msra.mxu0 %v4059
    %4101 = vmatpush.bf16.msra.mxu0 %v4055
    %4102 = vmatpush.bf16.msra.mxu0 %v4051
    %4103 = vmatpush.bf16.msra.mxu0 %v4047
    %4104 = vmatpush.bf16.msra.mxu0 %v4043
    %4105 = vmatpush.bf16.msra.mxu0 %v4039
    %4106 = vmatpush.bf16.msra.mxu0 %v4035
    %4107 = vmatmul.bf16.gmra.mxu0 %v3906
    %v4108 = vpop.f32.mrf.mxu0
    %v4109 = vadd.f32 0.0, %v4108
    %v4110 = vpop.f32.mrf.mxu0
    %4111 = vdwg.mxu0
    %4112 = vmatpush.bf16.msra.mxu0 %v4064
    %4113 = vmatpush.bf16.msra.mxu0 %v4060
    %4114 = vmatpush.bf16.msra.mxu0 %v4056
    %4115 = vmatpush.bf16.msra.mxu0 %v4052
    %4116 = vmatpush.bf16.msra.mxu0 %v4048
    %4117 = vmatpush.bf16.msra.mxu0 %v4044
    %4118 = vmatpush.bf16.msra.mxu0 %v4040
    %4119 = vmatpush.bf16.msra.mxu0 %v4036
    %4120 = vmatmul.bf16.gmra.mxu0 %v3906
    %v4121 = vpop.f32.mrf.mxu0
    %v4122 = vadd.f32 0.0, %v4121
    %v4123 = vpop.f32.mrf.mxu0
    %4124 = vdwg.mxu0
    %4125 = vmatpush.bf16.msra.mxu0 %v4065
    %4126 = vmatpush.bf16.msra.mxu0 %v4061
    %4127 = vmatpush.bf16.msra.mxu0 %v4057
    %4128 = vmatpush.bf16.msra.mxu0 %v4053
    %4129 = vmatpush.bf16.msra.mxu0 %v4049
    %4130 = vmatpush.bf16.msra.mxu0 %v4045
    %4131 = vmatpush.bf16.msra.mxu0 %v4041
    %4132 = vmatpush.bf16.msra.mxu0 %v4037
    %4133 = vmatmul.bf16.gmra.mxu0 %v3906
    %v4134 = vpop.f32.mrf.mxu0
    %v4135 = vadd.f32 0.0, %v4134
    %v4136 = vpop.f32.mrf.mxu0
    %4137 = vdwg.mxu0
    %4138 = vmatpush.bf16.msra.mxu0 %v4066
    %4139 = vmatpush.bf16.msra.mxu0 %v4062
    %4140 = vmatpush.bf16.msra.mxu0 %v4058
    %4141 = vmatpush.bf16.msra.mxu0 %v4054
    %4142 = vmatpush.bf16.msra.mxu0 %v4050
    %4143 = vmatpush.bf16.msra.mxu0 %v4046
    %4144 = vmatpush.bf16.msra.mxu0 %v4042
    %4145 = vmatpush.bf16.msra.mxu0 %v4038
    %4146 = vmatmul.bf16.gmra.mxu0 %v3906
    %v4147 = vpop.f32.mrf.mxu0
    %v4148 = vadd.f32 0.0, %v4147
    %v4149 = vpop.f32.mrf.mxu0
    %4150 = vdwg.mxu0
    %v4151 = vadd.f32 %v3901, %v4109
    %v4152 = vadd.f32 %v3902, %v4122
    %v4153 = vadd.f32 %v3903, %v4135
    %v4154 = vadd.f32 %v3904, %v4148
    %v4155 = vxor.u32 %v4151, 2147483648
    %v4156 = vmul.f32 %v4155, 1.442695
    %v4157 = vpow.pop %v4156
    %v4158 = vadd.f32 %v4157, 1.0
    %v4159 = vrcp.pop %v4158
    %v4160 = vmul.f32 %v4158, %v4159
    %v4161 = vsub.f32 1.0, %v4160
    %v4162 = vmul.f32 %v4159, %v4161
    %v4163 = vadd.f32 %v4159, %v4162
    %vm4164 = vweird.f32 %v4158
    %vm4165 = vweird.f32 %v4159
    %vm4166 = vmor %vm4164, %vm4165
    %v4167 = vsel %vm4166, %v4159, %v4163
    %v4168 = vand.u32 2147483647, %v4158
    %vm4169 = vcmp.eq.f32.partialorder %v4168, 8.507059e+37
    %v4170 = vand.u32 %v4158, 2147483648
    %v4171 = vor.u32 1.1754944e-38, %v4170
    %v4172 = vsel %vm4169, %v4171, %v4167
    %v4173 = vmul.f32 1.0, %v4172
    %v4174 = vxor.u32 %v4152, 2147483648
    %v4175 = vmul.f32 %v4174, 1.442695
    %v4176 = vpow.pop %v4175
    %v4177 = vadd.f32 %v4176, 1.0
    %v4178 = vrcp.pop %v4177
    %v4179 = vmul.f32 %v4177, %v4178
    %v4180 = vsub.f32 1.0, %v4179
    %v4181 = vmul.f32 %v4178, %v4180
    %v4182 = vadd.f32 %v4178, %v4181
    %vm4183 = vweird.f32 %v4177
    %vm4184 = vweird.f32 %v4178
    %vm4185 = vmor %vm4183, %vm4184
    %v4186 = vsel %vm4185, %v4178, %v4182
    %v4187 = vand.u32 2147483647, %v4177
    %vm4188 = vcmp.eq.f32.partialorder %v4187, 8.507059e+37
    %v4189 = vand.u32 %v4177, 2147483648
    %v4190 = vor.u32 1.1754944e-38, %v4189
    %v4191 = vsel %vm4188, %v4190, %v4186
    %v4192 = vmul.f32 1.0, %v4191
    %v4193 = vtanh.pop %v4153
    %v4194 = vxor.u32 %v4154, 2147483648
    %v4195 = vmul.f32 %v4194, 1.442695
    %v4196 = vpow.pop %v4195
    %v4197 = vadd.f32 %v4196, 1.0
    %v4198 = vrcp.pop %v4197
    %v4199 = vmul.f32 %v4197, %v4198
    %v4200 = vsub.f32 1.0, %v4199
    %v4201 = vmul.f32 %v4198, %v4200
    %v4202 = vadd.f32 %v4198, %v4201
    %vm4203 = vweird.f32 %v4197
    %vm4204 = vweird.f32 %v4198
    %vm4205 = vmor %vm4203, %vm4204
    %v4206 = vsel %vm4205, %v4198, %v4202
    %v4207 = vand.u32 2147483647, %v4197
    %vm4208 = vcmp.eq.f32.partialorder %v4207, 8.507059e+37
    %v4209 = vand.u32 %v4197, 2147483648
    %v4210 = vor.u32 1.1754944e-38, %v4209
    %v4211 = vsel %vm4208, %v4210, %v4206
    %v4212 = vmul.f32 1.0, %v4211
    %v4213 = vld [vmem:[#allocation5] sm:$0xff]
    %v4214 = vmul.f32 %v4192, %v4213
    %v4215 = vmul.f32 %v4173, %v4193
    %v4216 = vadd.f32 %v4214, %v4215
    %v4217 = vtanh.pop %v4216
    %v4218 = vmul.f32 %v4212, %v4217
    %4219 = vst [vmem:[#allocation5] sm:$0xff] %v4216
    %4220 = vst [vmem:[#allocation4] sm:$0xff] %v4218
    %v4221 = vld [vmem:[%s1274] sm:$0xff]
    %v4222 = vld [vmem:[%s1274 + $0x8] sm:$0xff]
    %v4223 = vld [vmem:[%s1274 + $0x10] sm:$0xff]
    %v4224 = vld [vmem:[%s1274 + $0x18] sm:$0xff]
    %v4225 = vld [vmem:[#allocation4] sm:$0xff]
    %v4226 = vpack.c.bf16 %v4225, %v4225
    %v4227 = vld [vmem:[#allocation11] sm:$0xff]
    %v4228 = vld [vmem:[#allocation11 + $0x8] sm:$0xff]
    %v4229 = vld [vmem:[#allocation11 + $0x10] sm:$0xff]
    %v4230 = vld [vmem:[#allocation11 + $0x18] sm:$0xff]
    %v4231 = vld [vmem:[#allocation11 + $0x20] sm:$0xff]
    %v4232 = vld [vmem:[#allocation11 + $0x28] sm:$0xff]
    %v4233 = vld [vmem:[#allocation11 + $0x30] sm:$0xff]
    %v4234 = vld [vmem:[#allocation11 + $0x38] sm:$0xff]
    %v4235 = vld [vmem:[#allocation11 + $0x40] sm:$0xff]
    %v4236 = vld [vmem:[#allocation11 + $0x48] sm:$0xff]
    %v4237 = vld [vmem:[#allocation11 + $0x50] sm:$0xff]
    %v4238 = vld [vmem:[#allocation11 + $0x58] sm:$0xff]
    %v4239 = vld [vmem:[#allocation11 + $0x60] sm:$0xff]
    %v4240 = vld [vmem:[#allocation11 + $0x68] sm:$0xff]
    %v4241 = vld [vmem:[#allocation11 + $0x70] sm:$0xff]
    %v4242 = vld [vmem:[#allocation11 + $0x78] sm:$0xff]
    %v4243 = vld [vmem:[#allocation11 + $0x80] sm:$0xff]
    %v4244 = vld [vmem:[#allocation11 + $0x88] sm:$0xff]
    %v4245 = vld [vmem:[#allocation11 + $0x90] sm:$0xff]
    %v4246 = vld [vmem:[#allocation11 + $0x98] sm:$0xff]
    %v4247 = vld [vmem:[#allocation11 + $0xa0] sm:$0xff]
    %v4248 = vld [vmem:[#allocation11 + $0xa8] sm:$0xff]
    %v4249 = vld [vmem:[#allocation11 + $0xb0] sm:$0xff]
    %v4250 = vld [vmem:[#allocation11 + $0xb8] sm:$0xff]
    %v4251 = vld [vmem:[#allocation11 + $0xc0] sm:$0xff]
    %v4252 = vld [vmem:[#allocation11 + $0xc8] sm:$0xff]
    %v4253 = vld [vmem:[#allocation11 + $0xd0] sm:$0xff]
    %v4254 = vld [vmem:[#allocation11 + $0xd8] sm:$0xff]
    %v4255 = vld [vmem:[#allocation11 + $0xe0] sm:$0xff]
    %v4256 = vld [vmem:[#allocation11 + $0xe8] sm:$0xff]
    %v4257 = vld [vmem:[#allocation11 + $0xf0] sm:$0xff]
    %v4258 = vld [vmem:[#allocation11 + $0xf8] sm:$0xff]
    %v4291 = vunpack.c.l.b16 %v4227
    %v4292 = vunpack.c.h.b16 %v4227
    %v4293 = vunpack.c.l.b16 %v4228
    %v4294 = vunpack.c.h.b16 %v4228
    %v4295 = vunpack.c.l.b16 %v4229
    %v4296 = vunpack.c.h.b16 %v4229
    %v4297 = vunpack.c.l.b16 %v4230
    %v4298 = vunpack.c.h.b16 %v4230
    %v4299 = vunpack.c.l.b16 %v4231
    %v4300 = vunpack.c.h.b16 %v4231
    %v4301 = vunpack.c.l.b16 %v4232
    %v4302 = vunpack.c.h.b16 %v4232
    %v4303 = vunpack.c.l.b16 %v4233
    %v4304 = vunpack.c.h.b16 %v4233
    %v4305 = vunpack.c.l.b16 %v4234
    %v4306 = vunpack.c.h.b16 %v4234
    %v4307 = vunpack.c.l.b16 %v4235
    %v4308 = vunpack.c.h.b16 %v4235
    %v4309 = vunpack.c.l.b16 %v4236
    %v4310 = vunpack.c.h.b16 %v4236
    %v4311 = vunpack.c.l.b16 %v4237
    %v4312 = vunpack.c.h.b16 %v4237
    %v4313 = vunpack.c.l.b16 %v4238
    %v4314 = vunpack.c.h.b16 %v4238
    %v4315 = vunpack.c.l.b16 %v4239
    %v4316 = vunpack.c.h.b16 %v4239
    %v4317 = vunpack.c.l.b16 %v4240
    %v4318 = vunpack.c.h.b16 %v4240
    %v4319 = vunpack.c.l.b16 %v4241
    %v4320 = vunpack.c.h.b16 %v4241
    %v4321 = vunpack.c.l.b16 %v4242
    %v4322 = vunpack.c.h.b16 %v4242
    %v4323 = vunpack.c.l.b16 %v4243
    %v4324 = vunpack.c.h.b16 %v4243
    %v4325 = vunpack.c.l.b16 %v4244
    %v4326 = vunpack.c.h.b16 %v4244
    %v4327 = vunpack.c.l.b16 %v4245
    %v4328 = vunpack.c.h.b16 %v4245
    %v4329 = vunpack.c.l.b16 %v4246
    %v4330 = vunpack.c.h.b16 %v4246
    %v4331 = vunpack.c.l.b16 %v4247
    %v4332 = vunpack.c.h.b16 %v4247
    %v4333 = vunpack.c.l.b16 %v4248
    %v4334 = vunpack.c.h.b16 %v4248
    %v4335 = vunpack.c.l.b16 %v4249
    %v4336 = vunpack.c.h.b16 %v4249
    %v4337 = vunpack.c.l.b16 %v4250
    %v4338 = vunpack.c.h.b16 %v4250
    %v4339 = vunpack.c.l.b16 %v4251
    %v4340 = vunpack.c.h.b16 %v4251
    %v4341 = vunpack.c.l.b16 %v4252
    %v4342 = vunpack.c.h.b16 %v4252
    %v4343 = vunpack.c.l.b16 %v4253
    %v4344 = vunpack.c.h.b16 %v4253
    %v4345 = vunpack.c.l.b16 %v4254
    %v4346 = vunpack.c.h.b16 %v4254
    %v4347 = vunpack.c.l.b16 %v4255
    %v4348 = vunpack.c.h.b16 %v4255
    %v4349 = vunpack.c.l.b16 %v4256
    %v4350 = vunpack.c.h.b16 %v4256
    %v4351 = vunpack.c.l.b16 %v4257
    %v4352 = vunpack.c.h.b16 %v4257
    %v4353 = vunpack.c.l.b16 %v4258
    %v4354 = vunpack.c.h.b16 %v4258
    %v4355 = vpack.c.b16 %v4295, %v4291
    %v4356 = vpack.c.b16 %v4296, %v4292
    %v4357 = vpack.c.b16 %v4297, %v4293
    %v4358 = vpack.c.b16 %v4298, %v4294
    %v4359 = vpack.c.b16 %v4303, %v4299
    %v4360 = vpack.c.b16 %v4304, %v4300
    %v4361 = vpack.c.b16 %v4305, %v4301
    %v4362 = vpack.c.b16 %v4306, %v4302
    %v4363 = vpack.c.b16 %v4311, %v4307
    %v4364 = vpack.c.b16 %v4312, %v4308
    %v4365 = vpack.c.b16 %v4313, %v4309
    %v4366 = vpack.c.b16 %v4314, %v4310
    %v4367 = vpack.c.b16 %v4319, %v4315
    %v4368 = vpack.c.b16 %v4320, %v4316
    %v4369 = vpack.c.b16 %v4321, %v4317
    %v4370 = vpack.c.b16 %v4322, %v4318
    %v4371 = vpack.c.b16 %v4327, %v4323
    %v4372 = vpack.c.b16 %v4328, %v4324
    %v4373 = vpack.c.b16 %v4329, %v4325
    %v4374 = vpack.c.b16 %v4330, %v4326
    %v4375 = vpack.c.b16 %v4335, %v4331
    %v4376 = vpack.c.b16 %v4336, %v4332
    %v4377 = vpack.c.b16 %v4337, %v4333
    %v4378 = vpack.c.b16 %v4338, %v4334
    %v4379 = vpack.c.b16 %v4343, %v4339
    %v4380 = vpack.c.b16 %v4344, %v4340
    %v4381 = vpack.c.b16 %v4345, %v4341
    %v4382 = vpack.c.b16 %v4346, %v4342
    %v4383 = vpack.c.b16 %v4351, %v4347
    %v4384 = vpack.c.b16 %v4352, %v4348
    %v4385 = vpack.c.b16 %v4353, %v4349
    %v4386 = vpack.c.b16 %v4354, %v4350
    %4419 = vmatpush.bf16.msra.mxu0 %v4383
    %4420 = vmatpush.bf16.msra.mxu0 %v4379
    %4421 = vmatpush.bf16.msra.mxu0 %v4375
    %4422 = vmatpush.bf16.msra.mxu0 %v4371
    %4423 = vmatpush.bf16.msra.mxu0 %v4367
    %4424 = vmatpush.bf16.msra.mxu0 %v4363
    %4425 = vmatpush.bf16.msra.mxu0 %v4359
    %4426 = vmatpush.bf16.msra.mxu0 %v4355
    %4427 = vmatmul.bf16.gmra.mxu0 %v4226
    %v4428 = vpop.f32.mrf.mxu0
    %v4429 = vadd.f32 0.0, %v4428
    %v4430 = vpop.f32.mrf.mxu0
    %4431 = vdwg.mxu0
    %4432 = vmatpush.bf16.msra.mxu0 %v4384
    %4433 = vmatpush.bf16.msra.mxu0 %v4380
    %4434 = vmatpush.bf16.msra.mxu0 %v4376
    %4435 = vmatpush.bf16.msra.mxu0 %v4372
    %4436 = vmatpush.bf16.msra.mxu0 %v4368
    %4437 = vmatpush.bf16.msra.mxu0 %v4364
    %4438 = vmatpush.bf16.msra.mxu0 %v4360
    %4439 = vmatpush.bf16.msra.mxu0 %v4356
    %4440 = vmatmul.bf16.gmra.mxu0 %v4226
    %v4441 = vpop.f32.mrf.mxu0
    %v4442 = vadd.f32 0.0, %v4441
    %v4443 = vpop.f32.mrf.mxu0
    %4444 = vdwg.mxu0
    %4445 = vmatpush.bf16.msra.mxu0 %v4385
    %4446 = vmatpush.bf16.msra.mxu0 %v4381
    %4447 = vmatpush.bf16.msra.mxu0 %v4377
    %4448 = vmatpush.bf16.msra.mxu0 %v4373
    %4449 = vmatpush.bf16.msra.mxu0 %v4369
    %4450 = vmatpush.bf16.msra.mxu0 %v4365
    %4451 = vmatpush.bf16.msra.mxu0 %v4361
    %4452 = vmatpush.bf16.msra.mxu0 %v4357
    %4453 = vmatmul.bf16.gmra.mxu0 %v4226
    %v4454 = vpop.f32.mrf.mxu0
    %v4455 = vadd.f32 0.0, %v4454
    %v4456 = vpop.f32.mrf.mxu0
    %4457 = vdwg.mxu0
    %4458 = vmatpush.bf16.msra.mxu0 %v4386
    %4459 = vmatpush.bf16.msra.mxu0 %v4382
    %4460 = vmatpush.bf16.msra.mxu0 %v4378
    %4461 = vmatpush.bf16.msra.mxu0 %v4374
    %4462 = vmatpush.bf16.msra.mxu0 %v4370
    %4463 = vmatpush.bf16.msra.mxu0 %v4366
    %4464 = vmatpush.bf16.msra.mxu0 %v4362
    %4465 = vmatpush.bf16.msra.mxu0 %v4358
    %4466 = vmatmul.bf16.gmra.mxu0 %v4226
    %v4467 = vpop.f32.mrf.mxu0
    %v4468 = vadd.f32 0.0, %v4467
    %v4469 = vpop.f32.mrf.mxu0
    %4470 = vdwg.mxu0
    %v4471 = vadd.f32 %v4221, %v4429
    %v4472 = vadd.f32 %v4222, %v4442
    %v4473 = vadd.f32 %v4223, %v4455
    %v4474 = vadd.f32 %v4224, %v4468
    %v4475 = vxor.u32 %v4471, 2147483648
    %v4476 = vmul.f32 %v4475, 1.442695
    %v4477 = vpow.pop %v4476
    %v4478 = vadd.f32 %v4477, 1.0
    %v4479 = vrcp.pop %v4478
    %v4480 = vmul.f32 %v4478, %v4479
    %v4481 = vsub.f32 1.0, %v4480
    %v4482 = vmul.f32 %v4479, %v4481
    %v4483 = vadd.f32 %v4479, %v4482
    %vm4484 = vweird.f32 %v4478
    %vm4485 = vweird.f32 %v4479
    %vm4486 = vmor %vm4484, %vm4485
    %v4487 = vsel %vm4486, %v4479, %v4483
    %v4488 = vand.u32 2147483647, %v4478
    %vm4489 = vcmp.eq.f32.partialorder %v4488, 8.507059e+37
    %v4490 = vand.u32 %v4478, 2147483648
    %v4491 = vor.u32 1.1754944e-38, %v4490
    %v4492 = vsel %vm4489, %v4491, %v4487
    %v4493 = vmul.f32 1.0, %v4492
    %v4494 = vxor.u32 %v4472, 2147483648
    %v4495 = vmul.f32 %v4494, 1.442695
    %v4496 = vpow.pop %v4495
    %v4497 = vadd.f32 %v4496, 1.0
    %v4498 = vrcp.pop %v4497
    %v4499 = vmul.f32 %v4497, %v4498
    %v4500 = vsub.f32 1.0, %v4499
    %v4501 = vmul.f32 %v4498, %v4500
    %v4502 = vadd.f32 %v4498, %v4501
    %vm4503 = vweird.f32 %v4497
    %vm4504 = vweird.f32 %v4498
    %vm4505 = vmor %vm4503, %vm4504
    %v4506 = vsel %vm4505, %v4498, %v4502
    %v4507 = vand.u32 2147483647, %v4497
    %vm4508 = vcmp.eq.f32.partialorder %v4507, 8.507059e+37
    %v4509 = vand.u32 %v4497, 2147483648
    %v4510 = vor.u32 1.1754944e-38, %v4509
    %v4511 = vsel %vm4508, %v4510, %v4506
    %v4512 = vmul.f32 1.0, %v4511
    %v4513 = vtanh.pop %v4473
    %v4514 = vxor.u32 %v4474, 2147483648
    %v4515 = vmul.f32 %v4514, 1.442695
    %v4516 = vpow.pop %v4515
    %v4517 = vadd.f32 %v4516, 1.0
    %v4518 = vrcp.pop %v4517
    %v4519 = vmul.f32 %v4517, %v4518
    %v4520 = vsub.f32 1.0, %v4519
    %v4521 = vmul.f32 %v4518, %v4520
    %v4522 = vadd.f32 %v4518, %v4521
    %vm4523 = vweird.f32 %v4517
    %vm4524 = vweird.f32 %v4518
    %vm4525 = vmor %vm4523, %vm4524
    %v4526 = vsel %vm4525, %v4518, %v4522
    %v4527 = vand.u32 2147483647, %v4517
    %vm4528 = vcmp.eq.f32.partialorder %v4527, 8.507059e+37
    %v4529 = vand.u32 %v4517, 2147483648
    %v4530 = vor.u32 1.1754944e-38, %v4529
    %v4531 = vsel %vm4528, %v4530, %v4526
    %v4532 = vmul.f32 1.0, %v4531
    %v4533 = vld [vmem:[#allocation5] sm:$0xff]
    %v4534 = vmul.f32 %v4512, %v4533
    %v4535 = vmul.f32 %v4493, %v4513
    %v4536 = vadd.f32 %v4534, %v4535
    %v4537 = vtanh.pop %v4536
    %v4538 = vmul.f32 %v4532, %v4537
    %4539 = vst [vmem:[#allocation5] sm:$0xff] %v4536
    %4540 = vst [vmem:[#allocation4] sm:$0xff] %v4538
    %v4541 = vld [vmem:[%s1599] sm:$0xff]
    %v4542 = vld [vmem:[%s1599 + $0x8] sm:$0xff]
    %v4543 = vld [vmem:[%s1599 + $0x10] sm:$0xff]
    %v4544 = vld [vmem:[%s1599 + $0x18] sm:$0xff]
    %v4545 = vld [vmem:[#allocation4] sm:$0xff]
    %v4546 = vpack.c.bf16 %v4545, %v4545
    %v4547 = vld [vmem:[#allocation11] sm:$0xff]
    %v4548 = vld [vmem:[#allocation11 + $0x8] sm:$0xff]
    %v4549 = vld [vmem:[#allocation11 + $0x10] sm:$0xff]
    %v4550 = vld [vmem:[#allocation11 + $0x18] sm:$0xff]
    %v4551 = vld [vmem:[#allocation11 + $0x20] sm:$0xff]
    %v4552 = vld [vmem:[#allocation11 + $0x28] sm:$0xff]
    %v4553 = vld [vmem:[#allocation11 + $0x30] sm:$0xff]
    %v4554 = vld [vmem:[#allocation11 + $0x38] sm:$0xff]
    %v4555 = vld [vmem:[#allocation11 + $0x40] sm:$0xff]
    %v4556 = vld [vmem:[#allocation11 + $0x48] sm:$0xff]
    %v4557 = vld [vmem:[#allocation11 + $0x50] sm:$0xff]
    %v4558 = vld [vmem:[#allocation11 + $0x58] sm:$0xff]
    %v4559 = vld [vmem:[#allocation11 + $0x60] sm:$0xff]
    %v4560 = vld [vmem:[#allocation11 + $0x68] sm:$0xff]
    %v4561 = vld [vmem:[#allocation11 + $0x70] sm:$0xff]
    %v4562 = vld [vmem:[#allocation11 + $0x78] sm:$0xff]
    %v4563 = vld [vmem:[#allocation11 + $0x80] sm:$0xff]
    %v4564 = vld [vmem:[#allocation11 + $0x88] sm:$0xff]
    %v4565 = vld [vmem:[#allocation11 + $0x90] sm:$0xff]
    %v4566 = vld [vmem:[#allocation11 + $0x98] sm:$0xff]
    %v4567 = vld [vmem:[#allocation11 + $0xa0] sm:$0xff]
    %v4568 = vld [vmem:[#allocation11 + $0xa8] sm:$0xff]
    %v4569 = vld [vmem:[#allocation11 + $0xb0] sm:$0xff]
    %v4570 = vld [vmem:[#allocation11 + $0xb8] sm:$0xff]
    %v4571 = vld [vmem:[#allocation11 + $0xc0] sm:$0xff]
    %v4572 = vld [vmem:[#allocation11 + $0xc8] sm:$0xff]
    %v4573 = vld [vmem:[#allocation11 + $0xd0] sm:$0xff]
    %v4574 = vld [vmem:[#allocation11 + $0xd8] sm:$0xff]
    %v4575 = vld [vmem:[#allocation11 + $0xe0] sm:$0xff]
    %v4576 = vld [vmem:[#allocation11 + $0xe8] sm:$0xff]
    %v4577 = vld [vmem:[#allocation11 + $0xf0] sm:$0xff]
    %v4578 = vld [vmem:[#allocation11 + $0xf8] sm:$0xff]
    %v4611 = vunpack.c.l.b16 %v4547
    %v4612 = vunpack.c.h.b16 %v4547
    %v4613 = vunpack.c.l.b16 %v4548
    %v4614 = vunpack.c.h.b16 %v4548
    %v4615 = vunpack.c.l.b16 %v4549
    %v4616 = vunpack.c.h.b16 %v4549
    %v4617 = vunpack.c.l.b16 %v4550
    %v4618 = vunpack.c.h.b16 %v4550
    %v4619 = vunpack.c.l.b16 %v4551
    %v4620 = vunpack.c.h.b16 %v4551
    %v4621 = vunpack.c.l.b16 %v4552
    %v4622 = vunpack.c.h.b16 %v4552
    %v4623 = vunpack.c.l.b16 %v4553
    %v4624 = vunpack.c.h.b16 %v4553
    %v4625 = vunpack.c.l.b16 %v4554
    %v4626 = vunpack.c.h.b16 %v4554
    %v4627 = vunpack.c.l.b16 %v4555
    %v4628 = vunpack.c.h.b16 %v4555
    %v4629 = vunpack.c.l.b16 %v4556
    %v4630 = vunpack.c.h.b16 %v4556
    %v4631 = vunpack.c.l.b16 %v4557
    %v4632 = vunpack.c.h.b16 %v4557
    %v4633 = vunpack.c.l.b16 %v4558
    %v4634 = vunpack.c.h.b16 %v4558
    %v4635 = vunpack.c.l.b16 %v4559
    %v4636 = vunpack.c.h.b16 %v4559
    %v4637 = vunpack.c.l.b16 %v4560
    %v4638 = vunpack.c.h.b16 %v4560
    %v4639 = vunpack.c.l.b16 %v4561
    %v4640 = vunpack.c.h.b16 %v4561
    %v4641 = vunpack.c.l.b16 %v4562
    %v4642 = vunpack.c.h.b16 %v4562
    %v4643 = vunpack.c.l.b16 %v4563
    %v4644 = vunpack.c.h.b16 %v4563
    %v4645 = vunpack.c.l.b16 %v4564
    %v4646 = vunpack.c.h.b16 %v4564
    %v4647 = vunpack.c.l.b16 %v4565
    %v4648 = vunpack.c.h.b16 %v4565
    %v4649 = vunpack.c.l.b16 %v4566
    %v4650 = vunpack.c.h.b16 %v4566
    %v4651 = vunpack.c.l.b16 %v4567
    %v4652 = vunpack.c.h.b16 %v4567
    %v4653 = vunpack.c.l.b16 %v4568
    %v4654 = vunpack.c.h.b16 %v4568
    %v4655 = vunpack.c.l.b16 %v4569
    %v4656 = vunpack.c.h.b16 %v4569
    %v4657 = vunpack.c.l.b16 %v4570
    %v4658 = vunpack.c.h.b16 %v4570
    %v4659 = vunpack.c.l.b16 %v4571
    %v4660 = vunpack.c.h.b16 %v4571
    %v4661 = vunpack.c.l.b16 %v4572
    %v4662 = vunpack.c.h.b16 %v4572
    %v4663 = vunpack.c.l.b16 %v4573
    %v4664 = vunpack.c.h.b16 %v4573
    %v4665 = vunpack.c.l.b16 %v4574
    %v4666 = vunpack.c.h.b16 %v4574
    %v4667 = vunpack.c.l.b16 %v4575
    %v4668 = vunpack.c.h.b16 %v4575
    %v4669 = vunpack.c.l.b16 %v4576
    %v4670 = vunpack.c.h.b16 %v4576
    %v4671 = vunpack.c.l.b16 %v4577
    %v4672 = vunpack.c.h.b16 %v4577
    %v4673 = vunpack.c.l.b16 %v4578
    %v4674 = vunpack.c.h.b16 %v4578
    %v4675 = vpack.c.b16 %v4615, %v4611
    %v4676 = vpack.c.b16 %v4616, %v4612
    %v4677 = vpack.c.b16 %v4617, %v4613
    %v4678 = vpack.c.b16 %v4618, %v4614
    %v4679 = vpack.c.b16 %v4623, %v4619
    %v4680 = vpack.c.b16 %v4624, %v4620
    %v4681 = vpack.c.b16 %v4625, %v4621
    %v4682 = vpack.c.b16 %v4626, %v4622
    %v4683 = vpack.c.b16 %v4631, %v4627
    %v4684 = vpack.c.b16 %v4632, %v4628
    %v4685 = vpack.c.b16 %v4633, %v4629
    %v4686 = vpack.c.b16 %v4634, %v4630
    %v4687 = vpack.c.b16 %v4639, %v4635
    %v4688 = vpack.c.b16 %v4640, %v4636
    %v4689 = vpack.c.b16 %v4641, %v4637
    %v4690 = vpack.c.b16 %v4642, %v4638
    %v4691 = vpack.c.b16 %v4647, %v4643
    %v4692 = vpack.c.b16 %v4648, %v4644
    %v4693 = vpack.c.b16 %v4649, %v4645
    %v4694 = vpack.c.b16 %v4650, %v4646
    %v4695 = vpack.c.b16 %v4655, %v4651
    %v4696 = vpack.c.b16 %v4656, %v4652
    %v4697 = vpack.c.b16 %v4657, %v4653
    %v4698 = vpack.c.b16 %v4658, %v4654
    %v4699 = vpack.c.b16 %v4663, %v4659
    %v4700 = vpack.c.b16 %v4664, %v4660
    %v4701 = vpack.c.b16 %v4665, %v4661
    %v4702 = vpack.c.b16 %v4666, %v4662
    %v4703 = vpack.c.b16 %v4671, %v4667
    %v4704 = vpack.c.b16 %v4672, %v4668
    %v4705 = vpack.c.b16 %v4673, %v4669
    %v4706 = vpack.c.b16 %v4674, %v4670
    %4739 = vmatpush.bf16.msra.mxu0 %v4703
    %4740 = vmatpush.bf16.msra.mxu0 %v4699
    %4741 = vmatpush.bf16.msra.mxu0 %v4695
    %4742 = vmatpush.bf16.msra.mxu0 %v4691
    %4743 = vmatpush.bf16.msra.mxu0 %v4687
    %4744 = vmatpush.bf16.msra.mxu0 %v4683
    %4745 = vmatpush.bf16.msra.mxu0 %v4679
    %4746 = vmatpush.bf16.msra.mxu0 %v4675
    %4747 = vmatmul.bf16.gmra.mxu0 %v4546
    %v4748 = vpop.f32.mrf.mxu0
    %v4749 = vadd.f32 0.0, %v4748
    %v4750 = vpop.f32.mrf.mxu0
    %4751 = vdwg.mxu0
    %4752 = vmatpush.bf16.msra.mxu0 %v4704
    %4753 = vmatpush.bf16.msra.mxu0 %v4700
    %4754 = vmatpush.bf16.msra.mxu0 %v4696
    %4755 = vmatpush.bf16.msra.mxu0 %v4692
    %4756 = vmatpush.bf16.msra.mxu0 %v4688
    %4757 = vmatpush.bf16.msra.mxu0 %v4684
    %4758 = vmatpush.bf16.msra.mxu0 %v4680
    %4759 = vmatpush.bf16.msra.mxu0 %v4676
    %4760 = vmatmul.bf16.gmra.mxu0 %v4546
    %v4761 = vpop.f32.mrf.mxu0
    %v4762 = vadd.f32 0.0, %v4761
    %v4763 = vpop.f32.mrf.mxu0
    %4764 = vdwg.mxu0
    %4765 = vmatpush.bf16.msra.mxu0 %v4705
    %4766 = vmatpush.bf16.msra.mxu0 %v4701
    %4767 = vmatpush.bf16.msra.mxu0 %v4697
    %4768 = vmatpush.bf16.msra.mxu0 %v4693
    %4769 = vmatpush.bf16.msra.mxu0 %v4689
    %4770 = vmatpush.bf16.msra.mxu0 %v4685
    %4771 = vmatpush.bf16.msra.mxu0 %v4681
    %4772 = vmatpush.bf16.msra.mxu0 %v4677
    %4773 = vmatmul.bf16.gmra.mxu0 %v4546
    %v4774 = vpop.f32.mrf.mxu0
    %v4775 = vadd.f32 0.0, %v4774
    %v4776 = vpop.f32.mrf.mxu0
    %4777 = vdwg.mxu0
    %4778 = vmatpush.bf16.msra.mxu0 %v4706
    %4779 = vmatpush.bf16.msra.mxu0 %v4702
    %4780 = vmatpush.bf16.msra.mxu0 %v4698
    %4781 = vmatpush.bf16.msra.mxu0 %v4694
    %4782 = vmatpush.bf16.msra.mxu0 %v4690
    %4783 = vmatpush.bf16.msra.mxu0 %v4686
    %4784 = vmatpush.bf16.msra.mxu0 %v4682
    %4785 = vmatpush.bf16.msra.mxu0 %v4678
    %4786 = vmatmul.bf16.gmra.mxu0 %v4546
    %v4787 = vpop.f32.mrf.mxu0
    %v4788 = vadd.f32 0.0, %v4787
    %v4789 = vpop.f32.mrf.mxu0
    %4790 = vdwg.mxu0
    %v4791 = vadd.f32 %v4541, %v4749
    %v4792 = vadd.f32 %v4542, %v4762
    %v4793 = vadd.f32 %v4543, %v4775
    %v4794 = vadd.f32 %v4544, %v4788
    %v4795 = vxor.u32 %v4791, 2147483648
    %v4796 = vmul.f32 %v4795, 1.442695
    %v4797 = vpow.pop %v4796
    %v4798 = vadd.f32 %v4797, 1.0
    %v4799 = vrcp.pop %v4798
    %v4800 = vmul.f32 %v4798, %v4799
    %v4801 = vsub.f32 1.0, %v4800
    %v4802 = vmul.f32 %v4799, %v4801
    %v4803 = vadd.f32 %v4799, %v4802
    %vm4804 = vweird.f32 %v4798
    %vm4805 = vweird.f32 %v4799
    %vm4806 = vmor %vm4804, %vm4805
    %v4807 = vsel %vm4806, %v4799, %v4803
    %v4808 = vand.u32 2147483647, %v4798
    %vm4809 = vcmp.eq.f32.partialorder %v4808, 8.507059e+37
    %v4810 = vand.u32 %v4798, 2147483648
    %v4811 = vor.u32 1.1754944e-38, %v4810
    %v4812 = vsel %vm4809, %v4811, %v4807
    %v4813 = vmul.f32 1.0, %v4812
    %v4814 = vxor.u32 %v4792, 2147483648
    %v4815 = vmul.f32 %v4814, 1.442695
    %v4816 = vpow.pop %v4815
    %v4817 = vadd.f32 %v4816, 1.0
    %v4818 = vrcp.pop %v4817
    %v4819 = vmul.f32 %v4817, %v4818
    %v4820 = vsub.f32 1.0, %v4819
    %v4821 = vmul.f32 %v4818, %v4820
    %v4822 = vadd.f32 %v4818, %v4821
    %vm4823 = vweird.f32 %v4817
    %vm4824 = vweird.f32 %v4818
    %vm4825 = vmor %vm4823, %vm4824
    %v4826 = vsel %vm4825, %v4818, %v4822
    %v4827 = vand.u32 2147483647, %v4817
    %vm4828 = vcmp.eq.f32.partialorder %v4827, 8.507059e+37
    %v4829 = vand.u32 %v4817, 2147483648
    %v4830 = vor.u32 1.1754944e-38, %v4829
    %v4831 = vsel %vm4828, %v4830, %v4826
    %v4832 = vmul.f32 1.0, %v4831
    %v4833 = vtanh.pop %v4793
    %v4834 = vxor.u32 %v4794, 2147483648
    %v4835 = vmul.f32 %v4834, 1.442695
    %v4836 = vpow.pop %v4835
    %v4837 = vadd.f32 %v4836, 1.0
    %v4838 = vrcp.pop %v4837
    %v4839 = vmul.f32 %v4837, %v4838
    %v4840 = vsub.f32 1.0, %v4839
    %v4841 = vmul.f32 %v4838, %v4840
    %v4842 = vadd.f32 %v4838, %v4841
    %vm4843 = vweird.f32 %v4837
    %vm4844 = vweird.f32 %v4838
    %vm4845 = vmor %vm4843, %vm4844
    %v4846 = vsel %vm4845, %v4838, %v4842
    %v4847 = vand.u32 2147483647, %v4837
    %vm4848 = vcmp.eq.f32.partialorder %v4847, 8.507059e+37
    %v4849 = vand.u32 %v4837, 2147483648
    %v4850 = vor.u32 1.1754944e-38, %v4849
    %v4851 = vsel %vm4848, %v4850, %v4846
    %v4852 = vmul.f32 1.0, %v4851
    %v4853 = vld [vmem:[#allocation5] sm:$0xff]
    %v4854 = vmul.f32 %v4832, %v4853
    %v4855 = vmul.f32 %v4813, %v4833
    %v4856 = vadd.f32 %v4854, %v4855
    %v4857 = vtanh.pop %v4856
    %v4858 = vmul.f32 %v4852, %v4857
    %4859 = vst [vmem:[#allocation5] sm:$0xff] %v4856
    %4860 = vst [vmem:[#allocation4] sm:$0xff] %v4858
    %v4861 = vld [vmem:[%s1924] sm:$0xff]
    %v4862 = vld [vmem:[%s1924 + $0x8] sm:$0xff]
    %v4863 = vld [vmem:[%s1924 + $0x10] sm:$0xff]
    %v4864 = vld [vmem:[%s1924 + $0x18] sm:$0xff]
    %v4865 = vld [vmem:[#allocation4] sm:$0xff]
    %v4866 = vpack.c.bf16 %v4865, %v4865
    %v4867 = vld [vmem:[#allocation11] sm:$0xff]
    %v4868 = vld [vmem:[#allocation11 + $0x8] sm:$0xff]
    %v4869 = vld [vmem:[#allocation11 + $0x10] sm:$0xff]
    %v4870 = vld [vmem:[#allocation11 + $0x18] sm:$0xff]
    %v4871 = vld [vmem:[#allocation11 + $0x20] sm:$0xff]
    %v4872 = vld [vmem:[#allocation11 + $0x28] sm:$0xff]
    %v4873 = vld [vmem:[#allocation11 + $0x30] sm:$0xff]
    %v4874 = vld [vmem:[#allocation11 + $0x38] sm:$0xff]
    %v4875 = vld [vmem:[#allocation11 + $0x40] sm:$0xff]
    %v4876 = vld [vmem:[#allocation11 + $0x48] sm:$0xff]
    %v4877 = vld [vmem:[#allocation11 + $0x50] sm:$0xff]
    %v4878 = vld [vmem:[#allocation11 + $0x58] sm:$0xff]
    %v4879 = vld [vmem:[#allocation11 + $0x60] sm:$0xff]
    %v4880 = vld [vmem:[#allocation11 + $0x68] sm:$0xff]
    %v4881 = vld [vmem:[#allocation11 + $0x70] sm:$0xff]
    %v4882 = vld [vmem:[#allocation11 + $0x78] sm:$0xff]
    %v4883 = vld [vmem:[#allocation11 + $0x80] sm:$0xff]
    %v4884 = vld [vmem:[#allocation11 + $0x88] sm:$0xff]
    %v4885 = vld [vmem:[#allocation11 + $0x90] sm:$0xff]
    %v4886 = vld [vmem:[#allocation11 + $0x98] sm:$0xff]
    %v4887 = vld [vmem:[#allocation11 + $0xa0] sm:$0xff]
    %v4888 = vld [vmem:[#allocation11 + $0xa8] sm:$0xff]
    %v4889 = vld [vmem:[#allocation11 + $0xb0] sm:$0xff]
    %v4890 = vld [vmem:[#allocation11 + $0xb8] sm:$0xff]
    %v4891 = vld [vmem:[#allocation11 + $0xc0] sm:$0xff]
    %v4892 = vld [vmem:[#allocation11 + $0xc8] sm:$0xff]
    %v4893 = vld [vmem:[#allocation11 + $0xd0] sm:$0xff]
    %v4894 = vld [vmem:[#allocation11 + $0xd8] sm:$0xff]
    %v4895 = vld [vmem:[#allocation11 + $0xe0] sm:$0xff]
    %v4896 = vld [vmem:[#allocation11 + $0xe8] sm:$0xff]
    %v4897 = vld [vmem:[#allocation11 + $0xf0] sm:$0xff]
    %v4898 = vld [vmem:[#allocation11 + $0xf8] sm:$0xff]
    %v4931 = vunpack.c.l.b16 %v4867
    %v4932 = vunpack.c.h.b16 %v4867
    %v4933 = vunpack.c.l.b16 %v4868
    %v4934 = vunpack.c.h.b16 %v4868
    %v4935 = vunpack.c.l.b16 %v4869
    %v4936 = vunpack.c.h.b16 %v4869
    %v4937 = vunpack.c.l.b16 %v4870
    %v4938 = vunpack.c.h.b16 %v4870
    %v4939 = vunpack.c.l.b16 %v4871
    %v4940 = vunpack.c.h.b16 %v4871
    %v4941 = vunpack.c.l.b16 %v4872
    %v4942 = vunpack.c.h.b16 %v4872
    %v4943 = vunpack.c.l.b16 %v4873
    %v4944 = vunpack.c.h.b16 %v4873
    %v4945 = vunpack.c.l.b16 %v4874
    %v4946 = vunpack.c.h.b16 %v4874
    %v4947 = vunpack.c.l.b16 %v4875
    %v4948 = vunpack.c.h.b16 %v4875
    %v4949 = vunpack.c.l.b16 %v4876
    %v4950 = vunpack.c.h.b16 %v4876
    %v4951 = vunpack.c.l.b16 %v4877
    %v4952 = vunpack.c.h.b16 %v4877
    %v4953 = vunpack.c.l.b16 %v4878
    %v4954 = vunpack.c.h.b16 %v4878
    %v4955 = vunpack.c.l.b16 %v4879
    %v4956 = vunpack.c.h.b16 %v4879
    %v4957 = vunpack.c.l.b16 %v4880
    %v4958 = vunpack.c.h.b16 %v4880
    %v4959 = vunpack.c.l.b16 %v4881
    %v4960 = vunpack.c.h.b16 %v4881
    %v4961 = vunpack.c.l.b16 %v4882
    %v4962 = vunpack.c.h.b16 %v4882
    %v4963 = vunpack.c.l.b16 %v4883
    %v4964 = vunpack.c.h.b16 %v4883
    %v4965 = vunpack.c.l.b16 %v4884
    %v4966 = vunpack.c.h.b16 %v4884
    %v4967 = vunpack.c.l.b16 %v4885
    %v4968 = vunpack.c.h.b16 %v4885
    %v4969 = vunpack.c.l.b16 %v4886
    %v4970 = vunpack.c.h.b16 %v4886
    %v4971 = vunpack.c.l.b16 %v4887
    %v4972 = vunpack.c.h.b16 %v4887
    %v4973 = vunpack.c.l.b16 %v4888
    %v4974 = vunpack.c.h.b16 %v4888
    %v4975 = vunpack.c.l.b16 %v4889
    %v4976 = vunpack.c.h.b16 %v4889
    %v4977 = vunpack.c.l.b16 %v4890
    %v4978 = vunpack.c.h.b16 %v4890
    %v4979 = vunpack.c.l.b16 %v4891
    %v4980 = vunpack.c.h.b16 %v4891
    %v4981 = vunpack.c.l.b16 %v4892
    %v4982 = vunpack.c.h.b16 %v4892
    %v4983 = vunpack.c.l.b16 %v4893
    %v4984 = vunpack.c.h.b16 %v4893
    %v4985 = vunpack.c.l.b16 %v4894
    %v4986 = vunpack.c.h.b16 %v4894
    %v4987 = vunpack.c.l.b16 %v4895
    %v4988 = vunpack.c.h.b16 %v4895
    %v4989 = vunpack.c.l.b16 %v4896
    %v4990 = vunpack.c.h.b16 %v4896
    %v4991 = vunpack.c.l.b16 %v4897
    %v4992 = vunpack.c.h.b16 %v4897
    %v4993 = vunpack.c.l.b16 %v4898
    %v4994 = vunpack.c.h.b16 %v4898
    %v4995 = vpack.c.b16 %v4935, %v4931
    %v4996 = vpack.c.b16 %v4936, %v4932
    %v4997 = vpack.c.b16 %v4937, %v4933
    %v4998 = vpack.c.b16 %v4938, %v4934
    %v4999 = vpack.c.b16 %v4943, %v4939
    %v5000 = vpack.c.b16 %v4944, %v4940
    %v5001 = vpack.c.b16 %v4945, %v4941
    %v5002 = vpack.c.b16 %v4946, %v4942
    %v5003 = vpack.c.b16 %v4951, %v4947
    %v5004 = vpack.c.b16 %v4952, %v4948
    %v5005 = vpack.c.b16 %v4953, %v4949
    %v5006 = vpack.c.b16 %v4954, %v4950
    %v5007 = vpack.c.b16 %v4959, %v4955
    %v5008 = vpack.c.b16 %v4960, %v4956
    %v5009 = vpack.c.b16 %v4961, %v4957
    %v5010 = vpack.c.b16 %v4962, %v4958
    %v5011 = vpack.c.b16 %v4967, %v4963
    %v5012 = vpack.c.b16 %v4968, %v4964
    %v5013 = vpack.c.b16 %v4969, %v4965
    %v5014 = vpack.c.b16 %v4970, %v4966
    %v5015 = vpack.c.b16 %v4975, %v4971
    %v5016 = vpack.c.b16 %v4976, %v4972
    %v5017 = vpack.c.b16 %v4977, %v4973
    %v5018 = vpack.c.b16 %v4978, %v4974
    %v5019 = vpack.c.b16 %v4983, %v4979
    %v5020 = vpack.c.b16 %v4984, %v4980
    %v5021 = vpack.c.b16 %v4985, %v4981
    %v5022 = vpack.c.b16 %v4986, %v4982
    %v5023 = vpack.c.b16 %v4991, %v4987
    %v5024 = vpack.c.b16 %v4992, %v4988
    %v5025 = vpack.c.b16 %v4993, %v4989
    %v5026 = vpack.c.b16 %v4994, %v4990
    %5059 = vmatpush.bf16.msra.mxu0 %v5023
    %5060 = vmatpush.bf16.msra.mxu0 %v5019
    %5061 = vmatpush.bf16.msra.mxu0 %v5015
    %5062 = vmatpush.bf16.msra.mxu0 %v5011
    %5063 = vmatpush.bf16.msra.mxu0 %v5007
    %5064 = vmatpush.bf16.msra.mxu0 %v5003
    %5065 = vmatpush.bf16.msra.mxu0 %v4999
    %5066 = vmatpush.bf16.msra.mxu0 %v4995
    %5067 = vmatmul.bf16.gmra.mxu0 %v4866
    %v5068 = vpop.f32.mrf.mxu0
    %v5069 = vadd.f32 0.0, %v5068
    %v5070 = vpop.f32.mrf.mxu0
    %5071 = vdwg.mxu0
    %5072 = vmatpush.bf16.msra.mxu0 %v5024
    %5073 = vmatpush.bf16.msra.mxu0 %v5020
    %5074 = vmatpush.bf16.msra.mxu0 %v5016
    %5075 = vmatpush.bf16.msra.mxu0 %v5012
    %5076 = vmatpush.bf16.msra.mxu0 %v5008
    %5077 = vmatpush.bf16.msra.mxu0 %v5004
    %5078 = vmatpush.bf16.msra.mxu0 %v5000
    %5079 = vmatpush.bf16.msra.mxu0 %v4996
    %5080 = vmatmul.bf16.gmra.mxu0 %v4866
    %v5081 = vpop.f32.mrf.mxu0
    %v5082 = vadd.f32 0.0, %v5081
    %v5083 = vpop.f32.mrf.mxu0
    %5084 = vdwg.mxu0
    %5085 = vmatpush.bf16.msra.mxu0 %v5025
    %5086 = vmatpush.bf16.msra.mxu0 %v5021
    %5087 = vmatpush.bf16.msra.mxu0 %v5017
    %5088 = vmatpush.bf16.msra.mxu0 %v5013
    %5089 = vmatpush.bf16.msra.mxu0 %v5009
    %5090 = vmatpush.bf16.msra.mxu0 %v5005
    %5091 = vmatpush.bf16.msra.mxu0 %v5001
    %5092 = vmatpush.bf16.msra.mxu0 %v4997
    %5093 = vmatmul.bf16.gmra.mxu0 %v4866
    %v5094 = vpop.f32.mrf.mxu0
    %v5095 = vadd.f32 0.0, %v5094
    %v5096 = vpop.f32.mrf.mxu0
    %5097 = vdwg.mxu0
    %5098 = vmatpush.bf16.msra.mxu0 %v5026
    %5099 = vmatpush.bf16.msra.mxu0 %v5022
    %5100 = vmatpush.bf16.msra.mxu0 %v5018
    %5101 = vmatpush.bf16.msra.mxu0 %v5014
    %5102 = vmatpush.bf16.msra.mxu0 %v5010
    %5103 = vmatpush.bf16.msra.mxu0 %v5006
    %5104 = vmatpush.bf16.msra.mxu0 %v5002
    %5105 = vmatpush.bf16.msra.mxu0 %v4998
    %5106 = vmatmul.bf16.gmra.mxu0 %v4866
    %v5107 = vpop.f32.mrf.mxu0
    %v5108 = vadd.f32 0.0, %v5107
    %v5109 = vpop.f32.mrf.mxu0
    %5110 = vdwg.mxu0
    %v5111 = vadd.f32 %v4861, %v5069
    %v5112 = vadd.f32 %v4862, %v5082
    %v5113 = vadd.f32 %v4863, %v5095
    %v5114 = vadd.f32 %v4864, %v5108
    %v5115 = vxor.u32 %v5111, 2147483648
    %v5116 = vmul.f32 %v5115, 1.442695
    %v5117 = vpow.pop %v5116
    %v5118 = vadd.f32 %v5117, 1.0
    %v5119 = vrcp.pop %v5118
    %v5120 = vmul.f32 %v5118, %v5119
    %v5121 = vsub.f32 1.0, %v5120
    %v5122 = vmul.f32 %v5119, %v5121
    %v5123 = vadd.f32 %v5119, %v5122
    %vm5124 = vweird.f32 %v5118
    %vm5125 = vweird.f32 %v5119
    %vm5126 = vmor %vm5124, %vm5125
    %v5127 = vsel %vm5126, %v5119, %v5123
    %v5128 = vand.u32 2147483647, %v5118
    %vm5129 = vcmp.eq.f32.partialorder %v5128, 8.507059e+37
    %v5130 = vand.u32 %v5118, 2147483648
    %v5131 = vor.u32 1.1754944e-38, %v5130
    %v5132 = vsel %vm5129, %v5131, %v5127
    %v5133 = vmul.f32 1.0, %v5132
    %v5134 = vxor.u32 %v5112, 2147483648
    %v5135 = vmul.f32 %v5134, 1.442695
    %v5136 = vpow.pop %v5135
    %v5137 = vadd.f32 %v5136, 1.0
    %v5138 = vrcp.pop %v5137
    %v5139 = vmul.f32 %v5137, %v5138
    %v5140 = vsub.f32 1.0, %v5139
    %v5141 = vmul.f32 %v5138, %v5140
    %v5142 = vadd.f32 %v5138, %v5141
    %vm5143 = vweird.f32 %v5137
    %vm5144 = vweird.f32 %v5138
    %vm5145 = vmor %vm5143, %vm5144
    %v5146 = vsel %vm5145, %v5138, %v5142
    %v5147 = vand.u32 2147483647, %v5137
    %vm5148 = vcmp.eq.f32.partialorder %v5147, 8.507059e+37
    %v5149 = vand.u32 %v5137, 2147483648
    %v5150 = vor.u32 1.1754944e-38, %v5149
    %v5151 = vsel %vm5148, %v5150, %v5146
    %v5152 = vmul.f32 1.0, %v5151
    %v5153 = vtanh.pop %v5113
    %v5154 = vxor.u32 %v5114, 2147483648
    %v5155 = vmul.f32 %v5154, 1.442695
    %v5156 = vpow.pop %v5155
    %v5157 = vadd.f32 %v5156, 1.0
    %v5158 = vrcp.pop %v5157
    %v5159 = vmul.f32 %v5157, %v5158
    %v5160 = vsub.f32 1.0, %v5159
    %v5161 = vmul.f32 %v5158, %v5160
    %v5162 = vadd.f32 %v5158, %v5161
    %vm5163 = vweird.f32 %v5157
    %vm5164 = vweird.f32 %v5158
    %vm5165 = vmor %vm5163, %vm5164
    %v5166 = vsel %vm5165, %v5158, %v5162
    %v5167 = vand.u32 2147483647, %v5157
    %vm5168 = vcmp.eq.f32.partialorder %v5167, 8.507059e+37
    %v5169 = vand.u32 %v5157, 2147483648
    %v5170 = vor.u32 1.1754944e-38, %v5169
    %v5171 = vsel %vm5168, %v5170, %v5166
    %v5172 = vmul.f32 1.0, %v5171
    %v5173 = vld [vmem:[#allocation5] sm:$0xff]
    %v5174 = vmul.f32 %v5152, %v5173
    %v5175 = vmul.f32 %v5133, %v5153
    %v5176 = vadd.f32 %v5174, %v5175
    %v5177 = vtanh.pop %v5176
    %v5178 = vmul.f32 %v5172, %v5177
    %5179 = vst [vmem:[#allocation5] sm:$0xff] %v5176
    %5180 = vst [vmem:[#allocation4] sm:$0xff] %v5178
    %v5181 = vld [vmem:[%s2249] sm:$0xff]
    %v5182 = vld [vmem:[%s2249 + $0x8] sm:$0xff]
    %v5183 = vld [vmem:[%s2249 + $0x10] sm:$0xff]
    %v5184 = vld [vmem:[%s2249 + $0x18] sm:$0xff]
    %v5185 = vld [vmem:[#allocation4] sm:$0xff]
    %v5186 = vpack.c.bf16 %v5185, %v5185
    %v5187 = vld [vmem:[#allocation11] sm:$0xff]
    %v5188 = vld [vmem:[#allocation11 + $0x8] sm:$0xff]
    %v5189 = vld [vmem:[#allocation11 + $0x10] sm:$0xff]
    %v5190 = vld [vmem:[#allocation11 + $0x18] sm:$0xff]
    %v5191 = vld [vmem:[#allocation11 + $0x20] sm:$0xff]
    %v5192 = vld [vmem:[#allocation11 + $0x28] sm:$0xff]
    %v5193 = vld [vmem:[#allocation11 + $0x30] sm:$0xff]
    %v5194 = vld [vmem:[#allocation11 + $0x38] sm:$0xff]
    %v5195 = vld [vmem:[#allocation11 + $0x40] sm:$0xff]
    %v5196 = vld [vmem:[#allocation11 + $0x48] sm:$0xff]
    %v5197 = vld [vmem:[#allocation11 + $0x50] sm:$0xff]
    %v5198 = vld [vmem:[#allocation11 + $0x58] sm:$0xff]
    %v5199 = vld [vmem:[#allocation11 + $0x60] sm:$0xff]
    %v5200 = vld [vmem:[#allocation11 + $0x68] sm:$0xff]
    %v5201 = vld [vmem:[#allocation11 + $0x70] sm:$0xff]
    %v5202 = vld [vmem:[#allocation11 + $0x78] sm:$0xff]
    %v5203 = vld [vmem:[#allocation11 + $0x80] sm:$0xff]
    %v5204 = vld [vmem:[#allocation11 + $0x88] sm:$0xff]
    %v5205 = vld [vmem:[#allocation11 + $0x90] sm:$0xff]
    %v5206 = vld [vmem:[#allocation11 + $0x98] sm:$0xff]
    %v5207 = vld [vmem:[#allocation11 + $0xa0] sm:$0xff]
    %v5208 = vld [vmem:[#allocation11 + $0xa8] sm:$0xff]
    %v5209 = vld [vmem:[#allocation11 + $0xb0] sm:$0xff]
    %v5210 = vld [vmem:[#allocation11 + $0xb8] sm:$0xff]
    %v5211 = vld [vmem:[#allocation11 + $0xc0] sm:$0xff]
    %v5212 = vld [vmem:[#allocation11 + $0xc8] sm:$0xff]
    %v5213 = vld [vmem:[#allocation11 + $0xd0] sm:$0xff]
    %v5214 = vld [vmem:[#allocation11 + $0xd8] sm:$0xff]
    %v5215 = vld [vmem:[#allocation11 + $0xe0] sm:$0xff]
    %v5216 = vld [vmem:[#allocation11 + $0xe8] sm:$0xff]
    %v5217 = vld [vmem:[#allocation11 + $0xf0] sm:$0xff]
    %v5218 = vld [vmem:[#allocation11 + $0xf8] sm:$0xff]
    %v5251 = vunpack.c.l.b16 %v5187
    %v5252 = vunpack.c.h.b16 %v5187
    %v5253 = vunpack.c.l.b16 %v5188
    %v5254 = vunpack.c.h.b16 %v5188
    %v5255 = vunpack.c.l.b16 %v5189
    %v5256 = vunpack.c.h.b16 %v5189
    %v5257 = vunpack.c.l.b16 %v5190
    %v5258 = vunpack.c.h.b16 %v5190
    %v5259 = vunpack.c.l.b16 %v5191
    %v5260 = vunpack.c.h.b16 %v5191
    %v5261 = vunpack.c.l.b16 %v5192
    %v5262 = vunpack.c.h.b16 %v5192
    %v5263 = vunpack.c.l.b16 %v5193
    %v5264 = vunpack.c.h.b16 %v5193
    %v5265 = vunpack.c.l.b16 %v5194
    %v5266 = vunpack.c.h.b16 %v5194
    %v5267 = vunpack.c.l.b16 %v5195
    %v5268 = vunpack.c.h.b16 %v5195
    %v5269 = vunpack.c.l.b16 %v5196
    %v5270 = vunpack.c.h.b16 %v5196
    %v5271 = vunpack.c.l.b16 %v5197
    %v5272 = vunpack.c.h.b16 %v5197
    %v5273 = vunpack.c.l.b16 %v5198
    %v5274 = vunpack.c.h.b16 %v5198
    %v5275 = vunpack.c.l.b16 %v5199
    %v5276 = vunpack.c.h.b16 %v5199
    %v5277 = vunpack.c.l.b16 %v5200
    %v5278 = vunpack.c.h.b16 %v5200
    %v5279 = vunpack.c.l.b16 %v5201
    %v5280 = vunpack.c.h.b16 %v5201
    %v5281 = vunpack.c.l.b16 %v5202
    %v5282 = vunpack.c.h.b16 %v5202
    %v5283 = vunpack.c.l.b16 %v5203
    %v5284 = vunpack.c.h.b16 %v5203
    %v5285 = vunpack.c.l.b16 %v5204
    %v5286 = vunpack.c.h.b16 %v5204
    %v5287 = vunpack.c.l.b16 %v5205
    %v5288 = vunpack.c.h.b16 %v5205
    %v5289 = vunpack.c.l.b16 %v5206
    %v5290 = vunpack.c.h.b16 %v5206
    %v5291 = vunpack.c.l.b16 %v5207
    %v5292 = vunpack.c.h.b16 %v5207
    %v5293 = vunpack.c.l.b16 %v5208
    %v5294 = vunpack.c.h.b16 %v5208
    %v5295 = vunpack.c.l.b16 %v5209
    %v5296 = vunpack.c.h.b16 %v5209
    %v5297 = vunpack.c.l.b16 %v5210
    %v5298 = vunpack.c.h.b16 %v5210
    %v5299 = vunpack.c.l.b16 %v5211
    %v5300 = vunpack.c.h.b16 %v5211
    %v5301 = vunpack.c.l.b16 %v5212
    %v5302 = vunpack.c.h.b16 %v5212
    %v5303 = vunpack.c.l.b16 %v5213
    %v5304 = vunpack.c.h.b16 %v5213
    %v5305 = vunpack.c.l.b16 %v5214
    %v5306 = vunpack.c.h.b16 %v5214
    %v5307 = vunpack.c.l.b16 %v5215
    %v5308 = vunpack.c.h.b16 %v5215
    %v5309 = vunpack.c.l.b16 %v5216
    %v5310 = vunpack.c.h.b16 %v5216
    %v5311 = vunpack.c.l.b16 %v5217
    %v5312 = vunpack.c.h.b16 %v5217
    %v5313 = vunpack.c.l.b16 %v5218
    %v5314 = vunpack.c.h.b16 %v5218
    %v5315 = vpack.c.b16 %v5255, %v5251
    %v5316 = vpack.c.b16 %v5256, %v5252
    %v5317 = vpack.c.b16 %v5257, %v5253
    %v5318 = vpack.c.b16 %v5258, %v5254
    %v5319 = vpack.c.b16 %v5263, %v5259
    %v5320 = vpack.c.b16 %v5264, %v5260
    %v5321 = vpack.c.b16 %v5265, %v5261
    %v5322 = vpack.c.b16 %v5266, %v5262
    %v5323 = vpack.c.b16 %v5271, %v5267
    %v5324 = vpack.c.b16 %v5272, %v5268
    %v5325 = vpack.c.b16 %v5273, %v5269
    %v5326 = vpack.c.b16 %v5274, %v5270
    %v5327 = vpack.c.b16 %v5279, %v5275
    %v5328 = vpack.c.b16 %v5280, %v5276
    %v5329 = vpack.c.b16 %v5281, %v5277
    %v5330 = vpack.c.b16 %v5282, %v5278
    %v5331 = vpack.c.b16 %v5287, %v5283
    %v5332 = vpack.c.b16 %v5288, %v5284
    %v5333 = vpack.c.b16 %v5289, %v5285
    %v5334 = vpack.c.b16 %v5290, %v5286
    %v5335 = vpack.c.b16 %v5295, %v5291
    %v5336 = vpack.c.b16 %v5296, %v5292
    %v5337 = vpack.c.b16 %v5297, %v5293
    %v5338 = vpack.c.b16 %v5298, %v5294
    %v5339 = vpack.c.b16 %v5303, %v5299
    %v5340 = vpack.c.b16 %v5304, %v5300
    %v5341 = vpack.c.b16 %v5305, %v5301
    %v5342 = vpack.c.b16 %v5306, %v5302
    %v5343 = vpack.c.b16 %v5311, %v5307
    %v5344 = vpack.c.b16 %v5312, %v5308
    %v5345 = vpack.c.b16 %v5313, %v5309
    %v5346 = vpack.c.b16 %v5314, %v5310
    %5379 = vmatpush.bf16.msra.mxu0 %v5343
    %5380 = vmatpush.bf16.msra.mxu0 %v5339
    %5381 = vmatpush.bf16.msra.mxu0 %v5335
    %5382 = vmatpush.bf16.msra.mxu0 %v5331
    %5383 = vmatpush.bf16.msra.mxu0 %v5327
    %5384 = vmatpush.bf16.msra.mxu0 %v5323
    %5385 = vmatpush.bf16.msra.mxu0 %v5319
    %5386 = vmatpush.bf16.msra.mxu0 %v5315
    %5387 = vmatmul.bf16.gmra.mxu0 %v5186
    %v5388 = vpop.f32.mrf.mxu0
    %v5389 = vadd.f32 0.0, %v5388
    %v5390 = vpop.f32.mrf.mxu0
    %5391 = vdwg.mxu0
    %5392 = vmatpush.bf16.msra.mxu0 %v5344
    %5393 = vmatpush.bf16.msra.mxu0 %v5340
    %5394 = vmatpush.bf16.msra.mxu0 %v5336
    %5395 = vmatpush.bf16.msra.mxu0 %v5332
    %5396 = vmatpush.bf16.msra.mxu0 %v5328
    %5397 = vmatpush.bf16.msra.mxu0 %v5324
    %5398 = vmatpush.bf16.msra.mxu0 %v5320
    %5399 = vmatpush.bf16.msra.mxu0 %v5316
    %5400 = vmatmul.bf16.gmra.mxu0 %v5186
    %v5401 = vpop.f32.mrf.mxu0
    %v5402 = vadd.f32 0.0, %v5401
    %v5403 = vpop.f32.mrf.mxu0
    %5404 = vdwg.mxu0
    %5405 = vmatpush.bf16.msra.mxu0 %v5345
    %5406 = vmatpush.bf16.msra.mxu0 %v5341
    %5407 = vmatpush.bf16.msra.mxu0 %v5337
    %5408 = vmatpush.bf16.msra.mxu0 %v5333
    %5409 = vmatpush.bf16.msra.mxu0 %v5329
    %5410 = vmatpush.bf16.msra.mxu0 %v5325
    %5411 = vmatpush.bf16.msra.mxu0 %v5321
    %5412 = vmatpush.bf16.msra.mxu0 %v5317
    %5413 = vmatmul.bf16.gmra.mxu0 %v5186
    %v5414 = vpop.f32.mrf.mxu0
    %v5415 = vadd.f32 0.0, %v5414
    %v5416 = vpop.f32.mrf.mxu0
    %5417 = vdwg.mxu0
    %5418 = vmatpush.bf16.msra.mxu0 %v5346
    %5419 = vmatpush.bf16.msra.mxu0 %v5342
    %5420 = vmatpush.bf16.msra.mxu0 %v5338
    %5421 = vmatpush.bf16.msra.mxu0 %v5334
    %5422 = vmatpush.bf16.msra.mxu0 %v5330
    %5423 = vmatpush.bf16.msra.mxu0 %v5326
    %5424 = vmatpush.bf16.msra.mxu0 %v5322
    %5425 = vmatpush.bf16.msra.mxu0 %v5318
    %5426 = vmatmul.bf16.gmra.mxu0 %v5186
    %v5427 = vpop.f32.mrf.mxu0
    %v5428 = vadd.f32 0.0, %v5427
    %v5429 = vpop.f32.mrf.mxu0
    %5430 = vdwg.mxu0
    %v5431 = vadd.f32 %v5181, %v5389
    %v5432 = vadd.f32 %v5182, %v5402
    %v5433 = vadd.f32 %v5183, %v5415
    %v5434 = vadd.f32 %v5184, %v5428
    %v5435 = vxor.u32 %v5431, 2147483648
    %v5436 = vmul.f32 %v5435, 1.442695
    %v5437 = vpow.pop %v5436
    %v5438 = vadd.f32 %v5437, 1.0
    %v5439 = vrcp.pop %v5438
    %v5440 = vmul.f32 %v5438, %v5439
    %v5441 = vsub.f32 1.0, %v5440
    %v5442 = vmul.f32 %v5439, %v5441
    %v5443 = vadd.f32 %v5439, %v5442
    %vm5444 = vweird.f32 %v5438
    %vm5445 = vweird.f32 %v5439
    %vm5446 = vmor %vm5444, %vm5445
    %v5447 = vsel %vm5446, %v5439, %v5443
    %v5448 = vand.u32 2147483647, %v5438
    %vm5449 = vcmp.eq.f32.partialorder %v5448, 8.507059e+37
    %v5450 = vand.u32 %v5438, 2147483648
    %v5451 = vor.u32 1.1754944e-38, %v5450
    %v5452 = vsel %vm5449, %v5451, %v5447
    %v5453 = vmul.f32 1.0, %v5452
    %v5454 = vxor.u32 %v5432, 2147483648
    %v5455 = vmul.f32 %v5454, 1.442695
    %v5456 = vpow.pop %v5455
    %v5457 = vadd.f32 %v5456, 1.0
    %v5458 = vrcp.pop %v5457
    %v5459 = vmul.f32 %v5457, %v5458
    %v5460 = vsub.f32 1.0, %v5459
    %v5461 = vmul.f32 %v5458, %v5460
    %v5462 = vadd.f32 %v5458, %v5461
    %vm5463 = vweird.f32 %v5457
    %vm5464 = vweird.f32 %v5458
    %vm5465 = vmor %vm5463, %vm5464
    %v5466 = vsel %vm5465, %v5458, %v5462
    %v5467 = vand.u32 2147483647, %v5457
    %vm5468 = vcmp.eq.f32.partialorder %v5467, 8.507059e+37
    %v5469 = vand.u32 %v5457, 2147483648
    %v5470 = vor.u32 1.1754944e-38, %v5469
    %v5471 = vsel %vm5468, %v5470, %v5466
    %v5472 = vmul.f32 1.0, %v5471
    %v5473 = vtanh.pop %v5433
    %v5474 = vxor.u32 %v5434, 2147483648
    %v5475 = vmul.f32 %v5474, 1.442695
    %v5476 = vpow.pop %v5475
    %v5477 = vadd.f32 %v5476, 1.0
    %v5478 = vrcp.pop %v5477
    %v5479 = vmul.f32 %v5477, %v5478
    %v5480 = vsub.f32 1.0, %v5479
    %v5481 = vmul.f32 %v5478, %v5480
    %v5482 = vadd.f32 %v5478, %v5481
    %vm5483 = vweird.f32 %v5477
    %vm5484 = vweird.f32 %v5478
    %vm5485 = vmor %vm5483, %vm5484
    %v5486 = vsel %vm5485, %v5478, %v5482
    %v5487 = vand.u32 2147483647, %v5477
    %vm5488 = vcmp.eq.f32.partialorder %v5487, 8.507059e+37
    %v5489 = vand.u32 %v5477, 2147483648
    %v5490 = vor.u32 1.1754944e-38, %v5489
    %v5491 = vsel %vm5488, %v5490, %v5486
    %v5492 = vmul.f32 1.0, %v5491
    %v5493 = vld [vmem:[#allocation5] sm:$0xff]
    %v5494 = vmul.f32 %v5472, %v5493
    %v5495 = vmul.f32 %v5453, %v5473
    %v5496 = vadd.f32 %v5494, %v5495
    %v5497 = vtanh.pop %v5496
    %v5498 = vmul.f32 %v5492, %v5497
    %5499 = vst [vmem:[#allocation5] sm:$0xff] %v5496
    %5500 = vst [vmem:[#allocation4] sm:$0xff] %v5498
    %v5501 = vld [vmem:[%s2574] sm:$0xff]
    %v5502 = vld [vmem:[%s2574 + $0x8] sm:$0xff]
    %v5503 = vld [vmem:[%s2574 + $0x10] sm:$0xff]
    %v5504 = vld [vmem:[%s2574 + $0x18] sm:$0xff]
    %v5505 = vld [vmem:[#allocation4] sm:$0xff]
    %v5506 = vpack.c.bf16 %v5505, %v5505
    %v5507 = vld [vmem:[#allocation11] sm:$0xff]
    %v5508 = vld [vmem:[#allocation11 + $0x8] sm:$0xff]
    %v5509 = vld [vmem:[#allocation11 + $0x10] sm:$0xff]
    %v5510 = vld [vmem:[#allocation11 + $0x18] sm:$0xff]
    %v5511 = vld [vmem:[#allocation11 + $0x20] sm:$0xff]
    %v5512 = vld [vmem:[#allocation11 + $0x28] sm:$0xff]
    %v5513 = vld [vmem:[#allocation11 + $0x30] sm:$0xff]
    %v5514 = vld [vmem:[#allocation11 + $0x38] sm:$0xff]
    %v5515 = vld [vmem:[#allocation11 + $0x40] sm:$0xff]
    %v5516 = vld [vmem:[#allocation11 + $0x48] sm:$0xff]
    %v5517 = vld [vmem:[#allocation11 + $0x50] sm:$0xff]
    %v5518 = vld [vmem:[#allocation11 + $0x58] sm:$0xff]
    %v5519 = vld [vmem:[#allocation11 + $0x60] sm:$0xff]
    %v5520 = vld [vmem:[#allocation11 + $0x68] sm:$0xff]
    %v5521 = vld [vmem:[#allocation11 + $0x70] sm:$0xff]
    %v5522 = vld [vmem:[#allocation11 + $0x78] sm:$0xff]
    %v5523 = vld [vmem:[#allocation11 + $0x80] sm:$0xff]
    %v5524 = vld [vmem:[#allocation11 + $0x88] sm:$0xff]
    %v5525 = vld [vmem:[#allocation11 + $0x90] sm:$0xff]
    %v5526 = vld [vmem:[#allocation11 + $0x98] sm:$0xff]
    %v5527 = vld [vmem:[#allocation11 + $0xa0] sm:$0xff]
    %v5528 = vld [vmem:[#allocation11 + $0xa8] sm:$0xff]
    %v5529 = vld [vmem:[#allocation11 + $0xb0] sm:$0xff]
    %v5530 = vld [vmem:[#allocation11 + $0xb8] sm:$0xff]
    %v5531 = vld [vmem:[#allocation11 + $0xc0] sm:$0xff]
    %v5532 = vld [vmem:[#allocation11 + $0xc8] sm:$0xff]
    %v5533 = vld [vmem:[#allocation11 + $0xd0] sm:$0xff]
    %v5534 = vld [vmem:[#allocation11 + $0xd8] sm:$0xff]
    %v5535 = vld [vmem:[#allocation11 + $0xe0] sm:$0xff]
    %v5536 = vld [vmem:[#allocation11 + $0xe8] sm:$0xff]
    %v5537 = vld [vmem:[#allocation11 + $0xf0] sm:$0xff]
    %v5538 = vld [vmem:[#allocation11 + $0xf8] sm:$0xff]
    %v5571 = vunpack.c.l.b16 %v5507
    %v5572 = vunpack.c.h.b16 %v5507
    %v5573 = vunpack.c.l.b16 %v5508
    %v5574 = vunpack.c.h.b16 %v5508
    %v5575 = vunpack.c.l.b16 %v5509
    %v5576 = vunpack.c.h.b16 %v5509
    %v5577 = vunpack.c.l.b16 %v5510
    %v5578 = vunpack.c.h.b16 %v5510
    %v5579 = vunpack.c.l.b16 %v5511
    %v5580 = vunpack.c.h.b16 %v5511
    %v5581 = vunpack.c.l.b16 %v5512
    %v5582 = vunpack.c.h.b16 %v5512
    %v5583 = vunpack.c.l.b16 %v5513
    %v5584 = vunpack.c.h.b16 %v5513
    %v5585 = vunpack.c.l.b16 %v5514
    %v5586 = vunpack.c.h.b16 %v5514
    %v5587 = vunpack.c.l.b16 %v5515
    %v5588 = vunpack.c.h.b16 %v5515
    %v5589 = vunpack.c.l.b16 %v5516
    %v5590 = vunpack.c.h.b16 %v5516
    %v5591 = vunpack.c.l.b16 %v5517
    %v5592 = vunpack.c.h.b16 %v5517
    %v5593 = vunpack.c.l.b16 %v5518
    %v5594 = vunpack.c.h.b16 %v5518
    %v5595 = vunpack.c.l.b16 %v5519
    %v5596 = vunpack.c.h.b16 %v5519
    %v5597 = vunpack.c.l.b16 %v5520
    %v5598 = vunpack.c.h.b16 %v5520
    %v5599 = vunpack.c.l.b16 %v5521
    %v5600 = vunpack.c.h.b16 %v5521
    %v5601 = vunpack.c.l.b16 %v5522
    %v5602 = vunpack.c.h.b16 %v5522
    %v5603 = vunpack.c.l.b16 %v5523
    %v5604 = vunpack.c.h.b16 %v5523
    %v5605 = vunpack.c.l.b16 %v5524
    %v5606 = vunpack.c.h.b16 %v5524
    %v5607 = vunpack.c.l.b16 %v5525
    %v5608 = vunpack.c.h.b16 %v5525
    %v5609 = vunpack.c.l.b16 %v5526
    %v5610 = vunpack.c.h.b16 %v5526
    %v5611 = vunpack.c.l.b16 %v5527
    %v5612 = vunpack.c.h.b16 %v5527
    %v5613 = vunpack.c.l.b16 %v5528
    %v5614 = vunpack.c.h.b16 %v5528
    %v5615 = vunpack.c.l.b16 %v5529
    %v5616 = vunpack.c.h.b16 %v5529
    %v5617 = vunpack.c.l.b16 %v5530
    %v5618 = vunpack.c.h.b16 %v5530
    %v5619 = vunpack.c.l.b16 %v5531
    %v5620 = vunpack.c.h.b16 %v5531
    %v5621 = vunpack.c.l.b16 %v5532
    %v5622 = vunpack.c.h.b16 %v5532
    %v5623 = vunpack.c.l.b16 %v5533
    %v5624 = vunpack.c.h.b16 %v5533
    %v5625 = vunpack.c.l.b16 %v5534
    %v5626 = vunpack.c.h.b16 %v5534
    %v5627 = vunpack.c.l.b16 %v5535
    %v5628 = vunpack.c.h.b16 %v5535
    %v5629 = vunpack.c.l.b16 %v5536
    %v5630 = vunpack.c.h.b16 %v5536
    %v5631 = vunpack.c.l.b16 %v5537
    %v5632 = vunpack.c.h.b16 %v5537
    %v5633 = vunpack.c.l.b16 %v5538
    %v5634 = vunpack.c.h.b16 %v5538
    %v5635 = vpack.c.b16 %v5575, %v5571
    %v5636 = vpack.c.b16 %v5576, %v5572
    %v5637 = vpack.c.b16 %v5577, %v5573
    %v5638 = vpack.c.b16 %v5578, %v5574
    %v5639 = vpack.c.b16 %v5583, %v5579
    %v5640 = vpack.c.b16 %v5584, %v5580
    %v5641 = vpack.c.b16 %v5585, %v5581
    %v5642 = vpack.c.b16 %v5586, %v5582
    %v5643 = vpack.c.b16 %v5591, %v5587
    %v5644 = vpack.c.b16 %v5592, %v5588
    %v5645 = vpack.c.b16 %v5593, %v5589
    %v5646 = vpack.c.b16 %v5594, %v5590
    %v5647 = vpack.c.b16 %v5599, %v5595
    %v5648 = vpack.c.b16 %v5600, %v5596
    %v5649 = vpack.c.b16 %v5601, %v5597
    %v5650 = vpack.c.b16 %v5602, %v5598
    %v5651 = vpack.c.b16 %v5607, %v5603
    %v5652 = vpack.c.b16 %v5608, %v5604
    %v5653 = vpack.c.b16 %v5609, %v5605
    %v5654 = vpack.c.b16 %v5610, %v5606
    %v5655 = vpack.c.b16 %v5615, %v5611
    %v5656 = vpack.c.b16 %v5616, %v5612
    %v5657 = vpack.c.b16 %v5617, %v5613
    %v5658 = vpack.c.b16 %v5618, %v5614
    %v5659 = vpack.c.b16 %v5623, %v5619
    %v5660 = vpack.c.b16 %v5624, %v5620
    %v5661 = vpack.c.b16 %v5625, %v5621
    %v5662 = vpack.c.b16 %v5626, %v5622
    %v5663 = vpack.c.b16 %v5631, %v5627
    %v5664 = vpack.c.b16 %v5632, %v5628
    %v5665 = vpack.c.b16 %v5633, %v5629
    %v5666 = vpack.c.b16 %v5634, %v5630
    %5699 = vmatpush.bf16.msra.mxu0 %v5663
    %5700 = vmatpush.bf16.msra.mxu0 %v5659
    %5701 = vmatpush.bf16.msra.mxu0 %v5655
    %5702 = vmatpush.bf16.msra.mxu0 %v5651
    %5703 = vmatpush.bf16.msra.mxu0 %v5647
    %5704 = vmatpush.bf16.msra.mxu0 %v5643
    %5705 = vmatpush.bf16.msra.mxu0 %v5639
    %5706 = vmatpush.bf16.msra.mxu0 %v5635
    %5707 = vmatmul.bf16.gmra.mxu0 %v5506
    %v5708 = vpop.f32.mrf.mxu0
    %v5709 = vadd.f32 0.0, %v5708
    %v5710 = vpop.f32.mrf.mxu0
    %5711 = vdwg.mxu0
    %5712 = vmatpush.bf16.msra.mxu0 %v5664
    %5713 = vmatpush.bf16.msra.mxu0 %v5660
    %5714 = vmatpush.bf16.msra.mxu0 %v5656
    %5715 = vmatpush.bf16.msra.mxu0 %v5652
    %5716 = vmatpush.bf16.msra.mxu0 %v5648
    %5717 = vmatpush.bf16.msra.mxu0 %v5644
    %5718 = vmatpush.bf16.msra.mxu0 %v5640
    %5719 = vmatpush.bf16.msra.mxu0 %v5636
    %5720 = vmatmul.bf16.gmra.mxu0 %v5506
    %v5721 = vpop.f32.mrf.mxu0
    %v5722 = vadd.f32 0.0, %v5721
    %v5723 = vpop.f32.mrf.mxu0
    %5724 = vdwg.mxu0
    %5725 = vmatpush.bf16.msra.mxu0 %v5665
    %5726 = vmatpush.bf16.msra.mxu0 %v5661
    %5727 = vmatpush.bf16.msra.mxu0 %v5657
    %5728 = vmatpush.bf16.msra.mxu0 %v5653
    %5729 = vmatpush.bf16.msra.mxu0 %v5649
    %5730 = vmatpush.bf16.msra.mxu0 %v5645
    %5731 = vmatpush.bf16.msra.mxu0 %v5641
    %5732 = vmatpush.bf16.msra.mxu0 %v5637
    %5733 = vmatmul.bf16.gmra.mxu0 %v5506
    %v5734 = vpop.f32.mrf.mxu0
    %v5735 = vadd.f32 0.0, %v5734
    %v5736 = vpop.f32.mrf.mxu0
    %5737 = vdwg.mxu0
    %5738 = vmatpush.bf16.msra.mxu0 %v5666
    %5739 = vmatpush.bf16.msra.mxu0 %v5662
    %5740 = vmatpush.bf16.msra.mxu0 %v5658
    %5741 = vmatpush.bf16.msra.mxu0 %v5654
    %5742 = vmatpush.bf16.msra.mxu0 %v5650
    %5743 = vmatpush.bf16.msra.mxu0 %v5646
    %5744 = vmatpush.bf16.msra.mxu0 %v5642
    %5745 = vmatpush.bf16.msra.mxu0 %v5638
    %5746 = vmatmul.bf16.gmra.mxu0 %v5506
    %v5747 = vpop.f32.mrf.mxu0
    %v5748 = vadd.f32 0.0, %v5747
    %v5749 = vpop.f32.mrf.mxu0
    %5750 = vdwg.mxu0
    %v5751 = vadd.f32 %v5501, %v5709
    %v5752 = vadd.f32 %v5502, %v5722
    %v5753 = vadd.f32 %v5503, %v5735
    %v5754 = vadd.f32 %v5504, %v5748
    %v5755 = vxor.u32 %v5751, 2147483648
    %v5756 = vmul.f32 %v5755, 1.442695
    %v5757 = vpow.pop %v5756
    %v5758 = vadd.f32 %v5757, 1.0
    %v5759 = vrcp.pop %v5758
    %v5760 = vmul.f32 %v5758, %v5759
    %v5761 = vsub.f32 1.0, %v5760
    %v5762 = vmul.f32 %v5759, %v5761
    %v5763 = vadd.f32 %v5759, %v5762
    %vm5764 = vweird.f32 %v5758
    %vm5765 = vweird.f32 %v5759
    %vm5766 = vmor %vm5764, %vm5765
    %v5767 = vsel %vm5766, %v5759, %v5763
    %v5768 = vand.u32 2147483647, %v5758
    %vm5769 = vcmp.eq.f32.partialorder %v5768, 8.507059e+37
    %v5770 = vand.u32 %v5758, 2147483648
    %v5771 = vor.u32 1.1754944e-38, %v5770
    %v5772 = vsel %vm5769, %v5771, %v5767
    %v5773 = vmul.f32 1.0, %v5772
    %v5774 = vxor.u32 %v5752, 2147483648
    %v5775 = vmul.f32 %v5774, 1.442695
    %v5776 = vpow.pop %v5775
    %v5777 = vadd.f32 %v5776, 1.0
    %v5778 = vrcp.pop %v5777
    %v5779 = vmul.f32 %v5777, %v5778
    %v5780 = vsub.f32 1.0, %v5779
    %v5781 = vmul.f32 %v5778, %v5780
    %v5782 = vadd.f32 %v5778, %v5781
    %vm5783 = vweird.f32 %v5777
    %vm5784 = vweird.f32 %v5778
    %vm5785 = vmor %vm5783, %vm5784
    %v5786 = vsel %vm5785, %v5778, %v5782
    %v5787 = vand.u32 2147483647, %v5777
    %vm5788 = vcmp.eq.f32.partialorder %v5787, 8.507059e+37
    %v5789 = vand.u32 %v5777, 2147483648
    %v5790 = vor.u32 1.1754944e-38, %v5789
    %v5791 = vsel %vm5788, %v5790, %v5786
    %v5792 = vmul.f32 1.0, %v5791
    %v5793 = vtanh.pop %v5753
    %v5794 = vxor.u32 %v5754, 2147483648
    %v5795 = vmul.f32 %v5794, 1.442695
    %v5796 = vpow.pop %v5795
    %v5797 = vadd.f32 %v5796, 1.0
    %v5798 = vrcp.pop %v5797
    %v5799 = vmul.f32 %v5797, %v5798
    %v5800 = vsub.f32 1.0, %v5799
    %v5801 = vmul.f32 %v5798, %v5800
    %v5802 = vadd.f32 %v5798, %v5801
    %vm5803 = vweird.f32 %v5797
    %vm5804 = vweird.f32 %v5798
    %vm5805 = vmor %vm5803, %vm5804
    %v5806 = vsel %vm5805, %v5798, %v5802
    %v5807 = vand.u32 2147483647, %v5797
    %vm5808 = vcmp.eq.f32.partialorder %v5807, 8.507059e+37
    %v5809 = vand.u32 %v5797, 2147483648
    %v5810 = vor.u32 1.1754944e-38, %v5809
    %v5811 = vsel %vm5808, %v5810, %v5806
    %v5812 = vmul.f32 1.0, %v5811
    %v5813 = vld [vmem:[#allocation5] sm:$0xff]
    %v5814 = vmul.f32 %v5792, %v5813
    %v5815 = vmul.f32 %v5773, %v5793
    %v5816 = vadd.f32 %v5814, %v5815
    %v5817 = vtanh.pop %v5816
    %v5818 = vmul.f32 %v5812, %v5817
    %5819 = vst [vmem:[#allocation5] sm:$0xff] %v5816
    %5820 = vst [vmem:[#allocation4] sm:$0xff] %v5818
    %v5821 = vld [vmem:[#allocation4] sm:$0xff]
    %v5822 = vld [vmem:[%s7] sm:$0xff]
    %v5823 = vld [vmem:[%s7 + $0x8] sm:$0xff]
    %v5824 = vld [vmem:[%s7 + $0x10] sm:$0xff]
    %v5825 = vld [vmem:[%s7 + $0x18] sm:$0xff]
    %v5826 = vld [vmem:[%s7 + $0x20] sm:$0xff]
    %v5827 = vld [vmem:[%s7 + $0x28] sm:$0xff]
    %v5828 = vld [vmem:[%s7 + $0x30] sm:$0xff]
    %v5829 = vld [vmem:[%s7 + $0x38] sm:$0xff]
    %v5830 = vld [vmem:[%s7 + $0x40] sm:$0xff]
    %v5831 = vld [vmem:[%s7 + $0x48] sm:$0xff]
    %v5832 = vld [vmem:[%s7 + $0x50] sm:$0xff]
    %v5833 = vld [vmem:[%s7 + $0x58] sm:$0xff]
    %v5834 = vld [vmem:[%s7 + $0x60] sm:$0xff]
    %v5835 = vld [vmem:[%s7 + $0x68] sm:$0xff]
    %v5836 = vld [vmem:[%s7 + $0x70] sm:$0xff]
    %v5837 = vld [vmem:[%s7 + $0x78] sm:$0xff]
    %v5838 = vld [vmem:[%s8] sm:$0x1]
    %v5840 = vperm.slane %v5838, 0
    %5842 = vmatpush.msra.mxu0 %v5837
    %5843 = vmatpush.msra.mxu0 %v5836
    %5844 = vmatpush.msra.mxu0 %v5835
    %5845 = vmatpush.msra.mxu0 %v5834
    %5846 = vmatpush.msra.mxu0 %v5833
    %5847 = vmatpush.msra.mxu0 %v5832
    %5848 = vmatpush.msra.mxu0 %v5831
    %5849 = vmatpush.msra.mxu0 %v5830
    %5850 = vmatpush.msra.mxu0 %v5829
    %5851 = vmatpush.msra.mxu0 %v5828
    %5852 = vmatpush.msra.mxu0 %v5827
    %5853 = vmatpush.msra.mxu0 %v5826
    %5854 = vmatpush.msra.mxu0 %v5825
    %5855 = vmatpush.msra.mxu0 %v5824
    %5856 = vmatpush.msra.mxu0 %v5823
    %5857 = vmatpush.msra.mxu0 %v5822
    %5858 = vmatmul.f32.gmra.mxu0 %v5821
    %v5859 = vpop.f32.mrf.mxu0
    %v5860 = vadd.f32 %v5840, %v5859
    %5861 = vdwg.mxu0
    %v5862 = vmax.f32 %v5860, 0.0
    %v5863 = vld [vmem:[%s9] sm:$0xff]
    %v5864 = vld [vmem:[%s9 + $0x8] sm:$0xff]
    %v5865 = vld [vmem:[#allocation6] sm:$0x1]
    %v5867 = vperm.slane %v5865, 0
    %vm5869 = vcmask 130048
    %v5871 = vsel %vm5869, %v5862, 0
    %5873 = vmatpush.msra.mxu0 0.0
    %5874 = vmatpush.msra.mxu0 0.0
    %5875 = vmatpush.msra.mxu0 0.0
    %5876 = vmatpush.msra.mxu0 0.0
    %5877 = vmatpush.msra.mxu0 0.0
    %5878 = vmatpush.msra.mxu0 0.0
    %5879 = vmatpush.msra.mxu0 0.0
    %5880 = vmatpush.msra.mxu0 0.0
    %5881 = vmatpush.msra.mxu0 0.0
    %5882 = vmatpush.msra.mxu0 0.0
    %5883 = vmatpush.msra.mxu0 0.0
    %5884 = vmatpush.msra.mxu0 0.0
    %5885 = vmatpush.msra.mxu0 0.0
    %5886 = vmatpush.msra.mxu0 0.0
    %5887 = vmatpush.msra.mxu0 %v5864
    %5888 = vmatpush.msra.mxu0 %v5863
    %5889 = vmatmul.f32.gmra.mxu0 %v5871
    %v5890 = vpop.f32.mrf.mxu0
    %v5891 = vadd.f32 %v5867, %v5890
    %5892 = vdwg.mxu0
    %vm5893 = vcmask 7168
    %5894 = vst.msk [vmem:[%s11] sm:$0xff] %vm5893, %v5891
    // Predicated region
    $region58: #{lstm_model_forward.1} parent=1 // pred_check
      _
    $region59: #{lstm_model_forward.1} parent=1 // pred_check_branch
      %5896 = sbr.rel (0) target = $region61
    $region60: #{lstm_model_forward.1} parent=1 // pred_region
      _
    $region61: #{lstm_model_forward.1} parent=1 // pred_fallthru
      _
    // Predicated region
    $region62: #{lstm_model_forward.1} parent=1 // pred_check
      _
    $region63: #{lstm_model_forward.1} parent=1 // pred_check_branch
      %5898 = sbr.rel (0) target = $region65
    $region64: #{lstm_model_forward.1} parent=1 // pred_region
      _
    $region65: #{lstm_model_forward.1} parent=1 // pred_fallthru
      _
    %5899 = vsyncpa [#allocation8], 1
    %5900 = vsyncpa [#allocation10], 1

</llo_original>
